<compile_context>
chip_gen: v7x
topology: tpu7x:2x2x1
jax: 0.10.0
libtpu: 0.0.40
codegen_flags: <defaults>
</compile_context>

<pallas_src>
import functools

import jax
import jax.numpy as jnp
from jax import lax
from jax.experimental import pallas as pl
from jax.experimental.pallas import tpu as pltpu

LN_EPS = 1e-5

_PARAM_ORDER = (
    "ln1q_w", "ln1q_b", "ln1k_w", "ln1k_b", "ln1v_w", "ln1v_b",
    "wq", "wk", "wv", "wp", "bp",
    "ln2_w", "ln2_b",
    "wfc1", "bfc1", "wfc2", "bfc2",
    "gamma1", "gamma2",
)


def _layer_norm(x, w, b):
    mean = jnp.mean(x, axis=-1, keepdims=True)
    var = jnp.mean((x - mean) ** 2, axis=-1, keepdims=True)
    return (x - mean) * lax.rsqrt(var + LN_EPS) * w + b


def _gelu_exact(x):
    # matches torch.nn.GELU() default (erf formulation)
    return x * 0.5 * (1.0 + lax.erf(x * (1.0 / jnp.sqrt(2.0).astype(x.dtype))))


def _softmax_lastdim(s):
    s_max = jnp.max(s, axis=-1, keepdims=True)
    p = jnp.exp(s - s_max)
    # exact reciprocal (tiny fraction of total work): rows sum to 1, so the error
    # does not compound when many such blocks are stacked.
    return p / jnp.sum(p, axis=-1, keepdims=True)


def _regressor_block_kernel(
    # activations: (b_fold, bn, C) query-side, (b_fold, Nk, C) kv-side
    x_q_ref, x_kv_ref, pos_q_ref, pos_k_ref,
    # layer-norm params (1, C), f32
    ln1q_w_ref, ln1q_b_ref, ln1k_w_ref, ln1k_b_ref, ln1v_w_ref, ln1v_b_ref,
    # attention projections (bf16): wq/wk/wv/wp (C, C) (softmax scale folded into wq);
    # proj bias (1, C) f32
    wq_ref, wk_ref, wv_ref, wp_ref, bp_ref,
    # norm2 params (1, C), f32
    ln2_w_ref, ln2_b_ref,
    # MLP params (weights bf16, biases f32)
    wfc1_ref, bfc1_ref, wfc2_ref, bfc2_ref,
    # gammas (1, C), f32
    gamma1_ref, gamma2_ref,
    # output
    out_ref,
    *, num_heads, head_dim, mlp_chunk, batched_heads,
):
    f32 = jnp.float32
    mm_dtype = wq_ref.dtype          # bf16 MXU inputs; accumulation stays f32
    H, D = num_heads, head_dim

    bb, nq, C = x_q_ref.shape
    _, nk, _ = x_kv_ref.shape
    mq = bb * nq
    mk = bb * nk

    # fold (batch-block, token-block) into matmul rows -> big-M 2-D GEMMs
    x_q = x_q_ref[...].astype(f32).reshape(mq, C)
    pos_q = pos_q_ref[...].astype(f32).reshape(mq, C)
    x_kv = x_kv_ref[...].astype(f32).reshape(mk, C)
    pos_k = pos_k_ref[...].astype(f32).reshape(mk, C)

    # --- pre-attention layernorms (f32 math) ---
    q_in = _layer_norm(x_q + pos_q, ln1q_w_ref[...], ln1q_b_ref[...]).astype(mm_dtype)
    k_in = _layer_norm(x_kv + pos_k, ln1k_w_ref[...], ln1k_b_ref[...]).astype(mm_dtype)
    v_in = _layer_norm(x_kv, ln1v_w_ref[...], ln1v_b_ref[...]).astype(mm_dtype)

    # --- q/k/v projections (qkv_bias=False; softmax scale pre-folded into wq) ---
    q2d = jnp.dot(q_in, wq_ref[...], preferred_element_type=f32).astype(mm_dtype)
    k2d = jnp.dot(k_in, wk_ref[...], preferred_element_type=f32).astype(mm_dtype)
    v2d = jnp.dot(v_in, wv_ref[...], preferred_element_type=f32).astype(mm_dtype)

    if batched_heads:
        # reshape-only head split (no lane slices / stack copies); batched
        # contraction directly on the (tokens, H, D) layout, batch dims (batch, head)
        q4 = q2d.reshape(bb, nq, H, D)
        k4 = k2d.reshape(bb, nk, H, D)
        v4 = v2d.reshape(bb, nk, H, D)
        s = lax.dot_general(q4, k4, (((3,), (3,)), ((0, 2), (0, 2))),
                            preferred_element_type=f32)             # (bb, H, nq, nk)
        p = _softmax_lastdim(s).astype(mm_dtype)
        ctx = lax.dot_general(p, v4, (((3,), (1,)), ((0, 1), (0, 2))),
                              preferred_element_type=f32).astype(mm_dtype)  # (bb,H,nq,D)
        # head merge back to rows x C (lane concat rides the XLU slot)
        ctx2d = jnp.concatenate([ctx[:, h] for h in range(H)], axis=-1).reshape(mq, C)
    else:
        # conservative fallback (wrapper guarantees bb == 1 here):
        # per-head lane slices + leading-batch-dim dots (known-good lowering).
        qh = jnp.stack([q2d[:, h * D:(h + 1) * D] for h in range(H)], axis=0)
        kh = jnp.stack([k2d[:, h * D:(h + 1) * D] for h in range(H)], axis=0)
        vh = jnp.stack([v2d[:, h * D:(h + 1) * D] for h in range(H)], axis=0)
        s = lax.dot_general(qh, kh, (((2,), (2,)), ((0,), (0,))),
                            preferred_element_type=f32)              # (H, mq, mk)
        p = _softmax_lastdim(s).astype(mm_dtype)
        ctx = lax.dot_general(p, vh, (((2,), (1,)), ((0,), (0,))),
                              preferred_element_type=f32).astype(mm_dtype)  # (H, mq, D)
        ctx2d = jnp.concatenate([ctx[h] for h in range(H)], axis=-1)        # (mq, C)

    # --- single full-K output projection (K = C keeps the MXU fed) ---
    attn_out = jnp.dot(ctx2d, wp_ref[...], preferred_element_type=f32) + bp_ref[...]

    # --- residual 1 (drop_path = Identity, dropout p=0) ---
    x = x_q + gamma1_ref[...] * attn_out

    # --- norm2 ---
    x = _layer_norm(x, ln2_w_ref[...], ln2_b_ref[...])

    # --- MLP (exact-erf GELU), chunked along the hidden dim ---
    # TODO(synk): for very large C on v7x, stream wfc1/wfc2 via a hidden-chunk grid
    # axis / emit_pipeline instead of holding them fully VMEM-resident.
    x_mm = x.astype(mm_dtype)
    hidden = wfc1_ref.shape[1]
    num_chunks = hidden // mlp_chunk          # wrapper guarantees divisibility
    if num_chunks <= 1:
        h1 = jnp.dot(x_mm, wfc1_ref[...], preferred_element_type=f32) + bfc1_ref[...]
        h2 = jnp.dot(_gelu_exact(h1).astype(mm_dtype), wfc2_ref[...],
                     preferred_element_type=f32)
    else:
        def body(c, acc):
            lo = pl.multiple_of(c * mlp_chunk, mlp_chunk)
            h1 = (jnp.dot(x_mm, wfc1_ref[:, pl.ds(lo, mlp_chunk)],
                          preferred_element_type=f32)
                  + bfc1_ref[:, pl.ds(lo, mlp_chunk)])
            h1 = _gelu_exact(h1).astype(mm_dtype)
            return acc + jnp.dot(h1, wfc2_ref[pl.ds(lo, mlp_chunk), :],
                                 preferred_element_type=f32)
        h2 = lax.fori_loop(0, num_chunks, body, jnp.zeros((mq, C), f32), unroll=True)
    h2 = h2 + bfc2_ref[...]

    # --- residual 2 ---
    out_ref[...] = (x + gamma2_ref[...] * h2).reshape(bb, nq, C).astype(out_ref.dtype)


def prepare_params(params, *, num_heads, mm_dtype=jnp.bfloat16):
    """One-time weight prep, hoisted out of the per-call path:
    fold the softmax scale into wq; matmul weights in bf16; LN/bias/gamma in f32."""
    f32 = jnp.float32
    C = params["wq"].shape[0]
    scale = (C // num_heads) ** (-0.5)
    prepped = {}
    for k in _PARAM_ORDER:
        p = params[k]
        if k == "wq":
            prepped[k] = (p * scale).astype(mm_dtype)
        elif k in ("wk", "wv", "wp", "wfc1", "wfc2"):
            prepped[k] = p.astype(mm_dtype)
        else:
            prepped[k] = p.astype(f32)
    return prepped


def regressor_block(x_q, x_kv, pos_q, pos_k, prepped, *, num_heads,
                    block_q=256, target_rows=256, mlp_chunk=1024):
    B, N, C = x_q.shape
    _, Nk, _ = x_kv.shape
    assert C % num_heads == 0
    head_dim = C // num_heads
    hidden = prepped["wfc1"].shape[1]
    param_list = [prepped[k] for k in _PARAM_ORDER]

    # query-token blocking (falls back to one full-N block if it doesn't divide)
    # TODO(synk): masked ragged-tail path for N % block_q != 0 at large odd N.
    bn = block_q if (N > block_q and N % block_q == 0) else N

    # fold batches into the matmul M dimension when the per-step token count is
    # small, but keep >= 2 grid steps so both v7x TensorCores get work.
    divisors = [d for d in range(1, B + 1) if B % d == 0]
    b_fold = max([d for d in divisors if d * bn <= target_rows] or [1])
    if (B // b_fold) * (N // bn) < 2:
        smaller = [d for d in divisors if d < b_fold]
        if smaller:
            b_fold = max(smaller)

    mlp_chunk = min(mlp_chunk, hidden)
    if hidden % mlp_chunk != 0:
        mlp_chunk = hidden

    try:
        vmem_cap = int(pltpu.get_tpu_info().vmem_capacity_bytes)
    except Exception:       # conservative default = smallest (v7x per-TC) VMEM
        vmem_cap = 64 * 1024 * 1024

    in_itemsize = x_q.dtype.itemsize
    weight_bytes = sum(int(p.size) * p.dtype.itemsize for p in param_list)

    flops = 2 * B * (
        N * C * C + 2 * Nk * C * C                      # q/k/v projections
        + 2 * num_heads * N * Nk * head_dim             # scores + context
        + N * C * C                                     # output projection
        + 2 * N * C * hidden)                           # MLP
    transcendentals = B * (num_heads * N * Nk + N * hidden)
    bytes_accessed = (B * (2 * N + 2 * Nk) * C * in_itemsize
                      + B * N * C * in_itemsize + weight_bytes)
    cost = pl.CostEstimate(flops=int(flops),
                           transcendentals=int(transcendentals),
                           bytes_accessed=int(bytes_accessed))

    def build_and_run(batched_heads, single_buffer_params):
        bb = b_fold if batched_heads else 1      # fallback attention assumes bb == 1
        mq, mk = bb * bn, bb * Nk

        def q_spec():
            return pl.BlockSpec((bb, bn, C), lambda b, n: (b, n, 0))

        def kv_spec():
            return pl.BlockSpec((bb, Nk, C), lambda b, n: (b, 0, 0))

        def param_spec(p):
            zeros = (0,) * p.ndim
            idx_map = lambda b, n, _z=zeros: _z
            if single_buffer_params:
                # constant index_map => never re-fetched; single-buffer so weights
                # are not duplicated in VMEM (matters on v7x's 64 MiB/TC).
                return pl.BlockSpec(p.shape, idx_map, pipeline_mode=pl.Buffered(1))
            return pl.BlockSpec(p.shape, idx_map)

        # VMEM budget: weights (x2 only if double-buffered), pipeline-double-buffered
        # activation blocks, in-kernel f32 intermediates, headroom; always leave
        # >= 8 MiB of physical VMEM for Mosaic internal scratch.
        act_bytes = 2 * ((2 * mq + 2 * mk + mq) * C * in_itemsize)
        inter_bytes = 4 * (8 * mq * C + 4 * mk * C
                           + 2 * bb * num_heads * bn * Nk + 2 * mq * mlp_chunk)
        need = ((1 if single_buffer_params else 2) * weight_bytes
                + act_bytes + inter_bytes + (16 << 20))
        vmem_limit = int(max(32 * 1024 * 1024, min(need, vmem_cap - (8 << 20))))

        kernel = functools.partial(
            _regressor_block_kernel,
            num_heads=num_heads, head_dim=head_dim,
            mlp_chunk=mlp_chunk, batched_heads=batched_heads)

        fn = pl.pallas_call(
            kernel,
            out_shape=jax.ShapeDtypeStruct((B, N, C), x_q.dtype),
            grid_spec=pltpu.PrefetchScalarGridSpec(
                num_scalar_prefetch=0,
                grid=(B // bb, N // bn),
                in_specs=[q_spec(), kv_spec(), q_spec(), kv_spec()]
                         + [param_spec(p) for p in param_list],
                out_specs=q_spec(),
            ),
            compiler_params=pltpu.CompilerParams(
                # TODO(synk): pltpu.CORE_PARALLEL on the batch axis for explicit
                # cross-TC sharding on v7x once both grid axes are guaranteed > 1.
                dimension_semantics=("parallel", "parallel"),
                vmem_limit_bytes=vmem_limit,
            ),
            cost_estimate=cost,
        )
        out = fn(x_q, x_kv, pos_q, pos_k, *param_list)
        return jax.block_until_ready(out)

    # Preferred configuration first; fall back to progressively more conservative
    # lowerings so the kernel always runs even on older Mosaic toolchains.
    last_err = None
    for batched_heads in (True, False):
        for single_buffer_params in (True, False):
            try:
                return build_and_run(batched_heads, single_buffer_params)
            except Exception as e:   # retry with a safer configuration
                last_err = e
    raise last_err


def _reference(x_q, x_kv, pos_q, pos_k, params, *, num_heads):
    # pure-JAX f32 reference mirroring the PyTorch forward
    B, N, C = x_q.shape
    Nk = x_kv.shape[1]
    D = C // num_heads
    scale = D ** (-0.5)

    def ln(x, w, b):
        m = jnp.mean(x, axis=-1, keepdims=True)
        v = jnp.mean((x - m) ** 2, axis=-1, keepdims=True)
        return (x - m) / jnp.sqrt(v + LN_EPS) * w + b

    q_in = ln(x_q + pos_q, params["ln1q_w"], params["ln1q_b"])
    k_in = ln(x_kv + pos_k, params["ln1k_w"], params["ln1k_b"])
    v_in = ln(x_kv, params["ln1v_w"], params["ln1v_b"])

    q = (q_in @ params["wq"]).reshape(B, N, num_heads, D).transpose(0, 2, 1, 3)
    k = (k_in @ params["wk"]).reshape(B, Nk, num_heads, D).transpose(0, 2, 1, 3)
    v = (v_in @ params["wv"]).reshape(B, Nk, num_heads, D).transpose(0, 2, 1, 3)

    attn = jax.nn.softmax((q * scale) @ jnp.swapaxes(k, -2, -1), axis=-1)
    o = (attn @ v).transpose(0, 2, 1, 3).reshape(B, N, C)
    o = o @ params["wp"] + params["bp"]

    x = x_q + params["gamma1"] * o
    x = ln(x, params["ln2_w"], params["ln2_b"])
    h = jax.nn.gelu(x @ params["wfc1"] + params["bfc1"], approximate=False)
    h = h @ params["wfc2"] + params["bfc2"]
    return x + params["gamma2"] * h


def init_params(key, dim, mlp_hidden):
    ks = jax.random.split(key, 6)
    s = 0.02
    return {
        "ln1q_w": jnp.ones((1, dim), jnp.float32),
        "ln1q_b": jnp.zeros((1, dim), jnp.float32),
        "ln1k_w": jnp.ones((1, dim), jnp.float32),
        "ln1k_b": jnp.zeros((1, dim), jnp.float32),
        "ln1v_w": jnp.ones((1, dim), jnp.float32),
        "ln1v_b": jnp.zeros((1, dim), jnp.float32),
        "wq": s * jax.random.normal(ks[0], (dim, dim), jnp.float32),
        "wk": s * jax.random.normal(ks[1], (dim, dim), jnp.float32),
        "wv": s * jax.random.normal(ks[2], (dim, dim), jnp.float32),
        "wp": s * jax.random.normal(ks[3], (dim, dim), jnp.float32),
        "bp": jnp.zeros((1, dim), jnp.float32),
        "ln2_w": jnp.ones((1, dim), jnp.float32),
        "ln2_b": jnp.zeros((1, dim), jnp.float32),
        "wfc1": s * jax.random.normal(ks[4], (dim, mlp_hidden), jnp.float32),
        "bfc1": jnp.zeros((1, mlp_hidden), jnp.float32),
        "wfc2": s * jax.random.normal(ks[5], (mlp_hidden, dim), jnp.float32),
        "bfc2": jnp.zeros((1, dim), jnp.float32),
        "gamma1": jnp.ones((1, dim), jnp.float32),
        "gamma2": jnp.ones((1, dim), jnp.float32),
    }


if __name__ == "__main__":
    # C = 128 keeps every activation/output block lane-dense (unmasked vst).
    B, N_q, N_kv = 2, 8, 16
    dim, num_heads = 128, 4
    mlp_hidden = int(dim * 4.0)

    key = jax.random.PRNGKey(0)
    k_xq, k_xkv, k_pq, k_pk, k_params = jax.random.split(key, 5)

    x_q = jax.random.normal(k_xq, (B, N_q, dim), jnp.float32)
    x_kv = jax.random.normal(k_xkv, (B, N_kv, dim), jnp.float32)
    pos_q = jax.random.normal(k_pq, (B, N_q, dim), jnp.float32)
    pos_k = jax.random.normal(k_pk, (B, N_kv, dim), jnp.float32)

    params = init_params(k_params, dim, mlp_hidden)
    prepped = prepare_params(params, num_heads=num_heads)   # one-time weight prep

    out = regressor_block(x_q, x_kv, pos_q, pos_k, prepped, num_heads=num_heads)
    out = jax.block_until_ready(out)

    ref = _reference(x_q, x_kv, pos_q, pos_k, params, num_heads=num_heads)
    assert out.shape == (B, N_q, dim)
    # bf16 MXU inputs (f32 accumulation, f32 LN/softmax/GELU) => slightly looser
    # tolerance than the pure-f32 reference.
    max_err = float(jnp.max(jnp.abs(out - ref)))
    assert jnp.allclose(out, ref, atol=2e-2, rtol=2e-2), (
        f"mismatch vs reference (max abs err {max_err})")

    print("KERNEL_OK")
</pallas_src>

<mosaic_0001>
module attributes {stable_mosaic.version = 11 : i64} {
  func.func @_regressor_block_kernel(%arg0: i32, %arg1: i32, %arg2: memref<1x8x128xf32, #tpu.memory_space<vmem>>, %arg3: memref<1x16x128xf32, #tpu.memory_space<vmem>>, %arg4: memref<1x8x128xf32, #tpu.memory_space<vmem>>, %arg5: memref<1x16x128xf32, #tpu.memory_space<vmem>>, %arg6: memref<1x128xf32, #tpu.memory_space<vmem>>, %arg7: memref<1x128xf32, #tpu.memory_space<vmem>>, %arg8: memref<1x128xf32, #tpu.memory_space<vmem>>, %arg9: memref<1x128xf32, #tpu.memory_space<vmem>>, %arg10: memref<1x128xf32, #tpu.memory_space<vmem>>, %arg11: memref<1x128xf32, #tpu.memory_space<vmem>>, %arg12: memref<128x128xbf16, #tpu.memory_space<vmem>>, %arg13: memref<128x128xbf16, #tpu.memory_space<vmem>>, %arg14: memref<128x128xbf16, #tpu.memory_space<vmem>>, %arg15: memref<128x128xbf16, #tpu.memory_space<vmem>>, %arg16: memref<1x128xf32, #tpu.memory_space<vmem>>, %arg17: memref<1x128xf32, #tpu.memory_space<vmem>>, %arg18: memref<1x128xf32, #tpu.memory_space<vmem>>, %arg19: memref<128x512xbf16, #tpu.memory_space<vmem>>, %arg20: memref<1x512xf32, #tpu.memory_space<vmem>>, %arg21: memref<512x128xbf16, #tpu.memory_space<vmem>>, %arg22: memref<1x128xf32, #tpu.memory_space<vmem>>, %arg23: memref<1x128xf32, #tpu.memory_space<vmem>>, %arg24: memref<1x128xf32, #tpu.memory_space<vmem>>, %arg25: memref<1x8x128xf32, #tpu.memory_space<vmem>>) attributes {dimension_semantics = [#tpu.dimension_semantics<parallel>, #tpu.dimension_semantics<parallel>], iteration_bounds = array<i64: 2, 1>, scalar_prefetch = 0 : i64, scratch_operands = 0 : i64, tpu.core_type = #tpu.core_type<tc>, window_params = [{transform_indices = @transform_0, window_bounds = array<i64: 1, 8, 128>}, {transform_indices = @transform_1, window_bounds = array<i64: 1, 16, 128>}, {transform_indices = @transform_2, window_bounds = array<i64: 1, 8, 128>}, {transform_indices = @transform_3, window_bounds = array<i64: 1, 16, 128>}, {pipeline_mode = #tpu.pipeline_mode<synchronous>, transform_indices = @transform_4, window_bounds = array<i64: 1, 128>}, {pipeline_mode = #tpu.pipeline_mode<synchronous>, transform_indices = @transform_5, window_bounds = array<i64: 1, 128>}, {pipeline_mode = #tpu.pipeline_mode<synchronous>, transform_indices = @transform_6, window_bounds = array<i64: 1, 128>}, {pipeline_mode = #tpu.pipeline_mode<synchronous>, transform_indices = @transform_7, window_bounds = array<i64: 1, 128>}, {pipeline_mode = #tpu.pipeline_mode<synchronous>, transform_indices = @transform_8, window_bounds = array<i64: 1, 128>}, {pipeline_mode = #tpu.pipeline_mode<synchronous>, transform_indices = @transform_9, window_bounds = array<i64: 1, 128>}, {pipeline_mode = #tpu.pipeline_mode<synchronous>, transform_indices = @transform_10, window_bounds = array<i64: 128, 128>}, {pipeline_mode = #tpu.pipeline_mode<synchronous>, transform_indices = @transform_11, window_bounds = array<i64: 128, 128>}, {pipeline_mode = #tpu.pipeline_mode<synchronous>, transform_indices = @transform_12, window_bounds = array<i64: 128, 128>}, {pipeline_mode = #tpu.pipeline_mode<synchronous>, transform_indices = @transform_13, window_bounds = array<i64: 128, 128>}, {pipeline_mode = #tpu.pipeline_mode<synchronous>, transform_indices = @transform_14, window_bounds = array<i64: 1, 128>}, {pipeline_mode = #tpu.pipeline_mode<synchronous>, transform_indices = @transform_15, window_bounds = array<i64: 1, 128>}, {pipeline_mode = #tpu.pipeline_mode<synchronous>, transform_indices = @transform_16, window_bounds = array<i64: 1, 128>}, {pipeline_mode = #tpu.pipeline_mode<synchronous>, transform_indices = @transform_17, window_bounds = array<i64: 128, 512>}, {pipeline_mode = #tpu.pipeline_mode<synchronous>, transform_indices = @transform_18, window_bounds = array<i64: 1, 512>}, {pipeline_mode = #tpu.pipeline_mode<synchronous>, transform_indices = @transform_19, window_bounds = array<i64: 512, 128>}, {pipeline_mode = #tpu.pipeline_mode<synchronous>, transform_indices = @transform_20, window_bounds = array<i64: 1, 128>}, {pipeline_mode = #tpu.pipeline_mode<synchronous>, transform_indices = @transform_21, window_bounds = array<i64: 1, 128>}, {pipeline_mode = #tpu.pipeline_mode<synchronous>, transform_indices = @transform_22, window_bounds = array<i64: 1, 128>}, {transform_indices = @transform_23, window_bounds = array<i64: 1, 8, 128>}]} {
    %c0 = arith.constant 0 : index
    %c0_0 = arith.constant 0 : index
    %c0_1 = arith.constant 0 : index
    %0 = vector.load %arg2[%c0, %c0_0, %c0_1] : memref<1x8x128xf32, #tpu.memory_space<vmem>>, vector<1x8x128xf32>
    %1 = vector.shape_cast %0 : vector<1x8x128xf32> to vector<8x128xf32>
    %c0_2 = arith.constant 0 : index
    %c0_3 = arith.constant 0 : index
    %c0_4 = arith.constant 0 : index
    %2 = vector.load %arg4[%c0_2, %c0_3, %c0_4] : memref<1x8x128xf32, #tpu.memory_space<vmem>>, vector<1x8x128xf32>
    %3 = vector.shape_cast %2 : vector<1x8x128xf32> to vector<8x128xf32>
    %c0_5 = arith.constant 0 : index
    %c0_6 = arith.constant 0 : index
    %c0_7 = arith.constant 0 : index
    %4 = vector.load %arg3[%c0_5, %c0_6, %c0_7] : memref<1x16x128xf32, #tpu.memory_space<vmem>>, vector<1x16x128xf32>
    %5 = vector.shape_cast %4 : vector<1x16x128xf32> to vector<16x128xf32>
    %c0_8 = arith.constant 0 : index
    %c0_9 = arith.constant 0 : index
    %c0_10 = arith.constant 0 : index
    %6 = vector.load %arg5[%c0_8, %c0_9, %c0_10] : memref<1x16x128xf32, #tpu.memory_space<vmem>>, vector<1x16x128xf32>
    %7 = vector.shape_cast %6 : vector<1x16x128xf32> to vector<16x128xf32>
    %8 = arith.addf %1, %3 : vector<8x128xf32>
    %c0_11 = arith.constant 0 : index
    %c0_12 = arith.constant 0 : index
    %9 = vector.load %arg6[%c0_11, %c0_12] : memref<1x128xf32, #tpu.memory_space<vmem>>, vector<1x128xf32>
    %c0_13 = arith.constant 0 : index
    %c0_14 = arith.constant 0 : index
    %10 = vector.load %arg7[%c0_13, %c0_14] : memref<1x128xf32, #tpu.memory_space<vmem>>, vector<1x128xf32>
    %cst = arith.constant dense<0.000000e+00> : vector<8xf32>
    %11 = vector.multi_reduction <add>, %8, %cst [1] : vector<8x128xf32> to vector<8xf32>
    %12 = vector.shape_cast %11 : vector<8xf32> to vector<8x1xf32>
    %cst_15 = arith.constant 1.280000e+02 : f32
    %13 = vector.broadcast %cst_15 : f32 to vector<8x1xf32>
    %14 = arith.divf %12, %13 : vector<8x1xf32>
    %15 = vector.broadcast %14 : vector<8x1xf32> to vector<8x128xf32>
    %16 = arith.subf %8, %15 : vector<8x128xf32>
    %17 = arith.mulf %16, %16 : vector<8x128xf32>
    %cst_16 = arith.constant dense<0.000000e+00> : vector<8xf32>
    %18 = vector.multi_reduction <add>, %17, %cst_16 [1] : vector<8x128xf32> to vector<8xf32>
    %19 = vector.shape_cast %18 : vector<8xf32> to vector<8x1xf32>
    %cst_17 = arith.constant 1.280000e+02 : f32
    %20 = vector.broadcast %cst_17 : f32 to vector<8x1xf32>
    %21 = arith.divf %19, %20 : vector<8x1xf32>
    %22 = vector.broadcast %14 : vector<8x1xf32> to vector<8x128xf32>
    %23 = arith.subf %8, %22 : vector<8x128xf32>
    %cst_18 = arith.constant 9.99999974E-6 : f32
    %24 = vector.broadcast %cst_18 : f32 to vector<8x1xf32>
    %25 = arith.addf %21, %24 : vector<8x1xf32>
    %26 = math.rsqrt %25 : vector<8x1xf32>
    %27 = vector.broadcast %26 : vector<8x1xf32> to vector<8x128xf32>
    %28 = arith.mulf %23, %27 : vector<8x128xf32>
    %29 = vector.broadcast %9 : vector<1x128xf32> to vector<8x128xf32>
    %30 = arith.mulf %28, %29 : vector<8x128xf32>
    %31 = vector.broadcast %10 : vector<1x128xf32> to vector<8x128xf32>
    %32 = arith.addf %30, %31 : vector<8x128xf32>
    %33 = arith.truncf %32 : vector<8x128xf32> to vector<8x128xbf16>
    %34 = arith.addf %5, %7 : vector<16x128xf32>
    %c0_19 = arith.constant 0 : index
    %c0_20 = arith.constant 0 : index
    %35 = vector.load %arg8[%c0_19, %c0_20] : memref<1x128xf32, #tpu.memory_space<vmem>>, vector<1x128xf32>
    %c0_21 = arith.constant 0 : index
    %c0_22 = arith.constant 0 : index
    %36 = vector.load %arg9[%c0_21, %c0_22] : memref<1x128xf32, #tpu.memory_space<vmem>>, vector<1x128xf32>
    %cst_23 = arith.constant dense<0.000000e+00> : vector<16xf32>
    %37 = vector.multi_reduction <add>, %34, %cst_23 [1] : vector<16x128xf32> to vector<16xf32>
    %38 = vector.shape_cast %37 : vector<16xf32> to vector<16x1xf32>
    %cst_24 = arith.constant 1.280000e+02 : f32
    %39 = vector.broadcast %cst_24 : f32 to vector<16x1xf32>
    %40 = arith.divf %38, %39 : vector<16x1xf32>
    %41 = vector.broadcast %40 : vector<16x1xf32> to vector<16x128xf32>
    %42 = arith.subf %34, %41 : vector<16x128xf32>
    %43 = arith.mulf %42, %42 : vector<16x128xf32>
    %cst_25 = arith.constant dense<0.000000e+00> : vector<16xf32>
    %44 = vector.multi_reduction <add>, %43, %cst_25 [1] : vector<16x128xf32> to vector<16xf32>
    %45 = vector.shape_cast %44 : vector<16xf32> to vector<16x1xf32>
    %cst_26 = arith.constant 1.280000e+02 : f32
    %46 = vector.broadcast %cst_26 : f32 to vector<16x1xf32>
    %47 = arith.divf %45, %46 : vector<16x1xf32>
    %48 = vector.broadcast %40 : vector<16x1xf32> to vector<16x128xf32>
    %49 = arith.subf %34, %48 : vector<16x128xf32>
    %cst_27 = arith.constant 9.99999974E-6 : f32
    %50 = vector.broadcast %cst_27 : f32 to vector<16x1xf32>
    %51 = arith.addf %47, %50 : vector<16x1xf32>
    %52 = math.rsqrt %51 : vector<16x1xf32>
    %53 = vector.broadcast %52 : vector<16x1xf32> to vector<16x128xf32>
    %54 = arith.mulf %49, %53 : vector<16x128xf32>
    %55 = vector.broadcast %35 : vector<1x128xf32> to vector<16x128xf32>
    %56 = arith.mulf %54, %55 : vector<16x128xf32>
    %57 = vector.broadcast %36 : vector<1x128xf32> to vector<16x128xf32>
    %58 = arith.addf %56, %57 : vector<16x128xf32>
    %59 = arith.truncf %58 : vector<16x128xf32> to vector<16x128xbf16>
    %c0_28 = arith.constant 0 : index
    %c0_29 = arith.constant 0 : index
    %60 = vector.load %arg10[%c0_28, %c0_29] : memref<1x128xf32, #tpu.memory_space<vmem>>, vector<1x128xf32>
    %c0_30 = arith.constant 0 : index
    %c0_31 = arith.constant 0 : index
    %61 = vector.load %arg11[%c0_30, %c0_31] : memref<1x128xf32, #tpu.memory_space<vmem>>, vector<1x128xf32>
    %cst_32 = arith.constant dense<0.000000e+00> : vector<16xf32>
    %62 = vector.multi_reduction <add>, %5, %cst_32 [1] : vector<16x128xf32> to vector<16xf32>
    %63 = vector.shape_cast %62 : vector<16xf32> to vector<16x1xf32>
    %cst_33 = arith.constant 1.280000e+02 : f32
    %64 = vector.broadcast %cst_33 : f32 to vector<16x1xf32>
    %65 = arith.divf %63, %64 : vector<16x1xf32>
    %66 = vector.broadcast %65 : vector<16x1xf32> to vector<16x128xf32>
    %67 = arith.subf %5, %66 : vector<16x128xf32>
    %68 = arith.mulf %67, %67 : vector<16x128xf32>
    %cst_34 = arith.constant dense<0.000000e+00> : vector<16xf32>
    %69 = vector.multi_reduction <add>, %68, %cst_34 [1] : vector<16x128xf32> to vector<16xf32>
    %70 = vector.shape_cast %69 : vector<16xf32> to vector<16x1xf32>
    %cst_35 = arith.constant 1.280000e+02 : f32
    %71 = vector.broadcast %cst_35 : f32 to vector<16x1xf32>
    %72 = arith.divf %70, %71 : vector<16x1xf32>
    %73 = vector.broadcast %65 : vector<16x1xf32> to vector<16x128xf32>
    %74 = arith.subf %5, %73 : vector<16x128xf32>
    %cst_36 = arith.constant 9.99999974E-6 : f32
    %75 = vector.broadcast %cst_36 : f32 to vector<16x1xf32>
    %76 = arith.addf %72, %75 : vector<16x1xf32>
    %77 = math.rsqrt %76 : vector<16x1xf32>
    %78 = vector.broadcast %77 : vector<16x1xf32> to vector<16x128xf32>
    %79 = arith.mulf %74, %78 : vector<16x128xf32>
    %80 = vector.broadcast %60 : vector<1x128xf32> to vector<16x128xf32>
    %81 = arith.mulf %79, %80 : vector<16x128xf32>
    %82 = vector.broadcast %61 : vector<1x128xf32> to vector<16x128xf32>
    %83 = arith.addf %81, %82 : vector<16x128xf32>
    %84 = arith.truncf %83 : vector<16x128xf32> to vector<16x128xbf16>
    %c0_37 = arith.constant 0 : index
    %c0_38 = arith.constant 0 : index
    %85 = vector.load %arg12[%c0_37, %c0_38] : memref<128x128xbf16, #tpu.memory_space<vmem>>, vector<128x128xbf16>
    %cst_39 = arith.constant dense<0.000000e+00> : vector<8x128xf32>
    %86 = tpu.matmul %33, %85, %cst_39 {dimension_numbers = #tpu.dot_dimension_numbers<[1], [0], [0], [1], [0, 0, 1, 1], [], []>} : vector<8x128xbf16>, vector<128x128xbf16>, vector<8x128xf32> -> vector<8x128xf32>
    %87 = arith.truncf %86 : vector<8x128xf32> to vector<8x128xbf16>
    %c0_40 = arith.constant 0 : index
    %c0_41 = arith.constant 0 : index
    %88 = vector.load %arg13[%c0_40, %c0_41] : memref<128x128xbf16, #tpu.memory_space<vmem>>, vector<128x128xbf16>
    %cst_42 = arith.constant dense<0.000000e+00> : vector<16x128xf32>
    %89 = tpu.matmul %59, %88, %cst_42 {dimension_numbers = #tpu.dot_dimension_numbers<[1], [0], [0], [1], [0, 0, 1, 1], [], []>} : vector<16x128xbf16>, vector<128x128xbf16>, vector<16x128xf32> -> vector<16x128xf32>
    %90 = arith.truncf %89 : vector<16x128xf32> to vector<16x128xbf16>
    %c0_43 = arith.constant 0 : index
    %c0_44 = arith.constant 0 : index
    %91 = vector.load %arg14[%c0_43, %c0_44] : memref<128x128xbf16, #tpu.memory_space<vmem>>, vector<128x128xbf16>
    %cst_45 = arith.constant dense<0.000000e+00> : vector<16x128xf32>
    %92 = tpu.matmul %84, %91, %cst_45 {dimension_numbers = #tpu.dot_dimension_numbers<[1], [0], [0], [1], [0, 0, 1, 1], [], []>} : vector<16x128xbf16>, vector<128x128xbf16>, vector<16x128xf32> -> vector<16x128xf32>
    %93 = arith.truncf %92 : vector<16x128xf32> to vector<16x128xbf16>
    %94 = vector.extract_strided_slice %87 {offsets = [0, 0], sizes = [8, 32], strides = [1, 1]} : vector<8x128xbf16> to vector<8x32xbf16>
    %95 = vector.extract_strided_slice %87 {offsets = [0, 32], sizes = [8, 32], strides = [1, 1]} : vector<8x128xbf16> to vector<8x32xbf16>
    %96 = vector.extract_strided_slice %87 {offsets = [0, 64], sizes = [8, 32], strides = [1, 1]} : vector<8x128xbf16> to vector<8x32xbf16>
    %97 = vector.extract_strided_slice %87 {offsets = [0, 96], sizes = [8, 32], strides = [1, 1]} : vector<8x128xbf16> to vector<8x32xbf16>
    %98 = vector.shape_cast %94 : vector<8x32xbf16> to vector<1x8x32xbf16>
    %99 = vector.shape_cast %95 : vector<8x32xbf16> to vector<1x8x32xbf16>
    %100 = vector.shape_cast %96 : vector<8x32xbf16> to vector<1x8x32xbf16>
    %101 = vector.shape_cast %97 : vector<8x32xbf16> to vector<1x8x32xbf16>
    %102 = tpu.concatenate %98, %99, %100, %101 in 0 : vector<1x8x32xbf16>, vector<1x8x32xbf16>, vector<1x8x32xbf16>, vector<1x8x32xbf16> -> vector<4x8x32xbf16>
    %103 = vector.extract_strided_slice %90 {offsets = [0, 0], sizes = [16, 32], strides = [1, 1]} : vector<16x128xbf16> to vector<16x32xbf16>
    %104 = vector.extract_strided_slice %90 {offsets = [0, 32], sizes = [16, 32], strides = [1, 1]} : vector<16x128xbf16> to vector<16x32xbf16>
    %105 = vector.extract_strided_slice %90 {offsets = [0, 64], sizes = [16, 32], strides = [1, 1]} : vector<16x128xbf16> to vector<16x32xbf16>
    %106 = vector.extract_strided_slice %90 {offsets = [0, 96], sizes = [16, 32], strides = [1, 1]} : vector<16x128xbf16> to vector<16x32xbf16>
    %107 = vector.shape_cast %103 : vector<16x32xbf16> to vector<1x16x32xbf16>
    %108 = vector.shape_cast %104 : vector<16x32xbf16> to vector<1x16x32xbf16>
    %109 = vector.shape_cast %105 : vector<16x32xbf16> to vector<1x16x32xbf16>
    %110 = vector.shape_cast %106 : vector<16x32xbf16> to vector<1x16x32xbf16>
    %111 = tpu.concatenate %107, %108, %109, %110 in 0 : vector<1x16x32xbf16>, vector<1x16x32xbf16>, vector<1x16x32xbf16>, vector<1x16x32xbf16> -> vector<4x16x32xbf16>
    %112 = vector.extract_strided_slice %93 {offsets = [0, 0], sizes = [16, 32], strides = [1, 1]} : vector<16x128xbf16> to vector<16x32xbf16>
    %113 = vector.extract_strided_slice %93 {offsets = [0, 32], sizes = [16, 32], strides = [1, 1]} : vector<16x128xbf16> to vector<16x32xbf16>
    %114 = vector.extract_strided_slice %93 {offsets = [0, 64], sizes = [16, 32], strides = [1, 1]} : vector<16x128xbf16> to vector<16x32xbf16>
    %115 = vector.extract_strided_slice %93 {offsets = [0, 96], sizes = [16, 32], strides = [1, 1]} : vector<16x128xbf16> to vector<16x32xbf16>
    %116 = vector.shape_cast %112 : vector<16x32xbf16> to vector<1x16x32xbf16>
    %117 = vector.shape_cast %113 : vector<16x32xbf16> to vector<1x16x32xbf16>
    %118 = vector.shape_cast %114 : vector<16x32xbf16> to vector<1x16x32xbf16>
    %119 = vector.shape_cast %115 : vector<16x32xbf16> to vector<1x16x32xbf16>
    %120 = tpu.concatenate %116, %117, %118, %119 in 0 : vector<1x16x32xbf16>, vector<1x16x32xbf16>, vector<1x16x32xbf16>, vector<1x16x32xbf16> -> vector<4x16x32xbf16>
    %cst_46 = arith.constant dense<0.000000e+00> : vector<4x8x16xf32>
    %121 = tpu.matmul %102, %111, %cst_46 {dimension_numbers = #tpu.dot_dimension_numbers<[2], [2], [1], [1], [0, 0, 0, 1, 1, 1], [0], [0]>} : vector<4x8x32xbf16>, vector<4x16x32xbf16>, vector<4x8x16xf32> -> vector<4x8x16xf32>
    %cst_47 = arith.constant dense<0xFF800000> : vector<4x8xf32>
    %122 = vector.multi_reduction <maximumf>, %121, %cst_47 [2] : vector<4x8x16xf32> to vector<4x8xf32>
    %123 = vector.shape_cast %122 : vector<4x8xf32> to vector<4x8x1xf32>
    %124 = vector.broadcast %123 : vector<4x8x1xf32> to vector<4x8x16xf32>
    %125 = arith.subf %121, %124 : vector<4x8x16xf32>
    %126 = math.exp %125 : vector<4x8x16xf32>
    %cst_48 = arith.constant dense<0.000000e+00> : vector<4x8xf32>
    %127 = vector.multi_reduction <add>, %126, %cst_48 [2] : vector<4x8x16xf32> to vector<4x8xf32>
    %128 = vector.shape_cast %127 : vector<4x8xf32> to vector<4x8x1xf32>
    %129 = vector.broadcast %128 : vector<4x8x1xf32> to vector<4x8x16xf32>
    %130 = arith.divf %126, %129 : vector<4x8x16xf32>
    %131 = arith.truncf %130 : vector<4x8x16xf32> to vector<4x8x16xbf16>
    %cst_49 = arith.constant dense<0.000000e+00> : vector<4x8x32xf32>
    %132 = tpu.matmul %131, %120, %cst_49 {dimension_numbers = #tpu.dot_dimension_numbers<[2], [1], [1], [2], [0, 0, 0, 1, 1, 2], [0], [0]>} : vector<4x8x16xbf16>, vector<4x16x32xbf16>, vector<4x8x32xf32> -> vector<4x8x32xf32>
    %133 = arith.truncf %132 : vector<4x8x32xf32> to vector<4x8x32xbf16>
    %134 = vector.extract_strided_slice %133 {offsets = [0, 0, 0], sizes = [1, 8, 32], strides = [1, 1, 1]} : vector<4x8x32xbf16> to vector<1x8x32xbf16>
    %135 = vector.shape_cast %134 : vector<1x8x32xbf16> to vector<8x32xbf16>
    %136 = vector.extract_strided_slice %133 {offsets = [1, 0, 0], sizes = [1, 8, 32], strides = [1, 1, 1]} : vector<4x8x32xbf16> to vector<1x8x32xbf16>
    %137 = vector.shape_cast %136 : vector<1x8x32xbf16> to vector<8x32xbf16>
    %138 = vector.extract_strided_slice %133 {offsets = [2, 0, 0], sizes = [1, 8, 32], strides = [1, 1, 1]} : vector<4x8x32xbf16> to vector<1x8x32xbf16>
    %139 = vector.shape_cast %138 : vector<1x8x32xbf16> to vector<8x32xbf16>
    %140 = vector.extract_strided_slice %133 {offsets = [3, 0, 0], sizes = [1, 8, 32], strides = [1, 1, 1]} : vector<4x8x32xbf16> to vector<1x8x32xbf16>
    %141 = vector.shape_cast %140 : vector<1x8x32xbf16> to vector<8x32xbf16>
    %142 = tpu.concatenate %135, %137, %139, %141 in 1 : vector<8x32xbf16>, vector<8x32xbf16>, vector<8x32xbf16>, vector<8x32xbf16> -> vector<8x128xbf16>
    %c0_50 = arith.constant 0 : index
    %c0_51 = arith.constant 0 : index
    %143 = vector.load %arg15[%c0_50, %c0_51] : memref<128x128xbf16, #tpu.memory_space<vmem>>, vector<128x128xbf16>
    %cst_52 = arith.constant dense<0.000000e+00> : vector<8x128xf32>
    %144 = tpu.matmul %142, %143, %cst_52 {dimension_numbers = #tpu.dot_dimension_numbers<[1], [0], [0], [1], [0, 0, 1, 1], [], []>} : vector<8x128xbf16>, vector<128x128xbf16>, vector<8x128xf32> -> vector<8x128xf32>
    %c0_53 = arith.constant 0 : index
    %c0_54 = arith.constant 0 : index
    %145 = vector.load %arg16[%c0_53, %c0_54] : memref<1x128xf32, #tpu.memory_space<vmem>>, vector<1x128xf32>
    %146 = vector.broadcast %145 : vector<1x128xf32> to vector<8x128xf32>
    %147 = arith.addf %144, %146 : vector<8x128xf32>
    %c0_55 = arith.constant 0 : index
    %c0_56 = arith.constant 0 : index
    %148 = vector.load %arg23[%c0_55, %c0_56] : memref<1x128xf32, #tpu.memory_space<vmem>>, vector<1x128xf32>
    %149 = vector.broadcast %148 : vector<1x128xf32> to vector<8x128xf32>
    %150 = arith.mulf %149, %147 : vector<8x128xf32>
    %151 = arith.addf %1, %150 : vector<8x128xf32>
    %c0_57 = arith.constant 0 : index
    %c0_58 = arith.constant 0 : index
    %152 = vector.load %arg17[%c0_57, %c0_58] : memref<1x128xf32, #tpu.memory_space<vmem>>, vector<1x128xf32>
    %c0_59 = arith.constant 0 : index
    %c0_60 = arith.constant 0 : index
    %153 = vector.load %arg18[%c0_59, %c0_60] : memref<1x128xf32, #tpu.memory_space<vmem>>, vector<1x128xf32>
    %cst_61 = arith.constant dense<0.000000e+00> : vector<8xf32>
    %154 = vector.multi_reduction <add>, %151, %cst_61 [1] : vector<8x128xf32> to vector<8xf32>
    %155 = vector.shape_cast %154 : vector<8xf32> to vector<8x1xf32>
    %cst_62 = arith.constant 1.280000e+02 : f32
    %156 = vector.broadcast %cst_62 : f32 to vector<8x1xf32>
    %157 = arith.divf %155, %156 : vector<8x1xf32>
    %158 = vector.broadcast %157 : vector<8x1xf32> to vector<8x128xf32>
    %159 = arith.subf %151, %158 : vector<8x128xf32>
    %160 = arith.mulf %159, %159 : vector<8x128xf32>
    %cst_63 = arith.constant dense<0.000000e+00> : vector<8xf32>
    %161 = vector.multi_reduction <add>, %160, %cst_63 [1] : vector<8x128xf32> to vector<8xf32>
    %162 = vector.shape_cast %161 : vector<8xf32> to vector<8x1xf32>
    %cst_64 = arith.constant 1.280000e+02 : f32
    %163 = vector.broadcast %cst_64 : f32 to vector<8x1xf32>
    %164 = arith.divf %162, %163 : vector<8x1xf32>
    %165 = vector.broadcast %157 : vector<8x1xf32> to vector<8x128xf32>
    %166 = arith.subf %151, %165 : vector<8x128xf32>
    %cst_65 = arith.constant 9.99999974E-6 : f32
    %167 = vector.broadcast %cst_65 : f32 to vector<8x1xf32>
    %168 = arith.addf %164, %167 : vector<8x1xf32>
    %169 = math.rsqrt %168 : vector<8x1xf32>
    %170 = vector.broadcast %169 : vector<8x1xf32> to vector<8x128xf32>
    %171 = arith.mulf %166, %170 : vector<8x128xf32>
    %172 = vector.broadcast %152 : vector<1x128xf32> to vector<8x128xf32>
    %173 = arith.mulf %171, %172 : vector<8x128xf32>
    %174 = vector.broadcast %153 : vector<1x128xf32> to vector<8x128xf32>
    %175 = arith.addf %173, %174 : vector<8x128xf32>
    %176 = arith.truncf %175 : vector<8x128xf32> to vector<8x128xbf16>
    %c0_66 = arith.constant 0 : index
    %c0_67 = arith.constant 0 : index
    %177 = vector.load %arg19[%c0_66, %c0_67] : memref<128x512xbf16, #tpu.memory_space<vmem>>, vector<128x512xbf16>
    %cst_68 = arith.constant dense<0.000000e+00> : vector<8x512xf32>
    %178 = tpu.matmul %176, %177, %cst_68 {dimension_numbers = #tpu.dot_dimension_numbers<[1], [0], [0], [1], [0, 0, 1, 1], [], []>} : vector<8x128xbf16>, vector<128x512xbf16>, vector<8x512xf32> -> vector<8x512xf32>
    %c0_69 = arith.constant 0 : index
    %c0_70 = arith.constant 0 : index
    %179 = vector.load %arg20[%c0_69, %c0_70] : memref<1x512xf32, #tpu.memory_space<vmem>>, vector<1x512xf32>
    %180 = vector.broadcast %179 : vector<1x512xf32> to vector<8x512xf32>
    %181 = arith.addf %178, %180 : vector<8x512xf32>
    %cst_71 = arith.constant 5.000000e-01 : f32
    %182 = vector.broadcast %cst_71 : f32 to vector<8x512xf32>
    %183 = arith.mulf %181, %182 : vector<8x512xf32>
    %cst_72 = arith.constant 2.000000e+00 : f32
    %184 = math.sqrt %cst_72 : f32
    %cst_73 = arith.constant 1.000000e+00 : f32
    %185 = arith.divf %cst_73, %184 : f32
    %186 = vector.broadcast %185 : f32 to vector<8x512xf32>
    %187 = arith.mulf %181, %186 : vector<8x512xf32>
    %188 = math.erf %187 : vector<8x512xf32>
    %cst_74 = arith.constant 1.000000e+00 : f32
    %189 = vector.broadcast %cst_74 : f32 to vector<8x512xf32>
    %190 = arith.addf %189, %188 : vector<8x512xf32>
    %191 = arith.mulf %183, %190 : vector<8x512xf32>
    %192 = arith.truncf %191 : vector<8x512xf32> to vector<8x512xbf16>
    %c0_75 = arith.constant 0 : index
    %c0_76 = arith.constant 0 : index
    %193 = vector.load %arg21[%c0_75, %c0_76] : memref<512x128xbf16, #tpu.memory_space<vmem>>, vector<512x128xbf16>
    %cst_77 = arith.constant dense<0.000000e+00> : vector<8x128xf32>
    %194 = tpu.matmul %192, %193, %cst_77 {dimension_numbers = #tpu.dot_dimension_numbers<[1], [0], [0], [1], [0, 0, 1, 1], [], []>} : vector<8x512xbf16>, vector<512x128xbf16>, vector<8x128xf32> -> vector<8x128xf32>
    %c0_78 = arith.constant 0 : index
    %c0_79 = arith.constant 0 : index
    %195 = vector.load %arg22[%c0_78, %c0_79] : memref<1x128xf32, #tpu.memory_space<vmem>>, vector<1x128xf32>
    %196 = vector.broadcast %195 : vector<1x128xf32> to vector<8x128xf32>
    %197 = arith.addf %194, %196 : vector<8x128xf32>
    %c0_80 = arith.constant 0 : index
    %c0_81 = arith.constant 0 : index
    %198 = vector.load %arg24[%c0_80, %c0_81] : memref<1x128xf32, #tpu.memory_space<vmem>>, vector<1x128xf32>
    %199 = vector.broadcast %198 : vector<1x128xf32> to vector<8x128xf32>
    %200 = arith.mulf %199, %197 : vector<8x128xf32>
    %201 = arith.addf %175, %200 : vector<8x128xf32>
    %202 = vector.shape_cast %201 : vector<8x128xf32> to vector<1x8x128xf32>
    %c0_82 = arith.constant 0 : index
    %c0_83 = arith.constant 0 : index
    %c0_84 = arith.constant 0 : index
    %203 = vector.load %arg25[%c0_82, %c0_83, %c0_84] : memref<1x8x128xf32, #tpu.memory_space<vmem>>, vector<1x8x128xf32>
    tpu.vector_store %arg25[%c0_82, %c0_83, %c0_84], %202 {strides = array<i32>} : memref<1x8x128xf32, #tpu.memory_space<vmem>>, vector<1x8x128xf32>,
    return
  }
  func.func @transform_0(%arg0: i32, %arg1: i32) -> (i32, i32, i32) {
    %c0_i32 = arith.constant 0 : i32
    %c0_i32_0 = arith.constant 0 : i32
    return %arg0, %arg1, %c0_i32 : i32, i32, i32
  }
  func.func @transform_1(%arg0: i32, %arg1: i32) -> (i32, i32, i32) {
    %c0_i32 = arith.constant 0 : i32
    %c0_i32_0 = arith.constant 0 : i32
    %c0_i32_1 = arith.constant 0 : i32
    return %arg0, %c0_i32, %c0_i32_0 : i32, i32, i32
  }
  func.func @transform_2(%arg0: i32, %arg1: i32) -> (i32, i32, i32) {
    %c0_i32 = arith.constant 0 : i32
    %c0_i32_0 = arith.constant 0 : i32
    return %arg0, %arg1, %c0_i32 : i32, i32, i32
  }
  func.func @transform_3(%arg0: i32, %arg1: i32) -> (i32, i32, i32) {
    %c0_i32 = arith.constant 0 : i32
    %c0_i32_0 = arith.constant 0 : i32
    %c0_i32_1 = arith.constant 0 : i32
    return %arg0, %c0_i32, %c0_i32_0 : i32, i32, i32
  }
  func.func @transform_4(%arg0: i32, %arg1: i32) -> (i32, i32) {
    %c0_i32 = arith.constant 0 : i32
    %c0_i32_0 = arith.constant 0 : i32
    %c0_i32_1 = arith.constant 0 : i32
    return %c0_i32, %c0_i32_0 : i32, i32
  }
  func.func @transform_5(%arg0: i32, %arg1: i32) -> (i32, i32) {
    %c0_i32 = arith.constant 0 : i32
    %c0_i32_0 = arith.constant 0 : i32
    %c0_i32_1 = arith.constant 0 : i32
    return %c0_i32, %c0_i32_0 : i32, i32
  }
  func.func @transform_6(%arg0: i32, %arg1: i32) -> (i32, i32) {
    %c0_i32 = arith.constant 0 : i32
    %c0_i32_0 = arith.constant 0 : i32
    %c0_i32_1 = arith.constant 0 : i32
    return %c0_i32, %c0_i32_0 : i32, i32
  }
  func.func @transform_7(%arg0: i32, %arg1: i32) -> (i32, i32) {
    %c0_i32 = arith.constant 0 : i32
    %c0_i32_0 = arith.constant 0 : i32
    %c0_i32_1 = arith.constant 0 : i32
    return %c0_i32, %c0_i32_0 : i32, i32
  }
  func.func @transform_8(%arg0: i32, %arg1: i32) -> (i32, i32) {
    %c0_i32 = arith.constant 0 : i32
    %c0_i32_0 = arith.constant 0 : i32
    %c0_i32_1 = arith.constant 0 : i32
    return %c0_i32, %c0_i32_0 : i32, i32
  }
  func.func @transform_9(%arg0: i32, %arg1: i32) -> (i32, i32) {
    %c0_i32 = arith.constant 0 : i32
    %c0_i32_0 = arith.constant 0 : i32
    %c0_i32_1 = arith.constant 0 : i32
    return %c0_i32, %c0_i32_0 : i32, i32
  }
  func.func @transform_10(%arg0: i32, %arg1: i32) -> (i32, i32) {
    %c0_i32 = arith.constant 0 : i32
    %c0_i32_0 = arith.constant 0 : i32
    %c0_i32_1 = arith.constant 0 : i32
    return %c0_i32, %c0_i32_0 : i32, i32
  }
  func.func @transform_11(%arg0: i32, %arg1: i32) -> (i32, i32) {
    %c0_i32 = arith.constant 0 : i32
    %c0_i32_0 = arith.constant 0 : i32
    %c0_i32_1 = arith.constant 0 : i32
    return %c0_i32, %c0_i32_0 : i32, i32
  }
  func.func @transform_12(%arg0: i32, %arg1: i32) -> (i32, i32) {
    %c0_i32 = arith.constant 0 : i32
    %c0_i32_0 = arith.constant 0 : i32
    %c0_i32_1 = arith.constant 0 : i32
    return %c0_i32, %c0_i32_0 : i32, i32
  }
  func.func @transform_13(%arg0: i32, %arg1: i32) -> (i32, i32) {
    %c0_i32 = arith.constant 0 : i32
    %c0_i32_0 = arith.constant 0 : i32
    %c0_i32_1 = arith.constant 0 : i32
    return %c0_i32, %c0_i32_0 : i32, i32
  }
  func.func @transform_14(%arg0: i32, %arg1: i32) -> (i32, i32) {
    %c0_i32 = arith.constant 0 : i32
    %c0_i32_0 = arith.constant 0 : i32
    %c0_i32_1 = arith.constant 0 : i32
    return %c0_i32, %c0_i32_0 : i32, i32
  }
  func.func @transform_15(%arg0: i32, %arg1: i32) -> (i32, i32) {
    %c0_i32 = arith.constant 0 : i32
    %c0_i32_0 = arith.constant 0 : i32
    %c0_i32_1 = arith.constant 0 : i32
    return %c0_i32, %c0_i32_0 : i32, i32
  }
  func.func @transform_16(%arg0: i32, %arg1: i32) -> (i32, i32) {
    %c0_i32 = arith.constant 0 : i32
    %c0_i32_0 = arith.constant 0 : i32
    %c0_i32_1 = arith.constant 0 : i32
    return %c0_i32, %c0_i32_0 : i32, i32
  }
  func.func @transform_17(%arg0: i32, %arg1: i32) -> (i32, i32) {
    %c0_i32 = arith.constant 0 : i32
    %c0_i32_0 = arith.constant 0 : i32
    %c0_i32_1 = arith.constant 0 : i32
    return %c0_i32, %c0_i32_0 : i32, i32
  }
  func.func @transform_18(%arg0: i32, %arg1: i32) -> (i32, i32) {
    %c0_i32 = arith.constant 0 : i32
    %c0_i32_0 = arith.constant 0 : i32
    %c0_i32_1 = arith.constant 0 : i32
    return %c0_i32, %c0_i32_0 : i32, i32
  }
  func.func @transform_19(%arg0: i32, %arg1: i32) -> (i32, i32) {
    %c0_i32 = arith.constant 0 : i32
    %c0_i32_0 = arith.constant 0 : i32
    %c0_i32_1 = arith.constant 0 : i32
    return %c0_i32, %c0_i32_0 : i32, i32
  }
  func.func @transform_20(%arg0: i32, %arg1: i32) -> (i32, i32) {
    %c0_i32 = arith.constant 0 : i32
    %c0_i32_0 = arith.constant 0 : i32
    %c0_i32_1 = arith.constant 0 : i32
    return %c0_i32, %c0_i32_0 : i32, i32
  }
  func.func @transform_21(%arg0: i32, %arg1: i32) -> (i32, i32) {
    %c0_i32 = arith.constant 0 : i32
    %c0_i32_0 = arith.constant 0 : i32
    %c0_i32_1 = arith.constant 0 : i32
    return %c0_i32, %c0_i32_0 : i32, i32
  }
  func.func @transform_22(%arg0: i32, %arg1: i32) -> (i32, i32) {
    %c0_i32 = arith.constant 0 : i32
    %c0_i32_0 = arith.constant 0 : i32
    %c0_i32_1 = arith.constant 0 : i32
    return %c0_i32, %c0_i32_0 : i32, i32
  }
  func.func @transform_23(%arg0: i32, %arg1: i32) -> (i32, i32, i32) {
    %c0_i32 = arith.constant 0 : i32
    %c0_i32_0 = arith.constant 0 : i32
    return %arg0, %arg1, %c0_i32 : i32, i32, i32
  }
}

module attributes {stable_mosaic.version = 11 : i64} {
  func.func @_regressor_block_kernel(%arg0: i32, %arg1: i32, %arg2: memref<1x8x128xf32, #tpu.memory_space<vmem>>, %arg3: memref<1x16x128xf32, #tpu.memory_space<vmem>>, %arg4: memref<1x8x128xf32, #tpu.memory_space<vmem>>, %arg5: memref<1x16x128xf32, #tpu.memory_space<vmem>>, %arg6: memref<1x128xf32, #tpu.memory_space<vmem>>, %arg7: memref<1x128xf32, #tpu.memory_space<vmem>>, %arg8: memref<1x128xf32, #tpu.memory_space<vmem>>, %arg9: memref<1x128xf32, #tpu.memory_space<vmem>>, %arg10: memref<1x128xf32, #tpu.memory_space<vmem>>, %arg11: memref<1x128xf32, #tpu.memory_space<vmem>>, %arg12: memref<128x128xbf16, #tpu.memory_space<vmem>>, %arg13: memref<128x128xbf16, #tpu.memory_space<vmem>>, %arg14: memref<128x128xbf16, #tpu.memory_space<vmem>>, %arg15: memref<128x128xbf16, #tpu.memory_space<vmem>>, %arg16: memref<1x128xf32, #tpu.memory_space<vmem>>, %arg17: memref<1x128xf32, #tpu.memory_space<vmem>>, %arg18: memref<1x128xf32, #tpu.memory_space<vmem>>, %arg19: memref<128x512xbf16, #tpu.memory_space<vmem>>, %arg20: memref<1x512xf32, #tpu.memory_space<vmem>>, %arg21: memref<512x128xbf16, #tpu.memory_space<vmem>>, %arg22: memref<1x128xf32, #tpu.memory_space<vmem>>, %arg23: memref<1x128xf32, #tpu.memory_space<vmem>>, %arg24: memref<1x128xf32, #tpu.memory_space<vmem>>, %arg25: memref<1x8x128xf32, #tpu.memory_space<vmem>>) attributes {dimension_semantics = [#tpu.dimension_semantics<parallel>, #tpu.dimension_semantics<parallel>], iteration_bounds = array<i64: 2, 1>, scalar_prefetch = 0 : i64, scratch_operands = 0 : i64, tpu.core_type = #tpu.core_type<tc>, window_params = [{transform_indices = @transform_0, window_bounds = array<i64: 1, 8, 128>}, {transform_indices = @transform_1, window_bounds = array<i64: 1, 16, 128>}, {transform_indices = @transform_2, window_bounds = array<i64: 1, 8, 128>}, {transform_indices = @transform_3, window_bounds = array<i64: 1, 16, 128>}, {pipeline_mode = #tpu.pipeline_mode<synchronous>, transform_indices = @transform_4, window_bounds = array<i64: 1, 128>}, {pipeline_mode = #tpu.pipeline_mode<synchronous>, transform_indices = @transform_5, window_bounds = array<i64: 1, 128>}, {pipeline_mode = #tpu.pipeline_mode<synchronous>, transform_indices = @transform_6, window_bounds = array<i64: 1, 128>}, {pipeline_mode = #tpu.pipeline_mode<synchronous>, transform_indices = @transform_7, window_bounds = array<i64: 1, 128>}, {pipeline_mode = #tpu.pipeline_mode<synchronous>, transform_indices = @transform_8, window_bounds = array<i64: 1, 128>}, {pipeline_mode = #tpu.pipeline_mode<synchronous>, transform_indices = @transform_9, window_bounds = array<i64: 1, 128>}, {pipeline_mode = #tpu.pipeline_mode<synchronous>, transform_indices = @transform_10, window_bounds = array<i64: 128, 128>}, {pipeline_mode = #tpu.pipeline_mode<synchronous>, transform_indices = @transform_11, window_bounds = array<i64: 128, 128>}, {pipeline_mode = #tpu.pipeline_mode<synchronous>, transform_indices = @transform_12, window_bounds = array<i64: 128, 128>}, {pipeline_mode = #tpu.pipeline_mode<synchronous>, transform_indices = @transform_13, window_bounds = array<i64: 128, 128>}, {pipeline_mode = #tpu.pipeline_mode<synchronous>, transform_indices = @transform_14, window_bounds = array<i64: 1, 128>}, {pipeline_mode = #tpu.pipeline_mode<synchronous>, transform_indices = @transform_15, window_bounds = array<i64: 1, 128>}, {pipeline_mode = #tpu.pipeline_mode<synchronous>, transform_indices = @transform_16, window_bounds = array<i64: 1, 128>}, {pipeline_mode = #tpu.pipeline_mode<synchronous>, transform_indices = @transform_17, window_bounds = array<i64: 128, 512>}, {pipeline_mode = #tpu.pipeline_mode<synchronous>, transform_indices = @transform_18, window_bounds = array<i64: 1, 512>}, {pipeline_mode = #tpu.pipeline_mode<synchronous>, transform_indices = @transform_19, window_bounds = array<i64: 512, 128>}, {pipeline_mode = #tpu.pipeline_mode<synchronous>, transform_indices = @transform_20, window_bounds = array<i64: 1, 128>}, {pipeline_mode = #tpu.pipeline_mode<synchronous>, transform_indices = @transform_21, window_bounds = array<i64: 1, 128>}, {pipeline_mode = #tpu.pipeline_mode<synchronous>, transform_indices = @transform_22, window_bounds = array<i64: 1, 128>}, {transform_indices = @transform_23, window_bounds = array<i64: 1, 8, 128>}]} {
    %c0 = arith.constant 0 : index
    %c0_0 = arith.constant 0 : index
    %c0_1 = arith.constant 0 : index
    %0 = vector.load %arg2[%c0, %c0_0, %c0_1] : memref<1x8x128xf32, #tpu.memory_space<vmem>>, vector<1x8x128xf32>
    %1 = vector.shape_cast %0 : vector<1x8x128xf32> to vector<8x128xf32>
    %c0_2 = arith.constant 0 : index
    %c0_3 = arith.constant 0 : index
    %c0_4 = arith.constant 0 : index
    %2 = vector.load %arg4[%c0_2, %c0_3, %c0_4] : memref<1x8x128xf32, #tpu.memory_space<vmem>>, vector<1x8x128xf32>
    %3 = vector.shape_cast %2 : vector<1x8x128xf32> to vector<8x128xf32>
    %c0_5 = arith.constant 0 : index
    %c0_6 = arith.constant 0 : index
    %c0_7 = arith.constant 0 : index
    %4 = vector.load %arg3[%c0_5, %c0_6, %c0_7] : memref<1x16x128xf32, #tpu.memory_space<vmem>>, vector<1x16x128xf32>
    %5 = vector.shape_cast %4 : vector<1x16x128xf32> to vector<16x128xf32>
    %c0_8 = arith.constant 0 : index
    %c0_9 = arith.constant 0 : index
    %c0_10 = arith.constant 0 : index
    %6 = vector.load %arg5[%c0_8, %c0_9, %c0_10] : memref<1x16x128xf32, #tpu.memory_space<vmem>>, vector<1x16x128xf32>
    %7 = vector.shape_cast %6 : vector<1x16x128xf32> to vector<16x128xf32>
    %8 = arith.addf %1, %3 : vector<8x128xf32>
    %c0_11 = arith.constant 0 : index
    %c0_12 = arith.constant 0 : index
    %9 = vector.load %arg6[%c0_11, %c0_12] : memref<1x128xf32, #tpu.memory_space<vmem>>, vector<1x128xf32>
    %c0_13 = arith.constant 0 : index
    %c0_14 = arith.constant 0 : index
    %10 = vector.load %arg7[%c0_13, %c0_14] : memref<1x128xf32, #tpu.memory_space<vmem>>, vector<1x128xf32>
    %cst = arith.constant dense<0.000000e+00> : vector<8xf32>
    %11 = vector.multi_reduction <add>, %8, %cst [1] : vector<8x128xf32> to vector<8xf32>
    %12 = vector.shape_cast %11 : vector<8xf32> to vector<8x1xf32>
    %cst_15 = arith.constant 1.280000e+02 : f32
    %13 = vector.broadcast %cst_15 : f32 to vector<8x1xf32>
    %14 = arith.divf %12, %13 : vector<8x1xf32>
    %15 = vector.broadcast %14 : vector<8x1xf32> to vector<8x128xf32>
    %16 = arith.subf %8, %15 : vector<8x128xf32>
    %17 = arith.mulf %16, %16 : vector<8x128xf32>
    %cst_16 = arith.constant dense<0.000000e+00> : vector<8xf32>
    %18 = vector.multi_reduction <add>, %17, %cst_16 [1] : vector<8x128xf32> to vector<8xf32>
    %19 = vector.shape_cast %18 : vector<8xf32> to vector<8x1xf32>
    %cst_17 = arith.constant 1.280000e+02 : f32
    %20 = vector.broadcast %cst_17 : f32 to vector<8x1xf32>
    %21 = arith.divf %19, %20 : vector<8x1xf32>
    %22 = vector.broadcast %14 : vector<8x1xf32> to vector<8x128xf32>
    %23 = arith.subf %8, %22 : vector<8x128xf32>
    %cst_18 = arith.constant 9.99999974E-6 : f32
    %24 = vector.broadcast %cst_18 : f32 to vector<8x1xf32>
    %25 = arith.addf %21, %24 : vector<8x1xf32>
    %26 = math.rsqrt %25 : vector<8x1xf32>
    %27 = vector.broadcast %26 : vector<8x1xf32> to vector<8x128xf32>
    %28 = arith.mulf %23, %27 : vector<8x128xf32>
    %29 = vector.broadcast %9 : vector<1x128xf32> to vector<8x128xf32>
    %30 = arith.mulf %28, %29 : vector<8x128xf32>
    %31 = vector.broadcast %10 : vector<1x128xf32> to vector<8x128xf32>
    %32 = arith.addf %30, %31 : vector<8x128xf32>
    %33 = arith.truncf %32 : vector<8x128xf32> to vector<8x128xbf16>
    %34 = arith.addf %5, %7 : vector<16x128xf32>
    %c0_19 = arith.constant 0 : index
    %c0_20 = arith.constant 0 : index
    %35 = vector.load %arg8[%c0_19, %c0_20] : memref<1x128xf32, #tpu.memory_space<vmem>>, vector<1x128xf32>
    %c0_21 = arith.constant 0 : index
    %c0_22 = arith.constant 0 : index
    %36 = vector.load %arg9[%c0_21, %c0_22] : memref<1x128xf32, #tpu.memory_space<vmem>>, vector<1x128xf32>
    %cst_23 = arith.constant dense<0.000000e+00> : vector<16xf32>
    %37 = vector.multi_reduction <add>, %34, %cst_23 [1] : vector<16x128xf32> to vector<16xf32>
    %38 = vector.shape_cast %37 : vector<16xf32> to vector<16x1xf32>
    %cst_24 = arith.constant 1.280000e+02 : f32
    %39 = vector.broadcast %cst_24 : f32 to vector<16x1xf32>
    %40 = arith.divf %38, %39 : vector<16x1xf32>
    %41 = vector.broadcast %40 : vector<16x1xf32> to vector<16x128xf32>
    %42 = arith.subf %34, %41 : vector<16x128xf32>
    %43 = arith.mulf %42, %42 : vector<16x128xf32>
    %cst_25 = arith.constant dense<0.000000e+00> : vector<16xf32>
    %44 = vector.multi_reduction <add>, %43, %cst_25 [1] : vector<16x128xf32> to vector<16xf32>
    %45 = vector.shape_cast %44 : vector<16xf32> to vector<16x1xf32>
    %cst_26 = arith.constant 1.280000e+02 : f32
    %46 = vector.broadcast %cst_26 : f32 to vector<16x1xf32>
    %47 = arith.divf %45, %46 : vector<16x1xf32>
    %48 = vector.broadcast %40 : vector<16x1xf32> to vector<16x128xf32>
    %49 = arith.subf %34, %48 : vector<16x128xf32>
    %cst_27 = arith.constant 9.99999974E-6 : f32
    %50 = vector.broadcast %cst_27 : f32 to vector<16x1xf32>
    %51 = arith.addf %47, %50 : vector<16x1xf32>
    %52 = math.rsqrt %51 : vector<16x1xf32>
    %53 = vector.broadcast %52 : vector<16x1xf32> to vector<16x128xf32>
    %54 = arith.mulf %49, %53 : vector<16x128xf32>
    %55 = vector.broadcast %35 : vector<1x128xf32> to vector<16x128xf32>
    %56 = arith.mulf %54, %55 : vector<16x128xf32>
    %57 = vector.broadcast %36 : vector<1x128xf32> to vector<16x128xf32>
    %58 = arith.addf %56, %57 : vector<16x128xf32>
    %59 = arith.truncf %58 : vector<16x128xf32> to vector<16x128xbf16>
    %c0_28 = arith.constant 0 : index
    %c0_29 = arith.constant 0 : index
    %60 = vector.load %arg10[%c0_28, %c0_29] : memref<1x128xf32, #tpu.memory_space<vmem>>, vector<1x128xf32>
    %c0_30 = arith.constant 0 : index
    %c0_31 = arith.constant 0 : index
    %61 = vector.load %arg11[%c0_30, %c0_31] : memref<1x128xf32, #tpu.memory_space<vmem>>, vector<1x128xf32>
    %cst_32 = arith.constant dense<0.000000e+00> : vector<16xf32>
    %62 = vector.multi_reduction <add>, %5, %cst_32 [1] : vector<16x128xf32> to vector<16xf32>
    %63 = vector.shape_cast %62 : vector<16xf32> to vector<16x1xf32>
    %cst_33 = arith.constant 1.280000e+02 : f32
    %64 = vector.broadcast %cst_33 : f32 to vector<16x1xf32>
    %65 = arith.divf %63, %64 : vector<16x1xf32>
    %66 = vector.broadcast %65 : vector<16x1xf32> to vector<16x128xf32>
    %67 = arith.subf %5, %66 : vector<16x128xf32>
    %68 = arith.mulf %67, %67 : vector<16x128xf32>
    %cst_34 = arith.constant dense<0.000000e+00> : vector<16xf32>
    %69 = vector.multi_reduction <add>, %68, %cst_34 [1] : vector<16x128xf32> to vector<16xf32>
    %70 = vector.shape_cast %69 : vector<16xf32> to vector<16x1xf32>
    %cst_35 = arith.constant 1.280000e+02 : f32
    %71 = vector.broadcast %cst_35 : f32 to vector<16x1xf32>
    %72 = arith.divf %70, %71 : vector<16x1xf32>
    %73 = vector.broadcast %65 : vector<16x1xf32> to vector<16x128xf32>
    %74 = arith.subf %5, %73 : vector<16x128xf32>
    %cst_36 = arith.constant 9.99999974E-6 : f32
    %75 = vector.broadcast %cst_36 : f32 to vector<16x1xf32>
    %76 = arith.addf %72, %75 : vector<16x1xf32>
    %77 = math.rsqrt %76 : vector<16x1xf32>
    %78 = vector.broadcast %77 : vector<16x1xf32> to vector<16x128xf32>
    %79 = arith.mulf %74, %78 : vector<16x128xf32>
    %80 = vector.broadcast %60 : vector<1x128xf32> to vector<16x128xf32>
    %81 = arith.mulf %79, %80 : vector<16x128xf32>
    %82 = vector.broadcast %61 : vector<1x128xf32> to vector<16x128xf32>
    %83 = arith.addf %81, %82 : vector<16x128xf32>
    %84 = arith.truncf %83 : vector<16x128xf32> to vector<16x128xbf16>
    %c0_37 = arith.constant 0 : index
    %c0_38 = arith.constant 0 : index
    %85 = vector.load %arg12[%c0_37, %c0_38] : memref<128x128xbf16, #tpu.memory_space<vmem>>, vector<128x128xbf16>
    %cst_39 = arith.constant dense<0.000000e+00> : vector<8x128xf32>
    %86 = tpu.matmul %33, %85, %cst_39 {dimension_numbers = #tpu.dot_dimension_numbers<[1], [0], [0], [1], [0, 0, 1, 1], [], []>} : vector<8x128xbf16>, vector<128x128xbf16>, vector<8x128xf32> -> vector<8x128xf32>
    %87 = arith.truncf %86 : vector<8x128xf32> to vector<8x128xbf16>
    %c0_40 = arith.constant 0 : index
    %c0_41 = arith.constant 0 : index
    %88 = vector.load %arg13[%c0_40, %c0_41] : memref<128x128xbf16, #tpu.memory_space<vmem>>, vector<128x128xbf16>
    %cst_42 = arith.constant dense<0.000000e+00> : vector<16x128xf32>
    %89 = tpu.matmul %59, %88, %cst_42 {dimension_numbers = #tpu.dot_dimension_numbers<[1], [0], [0], [1], [0, 0, 1, 1], [], []>} : vector<16x128xbf16>, vector<128x128xbf16>, vector<16x128xf32> -> vector<16x128xf32>
    %90 = arith.truncf %89 : vector<16x128xf32> to vector<16x128xbf16>
    %c0_43 = arith.constant 0 : index
    %c0_44 = arith.constant 0 : index
    %91 = vector.load %arg14[%c0_43, %c0_44] : memref<128x128xbf16, #tpu.memory_space<vmem>>, vector<128x128xbf16>
    %cst_45 = arith.constant dense<0.000000e+00> : vector<16x128xf32>
    %92 = tpu.matmul %84, %91, %cst_45 {dimension_numbers = #tpu.dot_dimension_numbers<[1], [0], [0], [1], [0, 0, 1, 1], [], []>} : vector<16x128xbf16>, vector<128x128xbf16>, vector<16x128xf32> -> vector<16x128xf32>
    %93 = arith.truncf %92 : vector<16x128xf32> to vector<16x128xbf16>
    %94 = vector.extract_strided_slice %87 {offsets = [0, 0], sizes = [8, 32], strides = [1, 1]} : vector<8x128xbf16> to vector<8x32xbf16>
    %95 = vector.extract_strided_slice %87 {offsets = [0, 32], sizes = [8, 32], strides = [1, 1]} : vector<8x128xbf16> to vector<8x32xbf16>
    %96 = vector.extract_strided_slice %87 {offsets = [0, 64], sizes = [8, 32], strides = [1, 1]} : vector<8x128xbf16> to vector<8x32xbf16>
    %97 = vector.extract_strided_slice %87 {offsets = [0, 96], sizes = [8, 32], strides = [1, 1]} : vector<8x128xbf16> to vector<8x32xbf16>
    %98 = vector.shape_cast %94 : vector<8x32xbf16> to vector<1x8x32xbf16>
    %99 = vector.shape_cast %95 : vector<8x32xbf16> to vector<1x8x32xbf16>
    %100 = vector.shape_cast %96 : vector<8x32xbf16> to vector<1x8x32xbf16>
    %101 = vector.shape_cast %97 : vector<8x32xbf16> to vector<1x8x32xbf16>
    %102 = tpu.concatenate %98, %99, %100, %101 in 0 : vector<1x8x32xbf16>, vector<1x8x32xbf16>, vector<1x8x32xbf16>, vector<1x8x32xbf16> -> vector<4x8x32xbf16>
    %103 = vector.extract_strided_slice %90 {offsets = [0, 0], sizes = [16, 32], strides = [1, 1]} : vector<16x128xbf16> to vector<16x32xbf16>
    %104 = vector.extract_strided_slice %90 {offsets = [0, 32], sizes = [16, 32], strides = [1, 1]} : vector<16x128xbf16> to vector<16x32xbf16>
    %105 = vector.extract_strided_slice %90 {offsets = [0, 64], sizes = [16, 32], strides = [1, 1]} : vector<16x128xbf16> to vector<16x32xbf16>
    %106 = vector.extract_strided_slice %90 {offsets = [0, 96], sizes = [16, 32], strides = [1, 1]} : vector<16x128xbf16> to vector<16x32xbf16>
    %107 = vector.shape_cast %103 : vector<16x32xbf16> to vector<1x16x32xbf16>
    %108 = vector.shape_cast %104 : vector<16x32xbf16> to vector<1x16x32xbf16>
    %109 = vector.shape_cast %105 : vector<16x32xbf16> to vector<1x16x32xbf16>
    %110 = vector.shape_cast %106 : vector<16x32xbf16> to vector<1x16x32xbf16>
    %111 = tpu.concatenate %107, %108, %109, %110 in 0 : vector<1x16x32xbf16>, vector<1x16x32xbf16>, vector<1x16x32xbf16>, vector<1x16x32xbf16> -> vector<4x16x32xbf16>
    %112 = vector.extract_strided_slice %93 {offsets = [0, 0], sizes = [16, 32], strides = [1, 1]} : vector<16x128xbf16> to vector<16x32xbf16>
    %113 = vector.extract_strided_slice %93 {offsets = [0, 32], sizes = [16, 32], strides = [1, 1]} : vector<16x128xbf16> to vector<16x32xbf16>
    %114 = vector.extract_strided_slice %93 {offsets = [0, 64], sizes = [16, 32], strides = [1, 1]} : vector<16x128xbf16> to vector<16x32xbf16>
    %115 = vector.extract_strided_slice %93 {offsets = [0, 96], sizes = [16, 32], strides = [1, 1]} : vector<16x128xbf16> to vector<16x32xbf16>
    %116 = vector.shape_cast %112 : vector<16x32xbf16> to vector<1x16x32xbf16>
    %117 = vector.shape_cast %113 : vector<16x32xbf16> to vector<1x16x32xbf16>
    %118 = vector.shape_cast %114 : vector<16x32xbf16> to vector<1x16x32xbf16>
    %119 = vector.shape_cast %115 : vector<16x32xbf16> to vector<1x16x32xbf16>
    %120 = tpu.concatenate %116, %117, %118, %119 in 0 : vector<1x16x32xbf16>, vector<1x16x32xbf16>, vector<1x16x32xbf16>, vector<1x16x32xbf16> -> vector<4x16x32xbf16>
    %cst_46 = arith.constant dense<0.000000e+00> : vector<4x8x16xf32>
    %121 = tpu.matmul %102, %111, %cst_46 {dimension_numbers = #tpu.dot_dimension_numbers<[2], [2], [1], [1], [0, 0, 0, 1, 1, 1], [0], [0]>} : vector<4x8x32xbf16>, vector<4x16x32xbf16>, vector<4x8x16xf32> -> vector<4x8x16xf32>
    %cst_47 = arith.constant dense<0xFF800000> : vector<4x8xf32>
    %122 = vector.multi_reduction <maximumf>, %121, %cst_47 [2] : vector<4x8x16xf32> to vector<4x8xf32>
    %123 = vector.shape_cast %122 : vector<4x8xf32> to vector<4x8x1xf32>
    %124 = vector.broadcast %123 : vector<4x8x1xf32> to vector<4x8x16xf32>
    %125 = arith.subf %121, %124 : vector<4x8x16xf32>
    %126 = math.exp %125 : vector<4x8x16xf32>
    %cst_48 = arith.constant dense<0.000000e+00> : vector<4x8xf32>
    %127 = vector.multi_reduction <add>, %126, %cst_48 [2] : vector<4x8x16xf32> to vector<4x8xf32>
    %128 = vector.shape_cast %127 : vector<4x8xf32> to vector<4x8x1xf32>
    %129 = vector.broadcast %128 : vector<4x8x1xf32> to vector<4x8x16xf32>
    %130 = arith.divf %126, %129 : vector<4x8x16xf32>
    %131 = arith.truncf %130 : vector<4x8x16xf32> to vector<4x8x16xbf16>
    %cst_49 = arith.constant dense<0.000000e+00> : vector<4x8x32xf32>
    %132 = tpu.matmul %131, %120, %cst_49 {dimension_numbers = #tpu.dot_dimension_numbers<[2], [1], [1], [2], [0, 0, 0, 1, 1, 2], [0], [0]>} : vector<4x8x16xbf16>, vector<4x16x32xbf16>, vector<4x8x32xf32> -> vector<4x8x32xf32>
    %133 = arith.truncf %132 : vector<4x8x32xf32> to vector<4x8x32xbf16>
    %134 = vector.extract_strided_slice %133 {offsets = [0, 0, 0], sizes = [1, 8, 32], strides = [1, 1, 1]} : vector<4x8x32xbf16> to vector<1x8x32xbf16>
    %135 = vector.shape_cast %134 : vector<1x8x32xbf16> to vector<8x32xbf16>
    %136 = vector.extract_strided_slice %133 {offsets = [1, 0, 0], sizes = [1, 8, 32], strides = [1, 1, 1]} : vector<4x8x32xbf16> to vector<1x8x32xbf16>
    %137 = vector.shape_cast %136 : vector<1x8x32xbf16> to vector<8x32xbf16>
    %138 = vector.extract_strided_slice %133 {offsets = [2, 0, 0], sizes = [1, 8, 32], strides = [1, 1, 1]} : vector<4x8x32xbf16> to vector<1x8x32xbf16>
    %139 = vector.shape_cast %138 : vector<1x8x32xbf16> to vector<8x32xbf16>
    %140 = vector.extract_strided_slice %133 {offsets = [3, 0, 0], sizes = [1, 8, 32], strides = [1, 1, 1]} : vector<4x8x32xbf16> to vector<1x8x32xbf16>
    %141 = vector.shape_cast %140 : vector<1x8x32xbf16> to vector<8x32xbf16>
    %142 = tpu.concatenate %135, %137, %139, %141 in 1 : vector<8x32xbf16>, vector<8x32xbf16>, vector<8x32xbf16>, vector<8x32xbf16> -> vector<8x128xbf16>
    %c0_50 = arith.constant 0 : index
    %c0_51 = arith.constant 0 : index
    %143 = vector.load %arg15[%c0_50, %c0_51] : memref<128x128xbf16, #tpu.memory_space<vmem>>, vector<128x128xbf16>
    %cst_52 = arith.constant dense<0.000000e+00> : vector<8x128xf32>
    %144 = tpu.matmul %142, %143, %cst_52 {dimension_numbers = #tpu.dot_dimension_numbers<[1], [0], [0], [1], [0, 0, 1, 1], [], []>} : vector<8x128xbf16>, vector<128x128xbf16>, vector<8x128xf32> -> vector<8x128xf32>
    %c0_53 = arith.constant 0 : index
    %c0_54 = arith.constant 0 : index
    %145 = vector.load %arg16[%c0_53, %c0_54] : memref<1x128xf32, #tpu.memory_space<vmem>>, vector<1x128xf32>
    %146 = vector.broadcast %145 : vector<1x128xf32> to vector<8x128xf32>
    %147 = arith.addf %144, %146 : vector<8x128xf32>
    %c0_55 = arith.constant 0 : index
    %c0_56 = arith.constant 0 : index
    %148 = vector.load %arg23[%c0_55, %c0_56] : memref<1x128xf32, #tpu.memory_space<vmem>>, vector<1x128xf32>
    %149 = vector.broadcast %148 : vector<1x128xf32> to vector<8x128xf32>
    %150 = arith.mulf %149, %147 : vector<8x128xf32>
    %151 = arith.addf %1, %150 : vector<8x128xf32>
    %c0_57 = arith.constant 0 : index
    %c0_58 = arith.constant 0 : index
    %152 = vector.load %arg17[%c0_57, %c0_58] : memref<1x128xf32, #tpu.memory_space<vmem>>, vector<1x128xf32>
    %c0_59 = arith.constant 0 : index
    %c0_60 = arith.constant 0 : index
    %153 = vector.load %arg18[%c0_59, %c0_60] : memref<1x128xf32, #tpu.memory_space<vmem>>, vector<1x128xf32>
    %cst_61 = arith.constant dense<0.000000e+00> : vector<8xf32>
    %154 = vector.multi_reduction <add>, %151, %cst_61 [1] : vector<8x128xf32> to vector<8xf32>
    %155 = vector.shape_cast %154 : vector<8xf32> to vector<8x1xf32>
    %cst_62 = arith.constant 1.280000e+02 : f32
    %156 = vector.broadcast %cst_62 : f32 to vector<8x1xf32>
    %157 = arith.divf %155, %156 : vector<8x1xf32>
    %158 = vector.broadcast %157 : vector<8x1xf32> to vector<8x128xf32>
    %159 = arith.subf %151, %158 : vector<8x128xf32>
    %160 = arith.mulf %159, %159 : vector<8x128xf32>
    %cst_63 = arith.constant dense<0.000000e+00> : vector<8xf32>
    %161 = vector.multi_reduction <add>, %160, %cst_63 [1] : vector<8x128xf32> to vector<8xf32>
    %162 = vector.shape_cast %161 : vector<8xf32> to vector<8x1xf32>
    %cst_64 = arith.constant 1.280000e+02 : f32
    %163 = vector.broadcast %cst_64 : f32 to vector<8x1xf32>
    %164 = arith.divf %162, %163 : vector<8x1xf32>
    %165 = vector.broadcast %157 : vector<8x1xf32> to vector<8x128xf32>
    %166 = arith.subf %151, %165 : vector<8x128xf32>
    %cst_65 = arith.constant 9.99999974E-6 : f32
    %167 = vector.broadcast %cst_65 : f32 to vector<8x1xf32>
    %168 = arith.addf %164, %167 : vector<8x1xf32>
    %169 = math.rsqrt %168 : vector<8x1xf32>
    %170 = vector.broadcast %169 : vector<8x1xf32> to vector<8x128xf32>
    %171 = arith.mulf %166, %170 : vector<8x128xf32>
    %172 = vector.broadcast %152 : vector<1x128xf32> to vector<8x128xf32>
    %173 = arith.mulf %171, %172 : vector<8x128xf32>
    %174 = vector.broadcast %153 : vector<1x128xf32> to vector<8x128xf32>
    %175 = arith.addf %173, %174 : vector<8x128xf32>
    %176 = arith.truncf %175 : vector<8x128xf32> to vector<8x128xbf16>
    %c0_66 = arith.constant 0 : index
    %c0_67 = arith.constant 0 : index
    %177 = vector.load %arg19[%c0_66, %c0_67] : memref<128x512xbf16, #tpu.memory_space<vmem>>, vector<128x512xbf16>
    %cst_68 = arith.constant dense<0.000000e+00> : vector<8x512xf32>
    %178 = tpu.matmul %176, %177, %cst_68 {dimension_numbers = #tpu.dot_dimension_numbers<[1], [0], [0], [1], [0, 0, 1, 1], [], []>} : vector<8x128xbf16>, vector<128x512xbf16>, vector<8x512xf32> -> vector<8x512xf32>
    %c0_69 = arith.constant 0 : index
    %c0_70 = arith.constant 0 : index
    %179 = vector.load %arg20[%c0_69, %c0_70] : memref<1x512xf32, #tpu.memory_space<vmem>>, vector<1x512xf32>
    %180 = vector.broadcast %179 : vector<1x512xf32> to vector<8x512xf32>
    %181 = arith.addf %178, %180 : vector<8x512xf32>
    %cst_71 = arith.constant 5.000000e-01 : f32
    %182 = vector.broadcast %cst_71 : f32 to vector<8x512xf32>
    %183 = arith.mulf %181, %182 : vector<8x512xf32>
    %cst_72 = arith.constant 2.000000e+00 : f32
    %184 = math.sqrt %cst_72 : f32
    %cst_73 = arith.constant 1.000000e+00 : f32
    %185 = arith.divf %cst_73, %184 : f32
    %186 = vector.broadcast %185 : f32 to vector<8x512xf32>
    %187 = arith.mulf %181, %186 : vector<8x512xf32>
    %188 = math.erf %187 : vector<8x512xf32>
    %cst_74 = arith.constant 1.000000e+00 : f32
    %189 = vector.broadcast %cst_74 : f32 to vector<8x512xf32>
    %190 = arith.addf %189, %188 : vector<8x512xf32>
    %191 = arith.mulf %183, %190 : vector<8x512xf32>
    %192 = arith.truncf %191 : vector<8x512xf32> to vector<8x512xbf16>
    %c0_75 = arith.constant 0 : index
    %c0_76 = arith.constant 0 : index
    %193 = vector.load %arg21[%c0_75, %c0_76] : memref<512x128xbf16, #tpu.memory_space<vmem>>, vector<512x128xbf16>
    %cst_77 = arith.constant dense<0.000000e+00> : vector<8x128xf32>
    %194 = tpu.matmul %192, %193, %cst_77 {dimension_numbers = #tpu.dot_dimension_numbers<[1], [0], [0], [1], [0, 0, 1, 1], [], []>} : vector<8x512xbf16>, vector<512x128xbf16>, vector<8x128xf32> -> vector<8x128xf32>
    %c0_78 = arith.constant 0 : index
    %c0_79 = arith.constant 0 : index
    %195 = vector.load %arg22[%c0_78, %c0_79] : memref<1x128xf32, #tpu.memory_space<vmem>>, vector<1x128xf32>
    %196 = vector.broadcast %195 : vector<1x128xf32> to vector<8x128xf32>
    %197 = arith.addf %194, %196 : vector<8x128xf32>
    %c0_80 = arith.constant 0 : index
    %c0_81 = arith.constant 0 : index
    %198 = vector.load %arg24[%c0_80, %c0_81] : memref<1x128xf32, #tpu.memory_space<vmem>>, vector<1x128xf32>
    %199 = vector.broadcast %198 : vector<1x128xf32> to vector<8x128xf32>
    %200 = arith.mulf %199, %197 : vector<8x128xf32>
    %201 = arith.addf %175, %200 : vector<8x128xf32>
    %202 = vector.shape_cast %201 : vector<8x128xf32> to vector<1x8x128xf32>
    %c0_82 = arith.constant 0 : index
    %c0_83 = arith.constant 0 : index
    %c0_84 = arith.constant 0 : index
    %203 = vector.load %arg25[%c0_82, %c0_83, %c0_84] : memref<1x8x128xf32, #tpu.memory_space<vmem>>, vector<1x8x128xf32>
    tpu.vector_store %arg25[%c0_82, %c0_83, %c0_84], %202 {strides = array<i32>} : memref<1x8x128xf32, #tpu.memory_space<vmem>>, vector<1x8x128xf32>,
    return
  }
  func.func @transform_0(%arg0: i32, %arg1: i32) -> (i32, i32, i32) {
    %c0_i32 = arith.constant 0 : i32
    %c0_i32_0 = arith.constant 0 : i32
    return %arg0, %arg1, %c0_i32 : i32, i32, i32
  }
  func.func @transform_1(%arg0: i32, %arg1: i32) -> (i32, i32, i32) {
    %c0_i32 = arith.constant 0 : i32
    %c0_i32_0 = arith.constant 0 : i32
    %c0_i32_1 = arith.constant 0 : i32
    return %arg0, %c0_i32, %c0_i32_0 : i32, i32, i32
  }
  func.func @transform_2(%arg0: i32, %arg1: i32) -> (i32, i32, i32) {
    %c0_i32 = arith.constant 0 : i32
    %c0_i32_0 = arith.constant 0 : i32
    return %arg0, %arg1, %c0_i32 : i32, i32, i32
  }
  func.func @transform_3(%arg0: i32, %arg1: i32) -> (i32, i32, i32) {
    %c0_i32 = arith.constant 0 : i32
    %c0_i32_0 = arith.constant 0 : i32
    %c0_i32_1 = arith.constant 0 : i32
    return %arg0, %c0_i32, %c0_i32_0 : i32, i32, i32
  }
  func.func @transform_4(%arg0: i32, %arg1: i32) -> (i32, i32) {
    %c0_i32 = arith.constant 0 : i32
    %c0_i32_0 = arith.constant 0 : i32
    %c0_i32_1 = arith.constant 0 : i32
    return %c0_i32, %c0_i32_0 : i32, i32
  }
  func.func @transform_5(%arg0: i32, %arg1: i32) -> (i32, i32) {
    %c0_i32 = arith.constant 0 : i32
    %c0_i32_0 = arith.constant 0 : i32
    %c0_i32_1 = arith.constant 0 : i32
    return %c0_i32, %c0_i32_0 : i32, i32
  }
  func.func @transform_6(%arg0: i32, %arg1: i32) -> (i32, i32) {
    %c0_i32 = arith.constant 0 : i32
    %c0_i32_0 = arith.constant 0 : i32
    %c0_i32_1 = arith.constant 0 : i32
    return %c0_i32, %c0_i32_0 : i32, i32
  }
  func.func @transform_7(%arg0: i32, %arg1: i32) -> (i32, i32) {
    %c0_i32 = arith.constant 0 : i32
    %c0_i32_0 = arith.constant 0 : i32
    %c0_i32_1 = arith.constant 0 : i32
    return %c0_i32, %c0_i32_0 : i32, i32
  }
  func.func @transform_8(%arg0: i32, %arg1: i32) -> (i32, i32) {
    %c0_i32 = arith.constant 0 : i32
    %c0_i32_0 = arith.constant 0 : i32
    %c0_i32_1 = arith.constant 0 : i32
    return %c0_i32, %c0_i32_0 : i32, i32
  }
  func.func @transform_9(%arg0: i32, %arg1: i32) -> (i32, i32) {
    %c0_i32 = arith.constant 0 : i32
    %c0_i32_0 = arith.constant 0 : i32
    %c0_i32_1 = arith.constant 0 : i32
    return %c0_i32, %c0_i32_0 : i32, i32
  }
  func.func @transform_10(%arg0: i32, %arg1: i32) -> (i32, i32) {
    %c0_i32 = arith.constant 0 : i32
    %c0_i32_0 = arith.constant 0 : i32
    %c0_i32_1 = arith.constant 0 : i32
    return %c0_i32, %c0_i32_0 : i32, i32
  }
  func.func @transform_11(%arg0: i32, %arg1: i32) -> (i32, i32) {
    %c0_i32 = arith.constant 0 : i32
    %c0_i32_0 = arith.constant 0 : i32
    %c0_i32_1 = arith.constant 0 : i32
    return %c0_i32, %c0_i32_0 : i32, i32
  }
  func.func @transform_12(%arg0: i32, %arg1: i32) -> (i32, i32) {
    %c0_i32 = arith.constant 0 : i32
    %c0_i32_0 = arith.constant 0 : i32
    %c0_i32_1 = arith.constant 0 : i32
    return %c0_i32, %c0_i32_0 : i32, i32
  }
  func.func @transform_13(%arg0: i32, %arg1: i32) -> (i32, i32) {
    %c0_i32 = arith.constant 0 : i32
    %c0_i32_0 = arith.constant 0 : i32
    %c0_i32_1 = arith.constant 0 : i32
    return %c0_i32, %c0_i32_0 : i32, i32
  }
  func.func @transform_14(%arg0: i32, %arg1: i32) -> (i32, i32) {
    %c0_i32 = arith.constant 0 : i32
    %c0_i32_0 = arith.constant 0 : i32
    %c0_i32_1 = arith.constant 0 : i32
    return %c0_i32, %c0_i32_0 : i32, i32
  }
  func.func @transform_15(%arg0: i32, %arg1: i32) -> (i32, i32) {
    %c0_i32 = arith.constant 0 : i32
    %c0_i32_0 = arith.constant 0 : i32
    %c0_i32_1 = arith.constant 0 : i32
    return %c0_i32, %c0_i32_0 : i32, i32
  }
  func.func @transform_16(%arg0: i32, %arg1: i32) -> (i32, i32) {
    %c0_i32 = arith.constant 0 : i32
    %c0_i32_0 = arith.constant 0 : i32
    %c0_i32_1 = arith.constant 0 : i32
    return %c0_i32, %c0_i32_0 : i32, i32
  }
  func.func @transform_17(%arg0: i32, %arg1: i32) -> (i32, i32) {
    %c0_i32 = arith.constant 0 : i32
    %c0_i32_0 = arith.constant 0 : i32
    %c0_i32_1 = arith.constant 0 : i32
    return %c0_i32, %c0_i32_0 : i32, i32
  }
  func.func @transform_18(%arg0: i32, %arg1: i32) -> (i32, i32) {
    %c0_i32 = arith.constant 0 : i32
    %c0_i32_0 = arith.constant 0 : i32
    %c0_i32_1 = arith.constant 0 : i32
    return %c0_i32, %c0_i32_0 : i32, i32
  }
  func.func @transform_19(%arg0: i32, %arg1: i32) -> (i32, i32) {
    %c0_i32 = arith.constant 0 : i32
    %c0_i32_0 = arith.constant 0 : i32
    %c0_i32_1 = arith.constant 0 : i32
    return %c0_i32, %c0_i32_0 : i32, i32
  }
  func.func @transform_20(%arg0: i32, %arg1: i32) -> (i32, i32) {
    %c0_i32 = arith.constant 0 : i32
    %c0_i32_0 = arith.constant 0 : i32
    %c0_i32_1 = arith.constant 0 : i32
    return %c0_i32, %c0_i32_0 : i32, i32
  }
  func.func @transform_21(%arg0: i32, %arg1: i32) -> (i32, i32) {
    %c0_i32 = arith.constant 0 : i32
    %c0_i32_0 = arith.constant 0 : i32
    %c0_i32_1 = arith.constant 0 : i32
    return %c0_i32, %c0_i32_0 : i32, i32
  }
  func.func @transform_22(%arg0: i32, %arg1: i32) -> (i32, i32) {
    %c0_i32 = arith.constant 0 : i32
    %c0_i32_0 = arith.constant 0 : i32
    %c0_i32_1 = arith.constant 0 : i32
    return %c0_i32, %c0_i32_0 : i32, i32
  }
  func.func @transform_23(%arg0: i32, %arg1: i32) -> (i32, i32, i32) {
    %c0_i32 = arith.constant 0 : i32
    %c0_i32_0 = arith.constant 0 : i32
    return %arg0, %arg1, %c0_i32 : i32, i32, i32
  }
}

</mosaic_0001>

<llo_original>
// kernel: tpu_custom_call.1
$region0: #{tpu_custom_call.1}
  #allocation0 [shape = 'u32[]', space=smem, size = 0x4, offset = 0x4, fixed_abs, tag = 'smem constant byte address 0x4 - core index']
  #allocation1 [shape = 'u32[144,128]{1,0:T(1,128)}', space=vmem, size = 0x12000, scoped, tag = 'internal scratch']
  %s0 = inlined_call_operand.hbm [shape: f32[2,8,128], index: 0, kind: input, shape index: {}]
  %s1 = inlined_call_operand.hbm [shape: f32[2,16,128], index: 1, kind: input, shape index: {}]
  %s2 = inlined_call_operand.hbm [shape: f32[2,8,128], index: 2, kind: input, shape index: {}]
  %s3 = inlined_call_operand.hbm [shape: f32[2,16,128], index: 3, kind: input, shape index: {}]
  %s4 = inlined_call_operand.vmem [shape: f32[1,128], index: 4, kind: input, shape index: {}]
  %s5 = inlined_call_operand.vmem [shape: f32[1,128], index: 5, kind: input, shape index: {}]
  %s6 = inlined_call_operand.vmem [shape: f32[1,128], index: 6, kind: input, shape index: {}]
  %s7 = inlined_call_operand.vmem [shape: f32[1,128], index: 7, kind: input, shape index: {}]
  %s8 = inlined_call_operand.vmem [shape: f32[1,128], index: 8, kind: input, shape index: {}]
  %s9 = inlined_call_operand.vmem [shape: f32[1,128], index: 9, kind: input, shape index: {}]
  %s10 = inlined_call_operand.hbm [shape: bf16[128,128], index: 10, kind: input, shape index: {}]
  %s11 = inlined_call_operand.hbm [shape: bf16[128,128], index: 11, kind: input, shape index: {}]
  %s12 = inlined_call_operand.hbm [shape: bf16[128,128], index: 12, kind: input, shape index: {}]
  %s13 = inlined_call_operand.hbm [shape: bf16[128,128], index: 13, kind: input, shape index: {}]
  %s14 = inlined_call_operand.vmem [shape: f32[1,128], index: 14, kind: input, shape index: {}]
  %s15 = inlined_call_operand.vmem [shape: f32[1,128], index: 15, kind: input, shape index: {}]
  %s16 = inlined_call_operand.vmem [shape: f32[1,128], index: 16, kind: input, shape index: {}]
  %s17 = inlined_call_operand.hbm [shape: bf16[128,512], index: 17, kind: input, shape index: {}]
  %s18 = inlined_call_operand.vmem [shape: f32[1,512], index: 18, kind: input, shape index: {}]
  %s19 = inlined_call_operand.hbm [shape: bf16[512,128], index: 19, kind: input, shape index: {}]
  %s20 = inlined_call_operand.vmem [shape: f32[1,128], index: 20, kind: input, shape index: {}]
  %s21 = inlined_call_operand.vmem [shape: f32[1,128], index: 21, kind: input, shape index: {}]
  %s22 = inlined_call_operand.vmem [shape: f32[1,128], index: 22, kind: input, shape index: {}]
  %s23 = inlined_call_operand.hbm [shape: f32[2,8,128], index: 23, kind: output, shape index: {}]
  %s24 = sld [smem:[#allocation0]]
  $region165: #{tpu_custom_call.1} parent=0
    _
  %s26 = ssub.s32 1, %s24
  %s27 = scalar_select 0, %s26, %s24
  $region1: #{tpu_custom_call.1} parent=0
    #allocation2 [shape = 'u8[8192]{0}', space=vmem, size = 0x2000, scoped, tag = 'input window, operand 0']
    #allocation3 [shape = 's32[2]{0}', space=sflag, size = 0x8, scoped, tag = 'scoped memory for tpu_custom_call.1']
    #allocation4 [shape = 's32[2]{0}', space=sflag, size = 0x8, scoped, tag = 'scoped memory for tpu_custom_call.1']
    #allocation5 [shape = 'u8[16384]{0}', space=vmem, size = 0x4000, scoped, tag = 'input window, operand 1']
    #allocation6 [shape = 's32[2]{0}', space=sflag, size = 0x8, scoped, tag = 'scoped memory for tpu_custom_call.1']
    #allocation7 [shape = 'u8[8192]{0}', space=vmem, size = 0x2000, scoped, tag = 'input window, operand 2']
    #allocation8 [shape = 'u8[16384]{0}', space=vmem, size = 0x4000, scoped, tag = 'input window, operand 3']
    #allocation9 [shape = 's32[2]{0}', space=sflag, size = 0x8, scoped, tag = 'scoped memory for tpu_custom_call.1']
    #allocation10 [shape = 'u8[32768]{0}', space=vmem, size = 0x8000, scoped, tag = 'input window, operand 10, single buffered']
    #allocation11 [shape = 'u8[32768]{0}', space=vmem, size = 0x8000, scoped, tag = 'input window, operand 11, single buffered']
    #allocation12 [shape = 's32[1]{0}', space=sflag, size = 0x4, scoped, tag = 'scoped memory for tpu_custom_call.1']
    #allocation13 [shape = 'u8[32768]{0}', space=vmem, size = 0x8000, scoped, tag = 'input window, operand 12, single buffered']
    #allocation14 [shape = 'u8[32768]{0}', space=vmem, size = 0x8000, scoped, tag = 'input window, operand 13, single buffered']
    #allocation15 [shape = 's32[1]{0}', space=sflag, size = 0x4, scoped, tag = 'scoped memory for tpu_custom_call.1']
    #allocation16 [shape = 'u8[131072]{0}', space=vmem, size = 0x20000, scoped, tag = 'input window, operand 17, single buffered']
    #allocation17 [shape = 'u8[131072]{0}', space=vmem, size = 0x20000, scoped, tag = 'input window, operand 19, single buffered']
    #allocation18 [shape = 's32[1]{0}', space=sflag, size = 0x4, scoped, tag = 'scoped memory for tpu_custom_call.1']
    #allocation19 [shape = 'u8[8192]{0}', space=vmem, size = 0x2000, scoped, tag = 'output window, operand 0']
    %28 = vsyncpa [#allocation3], 0
    %s29 = scalar_lea.sflag [#allocation3], 1
    %30 = vsyncpa %s29, 0
    %31 = vsyncpa [#allocation6], 0
    %s32 = scalar_lea.sflag [#allocation6], 1
    %33 = vsyncpa %s32, 0
    %34 = vsyncpa [#allocation9], 0
    %s35 = scalar_lea.sflag [#allocation9], 1
    %36 = vsyncpa %s35, 0
    %37 = vsyncpa [#allocation12], 0
    %38 = vsyncpa [#allocation15], 0
    %39 = vsyncpa [#allocation18], 0
    %40 = vsyncpa [#allocation4], 0
    %s41 = scalar_lea.sflag [#allocation4], 1
    %42 = vsyncpa %s41, 0
    loop: start=0, step=1, limit=4
    $region2: #{tpu_custom_call.1} parent=1 // loop_pre_header
      _
    $region3: #{tpu_custom_call.1} parent=1 // loop_header
      %s44 = sphi 0, %s48
      %p45 = scmp.ge.s32.totalorder %s44, 4
      %s51 = sphi 0, %s63
      %s52 = sphi 0, %s59
      %s53 = sphi 0, %s51
      %s54 = sphi 0, %s52
      %s55 = sphi 0, %s53
      %s56 = sphi 0, %s54
      %s68 = sphi 0, %s70
      %s71 = sphi 0, %s68
      %s72 = sphi 0, %s71
      %s88 = sphi 0, %s72
      %s94 = sphi 0, %s96
      %s97 = sphi 0, %s94
      %s98 = sphi 0, %s97
      %s114 = sphi 0, %s98
      %s122 = sphi 0, %s124
      %s125 = sphi 0, %s122
      %s126 = sphi 0, %s125
      %s142 = sphi 0, %s126
      %s148 = sphi 0, %s150
      %s151 = sphi 0, %s148
      %s152 = sphi 0, %s151
      %s168 = sphi 0, %s152
      %s172 = sphi 0, %s172
      %s174 = sphi 0, %s172
      %s175 = sphi 0, %s174
      %s189 = sphi 0, %s175
      %s193 = sphi 0, %s193
      %s195 = sphi 0, %s193
      %s196 = sphi 0, %s195
      %s210 = sphi 0, %s196
      %s214 = sphi 0, %s214
      %s216 = sphi 0, %s214
      %s217 = sphi 0, %s216
      %s231 = sphi 0, %s217
      %s235 = sphi 0, %s235
      %s237 = sphi 0, %s235
      %s238 = sphi 0, %s237
      %s252 = sphi 0, %s238
      %s256 = sphi 0, %s256
      %s258 = sphi 0, %s256
      %s259 = sphi 0, %s258
      %s273 = sphi 0, %s259
      %s277 = sphi 0, %s277
      %s279 = sphi 0, %s277
      %s280 = sphi 0, %s279
      %s294 = sphi 0, %s280
      %s298 = sphi 0, %s298
      %s300 = sphi 0, %s298
      %s301 = sphi 0, %s300
      %s315 = sphi 0, %s301
      %s319 = sphi 0, %s319
      %s321 = sphi 0, %s319
      %s322 = sphi 0, %s321
      %s336 = sphi 0, %s322
      %s340 = sphi 0, %s340
      %s342 = sphi 0, %s340
      %s343 = sphi 0, %s342
      %s357 = sphi 0, %s343
      %s361 = sphi 0, %s361
      %s363 = sphi 0, %s361
      %s364 = sphi 0, %s363
      %s378 = sphi 0, %s364
      %s382 = sphi 0, %s382
      %s384 = sphi 0, %s382
      %s385 = sphi 0, %s384
      %s399 = sphi 0, %s385
      %s403 = sphi 0, %s403
      %s405 = sphi 0, %s403
      %s406 = sphi 0, %s405
      %s420 = sphi 0, %s406
      %s424 = sphi 0, %s424
      %s426 = sphi 0, %s424
      %s427 = sphi 0, %s426
      %s441 = sphi 0, %s427
      %s445 = sphi 0, %s445
      %s447 = sphi 0, %s445
      %s448 = sphi 0, %s447
      %s462 = sphi 0, %s448
      %s466 = sphi 0, %s466
      %s468 = sphi 0, %s466
      %s469 = sphi 0, %s468
      %s483 = sphi 0, %s469
      %s487 = sphi 0, %s487
      %s489 = sphi 0, %s487
      %s490 = sphi 0, %s489
      %s504 = sphi 0, %s490
      %s508 = sphi 0, %s508
      %s510 = sphi 0, %s508
      %s511 = sphi 0, %s510
      %s525 = sphi 0, %s511
      %s529 = sphi 0, %s529
      %s531 = sphi 0, %s529
      %s532 = sphi 0, %s531
      %s546 = sphi 0, %s532
      %s550 = sphi 0, %s550
      %s552 = sphi 0, %s550
      %s553 = sphi 0, %s552
      %s567 = sphi 0, %s553
      %s575 = sphi 0, %s577
      %s578 = sphi 0, %s575
      %s579 = sphi 0, %s578
      %s595 = sphi 0, %s579
    $region4: #{tpu_custom_call.1} parent=1 // loop_header_branch
      %47 = sbr.rel (%p45) target = $region8
    $region5: #{tpu_custom_call.1} parent=1 // loop_body
      %s49 = ssub.s32 %s44, 1
      %s50 = ssub.s32 %s44, 2
      %s57 = sadd.s32 1, %s52
      %p58 = scmp.ge.s32.totalorder %s57, 1
      %s59 = scalar_select %p58, 0, %s57
      %s60 = sadd.s32 1, %s51
      %s61 = scalar_select %p58, %s60, %s51
      %p62 = scmp.ge.s32.totalorder %s61, 2
      %s63 = scalar_select %p62, 0, %s61
      %s64 = ssub.s32 %s51, %s63
      %s65 = ssub.s32 %s52, %s59
      %s66 = sor.u32 %s64, %s65
      %p67 = scmp.eq.s32.totalorder %s66, 0
      %s69 = sadd.s32 %s68, 1
      %s70 = scalar_select %p67, %s68, %s69
      %p73 = pneg %p67
      %p74 = scmp.eq.s32.totalorder %s44, 1
      %p75 = por %p73, %p74
      %p76 = scmp.ne.s32.totalorder %s68, %s71
      %p77 = scmp.eq.s32.totalorder %s44, 0
      %p78 = por %p76, %p77
      %p79 = scmp.ne.s32.totalorder %s68, %s71
      %p80 = scmp.eq.s32.totalorder %s49, 1
      %p81 = por %p79, %p80
      %p82 = scmp.ne.s32.totalorder %s71, %s72
      %p83 = scmp.eq.s32.totalorder %s49, 0
      %p84 = por %p82, %p83
      %p85 = scmp.ne.s32.totalorder %s71, %s72
      %p86 = scmp.eq.s32.totalorder %s50, 1
      %p87 = por %p85, %p86
      %p89 = scmp.ne.s32.totalorder %s72, %s88
      %p90 = scmp.eq.s32.totalorder %s50, 0
      %p91 = por %p89, %p90
      %s92 = ssub.s32 %s51, %s63
      %p93 = scmp.eq.s32.totalorder %s92, 0
      %s95 = sadd.s32 %s94, 1
      %s96 = scalar_select %p93, %s94, %s95
      %p99 = pneg %p93
      %p100 = scmp.eq.s32.totalorder %s44, 1
      %p101 = por %p99, %p100
      %p102 = scmp.ne.s32.totalorder %s94, %s97
      %p103 = scmp.eq.s32.totalorder %s44, 0
      %p104 = por %p102, %p103
      %p105 = scmp.ne.s32.totalorder %s94, %s97
      %p106 = scmp.eq.s32.totalorder %s49, 1
      %p107 = por %p105, %p106
      %p108 = scmp.ne.s32.totalorder %s97, %s98
      %p109 = scmp.eq.s32.totalorder %s49, 0
      %p110 = por %p108, %p109
      %p111 = scmp.ne.s32.totalorder %s97, %s98
      %p112 = scmp.eq.s32.totalorder %s50, 1
      %p113 = por %p111, %p112
      %p115 = scmp.ne.s32.totalorder %s98, %s114
      %p116 = scmp.eq.s32.totalorder %s50, 0
      %p117 = por %p115, %p116
      %s118 = ssub.s32 %s51, %s63
      %s119 = ssub.s32 %s52, %s59
      %s120 = sor.u32 %s118, %s119
      %p121 = scmp.eq.s32.totalorder %s120, 0
      %s123 = sadd.s32 %s122, 1
      %s124 = scalar_select %p121, %s122, %s123
      %p127 = pneg %p121
      %p128 = scmp.eq.s32.totalorder %s44, 1
      %p129 = por %p127, %p128
      %p130 = scmp.ne.s32.totalorder %s122, %s125
      %p131 = scmp.eq.s32.totalorder %s44, 0
      %p132 = por %p130, %p131
      %p133 = scmp.ne.s32.totalorder %s122, %s125
      %p134 = scmp.eq.s32.totalorder %s49, 1
      %p135 = por %p133, %p134
      %p136 = scmp.ne.s32.totalorder %s125, %s126
      %p137 = scmp.eq.s32.totalorder %s49, 0
      %p138 = por %p136, %p137
      %p139 = scmp.ne.s32.totalorder %s125, %s126
      %p140 = scmp.eq.s32.totalorder %s50, 1
      %p141 = por %p139, %p140
      %p143 = scmp.ne.s32.totalorder %s126, %s142
      %p144 = scmp.eq.s32.totalorder %s50, 0
      %p145 = por %p143, %p144
      %s146 = ssub.s32 %s51, %s63
      %p147 = scmp.eq.s32.totalorder %s146, 0
      %s149 = sadd.s32 %s148, 1
      %s150 = scalar_select %p147, %s148, %s149
      %p153 = pneg %p147
      %p154 = scmp.eq.s32.totalorder %s44, 1
      %p155 = por %p153, %p154
      %p156 = scmp.ne.s32.totalorder %s148, %s151
      %p157 = scmp.eq.s32.totalorder %s44, 0
      %p158 = por %p156, %p157
      %p159 = scmp.ne.s32.totalorder %s148, %s151
      %p160 = scmp.eq.s32.totalorder %s49, 1
      %p161 = por %p159, %p160
      %p162 = scmp.ne.s32.totalorder %s151, %s152
      %p163 = scmp.eq.s32.totalorder %s49, 0
      %p164 = por %p162, %p163
      %p165 = scmp.ne.s32.totalorder %s151, %s152
      %p166 = scmp.eq.s32.totalorder %s50, 1
      %p167 = por %p165, %p166
      %p169 = scmp.ne.s32.totalorder %s152, %s168
      %p170 = scmp.eq.s32.totalorder %s50, 0
      %p171 = por %p169, %p170
      %s173 = sadd.s32 %s172, 1
      %p176 = scmp.eq.s32.totalorder %s44, 1
      %p177 = scmp.ne.s32.totalorder %s172, %s174
      %p178 = scmp.eq.s32.totalorder %s44, 0
      %p179 = por %p177, %p178
      %p180 = scmp.ne.s32.totalorder %s172, %s174
      %p181 = scmp.eq.s32.totalorder %s49, 1
      %p182 = por %p180, %p181
      %p183 = scmp.ne.s32.totalorder %s174, %s175
      %p184 = scmp.eq.s32.totalorder %s49, 0
      %p185 = por %p183, %p184
      %p186 = scmp.ne.s32.totalorder %s174, %s175
      %p187 = scmp.eq.s32.totalorder %s50, 1
      %p188 = por %p186, %p187
      %p190 = scmp.ne.s32.totalorder %s175, %s189
      %p191 = scmp.eq.s32.totalorder %s50, 0
      %p192 = por %p190, %p191
      %s194 = sadd.s32 %s193, 1
      %p197 = scmp.eq.s32.totalorder %s44, 1
      %p198 = scmp.ne.s32.totalorder %s193, %s195
      %p199 = scmp.eq.s32.totalorder %s44, 0
      %p200 = por %p198, %p199
      %p201 = scmp.ne.s32.totalorder %s193, %s195
      %p202 = scmp.eq.s32.totalorder %s49, 1
      %p203 = por %p201, %p202
      %p204 = scmp.ne.s32.totalorder %s195, %s196
      %p205 = scmp.eq.s32.totalorder %s49, 0
      %p206 = por %p204, %p205
      %p207 = scmp.ne.s32.totalorder %s195, %s196
      %p208 = scmp.eq.s32.totalorder %s50, 1
      %p209 = por %p207, %p208
      %p211 = scmp.ne.s32.totalorder %s196, %s210
      %p212 = scmp.eq.s32.totalorder %s50, 0
      %p213 = por %p211, %p212
      %s215 = sadd.s32 %s214, 1
      %p218 = scmp.eq.s32.totalorder %s44, 1
      %p219 = scmp.ne.s32.totalorder %s214, %s216
      %p220 = scmp.eq.s32.totalorder %s44, 0
      %p221 = por %p219, %p220
      %p222 = scmp.ne.s32.totalorder %s214, %s216
      %p223 = scmp.eq.s32.totalorder %s49, 1
      %p224 = por %p222, %p223
      %p225 = scmp.ne.s32.totalorder %s216, %s217
      %p226 = scmp.eq.s32.totalorder %s49, 0
      %p227 = por %p225, %p226
      %p228 = scmp.ne.s32.totalorder %s216, %s217
      %p229 = scmp.eq.s32.totalorder %s50, 1
      %p230 = por %p228, %p229
      %p232 = scmp.ne.s32.totalorder %s217, %s231
      %p233 = scmp.eq.s32.totalorder %s50, 0
      %p234 = por %p232, %p233
      %s236 = sadd.s32 %s235, 1
      %p239 = scmp.eq.s32.totalorder %s44, 1
      %p240 = scmp.ne.s32.totalorder %s235, %s237
      %p241 = scmp.eq.s32.totalorder %s44, 0
      %p242 = por %p240, %p241
      %p243 = scmp.ne.s32.totalorder %s235, %s237
      %p244 = scmp.eq.s32.totalorder %s49, 1
      %p245 = por %p243, %p244
      %p246 = scmp.ne.s32.totalorder %s237, %s238
      %p247 = scmp.eq.s32.totalorder %s49, 0
      %p248 = por %p246, %p247
      %p249 = scmp.ne.s32.totalorder %s237, %s238
      %p250 = scmp.eq.s32.totalorder %s50, 1
      %p251 = por %p249, %p250
      %p253 = scmp.ne.s32.totalorder %s238, %s252
      %p254 = scmp.eq.s32.totalorder %s50, 0
      %p255 = por %p253, %p254
      %s257 = sadd.s32 %s256, 1
      %p260 = scmp.eq.s32.totalorder %s44, 1
      %p261 = scmp.ne.s32.totalorder %s256, %s258
      %p262 = scmp.eq.s32.totalorder %s44, 0
      %p263 = por %p261, %p262
      %p264 = scmp.ne.s32.totalorder %s256, %s258
      %p265 = scmp.eq.s32.totalorder %s49, 1
      %p266 = por %p264, %p265
      %p267 = scmp.ne.s32.totalorder %s258, %s259
      %p268 = scmp.eq.s32.totalorder %s49, 0
      %p269 = por %p267, %p268
      %p270 = scmp.ne.s32.totalorder %s258, %s259
      %p271 = scmp.eq.s32.totalorder %s50, 1
      %p272 = por %p270, %p271
      %p274 = scmp.ne.s32.totalorder %s259, %s273
      %p275 = scmp.eq.s32.totalorder %s50, 0
      %p276 = por %p274, %p275
      %s278 = sadd.s32 %s277, 1
      %p281 = scmp.eq.s32.totalorder %s44, 1
      %p282 = scmp.ne.s32.totalorder %s277, %s279
      %p283 = scmp.eq.s32.totalorder %s44, 0
      %p284 = por %p282, %p283
      %p285 = scmp.ne.s32.totalorder %s277, %s279
      %p286 = scmp.eq.s32.totalorder %s49, 1
      %p287 = por %p285, %p286
      %p288 = scmp.ne.s32.totalorder %s279, %s280
      %p289 = scmp.eq.s32.totalorder %s49, 0
      %p290 = por %p288, %p289
      %p291 = scmp.ne.s32.totalorder %s279, %s280
      %p292 = scmp.eq.s32.totalorder %s50, 1
      %p293 = por %p291, %p292
      %p295 = scmp.ne.s32.totalorder %s280, %s294
      %p296 = scmp.eq.s32.totalorder %s50, 0
      %p297 = por %p295, %p296
      %s299 = sadd.s32 %s298, 1
      %p302 = scmp.eq.s32.totalorder %s44, 1
      %p303 = scmp.ne.s32.totalorder %s298, %s300
      %p304 = scmp.eq.s32.totalorder %s44, 0
      %p305 = por %p303, %p304
      %p306 = scmp.ne.s32.totalorder %s298, %s300
      %p307 = scmp.eq.s32.totalorder %s49, 1
      %p308 = por %p306, %p307
      %p309 = scmp.ne.s32.totalorder %s300, %s301
      %p310 = scmp.eq.s32.totalorder %s49, 0
      %p311 = por %p309, %p310
      %p312 = scmp.ne.s32.totalorder %s300, %s301
      %p313 = scmp.eq.s32.totalorder %s50, 1
      %p314 = por %p312, %p313
      %p316 = scmp.ne.s32.totalorder %s301, %s315
      %p317 = scmp.eq.s32.totalorder %s50, 0
      %p318 = por %p316, %p317
      %s320 = sadd.s32 %s319, 1
      %p323 = scmp.eq.s32.totalorder %s44, 1
      %p324 = scmp.ne.s32.totalorder %s319, %s321
      %p325 = scmp.eq.s32.totalorder %s44, 0
      %p326 = por %p324, %p325
      %p327 = scmp.ne.s32.totalorder %s319, %s321
      %p328 = scmp.eq.s32.totalorder %s49, 1
      %p329 = por %p327, %p328
      %p330 = scmp.ne.s32.totalorder %s321, %s322
      %p331 = scmp.eq.s32.totalorder %s49, 0
      %p332 = por %p330, %p331
      %p333 = scmp.ne.s32.totalorder %s321, %s322
      %p334 = scmp.eq.s32.totalorder %s50, 1
      %p335 = por %p333, %p334
      %p337 = scmp.ne.s32.totalorder %s322, %s336
      %p338 = scmp.eq.s32.totalorder %s50, 0
      %p339 = por %p337, %p338
      %s341 = sadd.s32 %s340, 1
      %p344 = scmp.eq.s32.totalorder %s44, 1
      %p345 = scmp.ne.s32.totalorder %s340, %s342
      %p346 = scmp.eq.s32.totalorder %s44, 0
      %p347 = por %p345, %p346
      %p348 = scmp.ne.s32.totalorder %s340, %s342
      %p349 = scmp.eq.s32.totalorder %s49, 1
      %p350 = por %p348, %p349
      %p351 = scmp.ne.s32.totalorder %s342, %s343
      %p352 = scmp.eq.s32.totalorder %s49, 0
      %p353 = por %p351, %p352
      %p354 = scmp.ne.s32.totalorder %s342, %s343
      %p355 = scmp.eq.s32.totalorder %s50, 1
      %p356 = por %p354, %p355
      %p358 = scmp.ne.s32.totalorder %s343, %s357
      %p359 = scmp.eq.s32.totalorder %s50, 0
      %p360 = por %p358, %p359
      %s362 = sadd.s32 %s361, 1
      %p365 = scmp.eq.s32.totalorder %s44, 1
      %p366 = scmp.ne.s32.totalorder %s361, %s363
      %p367 = scmp.eq.s32.totalorder %s44, 0
      %p368 = por %p366, %p367
      %p369 = scmp.ne.s32.totalorder %s361, %s363
      %p370 = scmp.eq.s32.totalorder %s49, 1
      %p371 = por %p369, %p370
      %p372 = scmp.ne.s32.totalorder %s363, %s364
      %p373 = scmp.eq.s32.totalorder %s49, 0
      %p374 = por %p372, %p373
      %p375 = scmp.ne.s32.totalorder %s363, %s364
      %p376 = scmp.eq.s32.totalorder %s50, 1
      %p377 = por %p375, %p376
      %p379 = scmp.ne.s32.totalorder %s364, %s378
      %p380 = scmp.eq.s32.totalorder %s50, 0
      %p381 = por %p379, %p380
      %s383 = sadd.s32 %s382, 1
      %p386 = scmp.eq.s32.totalorder %s44, 1
      %p387 = scmp.ne.s32.totalorder %s382, %s384
      %p388 = scmp.eq.s32.totalorder %s44, 0
      %p389 = por %p387, %p388
      %p390 = scmp.ne.s32.totalorder %s382, %s384
      %p391 = scmp.eq.s32.totalorder %s49, 1
      %p392 = por %p390, %p391
      %p393 = scmp.ne.s32.totalorder %s384, %s385
      %p394 = scmp.eq.s32.totalorder %s49, 0
      %p395 = por %p393, %p394
      %p396 = scmp.ne.s32.totalorder %s384, %s385
      %p397 = scmp.eq.s32.totalorder %s50, 1
      %p398 = por %p396, %p397
      %p400 = scmp.ne.s32.totalorder %s385, %s399
      %p401 = scmp.eq.s32.totalorder %s50, 0
      %p402 = por %p400, %p401
      %s404 = sadd.s32 %s403, 1
      %p407 = scmp.eq.s32.totalorder %s44, 1
      %p408 = scmp.ne.s32.totalorder %s403, %s405
      %p409 = scmp.eq.s32.totalorder %s44, 0
      %p410 = por %p408, %p409
      %p411 = scmp.ne.s32.totalorder %s403, %s405
      %p412 = scmp.eq.s32.totalorder %s49, 1
      %p413 = por %p411, %p412
      %p414 = scmp.ne.s32.totalorder %s405, %s406
      %p415 = scmp.eq.s32.totalorder %s49, 0
      %p416 = por %p414, %p415
      %p417 = scmp.ne.s32.totalorder %s405, %s406
      %p418 = scmp.eq.s32.totalorder %s50, 1
      %p419 = por %p417, %p418
      %p421 = scmp.ne.s32.totalorder %s406, %s420
      %p422 = scmp.eq.s32.totalorder %s50, 0
      %p423 = por %p421, %p422
      %s425 = sadd.s32 %s424, 1
      %p428 = scmp.eq.s32.totalorder %s44, 1
      %p429 = scmp.ne.s32.totalorder %s424, %s426
      %p430 = scmp.eq.s32.totalorder %s44, 0
      %p431 = por %p429, %p430
      %p432 = scmp.ne.s32.totalorder %s424, %s426
      %p433 = scmp.eq.s32.totalorder %s49, 1
      %p434 = por %p432, %p433
      %p435 = scmp.ne.s32.totalorder %s426, %s427
      %p436 = scmp.eq.s32.totalorder %s49, 0
      %p437 = por %p435, %p436
      %p438 = scmp.ne.s32.totalorder %s426, %s427
      %p439 = scmp.eq.s32.totalorder %s50, 1
      %p440 = por %p438, %p439
      %p442 = scmp.ne.s32.totalorder %s427, %s441
      %p443 = scmp.eq.s32.totalorder %s50, 0
      %p444 = por %p442, %p443
      %s446 = sadd.s32 %s445, 1
      %p449 = scmp.eq.s32.totalorder %s44, 1
      %p450 = scmp.ne.s32.totalorder %s445, %s447
      %p451 = scmp.eq.s32.totalorder %s44, 0
      %p452 = por %p450, %p451
      %p453 = scmp.ne.s32.totalorder %s445, %s447
      %p454 = scmp.eq.s32.totalorder %s49, 1
      %p455 = por %p453, %p454
      %p456 = scmp.ne.s32.totalorder %s447, %s448
      %p457 = scmp.eq.s32.totalorder %s49, 0
      %p458 = por %p456, %p457
      %p459 = scmp.ne.s32.totalorder %s447, %s448
      %p460 = scmp.eq.s32.totalorder %s50, 1
      %p461 = por %p459, %p460
      %p463 = scmp.ne.s32.totalorder %s448, %s462
      %p464 = scmp.eq.s32.totalorder %s50, 0
      %p465 = por %p463, %p464
      %s467 = sadd.s32 %s466, 1
      %p470 = scmp.eq.s32.totalorder %s44, 1
      %p471 = scmp.ne.s32.totalorder %s466, %s468
      %p472 = scmp.eq.s32.totalorder %s44, 0
      %p473 = por %p471, %p472
      %p474 = scmp.ne.s32.totalorder %s466, %s468
      %p475 = scmp.eq.s32.totalorder %s49, 1
      %p476 = por %p474, %p475
      %p477 = scmp.ne.s32.totalorder %s468, %s469
      %p478 = scmp.eq.s32.totalorder %s49, 0
      %p479 = por %p477, %p478
      %p480 = scmp.ne.s32.totalorder %s468, %s469
      %p481 = scmp.eq.s32.totalorder %s50, 1
      %p482 = por %p480, %p481
      %p484 = scmp.ne.s32.totalorder %s469, %s483
      %p485 = scmp.eq.s32.totalorder %s50, 0
      %p486 = por %p484, %p485
      %s488 = sadd.s32 %s487, 1
      %p491 = scmp.eq.s32.totalorder %s44, 1
      %p492 = scmp.ne.s32.totalorder %s487, %s489
      %p493 = scmp.eq.s32.totalorder %s44, 0
      %p494 = por %p492, %p493
      %p495 = scmp.ne.s32.totalorder %s487, %s489
      %p496 = scmp.eq.s32.totalorder %s49, 1
      %p497 = por %p495, %p496
      %p498 = scmp.ne.s32.totalorder %s489, %s490
      %p499 = scmp.eq.s32.totalorder %s49, 0
      %p500 = por %p498, %p499
      %p501 = scmp.ne.s32.totalorder %s489, %s490
      %p502 = scmp.eq.s32.totalorder %s50, 1
      %p503 = por %p501, %p502
      %p505 = scmp.ne.s32.totalorder %s490, %s504
      %p506 = scmp.eq.s32.totalorder %s50, 0
      %p507 = por %p505, %p506
      %s509 = sadd.s32 %s508, 1
      %p512 = scmp.eq.s32.totalorder %s44, 1
      %p513 = scmp.ne.s32.totalorder %s508, %s510
      %p514 = scmp.eq.s32.totalorder %s44, 0
      %p515 = por %p513, %p514
      %p516 = scmp.ne.s32.totalorder %s508, %s510
      %p517 = scmp.eq.s32.totalorder %s49, 1
      %p518 = por %p516, %p517
      %p519 = scmp.ne.s32.totalorder %s510, %s511
      %p520 = scmp.eq.s32.totalorder %s49, 0
      %p521 = por %p519, %p520
      %p522 = scmp.ne.s32.totalorder %s510, %s511
      %p523 = scmp.eq.s32.totalorder %s50, 1
      %p524 = por %p522, %p523
      %p526 = scmp.ne.s32.totalorder %s511, %s525
      %p527 = scmp.eq.s32.totalorder %s50, 0
      %p528 = por %p526, %p527
      %s530 = sadd.s32 %s529, 1
      %p533 = scmp.eq.s32.totalorder %s44, 1
      %p534 = scmp.ne.s32.totalorder %s529, %s531
      %p535 = scmp.eq.s32.totalorder %s44, 0
      %p536 = por %p534, %p535
      %p537 = scmp.ne.s32.totalorder %s529, %s531
      %p538 = scmp.eq.s32.totalorder %s49, 1
      %p539 = por %p537, %p538
      %p540 = scmp.ne.s32.totalorder %s531, %s532
      %p541 = scmp.eq.s32.totalorder %s49, 0
      %p542 = por %p540, %p541
      %p543 = scmp.ne.s32.totalorder %s531, %s532
      %p544 = scmp.eq.s32.totalorder %s50, 1
      %p545 = por %p543, %p544
      %p547 = scmp.ne.s32.totalorder %s532, %s546
      %p548 = scmp.eq.s32.totalorder %s50, 0
      %p549 = por %p547, %p548
      %s551 = sadd.s32 %s550, 1
      %p554 = scmp.eq.s32.totalorder %s44, 1
      %p555 = scmp.ne.s32.totalorder %s550, %s552
      %p556 = scmp.eq.s32.totalorder %s44, 0
      %p557 = por %p555, %p556
      %p558 = scmp.ne.s32.totalorder %s550, %s552
      %p559 = scmp.eq.s32.totalorder %s49, 1
      %p560 = por %p558, %p559
      %p561 = scmp.ne.s32.totalorder %s552, %s553
      %p562 = scmp.eq.s32.totalorder %s49, 0
      %p563 = por %p561, %p562
      %p564 = scmp.ne.s32.totalorder %s552, %s553
      %p565 = scmp.eq.s32.totalorder %s50, 1
      %p566 = por %p564, %p565
      %p568 = scmp.ne.s32.totalorder %s553, %s567
      %p569 = scmp.eq.s32.totalorder %s50, 0
      %p570 = por %p568, %p569
      %s571 = ssub.s32 %s51, %s63
      %s572 = ssub.s32 %s52, %s59
      %s573 = sor.u32 %s571, %s572
      %p574 = scmp.eq.s32.totalorder %s573, 0
      %s576 = sadd.s32 %s575, 1
      %s577 = scalar_select %p574, %s575, %s576
      %p580 = pneg %p574
      %p581 = scmp.eq.s32.totalorder %s44, 1
      %p582 = por %p580, %p581
      %p583 = scmp.ne.s32.totalorder %s575, %s578
      %p584 = scmp.eq.s32.totalorder %s44, 0
      %p585 = por %p583, %p584
      %p586 = scmp.ne.s32.totalorder %s575, %s578
      %p587 = scmp.eq.s32.totalorder %s49, 1
      %p588 = por %p586, %p587
      %p589 = scmp.ne.s32.totalorder %s578, %s579
      %p590 = scmp.eq.s32.totalorder %s49, 0
      %p591 = por %p589, %p590
      %p592 = scmp.ne.s32.totalorder %s578, %s579
      %p593 = scmp.eq.s32.totalorder %s50, 1
      %p594 = por %p592, %p593
      %p596 = scmp.ne.s32.totalorder %s579, %s595
      %p597 = scmp.eq.s32.totalorder %s50, 0
      %p598 = por %p596, %p597
      %p599 = scmp.le.s32.totalorder 1, %s44
      %p600 = scmp.lt.s32.totalorder %s44, 3
      %p601 = pnand %p599, %p600
      %p602 = pneg %p601
      // Predicated region
      $region9: #{tpu_custom_call.1} parent=5 // pred_check
        _
      $region10: #{tpu_custom_call.1} parent=5 // pred_check_branch
        %604 = sbr.rel (%p601) target = $region12
      $region11: #{tpu_custom_call.1} parent=5 // pred_region
        %s605 = ssub.s32 %s44, 1
        // Predicated region
        $region13: #{tpu_custom_call.1} parent=11 // pred_check
          %p606 = pneg %p185
        $region14: #{tpu_custom_call.1} parent=11 // pred_check_branch
          %608 = sbr.rel (%p606) target = $region16
        $region15: #{tpu_custom_call.1} parent=11 // pred_region
          _
        $region16: #{tpu_custom_call.1} parent=11 // pred_fallthru
          _
        // Predicated region
        $region17: #{tpu_custom_call.1} parent=11 // pred_check
          %p609 = pneg %p206
        $region18: #{tpu_custom_call.1} parent=11 // pred_check_branch
          %611 = sbr.rel (%p609) target = $region20
        $region19: #{tpu_custom_call.1} parent=11 // pred_region
          _
        $region20: #{tpu_custom_call.1} parent=11 // pred_fallthru
          _
        // Predicated region
        $region21: #{tpu_custom_call.1} parent=11 // pred_check
          %p612 = pneg %p227
        $region22: #{tpu_custom_call.1} parent=11 // pred_check_branch
          %614 = sbr.rel (%p612) target = $region24
        $region23: #{tpu_custom_call.1} parent=11 // pred_region
          _
        $region24: #{tpu_custom_call.1} parent=11 // pred_fallthru
          _
        // Predicated region
        $region25: #{tpu_custom_call.1} parent=11 // pred_check
          %p615 = pneg %p248
        $region26: #{tpu_custom_call.1} parent=11 // pred_check_branch
          %617 = sbr.rel (%p615) target = $region28
        $region27: #{tpu_custom_call.1} parent=11 // pred_region
          _
        $region28: #{tpu_custom_call.1} parent=11 // pred_fallthru
          _
        // Predicated region
        $region29: #{tpu_custom_call.1} parent=11 // pred_check
          %p618 = pneg %p269
        $region30: #{tpu_custom_call.1} parent=11 // pred_check_branch
          %620 = sbr.rel (%p618) target = $region32
        $region31: #{tpu_custom_call.1} parent=11 // pred_region
          _
        $region32: #{tpu_custom_call.1} parent=11 // pred_fallthru
          _
        // Predicated region
        $region33: #{tpu_custom_call.1} parent=11 // pred_check
          %p621 = pneg %p290
        $region34: #{tpu_custom_call.1} parent=11 // pred_check_branch
          %623 = sbr.rel (%p621) target = $region36
        $region35: #{tpu_custom_call.1} parent=11 // pred_region
          _
        $region36: #{tpu_custom_call.1} parent=11 // pred_fallthru
          _
        // Predicated region
        $region37: #{tpu_custom_call.1} parent=11 // pred_check
          %p624 = pneg %p311
        $region38: #{tpu_custom_call.1} parent=11 // pred_check_branch
          %626 = sbr.rel (%p624) target = $region40
        $region39: #{tpu_custom_call.1} parent=11 // pred_region
          %s628 = ssub.s32 1024, 1024
          %629 = vsyncadd [#allocation9], %s628
          %s630 = sshll.u32 [#allocation10], 4
          %s631 = int_to_ptr.vmem [resolvable:$true] %s630
          %636 = dma.hbm_to_vmem [thread:$0]  %s10, 1024, %s631, [#allocation9], 64, 64, 4
        $region40: #{tpu_custom_call.1} parent=11 // pred_fallthru
          _
        // Predicated region
        $region41: #{tpu_custom_call.1} parent=11 // pred_check
          %p637 = pneg %p332
        $region42: #{tpu_custom_call.1} parent=11 // pred_check_branch
          %639 = sbr.rel (%p637) target = $region44
        $region43: #{tpu_custom_call.1} parent=11 // pred_region
          %s641 = ssub.s32 1024, 1024
          %642 = vsyncadd [#allocation12], %s641
          %s643 = sshll.u32 [#allocation11], 4
          %s644 = int_to_ptr.vmem [resolvable:$true] %s643
          %649 = dma.hbm_to_vmem [thread:$0]  %s11, 1024, %s644, [#allocation12], 64, 64, 4
        $region44: #{tpu_custom_call.1} parent=11 // pred_fallthru
          _
        // Predicated region
        $region45: #{tpu_custom_call.1} parent=11 // pred_check
          %p650 = pneg %p353
        $region46: #{tpu_custom_call.1} parent=11 // pred_check_branch
          %652 = sbr.rel (%p650) target = $region48
        $region47: #{tpu_custom_call.1} parent=11 // pred_region
          %s654 = ssub.s32 1024, 1024
          %655 = vsyncadd [#allocation12], %s654
          %s656 = sshll.u32 [#allocation13], 4
          %s657 = int_to_ptr.vmem [resolvable:$true] %s656
          %662 = dma.hbm_to_vmem [thread:$0]  %s12, 1024, %s657, [#allocation12], 64, 64, 4
        $region48: #{tpu_custom_call.1} parent=11 // pred_fallthru
          _
        // Predicated region
        $region49: #{tpu_custom_call.1} parent=11 // pred_check
          %p663 = pneg %p374
        $region50: #{tpu_custom_call.1} parent=11 // pred_check_branch
          %665 = sbr.rel (%p663) target = $region52
        $region51: #{tpu_custom_call.1} parent=11 // pred_region
          %s667 = ssub.s32 1024, 1024
          %668 = vsyncadd [#allocation15], %s667
          %s669 = sshll.u32 [#allocation14], 4
          %s670 = int_to_ptr.vmem [resolvable:$true] %s669
          %675 = dma.hbm_to_vmem [thread:$0]  %s13, 1024, %s670, [#allocation15], 64, 64, 4
        $region52: #{tpu_custom_call.1} parent=11 // pred_fallthru
          _
        // Predicated region
        $region53: #{tpu_custom_call.1} parent=11 // pred_check
          %p676 = pneg %p395
        $region54: #{tpu_custom_call.1} parent=11 // pred_check_branch
          %678 = sbr.rel (%p676) target = $region56
        $region55: #{tpu_custom_call.1} parent=11 // pred_region
          _
        $region56: #{tpu_custom_call.1} parent=11 // pred_fallthru
          _
        // Predicated region
        $region57: #{tpu_custom_call.1} parent=11 // pred_check
          %p679 = pneg %p416
        $region58: #{tpu_custom_call.1} parent=11 // pred_check_branch
          %681 = sbr.rel (%p679) target = $region60
        $region59: #{tpu_custom_call.1} parent=11 // pred_region
          _
        $region60: #{tpu_custom_call.1} parent=11 // pred_fallthru
          _
        // Predicated region
        $region61: #{tpu_custom_call.1} parent=11 // pred_check
          %p682 = pneg %p437
        $region62: #{tpu_custom_call.1} parent=11 // pred_check_branch
          %684 = sbr.rel (%p682) target = $region64
        $region63: #{tpu_custom_call.1} parent=11 // pred_region
          _
        $region64: #{tpu_custom_call.1} parent=11 // pred_fallthru
          _
        // Predicated region
        $region65: #{tpu_custom_call.1} parent=11 // pred_check
          %p685 = pneg %p458
        $region66: #{tpu_custom_call.1} parent=11 // pred_check_branch
          %687 = sbr.rel (%p685) target = $region68
        $region67: #{tpu_custom_call.1} parent=11 // pred_region
          %s689 = ssub.s32 4096, 4096
          %690 = vsyncadd [#allocation15], %s689
          %s691 = sshll.u32 [#allocation16], 4
          %s692 = int_to_ptr.vmem [resolvable:$true] %s691
          %697 = dma.hbm_to_vmem [thread:$0]  %s17, 4096, %s692, [#allocation15], 256, 256, 16
        $region68: #{tpu_custom_call.1} parent=11 // pred_fallthru
          _
        // Predicated region
        $region69: #{tpu_custom_call.1} parent=11 // pred_check
          %p698 = pneg %p479
        $region70: #{tpu_custom_call.1} parent=11 // pred_check_branch
          %700 = sbr.rel (%p698) target = $region72
        $region71: #{tpu_custom_call.1} parent=11 // pred_region
          _
        $region72: #{tpu_custom_call.1} parent=11 // pred_fallthru
          _
        // Predicated region
        $region73: #{tpu_custom_call.1} parent=11 // pred_check
          %p701 = pneg %p500
        $region74: #{tpu_custom_call.1} parent=11 // pred_check_branch
          %703 = sbr.rel (%p701) target = $region76
        $region75: #{tpu_custom_call.1} parent=11 // pred_region
          %s705 = ssub.s32 4096, 4096
          %706 = vsyncadd [#allocation18], %s705
          %s707 = sshll.u32 [#allocation17], 4
          %s708 = int_to_ptr.vmem [resolvable:$true] %s707
          %713 = dma.hbm_to_vmem [thread:$0]  %s19, 4096, %s708, [#allocation18], 64, 64, 4
        $region76: #{tpu_custom_call.1} parent=11 // pred_fallthru
          _
        // Predicated region
        $region77: #{tpu_custom_call.1} parent=11 // pred_check
          %p714 = pneg %p521
        $region78: #{tpu_custom_call.1} parent=11 // pred_check_branch
          %716 = sbr.rel (%p714) target = $region80
        $region79: #{tpu_custom_call.1} parent=11 // pred_region
          _
        $region80: #{tpu_custom_call.1} parent=11 // pred_fallthru
          _
        // Predicated region
        $region81: #{tpu_custom_call.1} parent=11 // pred_check
          %p717 = pneg %p542
        $region82: #{tpu_custom_call.1} parent=11 // pred_check_branch
          %719 = sbr.rel (%p717) target = $region84
        $region83: #{tpu_custom_call.1} parent=11 // pred_region
          _
        $region84: #{tpu_custom_call.1} parent=11 // pred_fallthru
          _
        // Predicated region
        $region85: #{tpu_custom_call.1} parent=11 // pred_check
          %p720 = pneg %p563
        $region86: #{tpu_custom_call.1} parent=11 // pred_check_branch
          %722 = sbr.rel (%p720) target = $region88
        $region87: #{tpu_custom_call.1} parent=11 // pred_region
          _
        $region88: #{tpu_custom_call.1} parent=11 // pred_fallthru
          _
      $region12: #{tpu_custom_call.1} parent=5 // pred_fallthru
        _
      %p723 = scmp.lt.s32.totalorder %s44, 2
      // Predicated region
      $region89: #{tpu_custom_call.1} parent=5 // pred_check
        %p724 = pneg %p723
      $region90: #{tpu_custom_call.1} parent=5 // pred_check_branch
        %726 = sbr.rel (%p724) target = $region92
      $region91: #{tpu_custom_call.1} parent=5 // pred_region
        // Predicated region
        $region93: #{tpu_custom_call.1} parent=91 // pred_check
          %p727 = pneg %p78
        $region94: #{tpu_custom_call.1} parent=91 // pred_check_branch
          %729 = sbr.rel (%p727) target = $region96
        $region95: #{tpu_custom_call.1} parent=91 // pred_region
          %s730 = sand.u32 %s68, 1
          %s731 = scalar_lea.sflag [#allocation3], %s730
          %s732 = sand.u32 %s68, 1
          %s733 = smul.addr %s732, 8
          %s734 = scalar_lea.vmem [#allocation2], %s733
          %s736 = ssub.s32 128, 128
          %737 = vsyncadd %s731, %s736
          %s738 = sadd.s32 %s52, %s51
          %s739 = smul.addr %s738, 128
          %s740 = scalar_lea.hbm %s0, %s739
          %s742 = sshll.u32 %s734, 4
          %s743 = int_to_ptr.vmem [resolvable:$true] %s742
          %745 = dma.hbm_to_vmem [thread:$0]  %s740, 128, %s743, %s731
        $region96: #{tpu_custom_call.1} parent=91 // pred_fallthru
          _
        // Predicated region
        $region97: #{tpu_custom_call.1} parent=91 // pred_check
          %p746 = pneg %p104
        $region98: #{tpu_custom_call.1} parent=91 // pred_check_branch
          %748 = sbr.rel (%p746) target = $region100
        $region99: #{tpu_custom_call.1} parent=91 // pred_region
          %s749 = sand.u32 %s44, 1
          %s750 = scalar_lea.sflag [#allocation6], %s749
          %s751 = sand.u32 %s94, 1
          %s752 = smul.addr %s751, 16
          %s753 = scalar_lea.vmem [#allocation5], %s752
          %s755 = ssub.s32 256, 256
          %756 = vsyncadd %s750, %s755
          %s757 = smul.addr %s51, 2
          %s758 = smul.addr %s757, 128
          %s759 = scalar_lea.hbm %s1, %s758
          %s760 = sshll.u32 %s753, 4
          %s761 = int_to_ptr.vmem [resolvable:$true] %s760
          %766 = dma.hbm_to_vmem [thread:$0]  %s759, 256, %s761, %s750, 128, 128, 8
        $region100: #{tpu_custom_call.1} parent=91 // pred_fallthru
          _
        // Predicated region
        $region101: #{tpu_custom_call.1} parent=91 // pred_check
          %p767 = pneg %p132
        $region102: #{tpu_custom_call.1} parent=91 // pred_check_branch
          %769 = sbr.rel (%p767) target = $region104
        $region103: #{tpu_custom_call.1} parent=91 // pred_region
          %s770 = sand.u32 %s44, 1
          %s771 = scalar_lea.sflag [#allocation6], %s770
          %s772 = sand.u32 %s122, 1
          %s773 = smul.addr %s772, 8
          %s774 = scalar_lea.vmem [#allocation7], %s773
          %s776 = ssub.s32 128, 128
          %777 = vsyncadd %s771, %s776
          %s778 = sadd.s32 %s52, %s51
          %s779 = smul.addr %s778, 128
          %s780 = scalar_lea.hbm %s2, %s779
          %s782 = sshll.u32 %s774, 4
          %s783 = int_to_ptr.vmem [resolvable:$true] %s782
          %785 = dma.hbm_to_vmem [thread:$0]  %s780, 128, %s783, %s771
        $region104: #{tpu_custom_call.1} parent=91 // pred_fallthru
          _
        // Predicated region
        $region105: #{tpu_custom_call.1} parent=91 // pred_check
          %p786 = pneg %p158
        $region106: #{tpu_custom_call.1} parent=91 // pred_check_branch
          %788 = sbr.rel (%p786) target = $region108
        $region107: #{tpu_custom_call.1} parent=91 // pred_region
          %s789 = sand.u32 %s44, 1
          %s790 = scalar_lea.sflag [#allocation9], %s789
          %s791 = sand.u32 %s148, 1
          %s792 = smul.addr %s791, 16
          %s793 = scalar_lea.vmem [#allocation8], %s792
          %s795 = ssub.s32 256, 256
          %796 = vsyncadd %s790, %s795
          %s797 = smul.addr %s51, 2
          %s798 = smul.addr %s797, 128
          %s799 = scalar_lea.hbm %s3, %s798
          %s800 = sshll.u32 %s793, 4
          %s801 = int_to_ptr.vmem [resolvable:$true] %s800
          %806 = dma.hbm_to_vmem [thread:$0]  %s799, 256, %s801, %s790, 128, 128, 8
        $region108: #{tpu_custom_call.1} parent=91 // pred_fallthru
          _
      $region92: #{tpu_custom_call.1} parent=5 // pred_fallthru
        _
      %p807 = scmp.le.s32.totalorder 1, %s44
      %p808 = scmp.lt.s32.totalorder %s44, 3
      %p809 = pnand %p807, %p808
      %p810 = pneg %p809
      // Predicated region
      $region109: #{tpu_custom_call.1} parent=5 // pred_check
        _
      $region110: #{tpu_custom_call.1} parent=5 // pred_check_branch
        %812 = sbr.rel (%p809) target = $region112
      $region111: #{tpu_custom_call.1} parent=5 // pred_region
        %s813 = ssub.s32 %s44, 1
        %s814 = sand.u32 %s71, 1
        %s815 = scalar_lea.sflag [#allocation3], %s814
        %s816 = sand.u32 %s71, 1
        %s817 = smul.addr %s816, 8
        %s818 = scalar_lea.vmem [#allocation2], %s817
        // Predicated region
        $region113: #{tpu_custom_call.1} parent=111 // pred_check
          %p819 = pneg %p84
        $region114: #{tpu_custom_call.1} parent=111 // pred_check_branch
          %821 = sbr.rel (%p819) target = $region116
        $region115: #{tpu_custom_call.1} parent=111 // pred_region
          %822 = dma.done %s815, 128
        $region116: #{tpu_custom_call.1} parent=111 // pred_fallthru
          _
        %s823 = sand.u32 %s49, 1
        %s824 = scalar_lea.sflag [#allocation6], %s823
        %s825 = sand.u32 %s97, 1
        %s826 = smul.addr %s825, 16
        %s827 = scalar_lea.vmem [#allocation5], %s826
        // Predicated region
        $region117: #{tpu_custom_call.1} parent=111 // pred_check
          %p828 = pneg %p110
        $region118: #{tpu_custom_call.1} parent=111 // pred_check_branch
          %830 = sbr.rel (%p828) target = $region120
        $region119: #{tpu_custom_call.1} parent=111 // pred_region
          %831 = dma.done %s824, 256
        $region120: #{tpu_custom_call.1} parent=111 // pred_fallthru
          _
        %s832 = sand.u32 %s49, 1
        %s833 = scalar_lea.sflag [#allocation6], %s832
        %s834 = sand.u32 %s125, 1
        %s835 = smul.addr %s834, 8
        %s836 = scalar_lea.vmem [#allocation7], %s835
        // Predicated region
        $region121: #{tpu_custom_call.1} parent=111 // pred_check
          %p837 = pneg %p138
        $region122: #{tpu_custom_call.1} parent=111 // pred_check_branch
          %839 = sbr.rel (%p837) target = $region124
        $region123: #{tpu_custom_call.1} parent=111 // pred_region
          %840 = dma.done %s833, 128
        $region124: #{tpu_custom_call.1} parent=111 // pred_fallthru
          _
        %s841 = sand.u32 %s49, 1
        %s842 = scalar_lea.sflag [#allocation9], %s841
        %s843 = sand.u32 %s151, 1
        %s844 = smul.addr %s843, 16
        %s845 = scalar_lea.vmem [#allocation8], %s844
        // Predicated region
        $region125: #{tpu_custom_call.1} parent=111 // pred_check
          %p846 = pneg %p164
        $region126: #{tpu_custom_call.1} parent=111 // pred_check_branch
          %848 = sbr.rel (%p846) target = $region128
        $region127: #{tpu_custom_call.1} parent=111 // pred_region
          %849 = dma.done %s842, 256
        $region128: #{tpu_custom_call.1} parent=111 // pred_fallthru
          _
        // Predicated region
        $region129: #{tpu_custom_call.1} parent=111 // pred_check
          %p850 = pneg %p311
        $region130: #{tpu_custom_call.1} parent=111 // pred_check_branch
          %852 = sbr.rel (%p850) target = $region132
        $region131: #{tpu_custom_call.1} parent=111 // pred_region
          %853 = dma.done [#allocation9], 1024
        $region132: #{tpu_custom_call.1} parent=111 // pred_fallthru
          _
        // Predicated region
        $region133: #{tpu_custom_call.1} parent=111 // pred_check
          %p854 = pneg %p332
        $region134: #{tpu_custom_call.1} parent=111 // pred_check_branch
          %856 = sbr.rel (%p854) target = $region136
        $region135: #{tpu_custom_call.1} parent=111 // pred_region
          %857 = dma.done [#allocation12], 1024
        $region136: #{tpu_custom_call.1} parent=111 // pred_fallthru
          _
        // Predicated region
        $region137: #{tpu_custom_call.1} parent=111 // pred_check
          %p858 = pneg %p353
        $region138: #{tpu_custom_call.1} parent=111 // pred_check_branch
          %860 = sbr.rel (%p858) target = $region140
        $region139: #{tpu_custom_call.1} parent=111 // pred_region
          %861 = dma.done [#allocation12], 1024
        $region140: #{tpu_custom_call.1} parent=111 // pred_fallthru
          _
        // Predicated region
        $region141: #{tpu_custom_call.1} parent=111 // pred_check
          %p862 = pneg %p374
        $region142: #{tpu_custom_call.1} parent=111 // pred_check_branch
          %864 = sbr.rel (%p862) target = $region144
        $region143: #{tpu_custom_call.1} parent=111 // pred_region
          %865 = dma.done [#allocation15], 1024
        $region144: #{tpu_custom_call.1} parent=111 // pred_fallthru
          _
        // Predicated region
        $region145: #{tpu_custom_call.1} parent=111 // pred_check
          %p866 = pneg %p458
        $region146: #{tpu_custom_call.1} parent=111 // pred_check_branch
          %868 = sbr.rel (%p866) target = $region148
        $region147: #{tpu_custom_call.1} parent=111 // pred_region
          %869 = dma.done [#allocation15], 4096
        $region148: #{tpu_custom_call.1} parent=111 // pred_fallthru
          _
        // Predicated region
        $region149: #{tpu_custom_call.1} parent=111 // pred_check
          %p870 = pneg %p500
        $region150: #{tpu_custom_call.1} parent=111 // pred_check_branch
          %872 = sbr.rel (%p870) target = $region152
        $region151: #{tpu_custom_call.1} parent=111 // pred_region
          %873 = dma.done [#allocation18], 4096
        $region152: #{tpu_custom_call.1} parent=111 // pred_fallthru
          _
        %s874 = sand.u32 %s71, 1
        %s875 = scalar_lea.sflag [#allocation3], %s874
        %s876 = sand.u32 %s71, 1
        %s877 = smul.addr %s876, 8
        %s878 = scalar_lea.vmem [#allocation2], %s877
        %p879 = pneg %p84
        %p880 = pneg %p81
        %s881 = sand.u32 %s49, 1
        %s882 = scalar_lea.sflag [#allocation6], %s881
        %s883 = sand.u32 %s97, 1
        %s884 = smul.addr %s883, 16
        %s885 = scalar_lea.vmem [#allocation5], %s884
        %p886 = pneg %p110
        %p887 = pneg %p107
        %s888 = sand.u32 %s49, 1
        %s889 = scalar_lea.sflag [#allocation6], %s888
        %s890 = sand.u32 %s125, 1
        %s891 = smul.addr %s890, 8
        %s892 = scalar_lea.vmem [#allocation7], %s891
        %p893 = pneg %p138
        %p894 = pneg %p135
        %s895 = sand.u32 %s49, 1
        %s896 = scalar_lea.sflag [#allocation9], %s895
        %s897 = sand.u32 %s151, 1
        %s898 = smul.addr %s897, 16
        %s899 = scalar_lea.vmem [#allocation8], %s898
        %p900 = pneg %p164
        %p901 = pneg %p161
        %p902 = pneg %p185
        %p903 = pneg %p182
        %p904 = pneg %p206
        %p905 = pneg %p203
        %p906 = pneg %p227
        %p907 = pneg %p224
        %p908 = pneg %p248
        %p909 = pneg %p245
        %p910 = pneg %p269
        %p911 = pneg %p266
        %p912 = pneg %p290
        %p913 = pneg %p287
        %p914 = pneg %p311
        %p915 = pneg %p308
        %p916 = pneg %p332
        %p917 = pneg %p329
        %p918 = pneg %p353
        %p919 = pneg %p350
        %p920 = pneg %p374
        %p921 = pneg %p371
        %p922 = pneg %p395
        %p923 = pneg %p392
        %p924 = pneg %p416
        %p925 = pneg %p413
        %p926 = pneg %p437
        %p927 = pneg %p434
        %p928 = pneg %p458
        %p929 = pneg %p455
        %p930 = pneg %p479
        %p931 = pneg %p476
        %p932 = pneg %p500
        %p933 = pneg %p497
        %p934 = pneg %p521
        %p935 = pneg %p518
        %p936 = pneg %p542
        %p937 = pneg %p539
        %p938 = pneg %p563
        %p939 = pneg %p560
        %p940 = pneg %p591
        %p941 = pneg %p588
        %s942 = sand.u32 %s578, 1
        %s943 = scalar_lea.sflag [#allocation4], %s942
        %s944 = sand.u32 %s578, 1
        %s945 = smul.addr %s944, 8
        %s946 = scalar_lea.vmem [#allocation19], %s945
        %v948 = vld [vmem:[%s818] sm:$0xff]
        %v949 = vld [vmem:[%s836] sm:$0xff]
        %v950 = vld [vmem:[%s827] sm:$0xff]
        %v951 = vld [vmem:[%s827 + $0x8] sm:$0xff]
        %v952 = vld [vmem:[%s845] sm:$0xff]
        %v953 = vld [vmem:[%s845 + $0x8] sm:$0xff]
        %v954 = vadd.f32 %v948, %v949
        %v955 = vld [vmem:[%s4] sm:$0x1]
        %v956 = vld [vmem:[%s5] sm:$0x1]
        %957 = vadd.xlane.f32.xlu0 %v954
        %v958 = vpop.xlane.xlu0 %957
        %v959 = vrcp.pop 128.0
        %v960 = vmul.f32 %v958, %v959
        %v961 = vsub.f32 %v954, %v960
        %v962 = vmul.f32 %v961, %v961
        %963 = vadd.xlane.f32.xlu0 %v962
        %v964 = vpop.xlane.xlu0 %963
        %v965 = vmul.f32 %v964, %v959
        %v966 = vadd.f32 %v965, 1e-05
        %v967 = vrsqrt.pop %v966
        %v968 = vmul.f32 %v961, %v967
        %v970 = vlaneseq
        %v971 = vshrl.u32 %v970, 7
        %v972 = vsub.s32 0, %v971
        %v973 = vrot.slane %v955, %v972
        %v975 = vmul.f32 %v968, %v973
        %v977 = vlaneseq
        %v978 = vshrl.u32 %v977, 7
        %v979 = vsub.s32 0, %v978
        %v980 = vrot.slane %v956, %v979
        %v982 = vadd.f32 %v975, %v980
        %v983 = vpack.c.bf16 %v982, %v982
        %v984 = vadd.f32 %v950, %v952
        %v985 = vadd.f32 %v951, %v953
        %v986 = vld [vmem:[%s6] sm:$0x1]
        %v987 = vld [vmem:[%s7] sm:$0x1]
        %988 = vadd.xlane.f32.xlu0 %v984
        %v989 = vpop.xlane.xlu0 %988
        %990 = vadd.xlane.f32.xlu0 %v985
        %v991 = vpop.xlane.xlu0 %990
        %v992 = vmul.f32 %v989, %v959
        %v993 = vmul.f32 %v991, %v959
        %v994 = vsub.f32 %v984, %v992
        %v995 = vsub.f32 %v985, %v993
        %v996 = vmul.f32 %v994, %v994
        %v997 = vmul.f32 %v995, %v995
        %998 = vadd.xlane.f32.xlu0 %v996
        %v999 = vpop.xlane.xlu0 %998
        %1000 = vadd.xlane.f32.xlu0 %v997
        %v1001 = vpop.xlane.xlu0 %1000
        %v1002 = vmul.f32 %v999, %v959
        %v1003 = vmul.f32 %v1001, %v959
        %v1004 = vadd.f32 %v1002, 1e-05
        %v1005 = vadd.f32 %v1003, 1e-05
        %v1006 = vrsqrt.pop %v1004
        %v1007 = vrsqrt.pop %v1005
        %v1008 = vmul.f32 %v994, %v1006
        %v1009 = vmul.f32 %v995, %v1007
        %v1011 = vlaneseq
        %v1012 = vshrl.u32 %v1011, 7
        %v1013 = vsub.s32 0, %v1012
        %v1014 = vrot.slane %v986, %v1013
        %v1016 = vmul.f32 %v1008, %v1014
        %v1017 = vmul.f32 %v1009, %v1014
        %v1019 = vlaneseq
        %v1020 = vshrl.u32 %v1019, 7
        %v1021 = vsub.s32 0, %v1020
        %v1022 = vrot.slane %v987, %v1021
        %v1024 = vadd.f32 %v1016, %v1022
        %v1025 = vadd.f32 %v1017, %v1022
        %v1026 = vpack.c.bf16 %v1025, %v1024
        %v1027 = vld [vmem:[%s8] sm:$0x1]
        %v1028 = vld [vmem:[%s9] sm:$0x1]
        %1029 = vadd.xlane.f32.xlu0 %v950
        %v1030 = vpop.xlane.xlu0 %1029
        %1031 = vadd.xlane.f32.xlu0 %v951
        %v1032 = vpop.xlane.xlu0 %1031
        %v1033 = vmul.f32 %v1030, %v959
        %v1034 = vmul.f32 %v1032, %v959
        %v1035 = vsub.f32 %v950, %v1033
        %v1036 = vsub.f32 %v951, %v1034
        %v1037 = vmul.f32 %v1035, %v1035
        %v1038 = vmul.f32 %v1036, %v1036
        %1039 = vadd.xlane.f32.xlu0 %v1037
        %v1040 = vpop.xlane.xlu0 %1039
        %1041 = vadd.xlane.f32.xlu0 %v1038
        %v1042 = vpop.xlane.xlu0 %1041
        %v1043 = vmul.f32 %v1040, %v959
        %v1044 = vmul.f32 %v1042, %v959
        %v1045 = vadd.f32 %v1043, 1e-05
        %v1046 = vadd.f32 %v1044, 1e-05
        %v1047 = vrsqrt.pop %v1045
        %v1048 = vrsqrt.pop %v1046
        %v1049 = vmul.f32 %v1035, %v1047
        %v1050 = vmul.f32 %v1036, %v1048
        %v1052 = vlaneseq
        %v1053 = vshrl.u32 %v1052, 7
        %v1054 = vsub.s32 0, %v1053
        %v1055 = vrot.slane %v1027, %v1054
        %v1057 = vmul.f32 %v1049, %v1055
        %v1058 = vmul.f32 %v1050, %v1055
        %v1060 = vlaneseq
        %v1061 = vshrl.u32 %v1060, 7
        %v1062 = vsub.s32 0, %v1061
        %v1063 = vrot.slane %v1028, %v1062
        %v1065 = vadd.f32 %v1057, %v1063
        %v1066 = vadd.f32 %v1058, %v1063
        %v1067 = vpack.c.bf16 %v1066, %v1065
        %v1068 = vld [vmem:[#allocation10] sm:$0xf]
        %v1069 = vld [vmem:[#allocation10 + $0x4] sm:$0xf]
        %v1070 = vld [vmem:[#allocation10 + $0x8] sm:$0xf]
        %v1071 = vld [vmem:[#allocation10 + $0xc] sm:$0xf]
        %v1072 = vld [vmem:[#allocation10 + $0x10] sm:$0xf]
        %v1073 = vld [vmem:[#allocation10 + $0x14] sm:$0xf]
        %v1074 = vld [vmem:[#allocation10 + $0x18] sm:$0xf]
        %v1075 = vld [vmem:[#allocation10 + $0x1c] sm:$0xf]
        %v1076 = vld [vmem:[#allocation10 + $0x20] sm:$0xf]
        %v1077 = vld [vmem:[#allocation10 + $0x24] sm:$0xf]
        %v1078 = vld [vmem:[#allocation10 + $0x28] sm:$0xf]
        %v1079 = vld [vmem:[#allocation10 + $0x2c] sm:$0xf]
        %v1080 = vld [vmem:[#allocation10 + $0x30] sm:$0xf]
        %v1081 = vld [vmem:[#allocation10 + $0x34] sm:$0xf]
        %v1082 = vld [vmem:[#allocation10 + $0x38] sm:$0xf]
        %v1083 = vld [vmem:[#allocation10 + $0x3c] sm:$0xf]
        %v1100 = vunpack.c.l.b16 %v1068
        %v1101 = vunpack.c.l.b16 %v1069
        %v1102 = vunpack.c.l.b16 %v1070
        %v1103 = vunpack.c.l.b16 %v1071
        %v1104 = vunpack.c.l.b16 %v1072
        %v1105 = vunpack.c.l.b16 %v1073
        %v1106 = vunpack.c.l.b16 %v1074
        %v1107 = vunpack.c.l.b16 %v1075
        %v1108 = vunpack.c.l.b16 %v1076
        %v1109 = vunpack.c.l.b16 %v1077
        %v1110 = vunpack.c.l.b16 %v1078
        %v1111 = vunpack.c.l.b16 %v1079
        %v1112 = vunpack.c.l.b16 %v1080
        %v1113 = vunpack.c.l.b16 %v1081
        %v1114 = vunpack.c.l.b16 %v1082
        %v1115 = vunpack.c.l.b16 %v1083
        %v1116 = vpack.c.b16 %v1101, %v1100
        %v1117 = vpack.c.b16 %v1103, %v1102
        %v1118 = vpack.c.b16 %v1105, %v1104
        %v1119 = vpack.c.b16 %v1107, %v1106
        %v1120 = vpack.c.b16 %v1109, %v1108
        %v1121 = vpack.c.b16 %v1111, %v1110
        %v1122 = vpack.c.b16 %v1113, %v1112
        %v1123 = vpack.c.b16 %v1115, %v1114
        %1132 = vmatprep.subr.bf16.mxu0 0
        %1133 = vmatpush1.bf16.msra.mxu0 %v1116
        %1134 = vmatprep.subr.bf16.mxu0 0
        %1135 = vmatpush1.bf16.msra.mxu0 %v1117
        %1136 = vmatprep.subr.bf16.mxu0 0
        %1137 = vmatpush1.bf16.msra.mxu0 %v1118
        %1138 = vmatprep.subr.bf16.mxu0 0
        %1139 = vmatpush1.bf16.msra.mxu0 %v1119
        %1140 = vmatprep.subr.bf16.mxu0 0
        %1141 = vmatpush1.bf16.msra.mxu0 %v1120
        %1142 = vmatprep.subr.bf16.mxu0 0
        %1143 = vmatpush1.bf16.msra.mxu0 %v1121
        %1144 = vmatprep.subr.bf16.mxu0 0
        %1145 = vmatpush1.bf16.msra.mxu0 %v1122
        %1146 = vmatprep.subr.bf16.mxu0 0
        %1147 = vmatpush1.bf16.msra.mxu0 %v1123
        %1148 = vmatprep.subr.bf16.mxu0 0
        %1149 = vmatpush1.bf16.msra.mxu0 0
        %1150 = vmatprep.subr.bf16.mxu0 0
        %1151 = vmatpush1.bf16.msra.mxu0 0
        %1152 = vmatprep.subr.bf16.mxu0 0
        %1153 = vmatpush1.bf16.msra.mxu0 0
        %1154 = vmatprep.subr.bf16.mxu0 0
        %1155 = vmatpush1.bf16.msra.mxu0 0
        %1156 = vmatprep.subr.bf16.mxu0 0
        %1157 = vmatpush1.bf16.msra.mxu0 0
        %1158 = vmatprep.subr.bf16.mxu0 0
        %1159 = vmatpush1.bf16.msra.mxu0 0
        %1160 = vmatprep.subr.bf16.mxu0 0
        %1161 = vmatpush1.bf16.msra.mxu0 0
        %1162 = vmatprep.subr.bf16.mxu0 0
        %1163 = vmatpush1.bf16.msra.mxu0 0
        %1164 = vmatprep.mubr.bf16.mxu0 0
        %1165 = vmatmul.mubr.bf16.gmra.mrb[0].mxu0 %v983
        %v1166 = vpop.f32.mrb[0].mxu0
        %v1167 = vadd.f32 0.0, %v1166
        %v1168 = vpop.f32.mrb[0].mxu0
        %v1169 = vpop.f32.mrb[0].mxu0
        %v1170 = vpop.f32.mrb[0].mxu0
        %1171 = vdwg.mxu0
        %v1172 = vpack.c.bf16 %v1167, %v1167
        %v1173 = vld [vmem:[#allocation11] sm:$0xf]
        %v1174 = vld [vmem:[#allocation11 + $0x4] sm:$0xf]
        %v1175 = vld [vmem:[#allocation11 + $0x8] sm:$0xf]
        %v1176 = vld [vmem:[#allocation11 + $0xc] sm:$0xf]
        %v1177 = vld [vmem:[#allocation11 + $0x10] sm:$0xf]
        %v1178 = vld [vmem:[#allocation11 + $0x14] sm:$0xf]
        %v1179 = vld [vmem:[#allocation11 + $0x18] sm:$0xf]
        %v1180 = vld [vmem:[#allocation11 + $0x1c] sm:$0xf]
        %v1181 = vld [vmem:[#allocation11 + $0x20] sm:$0xf]
        %v1182 = vld [vmem:[#allocation11 + $0x24] sm:$0xf]
        %v1183 = vld [vmem:[#allocation11 + $0x28] sm:$0xf]
        %v1184 = vld [vmem:[#allocation11 + $0x2c] sm:$0xf]
        %v1185 = vld [vmem:[#allocation11 + $0x30] sm:$0xf]
        %v1186 = vld [vmem:[#allocation11 + $0x34] sm:$0xf]
        %v1187 = vld [vmem:[#allocation11 + $0x38] sm:$0xf]
        %v1188 = vld [vmem:[#allocation11 + $0x3c] sm:$0xf]
        %v1205 = vunpack.c.l.b16 %v1173
        %v1206 = vunpack.c.l.b16 %v1174
        %v1207 = vunpack.c.l.b16 %v1175
        %v1208 = vunpack.c.l.b16 %v1176
        %v1209 = vunpack.c.l.b16 %v1177
        %v1210 = vunpack.c.l.b16 %v1178
        %v1211 = vunpack.c.l.b16 %v1179
        %v1212 = vunpack.c.l.b16 %v1180
        %v1213 = vunpack.c.l.b16 %v1181
        %v1214 = vunpack.c.l.b16 %v1182
        %v1215 = vunpack.c.l.b16 %v1183
        %v1216 = vunpack.c.l.b16 %v1184
        %v1217 = vunpack.c.l.b16 %v1185
        %v1218 = vunpack.c.l.b16 %v1186
        %v1219 = vunpack.c.l.b16 %v1187
        %v1220 = vunpack.c.l.b16 %v1188
        %v1221 = vpack.c.b16 %v1206, %v1205
        %v1222 = vpack.c.b16 %v1208, %v1207
        %v1223 = vpack.c.b16 %v1210, %v1209
        %v1224 = vpack.c.b16 %v1212, %v1211
        %v1225 = vpack.c.b16 %v1214, %v1213
        %v1226 = vpack.c.b16 %v1216, %v1215
        %v1227 = vpack.c.b16 %v1218, %v1217
        %v1228 = vpack.c.b16 %v1220, %v1219
        %1237 = vmatprep.subr.bf16.mxu0 0
        %1238 = vmatpush1.bf16.msra.mxu0 %v1221
        %1239 = vmatprep.subr.bf16.mxu0 0
        %1240 = vmatpush1.bf16.msra.mxu0 %v1222
        %1241 = vmatprep.subr.bf16.mxu0 0
        %1242 = vmatpush1.bf16.msra.mxu0 %v1223
        %1243 = vmatprep.subr.bf16.mxu0 0
        %1244 = vmatpush1.bf16.msra.mxu0 %v1224
        %1245 = vmatprep.subr.bf16.mxu0 0
        %1246 = vmatpush1.bf16.msra.mxu0 %v1225
        %1247 = vmatprep.subr.bf16.mxu0 0
        %1248 = vmatpush1.bf16.msra.mxu0 %v1226
        %1249 = vmatprep.subr.bf16.mxu0 0
        %1250 = vmatpush1.bf16.msra.mxu0 %v1227
        %1251 = vmatprep.subr.bf16.mxu0 0
        %1252 = vmatpush1.bf16.msra.mxu0 %v1228
        %1253 = vmatprep.subr.bf16.mxu0 0
        %1254 = vmatpush1.bf16.msra.mxu0 0
        %1255 = vmatprep.subr.bf16.mxu0 0
        %1256 = vmatpush1.bf16.msra.mxu0 0
        %1257 = vmatprep.subr.bf16.mxu0 0
        %1258 = vmatpush1.bf16.msra.mxu0 0
        %1259 = vmatprep.subr.bf16.mxu0 0
        %1260 = vmatpush1.bf16.msra.mxu0 0
        %1261 = vmatprep.subr.bf16.mxu0 0
        %1262 = vmatpush1.bf16.msra.mxu0 0
        %1263 = vmatprep.subr.bf16.mxu0 0
        %1264 = vmatpush1.bf16.msra.mxu0 0
        %1265 = vmatprep.subr.bf16.mxu0 0
        %1266 = vmatpush1.bf16.msra.mxu0 0
        %1267 = vmatprep.subr.bf16.mxu0 0
        %1268 = vmatpush1.bf16.msra.mxu0 0
        %1269 = vmatprep.mubr.bf16.mxu0 0
        %1270 = vmatmul.mubr.bf16.gmra.mrb[0].mxu0 %v1026
        %v1271 = vpop.f32.mrb[0].mxu0
        %v1272 = vadd.f32 0.0, %v1271
        %v1273 = vpop.f32.mrb[0].mxu0
        %v1274 = vpop.f32.mrb[0].mxu0
        %v1275 = vadd.f32 0.0, %v1274
        %v1276 = vpop.f32.mrb[0].mxu0
        %1277 = vdwg.mxu0
        %v1278 = vpack.c.bf16 %v1275, %v1272
        %v1279 = vld [vmem:[#allocation13] sm:$0xf]
        %v1280 = vld [vmem:[#allocation13 + $0x4] sm:$0xf]
        %v1281 = vld [vmem:[#allocation13 + $0x8] sm:$0xf]
        %v1282 = vld [vmem:[#allocation13 + $0xc] sm:$0xf]
        %v1283 = vld [vmem:[#allocation13 + $0x10] sm:$0xf]
        %v1284 = vld [vmem:[#allocation13 + $0x14] sm:$0xf]
        %v1285 = vld [vmem:[#allocation13 + $0x18] sm:$0xf]
        %v1286 = vld [vmem:[#allocation13 + $0x1c] sm:$0xf]
        %v1287 = vld [vmem:[#allocation13 + $0x20] sm:$0xf]
        %v1288 = vld [vmem:[#allocation13 + $0x24] sm:$0xf]
        %v1289 = vld [vmem:[#allocation13 + $0x28] sm:$0xf]
        %v1290 = vld [vmem:[#allocation13 + $0x2c] sm:$0xf]
        %v1291 = vld [vmem:[#allocation13 + $0x30] sm:$0xf]
        %v1292 = vld [vmem:[#allocation13 + $0x34] sm:$0xf]
        %v1293 = vld [vmem:[#allocation13 + $0x38] sm:$0xf]
        %v1294 = vld [vmem:[#allocation13 + $0x3c] sm:$0xf]
        %v1311 = vunpack.c.l.b16 %v1279
        %v1312 = vunpack.c.l.b16 %v1280
        %v1313 = vunpack.c.l.b16 %v1281
        %v1314 = vunpack.c.l.b16 %v1282
        %v1315 = vunpack.c.l.b16 %v1283
        %v1316 = vunpack.c.l.b16 %v1284
        %v1317 = vunpack.c.l.b16 %v1285
        %v1318 = vunpack.c.l.b16 %v1286
        %v1319 = vunpack.c.l.b16 %v1287
        %v1320 = vunpack.c.l.b16 %v1288
        %v1321 = vunpack.c.l.b16 %v1289
        %v1322 = vunpack.c.l.b16 %v1290
        %v1323 = vunpack.c.l.b16 %v1291
        %v1324 = vunpack.c.l.b16 %v1292
        %v1325 = vunpack.c.l.b16 %v1293
        %v1326 = vunpack.c.l.b16 %v1294
        %v1327 = vpack.c.b16 %v1312, %v1311
        %v1328 = vpack.c.b16 %v1314, %v1313
        %v1329 = vpack.c.b16 %v1316, %v1315
        %v1330 = vpack.c.b16 %v1318, %v1317
        %v1331 = vpack.c.b16 %v1320, %v1319
        %v1332 = vpack.c.b16 %v1322, %v1321
        %v1333 = vpack.c.b16 %v1324, %v1323
        %v1334 = vpack.c.b16 %v1326, %v1325
        %1343 = vmatprep.subr.bf16.mxu0 0
        %1344 = vmatpush1.bf16.msra.mxu0 %v1327
        %1345 = vmatprep.subr.bf16.mxu0 0
        %1346 = vmatpush1.bf16.msra.mxu0 %v1328
        %1347 = vmatprep.subr.bf16.mxu0 0
        %1348 = vmatpush1.bf16.msra.mxu0 %v1329
        %1349 = vmatprep.subr.bf16.mxu0 0
        %1350 = vmatpush1.bf16.msra.mxu0 %v1330
        %1351 = vmatprep.subr.bf16.mxu0 0
        %1352 = vmatpush1.bf16.msra.mxu0 %v1331
        %1353 = vmatprep.subr.bf16.mxu0 0
        %1354 = vmatpush1.bf16.msra.mxu0 %v1332
        %1355 = vmatprep.subr.bf16.mxu0 0
        %1356 = vmatpush1.bf16.msra.mxu0 %v1333
        %1357 = vmatprep.subr.bf16.mxu0 0
        %1358 = vmatpush1.bf16.msra.mxu0 %v1334
        %1359 = vmatprep.subr.bf16.mxu0 0
        %1360 = vmatpush1.bf16.msra.mxu0 0
        %1361 = vmatprep.subr.bf16.mxu0 0
        %1362 = vmatpush1.bf16.msra.mxu0 0
        %1363 = vmatprep.subr.bf16.mxu0 0
        %1364 = vmatpush1.bf16.msra.mxu0 0
        %1365 = vmatprep.subr.bf16.mxu0 0
        %1366 = vmatpush1.bf16.msra.mxu0 0
        %1367 = vmatprep.subr.bf16.mxu0 0
        %1368 = vmatpush1.bf16.msra.mxu0 0
        %1369 = vmatprep.subr.bf16.mxu0 0
        %1370 = vmatpush1.bf16.msra.mxu0 0
        %1371 = vmatprep.subr.bf16.mxu0 0
        %1372 = vmatpush1.bf16.msra.mxu0 0
        %1373 = vmatprep.subr.bf16.mxu0 0
        %1374 = vmatpush1.bf16.msra.mxu0 0
        %1375 = vmatprep.mubr.bf16.mxu0 0
        %1376 = vmatmul.mubr.bf16.gmra.mrb[0].mxu0 %v1067
        %v1377 = vpop.f32.mrb[0].mxu0
        %v1378 = vadd.f32 0.0, %v1377
        %v1379 = vpop.f32.mrb[0].mxu0
        %v1380 = vpop.f32.mrb[0].mxu0
        %v1381 = vadd.f32 0.0, %v1380
        %v1382 = vpop.f32.mrb[0].mxu0
        %1383 = vdwg.mxu0
        %v1384 = vpack.c.bf16 %v1381, %v1378
        %1386 = vrot.lane.b32.xlu0 %v1172, 96
        %v1387 = vpop.permute.xlu0 %1386
        %1388 = vrot.lane.b32.xlu0 %v1172, 64
        %v1389 = vpop.permute.xlu0 %1388
        %1390 = vrot.lane.b32.xlu0 %v1172, 32
        %v1391 = vpop.permute.xlu0 %1390
        %1393 = vrot.lane.b32.xlu0 %v1278, 96
        %v1394 = vpop.permute.xlu0 %1393
        %1395 = vrot.lane.b32.xlu0 %v1278, 64
        %v1396 = vpop.permute.xlu0 %1395
        %1397 = vrot.lane.b32.xlu0 %v1278, 32
        %v1398 = vpop.permute.xlu0 %1397
        %1400 = vrot.lane.b32.xlu0 %v1384, 96
        %v1401 = vpop.permute.xlu0 %1400
        %1403 = vrot.lane.b32.xlu0 %v1384, 64
        %v1404 = vpop.permute.xlu0 %1403
        %1406 = vrot.lane.b32.xlu0 %v1384, 32
        %v1407 = vpop.permute.xlu0 %1406
        %vm1409 = vcmask 261120
        %v1411 = vsel %vm1409, %v1172, 0
        %v1414 = vsel %vm1409, %v1278, 0
        %1416 = vmatprep.subr.bf16.mxu0 0
        %1417 = vmatpush1.bf16.xpose.msra.mxu0 %v1414
        %1418 = vmatprep.subr.bf16.mxu0 0
        %1419 = vmatpush1.bf16.xpose.msra.mxu0 0
        %1420 = vmatprep.subr.bf16.mxu0 0
        %1421 = vmatpush1.bf16.xpose.msra.mxu0 0
        %1422 = vmatprep.subr.bf16.mxu0 0
        %1423 = vmatpush1.bf16.xpose.msra.mxu0 0
        %1424 = vmatprep.subr.bf16.mxu0 0
        %1425 = vmatpush1.bf16.xpose.msra.mxu0 0
        %1426 = vmatprep.subr.bf16.mxu0 0
        %1427 = vmatpush1.bf16.xpose.msra.mxu0 0
        %1428 = vmatprep.subr.bf16.mxu0 0
        %1429 = vmatpush1.bf16.xpose.msra.mxu0 0
        %1430 = vmatprep.subr.bf16.mxu0 0
        %1431 = vmatpush1.bf16.xpose.msra.mxu0 0
        %1432 = vmatprep.subr.bf16.mxu0 0
        %1433 = vmatpush1.bf16.xpose.msra.mxu0 0
        %1434 = vmatprep.subr.bf16.mxu0 0
        %1435 = vmatpush1.bf16.xpose.msra.mxu0 0
        %1436 = vmatprep.subr.bf16.mxu0 0
        %1437 = vmatpush1.bf16.xpose.msra.mxu0 0
        %1438 = vmatprep.subr.bf16.mxu0 0
        %1439 = vmatpush1.bf16.xpose.msra.mxu0 0
        %1440 = vmatprep.subr.bf16.mxu0 0
        %1441 = vmatpush1.bf16.xpose.msra.mxu0 0
        %1442 = vmatprep.subr.bf16.mxu0 0
        %1443 = vmatpush1.bf16.xpose.msra.mxu0 0
        %1444 = vmatprep.subr.bf16.mxu0 0
        %1445 = vmatpush1.bf16.xpose.msra.mxu0 0
        %1446 = vmatprep.subr.bf16.mxu0 0
        %1447 = vmatpush1.bf16.xpose.msra.mxu0 0
        %1448 = vmatprep.mubr.bf16.mxu0 0
        %1449 = vmatmul.mubr.bf16.gmra.mrb[0].mxu0 %v1411
        %v1450 = vpop.f32.mrb[0].mxu0
        %v1451 = vadd.f32 0.0, %v1450
        %v1452 = vpop.f32.mrb[0].mxu0
        %v1453 = vpop.f32.mrb[0].mxu0
        %v1454 = vpop.f32.mrb[0].mxu0
        %1455 = vdwg.mxu0
        %v1457 = vsel %vm1409, %v1387, 0
        %v1460 = vsel %vm1409, %v1394, 0
        %1462 = vmatprep.subr.bf16.mxu0 0
        %1463 = vmatpush1.bf16.xpose.msra.mxu0 %v1460
        %1464 = vmatprep.subr.bf16.mxu0 0
        %1465 = vmatpush1.bf16.xpose.msra.mxu0 0
        %1466 = vmatprep.subr.bf16.mxu0 0
        %1467 = vmatpush1.bf16.xpose.msra.mxu0 0
        %1468 = vmatprep.subr.bf16.mxu0 0
        %1469 = vmatpush1.bf16.xpose.msra.mxu0 0
        %1470 = vmatprep.subr.bf16.mxu0 0
        %1471 = vmatpush1.bf16.xpose.msra.mxu0 0
        %1472 = vmatprep.subr.bf16.mxu0 0
        %1473 = vmatpush1.bf16.xpose.msra.mxu0 0
        %1474 = vmatprep.subr.bf16.mxu0 0
        %1475 = vmatpush1.bf16.xpose.msra.mxu0 0
        %1476 = vmatprep.subr.bf16.mxu0 0
        %1477 = vmatpush1.bf16.xpose.msra.mxu0 0
        %1478 = vmatprep.subr.bf16.mxu0 0
        %1479 = vmatpush1.bf16.xpose.msra.mxu0 0
        %1480 = vmatprep.subr.bf16.mxu0 0
        %1481 = vmatpush1.bf16.xpose.msra.mxu0 0
        %1482 = vmatprep.subr.bf16.mxu0 0
        %1483 = vmatpush1.bf16.xpose.msra.mxu0 0
        %1484 = vmatprep.subr.bf16.mxu0 0
        %1485 = vmatpush1.bf16.xpose.msra.mxu0 0
        %1486 = vmatprep.subr.bf16.mxu0 0
        %1487 = vmatpush1.bf16.xpose.msra.mxu0 0
        %1488 = vmatprep.subr.bf16.mxu0 0
        %1489 = vmatpush1.bf16.xpose.msra.mxu0 0
        %1490 = vmatprep.subr.bf16.mxu0 0
        %1491 = vmatpush1.bf16.xpose.msra.mxu0 0
        %1492 = vmatprep.subr.bf16.mxu0 0
        %1493 = vmatpush1.bf16.xpose.msra.mxu0 0
        %1494 = vmatprep.mubr.bf16.mxu0 0
        %1495 = vmatmul.mubr.bf16.gmra.mrb[0].mxu0 %v1457
        %v1496 = vpop.f32.mrb[0].mxu0
        %v1497 = vadd.f32 0.0, %v1496
        %v1498 = vpop.f32.mrb[0].mxu0
        %v1499 = vpop.f32.mrb[0].mxu0
        %v1500 = vpop.f32.mrb[0].mxu0
        %1501 = vdwg.mxu0
        %v1503 = vsel %vm1409, %v1389, 0
        %v1506 = vsel %vm1409, %v1396, 0
        %1508 = vmatprep.subr.bf16.mxu0 0
        %1509 = vmatpush1.bf16.xpose.msra.mxu0 %v1506
        %1510 = vmatprep.subr.bf16.mxu0 0
        %1511 = vmatpush1.bf16.xpose.msra.mxu0 0
        %1512 = vmatprep.subr.bf16.mxu0 0
        %1513 = vmatpush1.bf16.xpose.msra.mxu0 0
        %1514 = vmatprep.subr.bf16.mxu0 0
        %1515 = vmatpush1.bf16.xpose.msra.mxu0 0
        %1516 = vmatprep.subr.bf16.mxu0 0
        %1517 = vmatpush1.bf16.xpose.msra.mxu0 0
        %1518 = vmatprep.subr.bf16.mxu0 0
        %1519 = vmatpush1.bf16.xpose.msra.mxu0 0
        %1520 = vmatprep.subr.bf16.mxu0 0
        %1521 = vmatpush1.bf16.xpose.msra.mxu0 0
        %1522 = vmatprep.subr.bf16.mxu0 0
        %1523 = vmatpush1.bf16.xpose.msra.mxu0 0
        %1524 = vmatprep.subr.bf16.mxu0 0
        %1525 = vmatpush1.bf16.xpose.msra.mxu0 0
        %1526 = vmatprep.subr.bf16.mxu0 0
        %1527 = vmatpush1.bf16.xpose.msra.mxu0 0
        %1528 = vmatprep.subr.bf16.mxu0 0
        %1529 = vmatpush1.bf16.xpose.msra.mxu0 0
        %1530 = vmatprep.subr.bf16.mxu0 0
        %1531 = vmatpush1.bf16.xpose.msra.mxu0 0
        %1532 = vmatprep.subr.bf16.mxu0 0
        %1533 = vmatpush1.bf16.xpose.msra.mxu0 0
        %1534 = vmatprep.subr.bf16.mxu0 0
        %1535 = vmatpush1.bf16.xpose.msra.mxu0 0
        %1536 = vmatprep.subr.bf16.mxu0 0
        %1537 = vmatpush1.bf16.xpose.msra.mxu0 0
        %1538 = vmatprep.subr.bf16.mxu0 0
        %1539 = vmatpush1.bf16.xpose.msra.mxu0 0
        %1540 = vmatprep.mubr.bf16.mxu0 0
        %1541 = vmatmul.mubr.bf16.gmra.mrb[0].mxu0 %v1503
        %v1542 = vpop.f32.mrb[0].mxu0
        %v1543 = vadd.f32 0.0, %v1542
        %v1544 = vpop.f32.mrb[0].mxu0
        %v1545 = vpop.f32.mrb[0].mxu0
        %v1546 = vpop.f32.mrb[0].mxu0
        %1547 = vdwg.mxu0
        %v1549 = vsel %vm1409, %v1391, 0
        %v1552 = vsel %vm1409, %v1398, 0
        %1554 = vmatprep.subr.bf16.mxu0 0
        %1555 = vmatpush1.bf16.xpose.msra.mxu0 %v1552
        %1556 = vmatprep.subr.bf16.mxu0 0
        %1557 = vmatpush1.bf16.xpose.msra.mxu0 0
        %1558 = vmatprep.subr.bf16.mxu0 0
        %1559 = vmatpush1.bf16.xpose.msra.mxu0 0
        %1560 = vmatprep.subr.bf16.mxu0 0
        %1561 = vmatpush1.bf16.xpose.msra.mxu0 0
        %1562 = vmatprep.subr.bf16.mxu0 0
        %1563 = vmatpush1.bf16.xpose.msra.mxu0 0
        %1564 = vmatprep.subr.bf16.mxu0 0
        %1565 = vmatpush1.bf16.xpose.msra.mxu0 0
        %1566 = vmatprep.subr.bf16.mxu0 0
        %1567 = vmatpush1.bf16.xpose.msra.mxu0 0
        %1568 = vmatprep.subr.bf16.mxu0 0
        %1569 = vmatpush1.bf16.xpose.msra.mxu0 0
        %1570 = vmatprep.subr.bf16.mxu0 0
        %1571 = vmatpush1.bf16.xpose.msra.mxu0 0
        %1572 = vmatprep.subr.bf16.mxu0 0
        %1573 = vmatpush1.bf16.xpose.msra.mxu0 0
        %1574 = vmatprep.subr.bf16.mxu0 0
        %1575 = vmatpush1.bf16.xpose.msra.mxu0 0
        %1576 = vmatprep.subr.bf16.mxu0 0
        %1577 = vmatpush1.bf16.xpose.msra.mxu0 0
        %1578 = vmatprep.subr.bf16.mxu0 0
        %1579 = vmatpush1.bf16.xpose.msra.mxu0 0
        %1580 = vmatprep.subr.bf16.mxu0 0
        %1581 = vmatpush1.bf16.xpose.msra.mxu0 0
        %1582 = vmatprep.subr.bf16.mxu0 0
        %1583 = vmatpush1.bf16.xpose.msra.mxu0 0
        %1584 = vmatprep.subr.bf16.mxu0 0
        %1585 = vmatpush1.bf16.xpose.msra.mxu0 0
        %1586 = vmatprep.mubr.bf16.mxu0 0
        %1587 = vmatmul.mubr.bf16.gmra.mrb[0].mxu0 %v1549
        %v1588 = vpop.f32.mrb[0].mxu0
        %v1589 = vadd.f32 0.0, %v1588
        %v1590 = vpop.f32.mrb[0].mxu0
        %v1591 = vpop.f32.mrb[0].mxu0
        %v1592 = vpop.f32.mrb[0].mxu0
        %1593 = vdwg.mxu0
        %vm1594 = vcmask 130048
        %v1595 = vsel %vm1594, %v1451, -inf
        %1596 = vmax.xlane.f32.xlu0 %v1595
        %v1597 = vpop.xlane.xlu0 %1596
        %v1598 = vsel %vm1594, %v1497, -inf
        %1599 = vmax.xlane.f32.xlu0 %v1598
        %v1600 = vpop.xlane.xlu0 %1599
        %v1601 = vsel %vm1594, %v1543, -inf
        %1602 = vmax.xlane.f32.xlu0 %v1601
        %v1603 = vpop.xlane.xlu0 %1602
        %v1604 = vsel %vm1594, %v1589, -inf
        %1605 = vmax.xlane.f32.xlu0 %v1604
        %v1606 = vpop.xlane.xlu0 %1605
        %v1607 = vsub.f32 %v1451, %v1597
        %v1608 = vsub.f32 %v1497, %v1600
        %v1609 = vsub.f32 %v1543, %v1603
        %v1610 = vsub.f32 %v1589, %v1606
        %v1611 = vmul.f32 %v1607, 1.442695
        %v1612 = vpow.pop %v1611
        %v1613 = vmul.f32 %v1608, 1.442695
        %v1614 = vpow.pop %v1613
        %v1615 = vmul.f32 %v1609, 1.442695
        %v1616 = vpow.pop %v1615
        %v1617 = vmul.f32 %v1610, 1.442695
        %v1618 = vpow.pop %v1617
        %v1619 = vsel %vm1594, %v1612, 0.0
        %1620 = vadd.xlane.f32.xlu0 %v1619
        %v1621 = vpop.xlane.xlu0 %1620
        %v1622 = vsel %vm1594, %v1614, 0.0
        %1623 = vadd.xlane.f32.xlu0 %v1622
        %v1624 = vpop.xlane.xlu0 %1623
        %v1625 = vsel %vm1594, %v1616, 0.0
        %1626 = vadd.xlane.f32.xlu0 %v1625
        %v1627 = vpop.xlane.xlu0 %1626
        %v1628 = vsel %vm1594, %v1618, 0.0
        %1629 = vadd.xlane.f32.xlu0 %v1628
        %v1630 = vpop.xlane.xlu0 %1629
        %v1631 = vrcp.pop %v1621
        %v1632 = vmul.f32 %v1612, %v1631
        %v1633 = vrcp.pop %v1624
        %v1634 = vmul.f32 %v1614, %v1633
        %v1635 = vrcp.pop %v1627
        %v1636 = vmul.f32 %v1616, %v1635
        %v1637 = vrcp.pop %v1630
        %v1638 = vmul.f32 %v1618, %v1637
        %v1639 = vpack.c.bf16 %v1632, %v1632
        %v1640 = vpack.c.bf16 %v1634, %v1634
        %v1641 = vpack.c.bf16 %v1636, %v1636
        %v1642 = vpack.c.bf16 %v1638, %v1638
        %v1644 = vsel %vm1594, %v1639, 0
        %1646 = vmatprep.subr.bf16.mxu0 0
        %1647 = vmatpush1.bf16.msra.mxu0 %v1384
        %1648 = vmatprep.subr.bf16.mxu0 0
        %1649 = vmatpush1.bf16.msra.mxu0 0
        %1650 = vmatprep.subr.bf16.mxu0 0
        %1651 = vmatpush1.bf16.msra.mxu0 0
        %1652 = vmatprep.subr.bf16.mxu0 0
        %1653 = vmatpush1.bf16.msra.mxu0 0
        %1654 = vmatprep.subr.bf16.mxu0 0
        %1655 = vmatpush1.bf16.msra.mxu0 0
        %1656 = vmatprep.subr.bf16.mxu0 0
        %1657 = vmatpush1.bf16.msra.mxu0 0
        %1658 = vmatprep.subr.bf16.mxu0 0
        %1659 = vmatpush1.bf16.msra.mxu0 0
        %1660 = vmatprep.subr.bf16.mxu0 0
        %1661 = vmatpush1.bf16.msra.mxu0 0
        %1662 = vmatprep.subr.bf16.mxu0 0
        %1663 = vmatpush1.bf16.msra.mxu0 0
        %1664 = vmatprep.subr.bf16.mxu0 0
        %1665 = vmatpush1.bf16.msra.mxu0 0
        %1666 = vmatprep.subr.bf16.mxu0 0
        %1667 = vmatpush1.bf16.msra.mxu0 0
        %1668 = vmatprep.subr.bf16.mxu0 0
        %1669 = vmatpush1.bf16.msra.mxu0 0
        %1670 = vmatprep.subr.bf16.mxu0 0
        %1671 = vmatpush1.bf16.msra.mxu0 0
        %1672 = vmatprep.subr.bf16.mxu0 0
        %1673 = vmatpush1.bf16.msra.mxu0 0
        %1674 = vmatprep.subr.bf16.mxu0 0
        %1675 = vmatpush1.bf16.msra.mxu0 0
        %1676 = vmatprep.subr.bf16.mxu0 0
        %1677 = vmatpush1.bf16.msra.mxu0 0
        %1678 = vmatprep.mubr.bf16.mxu0 0
        %1679 = vmatmul.mubr.bf16.gmra.mrb[0].mxu0 %v1644
        %v1680 = vpop.f32.mrb[0].mxu0
        %v1681 = vadd.f32 0.0, %v1680
        %v1682 = vpop.f32.mrb[0].mxu0
        %v1683 = vpop.f32.mrb[0].mxu0
        %v1684 = vpop.f32.mrb[0].mxu0
        %1685 = vdwg.mxu0
        %v1687 = vsel %vm1594, %v1640, 0
        %1689 = vmatprep.subr.bf16.mxu0 0
        %1690 = vmatpush1.bf16.msra.mxu0 %v1401
        %1691 = vmatprep.subr.bf16.mxu0 0
        %1692 = vmatpush1.bf16.msra.mxu0 0
        %1693 = vmatprep.subr.bf16.mxu0 0
        %1694 = vmatpush1.bf16.msra.mxu0 0
        %1695 = vmatprep.subr.bf16.mxu0 0
        %1696 = vmatpush1.bf16.msra.mxu0 0
        %1697 = vmatprep.subr.bf16.mxu0 0
        %1698 = vmatpush1.bf16.msra.mxu0 0
        %1699 = vmatprep.subr.bf16.mxu0 0
        %1700 = vmatpush1.bf16.msra.mxu0 0
        %1701 = vmatprep.subr.bf16.mxu0 0
        %1702 = vmatpush1.bf16.msra.mxu0 0
        %1703 = vmatprep.subr.bf16.mxu0 0
        %1704 = vmatpush1.bf16.msra.mxu0 0
        %1705 = vmatprep.subr.bf16.mxu0 0
        %1706 = vmatpush1.bf16.msra.mxu0 0
        %1707 = vmatprep.subr.bf16.mxu0 0
        %1708 = vmatpush1.bf16.msra.mxu0 0
        %1709 = vmatprep.subr.bf16.mxu0 0
        %1710 = vmatpush1.bf16.msra.mxu0 0
        %1711 = vmatprep.subr.bf16.mxu0 0
        %1712 = vmatpush1.bf16.msra.mxu0 0
        %1713 = vmatprep.subr.bf16.mxu0 0
        %1714 = vmatpush1.bf16.msra.mxu0 0
        %1715 = vmatprep.subr.bf16.mxu0 0
        %1716 = vmatpush1.bf16.msra.mxu0 0
        %1717 = vmatprep.subr.bf16.mxu0 0
        %1718 = vmatpush1.bf16.msra.mxu0 0
        %1719 = vmatprep.subr.bf16.mxu0 0
        %1720 = vmatpush1.bf16.msra.mxu0 0
        %1721 = vmatprep.mubr.bf16.mxu0 0
        %1722 = vmatmul.mubr.bf16.gmra.mrb[0].mxu0 %v1687
        %v1723 = vpop.f32.mrb[0].mxu0
        %v1724 = vadd.f32 0.0, %v1723
        %v1725 = vpop.f32.mrb[0].mxu0
        %v1726 = vpop.f32.mrb[0].mxu0
        %v1727 = vpop.f32.mrb[0].mxu0
        %1728 = vdwg.mxu0
        %v1730 = vsel %vm1594, %v1641, 0
        %1732 = vmatprep.subr.bf16.mxu0 0
        %1733 = vmatpush1.bf16.msra.mxu0 %v1404
        %1734 = vmatprep.subr.bf16.mxu0 0
        %1735 = vmatpush1.bf16.msra.mxu0 0
        %1736 = vmatprep.subr.bf16.mxu0 0
        %1737 = vmatpush1.bf16.msra.mxu0 0
        %1738 = vmatprep.subr.bf16.mxu0 0
        %1739 = vmatpush1.bf16.msra.mxu0 0
        %1740 = vmatprep.subr.bf16.mxu0 0
        %1741 = vmatpush1.bf16.msra.mxu0 0
        %1742 = vmatprep.subr.bf16.mxu0 0
        %1743 = vmatpush1.bf16.msra.mxu0 0
        %1744 = vmatprep.subr.bf16.mxu0 0
        %1745 = vmatpush1.bf16.msra.mxu0 0
        %1746 = vmatprep.subr.bf16.mxu0 0
        %1747 = vmatpush1.bf16.msra.mxu0 0
        %1748 = vmatprep.subr.bf16.mxu0 0
        %1749 = vmatpush1.bf16.msra.mxu0 0
        %1750 = vmatprep.subr.bf16.mxu0 0
        %1751 = vmatpush1.bf16.msra.mxu0 0
        %1752 = vmatprep.subr.bf16.mxu0 0
        %1753 = vmatpush1.bf16.msra.mxu0 0
        %1754 = vmatprep.subr.bf16.mxu0 0
        %1755 = vmatpush1.bf16.msra.mxu0 0
        %1756 = vmatprep.subr.bf16.mxu0 0
        %1757 = vmatpush1.bf16.msra.mxu0 0
        %1758 = vmatprep.subr.bf16.mxu0 0
        %1759 = vmatpush1.bf16.msra.mxu0 0
        %1760 = vmatprep.subr.bf16.mxu0 0
        %1761 = vmatpush1.bf16.msra.mxu0 0
        %1762 = vmatprep.subr.bf16.mxu0 0
        %1763 = vmatpush1.bf16.msra.mxu0 0
        %1764 = vmatprep.mubr.bf16.mxu0 0
        %1765 = vmatmul.mubr.bf16.gmra.mrb[0].mxu0 %v1730
        %v1766 = vpop.f32.mrb[0].mxu0
        %v1767 = vadd.f32 0.0, %v1766
        %v1768 = vpop.f32.mrb[0].mxu0
        %v1769 = vpop.f32.mrb[0].mxu0
        %v1770 = vpop.f32.mrb[0].mxu0
        %1771 = vdwg.mxu0
        %v1773 = vsel %vm1594, %v1642, 0
        %1775 = vmatprep.subr.bf16.mxu0 0
        %1776 = vmatpush1.bf16.msra.mxu0 %v1407
        %1777 = vmatprep.subr.bf16.mxu0 0
        %1778 = vmatpush1.bf16.msra.mxu0 0
        %1779 = vmatprep.subr.bf16.mxu0 0
        %1780 = vmatpush1.bf16.msra.mxu0 0
        %1781 = vmatprep.subr.bf16.mxu0 0
        %1782 = vmatpush1.bf16.msra.mxu0 0
        %1783 = vmatprep.subr.bf16.mxu0 0
        %1784 = vmatpush1.bf16.msra.mxu0 0
        %1785 = vmatprep.subr.bf16.mxu0 0
        %1786 = vmatpush1.bf16.msra.mxu0 0
        %1787 = vmatprep.subr.bf16.mxu0 0
        %1788 = vmatpush1.bf16.msra.mxu0 0
        %1789 = vmatprep.subr.bf16.mxu0 0
        %1790 = vmatpush1.bf16.msra.mxu0 0
        %1791 = vmatprep.subr.bf16.mxu0 0
        %1792 = vmatpush1.bf16.msra.mxu0 0
        %1793 = vmatprep.subr.bf16.mxu0 0
        %1794 = vmatpush1.bf16.msra.mxu0 0
        %1795 = vmatprep.subr.bf16.mxu0 0
        %1796 = vmatpush1.bf16.msra.mxu0 0
        %1797 = vmatprep.subr.bf16.mxu0 0
        %1798 = vmatpush1.bf16.msra.mxu0 0
        %1799 = vmatprep.subr.bf16.mxu0 0
        %1800 = vmatpush1.bf16.msra.mxu0 0
        %1801 = vmatprep.subr.bf16.mxu0 0
        %1802 = vmatpush1.bf16.msra.mxu0 0
        %1803 = vmatprep.subr.bf16.mxu0 0
        %1804 = vmatpush1.bf16.msra.mxu0 0
        %1805 = vmatprep.subr.bf16.mxu0 0
        %1806 = vmatpush1.bf16.msra.mxu0 0
        %1807 = vmatprep.mubr.bf16.mxu0 0
        %1808 = vmatmul.mubr.bf16.gmra.mrb[0].mxu0 %v1773
        %v1809 = vpop.f32.mrb[0].mxu0
        %v1810 = vadd.f32 0.0, %v1809
        %v1811 = vpop.f32.mrb[0].mxu0
        %v1812 = vpop.f32.mrb[0].mxu0
        %v1813 = vpop.f32.mrb[0].mxu0
        %1814 = vdwg.mxu0
        %v1815 = vpack.c.bf16 %v1681, %v1681
        %v1816 = vpack.c.bf16 %v1724, %v1724
        %v1817 = vpack.c.bf16 %v1767, %v1767
        %v1818 = vpack.c.bf16 %v1810, %v1810
        %1820 = vrot.lane.b32.xlu0 %v1816, 32
        %v1821 = vpop.permute.xlu0 %1820
        %1823 = vrot.lane.b32.xlu0 %v1817, 64
        %v1824 = vpop.permute.xlu0 %1823
        %1826 = vrot.lane.b32.xlu0 %v1818, 96
        %v1827 = vpop.permute.xlu0 %1826
        %v1830 = vsel %vm1409, %v1815, %v1821
        %vm1831 = vcmask 523264
        %v1833 = vsel %vm1831, %v1830, %v1824
        %vm1834 = vcmask 785408
        %v1836 = vsel %vm1834, %v1833, %v1827
        %v1838 = vld [vmem:[#allocation14] sm:$0xf]
        %v1839 = vld [vmem:[#allocation14 + $0x4] sm:$0xf]
        %v1840 = vld [vmem:[#allocation14 + $0x8] sm:$0xf]
        %v1841 = vld [vmem:[#allocation14 + $0xc] sm:$0xf]
        %v1842 = vld [vmem:[#allocation14 + $0x10] sm:$0xf]
        %v1843 = vld [vmem:[#allocation14 + $0x14] sm:$0xf]
        %v1844 = vld [vmem:[#allocation14 + $0x18] sm:$0xf]
        %v1845 = vld [vmem:[#allocation14 + $0x1c] sm:$0xf]
        %v1846 = vld [vmem:[#allocation14 + $0x20] sm:$0xf]
        %v1847 = vld [vmem:[#allocation14 + $0x24] sm:$0xf]
        %v1848 = vld [vmem:[#allocation14 + $0x28] sm:$0xf]
        %v1849 = vld [vmem:[#allocation14 + $0x2c] sm:$0xf]
        %v1850 = vld [vmem:[#allocation14 + $0x30] sm:$0xf]
        %v1851 = vld [vmem:[#allocation14 + $0x34] sm:$0xf]
        %v1852 = vld [vmem:[#allocation14 + $0x38] sm:$0xf]
        %v1853 = vld [vmem:[#allocation14 + $0x3c] sm:$0xf]
        %v1854 = vld [vmem:[%s14] sm:$0x1]
        %v1856 = vlaneseq
        %v1857 = vshrl.u32 %v1856, 7
        %v1858 = vsub.s32 0, %v1857
        %v1859 = vrot.slane %v1854, %v1858
        %v1877 = vunpack.c.l.b16 %v1838
        %v1878 = vunpack.c.l.b16 %v1839
        %v1879 = vunpack.c.l.b16 %v1840
        %v1880 = vunpack.c.l.b16 %v1841
        %v1881 = vunpack.c.l.b16 %v1842
        %v1882 = vunpack.c.l.b16 %v1843
        %v1883 = vunpack.c.l.b16 %v1844
        %v1884 = vunpack.c.l.b16 %v1845
        %v1885 = vunpack.c.l.b16 %v1846
        %v1886 = vunpack.c.l.b16 %v1847
        %v1887 = vunpack.c.l.b16 %v1848
        %v1888 = vunpack.c.l.b16 %v1849
        %v1889 = vunpack.c.l.b16 %v1850
        %v1890 = vunpack.c.l.b16 %v1851
        %v1891 = vunpack.c.l.b16 %v1852
        %v1892 = vunpack.c.l.b16 %v1853
        %v1893 = vpack.c.b16 %v1878, %v1877
        %v1894 = vpack.c.b16 %v1880, %v1879
        %v1895 = vpack.c.b16 %v1882, %v1881
        %v1896 = vpack.c.b16 %v1884, %v1883
        %v1897 = vpack.c.b16 %v1886, %v1885
        %v1898 = vpack.c.b16 %v1888, %v1887
        %v1899 = vpack.c.b16 %v1890, %v1889
        %v1900 = vpack.c.b16 %v1892, %v1891
        %1909 = vmatprep.subr.bf16.mxu0 0
        %1910 = vmatpush1.bf16.msra.mxu0 %v1893
        %1911 = vmatprep.subr.bf16.mxu0 0
        %1912 = vmatpush1.bf16.msra.mxu0 %v1894
        %1913 = vmatprep.subr.bf16.mxu0 0
        %1914 = vmatpush1.bf16.msra.mxu0 %v1895
        %1915 = vmatprep.subr.bf16.mxu0 0
        %1916 = vmatpush1.bf16.msra.mxu0 %v1896
        %1917 = vmatprep.subr.bf16.mxu0 0
        %1918 = vmatpush1.bf16.msra.mxu0 %v1897
        %1919 = vmatprep.subr.bf16.mxu0 0
        %1920 = vmatpush1.bf16.msra.mxu0 %v1898
        %1921 = vmatprep.subr.bf16.mxu0 0
        %1922 = vmatpush1.bf16.msra.mxu0 %v1899
        %1923 = vmatprep.subr.bf16.mxu0 0
        %1924 = vmatpush1.bf16.msra.mxu0 %v1900
        %1925 = vmatprep.subr.bf16.mxu0 0
        %1926 = vmatpush1.bf16.msra.mxu0 0
        %1927 = vmatprep.subr.bf16.mxu0 0
        %1928 = vmatpush1.bf16.msra.mxu0 0
        %1929 = vmatprep.subr.bf16.mxu0 0
        %1930 = vmatpush1.bf16.msra.mxu0 0
        %1931 = vmatprep.subr.bf16.mxu0 0
        %1932 = vmatpush1.bf16.msra.mxu0 0
        %1933 = vmatprep.subr.bf16.mxu0 0
        %1934 = vmatpush1.bf16.msra.mxu0 0
        %1935 = vmatprep.subr.bf16.mxu0 0
        %1936 = vmatpush1.bf16.msra.mxu0 0
        %1937 = vmatprep.subr.bf16.mxu0 0
        %1938 = vmatpush1.bf16.msra.mxu0 0
        %1939 = vmatprep.subr.bf16.mxu0 0
        %1940 = vmatpush1.bf16.msra.mxu0 0
        %1941 = vmatprep.mubr.bf16.mxu0 0
        %1942 = vmatmul.mubr.bf16.gmra.mrb[0].mxu0 %v1836
        %v1943 = vpop.f32.mrb[0].mxu0
        %v1944 = vadd.f32 %v1859, %v1943
        %v1945 = vpop.f32.mrb[0].mxu0
        %v1946 = vpop.f32.mrb[0].mxu0
        %v1947 = vpop.f32.mrb[0].mxu0
        %1948 = vdwg.mxu0
        %v1949 = vld [vmem:[%s21] sm:$0x1]
        %v1951 = vlaneseq
        %v1952 = vshrl.u32 %v1951, 7
        %v1953 = vsub.s32 0, %v1952
        %v1954 = vrot.slane %v1949, %v1953
        %v1956 = vmul.f32 %v1954, %v1944
        %v1957 = vadd.f32 %v948, %v1956
        %v1958 = vld [vmem:[%s15] sm:$0x1]
        %v1959 = vld [vmem:[%s16] sm:$0x1]
        %1960 = vadd.xlane.f32.xlu0 %v1957
        %v1961 = vpop.xlane.xlu0 %1960
        %v1962 = vmul.f32 %v1961, %v959
        %v1963 = vsub.f32 %v1957, %v1962
        %v1964 = vmul.f32 %v1963, %v1963
        %1965 = vadd.xlane.f32.xlu0 %v1964
        %v1966 = vpop.xlane.xlu0 %1965
        %v1967 = vmul.f32 %v1966, %v959
        %v1968 = vadd.f32 %v1967, 1e-05
        %v1969 = vrsqrt.pop %v1968
        %v1970 = vmul.f32 %v1963, %v1969
        %v1972 = vlaneseq
        %v1973 = vshrl.u32 %v1972, 7
        %v1974 = vsub.s32 0, %v1973
        %v1975 = vrot.slane %v1958, %v1974
        %v1977 = vmul.f32 %v1970, %v1975
        %v1979 = vlaneseq
        %v1980 = vshrl.u32 %v1979, 7
        %v1981 = vsub.s32 0, %v1980
        %v1982 = vrot.slane %v1959, %v1981
        %v1984 = vadd.f32 %v1977, %v1982
        %v1985 = vpack.c.bf16 %v1984, %v1984
        %v1986 = vld [vmem:[#allocation16] sm:$0xff]
        %v1987 = vld [vmem:[#allocation16 + $0x8] sm:$0xff]
        %v1988 = vld [vmem:[#allocation16 + $0x10] sm:$0xff]
        %v1989 = vld [vmem:[#allocation16 + $0x18] sm:$0xff]
        %v1990 = vld [vmem:[#allocation16 + $0x20] sm:$0xff]
        %v1991 = vld [vmem:[#allocation16 + $0x28] sm:$0xff]
        %v1992 = vld [vmem:[#allocation16 + $0x30] sm:$0xff]
        %v1993 = vld [vmem:[#allocation16 + $0x38] sm:$0xff]
        %v1994 = vld [vmem:[#allocation16 + $0x40] sm:$0xff]
        %v1995 = vld [vmem:[#allocation16 + $0x48] sm:$0xff]
        %v1996 = vld [vmem:[#allocation16 + $0x50] sm:$0xff]
        %v1997 = vld [vmem:[#allocation16 + $0x58] sm:$0xff]
        %v1998 = vld [vmem:[#allocation16 + $0x60] sm:$0xff]
        %v1999 = vld [vmem:[#allocation16 + $0x68] sm:$0xff]
        %v2000 = vld [vmem:[#allocation16 + $0x70] sm:$0xff]
        %v2001 = vld [vmem:[#allocation16 + $0x78] sm:$0xff]
        %v2002 = vld [vmem:[#allocation16 + $0x80] sm:$0xff]
        %v2003 = vld [vmem:[#allocation16 + $0x88] sm:$0xff]
        %v2004 = vld [vmem:[#allocation16 + $0x90] sm:$0xff]
        %v2005 = vld [vmem:[#allocation16 + $0x98] sm:$0xff]
        %v2006 = vld [vmem:[#allocation16 + $0xa0] sm:$0xff]
        %v2007 = vld [vmem:[#allocation16 + $0xa8] sm:$0xff]
        %v2008 = vld [vmem:[#allocation16 + $0xb0] sm:$0xff]
        %v2009 = vld [vmem:[#allocation16 + $0xb8] sm:$0xff]
        %v2010 = vld [vmem:[#allocation16 + $0xc0] sm:$0xff]
        %v2011 = vld [vmem:[#allocation16 + $0xc8] sm:$0xff]
        %v2012 = vld [vmem:[#allocation16 + $0xd0] sm:$0xff]
        %v2013 = vld [vmem:[#allocation16 + $0xd8] sm:$0xff]
        %v2014 = vld [vmem:[#allocation16 + $0xe0] sm:$0xff]
        %v2015 = vld [vmem:[#allocation16 + $0xe8] sm:$0xff]
        %v2016 = vld [vmem:[#allocation16 + $0xf0] sm:$0xff]
        %v2017 = vld [vmem:[#allocation16 + $0xf8] sm:$0xff]
        %v2018 = vld [vmem:[%s18] sm:$0xf]
        %v2020 = vlaneseq
        %v2021 = vshrl.u32 %v2020, 7
        %v2022 = vsub.s32 0, %v2021
        %v2023 = vrot.slane %v2018, %v2022
        %v2024 = vlaneseq
        %v2025 = vshrl.u32 %v2024, 7
        %v2026 = vsub.s32 1, %v2025
        %v2027 = vrot.slane %v2018, %v2026
        %v2028 = vlaneseq
        %v2029 = vshrl.u32 %v2028, 7
        %v2030 = vsub.s32 2, %v2029
        %v2031 = vrot.slane %v2018, %v2030
        %v2032 = vlaneseq
        %v2033 = vshrl.u32 %v2032, 7
        %v2034 = vsub.s32 3, %v2033
        %v2035 = vrot.slane %v2018, %v2034
        %v2072 = vunpack.c.l.b16 %v1986
        %v2073 = vunpack.c.h.b16 %v1986
        %v2074 = vunpack.c.l.b16 %v1987
        %v2075 = vunpack.c.h.b16 %v1987
        %v2076 = vunpack.c.l.b16 %v1988
        %v2077 = vunpack.c.h.b16 %v1988
        %v2078 = vunpack.c.l.b16 %v1989
        %v2079 = vunpack.c.h.b16 %v1989
        %v2080 = vunpack.c.l.b16 %v1990
        %v2081 = vunpack.c.h.b16 %v1990
        %v2082 = vunpack.c.l.b16 %v1991
        %v2083 = vunpack.c.h.b16 %v1991
        %v2084 = vunpack.c.l.b16 %v1992
        %v2085 = vunpack.c.h.b16 %v1992
        %v2086 = vunpack.c.l.b16 %v1993
        %v2087 = vunpack.c.h.b16 %v1993
        %v2088 = vunpack.c.l.b16 %v1994
        %v2089 = vunpack.c.h.b16 %v1994
        %v2090 = vunpack.c.l.b16 %v1995
        %v2091 = vunpack.c.h.b16 %v1995
        %v2092 = vunpack.c.l.b16 %v1996
        %v2093 = vunpack.c.h.b16 %v1996
        %v2094 = vunpack.c.l.b16 %v1997
        %v2095 = vunpack.c.h.b16 %v1997
        %v2096 = vunpack.c.l.b16 %v1998
        %v2097 = vunpack.c.h.b16 %v1998
        %v2098 = vunpack.c.l.b16 %v1999
        %v2099 = vunpack.c.h.b16 %v1999
        %v2100 = vunpack.c.l.b16 %v2000
        %v2101 = vunpack.c.h.b16 %v2000
        %v2102 = vunpack.c.l.b16 %v2001
        %v2103 = vunpack.c.h.b16 %v2001
        %v2104 = vunpack.c.l.b16 %v2002
        %v2105 = vunpack.c.h.b16 %v2002
        %v2106 = vunpack.c.l.b16 %v2003
        %v2107 = vunpack.c.h.b16 %v2003
        %v2108 = vunpack.c.l.b16 %v2004
        %v2109 = vunpack.c.h.b16 %v2004
        %v2110 = vunpack.c.l.b16 %v2005
        %v2111 = vunpack.c.h.b16 %v2005
        %v2112 = vunpack.c.l.b16 %v2006
        %v2113 = vunpack.c.h.b16 %v2006
        %v2114 = vunpack.c.l.b16 %v2007
        %v2115 = vunpack.c.h.b16 %v2007
        %v2116 = vunpack.c.l.b16 %v2008
        %v2117 = vunpack.c.h.b16 %v2008
        %v2118 = vunpack.c.l.b16 %v2009
        %v2119 = vunpack.c.h.b16 %v2009
        %v2120 = vunpack.c.l.b16 %v2010
        %v2121 = vunpack.c.h.b16 %v2010
        %v2122 = vunpack.c.l.b16 %v2011
        %v2123 = vunpack.c.h.b16 %v2011
        %v2124 = vunpack.c.l.b16 %v2012
        %v2125 = vunpack.c.h.b16 %v2012
        %v2126 = vunpack.c.l.b16 %v2013
        %v2127 = vunpack.c.h.b16 %v2013
        %v2128 = vunpack.c.l.b16 %v2014
        %v2129 = vunpack.c.h.b16 %v2014
        %v2130 = vunpack.c.l.b16 %v2015
        %v2131 = vunpack.c.h.b16 %v2015
        %v2132 = vunpack.c.l.b16 %v2016
        %v2133 = vunpack.c.h.b16 %v2016
        %v2134 = vunpack.c.l.b16 %v2017
        %v2135 = vunpack.c.h.b16 %v2017
        %v2136 = vpack.c.b16 %v2076, %v2072
        %v2137 = vpack.c.b16 %v2077, %v2073
        %v2138 = vpack.c.b16 %v2078, %v2074
        %v2139 = vpack.c.b16 %v2079, %v2075
        %v2140 = vpack.c.b16 %v2084, %v2080
        %v2141 = vpack.c.b16 %v2085, %v2081
        %v2142 = vpack.c.b16 %v2086, %v2082
        %v2143 = vpack.c.b16 %v2087, %v2083
        %v2144 = vpack.c.b16 %v2092, %v2088
        %v2145 = vpack.c.b16 %v2093, %v2089
        %v2146 = vpack.c.b16 %v2094, %v2090
        %v2147 = vpack.c.b16 %v2095, %v2091
        %v2148 = vpack.c.b16 %v2100, %v2096
        %v2149 = vpack.c.b16 %v2101, %v2097
        %v2150 = vpack.c.b16 %v2102, %v2098
        %v2151 = vpack.c.b16 %v2103, %v2099
        %v2152 = vpack.c.b16 %v2108, %v2104
        %v2153 = vpack.c.b16 %v2109, %v2105
        %v2154 = vpack.c.b16 %v2110, %v2106
        %v2155 = vpack.c.b16 %v2111, %v2107
        %v2156 = vpack.c.b16 %v2116, %v2112
        %v2157 = vpack.c.b16 %v2117, %v2113
        %v2158 = vpack.c.b16 %v2118, %v2114
        %v2159 = vpack.c.b16 %v2119, %v2115
        %v2160 = vpack.c.b16 %v2124, %v2120
        %v2161 = vpack.c.b16 %v2125, %v2121
        %v2162 = vpack.c.b16 %v2126, %v2122
        %v2163 = vpack.c.b16 %v2127, %v2123
        %v2164 = vpack.c.b16 %v2132, %v2128
        %v2165 = vpack.c.b16 %v2133, %v2129
        %v2166 = vpack.c.b16 %v2134, %v2130
        %v2167 = vpack.c.b16 %v2135, %v2131
        %2200 = vmatprep.subr.bf16.mxu0 %v2137
        %2201 = vmatpush1.bf16.msra.mxu0 %v2136
        %2202 = vmatprep.subr.bf16.mxu0 %v2141
        %2203 = vmatpush1.bf16.msra.mxu0 %v2140
        %2204 = vmatprep.subr.bf16.mxu0 %v2145
        %2205 = vmatpush1.bf16.msra.mxu0 %v2144
        %2206 = vmatprep.subr.bf16.mxu0 %v2149
        %2207 = vmatpush1.bf16.msra.mxu0 %v2148
        %2208 = vmatprep.subr.bf16.mxu0 %v2153
        %2209 = vmatpush1.bf16.msra.mxu0 %v2152
        %2210 = vmatprep.subr.bf16.mxu0 %v2157
        %2211 = vmatpush1.bf16.msra.mxu0 %v2156
        %2212 = vmatprep.subr.bf16.mxu0 %v2161
        %2213 = vmatpush1.bf16.msra.mxu0 %v2160
        %2214 = vmatprep.subr.bf16.mxu0 %v2165
        %2215 = vmatpush1.bf16.msra.mxu0 %v2164
        %2216 = vmatprep.subr.bf16.mxu0 0
        %2217 = vmatpush1.bf16.msra.mxu0 0
        %2218 = vmatprep.subr.bf16.mxu0 0
        %2219 = vmatpush1.bf16.msra.mxu0 0
        %2220 = vmatprep.subr.bf16.mxu0 0
        %2221 = vmatpush1.bf16.msra.mxu0 0
        %2222 = vmatprep.subr.bf16.mxu0 0
        %2223 = vmatpush1.bf16.msra.mxu0 0
        %2224 = vmatprep.subr.bf16.mxu0 0
        %2225 = vmatpush1.bf16.msra.mxu0 0
        %2226 = vmatprep.subr.bf16.mxu0 0
        %2227 = vmatpush1.bf16.msra.mxu0 0
        %2228 = vmatprep.subr.bf16.mxu0 0
        %2229 = vmatpush1.bf16.msra.mxu0 0
        %2230 = vmatprep.subr.bf16.mxu0 0
        %2231 = vmatpush1.bf16.msra.mxu0 0
        %2232 = vmatprep.mubr.bf16.mxu0 0
        %2233 = vmatmul.mubr.bf16.gmra.mrb[0].mxu0 %v1985
        %v2234 = vpop.f32.mrb[0].mxu0
        %v2235 = vadd.f32 %v2023, %v2234
        %v2236 = vpop.f32.mrb[0].mxu0
        %v2237 = vadd.f32 %v2027, %v2236
        %v2238 = vpop.f32.mrb[0].mxu0
        %v2239 = vpop.f32.mrb[0].mxu0
        %2240 = vdwg.mxu0
        %2241 = vmatprep.subr.bf16.mxu0 %v2139
        %2242 = vmatpush1.bf16.msra.mxu0 %v2138
        %2243 = vmatprep.subr.bf16.mxu0 %v2143
        %2244 = vmatpush1.bf16.msra.mxu0 %v2142
        %2245 = vmatprep.subr.bf16.mxu0 %v2147
        %2246 = vmatpush1.bf16.msra.mxu0 %v2146
        %2247 = vmatprep.subr.bf16.mxu0 %v2151
        %2248 = vmatpush1.bf16.msra.mxu0 %v2150
        %2249 = vmatprep.subr.bf16.mxu0 %v2155
        %2250 = vmatpush1.bf16.msra.mxu0 %v2154
        %2251 = vmatprep.subr.bf16.mxu0 %v2159
        %2252 = vmatpush1.bf16.msra.mxu0 %v2158
        %2253 = vmatprep.subr.bf16.mxu0 %v2163
        %2254 = vmatpush1.bf16.msra.mxu0 %v2162
        %2255 = vmatprep.subr.bf16.mxu0 %v2167
        %2256 = vmatpush1.bf16.msra.mxu0 %v2166
        %2257 = vmatprep.subr.bf16.mxu0 0
        %2258 = vmatpush1.bf16.msra.mxu0 0
        %2259 = vmatprep.subr.bf16.mxu0 0
        %2260 = vmatpush1.bf16.msra.mxu0 0
        %2261 = vmatprep.subr.bf16.mxu0 0
        %2262 = vmatpush1.bf16.msra.mxu0 0
        %2263 = vmatprep.subr.bf16.mxu0 0
        %2264 = vmatpush1.bf16.msra.mxu0 0
        %2265 = vmatprep.subr.bf16.mxu0 0
        %2266 = vmatpush1.bf16.msra.mxu0 0
        %2267 = vmatprep.subr.bf16.mxu0 0
        %2268 = vmatpush1.bf16.msra.mxu0 0
        %2269 = vmatprep.subr.bf16.mxu0 0
        %2270 = vmatpush1.bf16.msra.mxu0 0
        %2271 = vmatprep.subr.bf16.mxu0 0
        %2272 = vmatpush1.bf16.msra.mxu0 0
        %2273 = vmatprep.mubr.bf16.mxu0 0
        %2274 = vmatmul.mubr.bf16.gmra.mrb[0].mxu0 %v1985
        %v2275 = vpop.f32.mrb[0].mxu0
        %v2276 = vadd.f32 %v2031, %v2275
        %v2277 = vpop.f32.mrb[0].mxu0
        %v2278 = vadd.f32 %v2035, %v2277
        %v2279 = vpop.f32.mrb[0].mxu0
        %v2280 = vpop.f32.mrb[0].mxu0
        %2281 = vdwg.mxu0
        %v2282 = vmul.f32 %v2235, 0.5
        %v2283 = vmul.f32 %v2237, 0.5
        %v2284 = vmul.f32 %v2276, 0.5
        %v2285 = vmul.f32 %v2278, 0.5
        %v2286 = vmul.f32 %v2235, 0.70710677
        %v2287 = vmul.f32 %v2237, 0.70710677
        %v2288 = vmul.f32 %v2276, 0.70710677
        %v2289 = vmul.f32 %v2278, 0.70710677
        %v2290 = verf.f32.pop %v2286
        %v2291 = verf.f32.pop %v2287
        %v2292 = verf.f32.pop %v2288
        %v2293 = verf.f32.pop %v2289
        %v2294 = vadd.f32 %v2290, 1.0
        %v2295 = vadd.f32 %v2291, 1.0
        %v2296 = vadd.f32 %v2292, 1.0
        %v2297 = vadd.f32 %v2293, 1.0
        %v2298 = vmul.f32 %v2282, %v2294
        %v2299 = vmul.f32 %v2283, %v2295
        %v2300 = vmul.f32 %v2284, %v2296
        %v2301 = vmul.f32 %v2285, %v2297
        %v2302 = vpack.c.bf16 %v2298, %v2298
        %v2303 = vpack.c.bf16 %v2299, %v2299
        %v2304 = vpack.c.bf16 %v2300, %v2300
        %v2305 = vpack.c.bf16 %v2301, %v2301
        %v2306 = vld [vmem:[#allocation17] sm:$0xf]
        %v2307 = vld [vmem:[#allocation17 + $0x4] sm:$0xf]
        %v2308 = vld [vmem:[#allocation17 + $0x8] sm:$0xf]
        %v2309 = vld [vmem:[#allocation17 + $0xc] sm:$0xf]
        %v2310 = vld [vmem:[#allocation17 + $0x10] sm:$0xf]
        %v2311 = vld [vmem:[#allocation17 + $0x14] sm:$0xf]
        %v2312 = vld [vmem:[#allocation17 + $0x18] sm:$0xf]
        %v2313 = vld [vmem:[#allocation17 + $0x1c] sm:$0xf]
        %v2314 = vld [vmem:[#allocation17 + $0x20] sm:$0xf]
        %v2315 = vld [vmem:[#allocation17 + $0x24] sm:$0xf]
        %v2316 = vld [vmem:[#allocation17 + $0x28] sm:$0xf]
        %v2317 = vld [vmem:[#allocation17 + $0x2c] sm:$0xf]
        %v2318 = vld [vmem:[#allocation17 + $0x30] sm:$0xf]
        %v2319 = vld [vmem:[#allocation17 + $0x34] sm:$0xf]
        %v2320 = vld [vmem:[#allocation17 + $0x38] sm:$0xf]
        %v2321 = vld [vmem:[#allocation17 + $0x3c] sm:$0xf]
        %v2322 = vld [vmem:[#allocation17 + $0x40] sm:$0xf]
        %v2323 = vld [vmem:[#allocation17 + $0x44] sm:$0xf]
        %v2324 = vld [vmem:[#allocation17 + $0x48] sm:$0xf]
        %v2325 = vld [vmem:[#allocation17 + $0x4c] sm:$0xf]
        %v2326 = vld [vmem:[#allocation17 + $0x50] sm:$0xf]
        %v2327 = vld [vmem:[#allocation17 + $0x54] sm:$0xf]
        %v2328 = vld [vmem:[#allocation17 + $0x58] sm:$0xf]
        %v2329 = vld [vmem:[#allocation17 + $0x5c] sm:$0xf]
        %v2330 = vld [vmem:[#allocation17 + $0x60] sm:$0xf]
        %v2331 = vld [vmem:[#allocation17 + $0x64] sm:$0xf]
        %v2332 = vld [vmem:[#allocation17 + $0x68] sm:$0xf]
        %v2333 = vld [vmem:[#allocation17 + $0x6c] sm:$0xf]
        %v2334 = vld [vmem:[#allocation17 + $0x70] sm:$0xf]
        %v2335 = vld [vmem:[#allocation17 + $0x74] sm:$0xf]
        %v2336 = vld [vmem:[#allocation17 + $0x78] sm:$0xf]
        %v2337 = vld [vmem:[#allocation17 + $0x7c] sm:$0xf]
        %v2338 = vld [vmem:[#allocation17 + $0x80] sm:$0xf]
        %v2339 = vld [vmem:[#allocation17 + $0x84] sm:$0xf]
        %v2340 = vld [vmem:[#allocation17 + $0x88] sm:$0xf]
        %v2341 = vld [vmem:[#allocation17 + $0x8c] sm:$0xf]
        %v2342 = vld [vmem:[#allocation17 + $0x90] sm:$0xf]
        %v2343 = vld [vmem:[#allocation17 + $0x94] sm:$0xf]
        %v2344 = vld [vmem:[#allocation17 + $0x98] sm:$0xf]
        %v2345 = vld [vmem:[#allocation17 + $0x9c] sm:$0xf]
        %v2346 = vld [vmem:[#allocation17 + $0xa0] sm:$0xf]
        %v2347 = vld [vmem:[#allocation17 + $0xa4] sm:$0xf]
        %v2348 = vld [vmem:[#allocation17 + $0xa8] sm:$0xf]
        %v2349 = vld [vmem:[#allocation17 + $0xac] sm:$0xf]
        %v2350 = vld [vmem:[#allocation17 + $0xb0] sm:$0xf]
        %v2351 = vld [vmem:[#allocation17 + $0xb4] sm:$0xf]
        %v2352 = vld [vmem:[#allocation17 + $0xb8] sm:$0xf]
        %v2353 = vld [vmem:[#allocation17 + $0xbc] sm:$0xf]
        %v2354 = vld [vmem:[#allocation17 + $0xc0] sm:$0xf]
        %v2355 = vld [vmem:[#allocation17 + $0xc4] sm:$0xf]
        %v2356 = vld [vmem:[#allocation17 + $0xc8] sm:$0xf]
        %v2357 = vld [vmem:[#allocation17 + $0xcc] sm:$0xf]
        %v2358 = vld [vmem:[#allocation17 + $0xd0] sm:$0xf]
        %v2359 = vld [vmem:[#allocation17 + $0xd4] sm:$0xf]
        %v2360 = vld [vmem:[#allocation17 + $0xd8] sm:$0xf]
        %v2361 = vld [vmem:[#allocation17 + $0xdc] sm:$0xf]
        %v2362 = vld [vmem:[#allocation17 + $0xe0] sm:$0xf]
        %v2363 = vld [vmem:[#allocation17 + $0xe4] sm:$0xf]
        %v2364 = vld [vmem:[#allocation17 + $0xe8] sm:$0xf]
        %v2365 = vld [vmem:[#allocation17 + $0xec] sm:$0xf]
        %v2366 = vld [vmem:[#allocation17 + $0xf0] sm:$0xf]
        %v2367 = vld [vmem:[#allocation17 + $0xf4] sm:$0xf]
        %v2368 = vld [vmem:[#allocation17 + $0xf8] sm:$0xf]
        %v2369 = vld [vmem:[#allocation17 + $0xfc] sm:$0xf]
        %v2370 = vld [vmem:[%s20] sm:$0x1]
        %v2372 = vlaneseq
        %v2373 = vshrl.u32 %v2372, 7
        %v2374 = vsub.s32 0, %v2373
        %v2375 = vrot.slane %v2370, %v2374
        %v2441 = vunpack.c.l.b16 %v2306
        %v2442 = vunpack.c.l.b16 %v2307
        %v2443 = vunpack.c.l.b16 %v2308
        %v2444 = vunpack.c.l.b16 %v2309
        %v2445 = vunpack.c.l.b16 %v2310
        %v2446 = vunpack.c.l.b16 %v2311
        %v2447 = vunpack.c.l.b16 %v2312
        %v2448 = vunpack.c.l.b16 %v2313
        %v2449 = vunpack.c.l.b16 %v2314
        %v2450 = vunpack.c.l.b16 %v2315
        %v2451 = vunpack.c.l.b16 %v2316
        %v2452 = vunpack.c.l.b16 %v2317
        %v2453 = vunpack.c.l.b16 %v2318
        %v2454 = vunpack.c.l.b16 %v2319
        %v2455 = vunpack.c.l.b16 %v2320
        %v2456 = vunpack.c.l.b16 %v2321
        %v2457 = vunpack.c.l.b16 %v2322
        %v2458 = vunpack.c.l.b16 %v2323
        %v2459 = vunpack.c.l.b16 %v2324
        %v2460 = vunpack.c.l.b16 %v2325
        %v2461 = vunpack.c.l.b16 %v2326
        %v2462 = vunpack.c.l.b16 %v2327
        %v2463 = vunpack.c.l.b16 %v2328
        %v2464 = vunpack.c.l.b16 %v2329
        %v2465 = vunpack.c.l.b16 %v2330
        %v2466 = vunpack.c.l.b16 %v2331
        %v2467 = vunpack.c.l.b16 %v2332
        %v2468 = vunpack.c.l.b16 %v2333
        %v2469 = vunpack.c.l.b16 %v2334
        %v2470 = vunpack.c.l.b16 %v2335
        %v2471 = vunpack.c.l.b16 %v2336
        %v2472 = vunpack.c.l.b16 %v2337
        %v2473 = vunpack.c.l.b16 %v2338
        %v2474 = vunpack.c.l.b16 %v2339
        %v2475 = vunpack.c.l.b16 %v2340
        %v2476 = vunpack.c.l.b16 %v2341
        %v2477 = vunpack.c.l.b16 %v2342
        %v2478 = vunpack.c.l.b16 %v2343
        %v2479 = vunpack.c.l.b16 %v2344
        %v2480 = vunpack.c.l.b16 %v2345
        %v2481 = vunpack.c.l.b16 %v2346
        %v2482 = vunpack.c.l.b16 %v2347
        %v2483 = vunpack.c.l.b16 %v2348
        %v2484 = vunpack.c.l.b16 %v2349
        %v2485 = vunpack.c.l.b16 %v2350
        %v2486 = vunpack.c.l.b16 %v2351
        %v2487 = vunpack.c.l.b16 %v2352
        %v2488 = vunpack.c.l.b16 %v2353
        %v2489 = vunpack.c.l.b16 %v2354
        %v2490 = vunpack.c.l.b16 %v2355
        %v2491 = vunpack.c.l.b16 %v2356
        %v2492 = vunpack.c.l.b16 %v2357
        %v2493 = vunpack.c.l.b16 %v2358
        %v2494 = vunpack.c.l.b16 %v2359
        %v2495 = vunpack.c.l.b16 %v2360
        %v2496 = vunpack.c.l.b16 %v2361
        %v2497 = vunpack.c.l.b16 %v2362
        %v2498 = vunpack.c.l.b16 %v2363
        %v2499 = vunpack.c.l.b16 %v2364
        %v2500 = vunpack.c.l.b16 %v2365
        %v2501 = vunpack.c.l.b16 %v2366
        %v2502 = vunpack.c.l.b16 %v2367
        %v2503 = vunpack.c.l.b16 %v2368
        %v2504 = vunpack.c.l.b16 %v2369
        %v2505 = vpack.c.b16 %v2442, %v2441
        %v2506 = vpack.c.b16 %v2444, %v2443
        %v2507 = vpack.c.b16 %v2446, %v2445
        %v2508 = vpack.c.b16 %v2448, %v2447
        %v2509 = vpack.c.b16 %v2450, %v2449
        %v2510 = vpack.c.b16 %v2452, %v2451
        %v2511 = vpack.c.b16 %v2454, %v2453
        %v2512 = vpack.c.b16 %v2456, %v2455
        %v2513 = vpack.c.b16 %v2458, %v2457
        %v2514 = vpack.c.b16 %v2460, %v2459
        %v2515 = vpack.c.b16 %v2462, %v2461
        %v2516 = vpack.c.b16 %v2464, %v2463
        %v2517 = vpack.c.b16 %v2466, %v2465
        %v2518 = vpack.c.b16 %v2468, %v2467
        %v2519 = vpack.c.b16 %v2470, %v2469
        %v2520 = vpack.c.b16 %v2472, %v2471
        %v2521 = vpack.c.b16 %v2474, %v2473
        %v2522 = vpack.c.b16 %v2476, %v2475
        %v2523 = vpack.c.b16 %v2478, %v2477
        %v2524 = vpack.c.b16 %v2480, %v2479
        %v2525 = vpack.c.b16 %v2482, %v2481
        %v2526 = vpack.c.b16 %v2484, %v2483
        %v2527 = vpack.c.b16 %v2486, %v2485
        %v2528 = vpack.c.b16 %v2488, %v2487
        %v2529 = vpack.c.b16 %v2490, %v2489
        %v2530 = vpack.c.b16 %v2492, %v2491
        %v2531 = vpack.c.b16 %v2494, %v2493
        %v2532 = vpack.c.b16 %v2496, %v2495
        %v2533 = vpack.c.b16 %v2498, %v2497
        %v2534 = vpack.c.b16 %v2500, %v2499
        %v2535 = vpack.c.b16 %v2502, %v2501
        %v2536 = vpack.c.b16 %v2504, %v2503
        %2569 = vmatprep.subr.bf16.mxu0 0
        %2570 = vmatpush1.bf16.msra.mxu0 %v2505
        %2571 = vmatprep.subr.bf16.mxu0 0
        %2572 = vmatpush1.bf16.msra.mxu0 %v2506
        %2573 = vmatprep.subr.bf16.mxu0 0
        %2574 = vmatpush1.bf16.msra.mxu0 %v2507
        %2575 = vmatprep.subr.bf16.mxu0 0
        %2576 = vmatpush1.bf16.msra.mxu0 %v2508
        %2577 = vmatprep.subr.bf16.mxu0 0
        %2578 = vmatpush1.bf16.msra.mxu0 %v2509
        %2579 = vmatprep.subr.bf16.mxu0 0
        %2580 = vmatpush1.bf16.msra.mxu0 %v2510
        %2581 = vmatprep.subr.bf16.mxu0 0
        %2582 = vmatpush1.bf16.msra.mxu0 %v2511
        %2583 = vmatprep.subr.bf16.mxu0 0
        %2584 = vmatpush1.bf16.msra.mxu0 %v2512
        %2585 = vmatprep.subr.bf16.mxu0 0
        %2586 = vmatpush1.bf16.msra.mxu0 %v2513
        %2587 = vmatprep.subr.bf16.mxu0 0
        %2588 = vmatpush1.bf16.msra.mxu0 %v2514
        %2589 = vmatprep.subr.bf16.mxu0 0
        %2590 = vmatpush1.bf16.msra.mxu0 %v2515
        %2591 = vmatprep.subr.bf16.mxu0 0
        %2592 = vmatpush1.bf16.msra.mxu0 %v2516
        %2593 = vmatprep.subr.bf16.mxu0 0
        %2594 = vmatpush1.bf16.msra.mxu0 %v2517
        %2595 = vmatprep.subr.bf16.mxu0 0
        %2596 = vmatpush1.bf16.msra.mxu0 %v2518
        %2597 = vmatprep.subr.bf16.mxu0 0
        %2598 = vmatpush1.bf16.msra.mxu0 %v2519
        %2599 = vmatprep.subr.bf16.mxu0 0
        %2600 = vmatpush1.bf16.msra.mxu0 %v2520
        %2601 = vmatprep.mubr.bf16.mxu0 %v2303
        %2602 = vmatmul.mubr.bf16.gmra.mrb[0].mxu0 %v2302
        %v2603 = vpop.f32.mrb[0].mxu0
        %v2604 = vadd.f32 %v2375, %v2603
        %v2605 = vpop.f32.mrb[0].mxu0
        %v2606 = vpop.f32.mrb[0].mxu0
        %v2607 = vpop.f32.mrb[0].mxu0
        %2608 = vdwg.mxu0
        %2609 = vmatprep.subr.bf16.mxu0 0
        %2610 = vmatpush1.bf16.msra.mxu0 %v2521
        %2611 = vmatprep.subr.bf16.mxu0 0
        %2612 = vmatpush1.bf16.msra.mxu0 %v2522
        %2613 = vmatprep.subr.bf16.mxu0 0
        %2614 = vmatpush1.bf16.msra.mxu0 %v2523
        %2615 = vmatprep.subr.bf16.mxu0 0
        %2616 = vmatpush1.bf16.msra.mxu0 %v2524
        %2617 = vmatprep.subr.bf16.mxu0 0
        %2618 = vmatpush1.bf16.msra.mxu0 %v2525
        %2619 = vmatprep.subr.bf16.mxu0 0
        %2620 = vmatpush1.bf16.msra.mxu0 %v2526
        %2621 = vmatprep.subr.bf16.mxu0 0
        %2622 = vmatpush1.bf16.msra.mxu0 %v2527
        %2623 = vmatprep.subr.bf16.mxu0 0
        %2624 = vmatpush1.bf16.msra.mxu0 %v2528
        %2625 = vmatprep.subr.bf16.mxu0 0
        %2626 = vmatpush1.bf16.msra.mxu0 %v2529
        %2627 = vmatprep.subr.bf16.mxu0 0
        %2628 = vmatpush1.bf16.msra.mxu0 %v2530
        %2629 = vmatprep.subr.bf16.mxu0 0
        %2630 = vmatpush1.bf16.msra.mxu0 %v2531
        %2631 = vmatprep.subr.bf16.mxu0 0
        %2632 = vmatpush1.bf16.msra.mxu0 %v2532
        %2633 = vmatprep.subr.bf16.mxu0 0
        %2634 = vmatpush1.bf16.msra.mxu0 %v2533
        %2635 = vmatprep.subr.bf16.mxu0 0
        %2636 = vmatpush1.bf16.msra.mxu0 %v2534
        %2637 = vmatprep.subr.bf16.mxu0 0
        %2638 = vmatpush1.bf16.msra.mxu0 %v2535
        %2639 = vmatprep.subr.bf16.mxu0 0
        %2640 = vmatpush1.bf16.msra.mxu0 %v2536
        %2641 = vmatprep.mubr.bf16.mxu0 %v2305
        %2642 = vmatmul.mubr.bf16.gmra.mrb[0].mxu0 %v2304
        %v2643 = vpop.f32.mrb[0].mxu0
        %v2644 = vadd.f32 %v2604, %v2643
        %v2645 = vpop.f32.mrb[0].mxu0
        %v2646 = vpop.f32.mrb[0].mxu0
        %v2647 = vpop.f32.mrb[0].mxu0
        %2648 = vdwg.mxu0
        %v2649 = vld [vmem:[%s22] sm:$0x1]
        %v2651 = vlaneseq
        %v2652 = vshrl.u32 %v2651, 7
        %v2653 = vsub.s32 0, %v2652
        %v2654 = vrot.slane %v2649, %v2653
        %v2656 = vmul.f32 %v2654, %v2644
        %v2657 = vadd.f32 %v1984, %v2656
        %2658 = vst [vmem:[%s946] sm:$0xff] %v2657
        %s2659 = sand.u32 %s578, 1
        %s2660 = scalar_lea.sflag [#allocation4], %s2659
        %s2661 = sand.u32 %s578, 1
        %s2662 = smul.addr %s2661, 8
        %s2663 = scalar_lea.vmem [#allocation19], %s2662
        // Predicated region
        $region153: #{tpu_custom_call.1} parent=111 // pred_check
          %p2664 = pneg %p588
        $region154: #{tpu_custom_call.1} parent=111 // pred_check_branch
          %2666 = sbr.rel (%p2664) target = $region156
        $region155: #{tpu_custom_call.1} parent=111 // pred_region
          %s2668 = ssub.s32 128, 128
          %2669 = vsyncadd %s2660, %s2668
          %s2670 = sadd.s32 %s54, %s53
          %s2671 = smul.addr %s2670, 128
          %s2672 = scalar_lea.hbm %s23, %s2671
          %s2674 = sshll.u32 %s2663, 4
          %s2675 = int_to_ptr.vmem [resolvable:$true] %s2674
          %2677 = dma.vmem_to_hbm [thread:$0]  %s2675, 128, %s2672, %s2660
        $region156: #{tpu_custom_call.1} parent=111 // pred_fallthru
          _
      $region112: #{tpu_custom_call.1} parent=5 // pred_fallthru
        _
      %p2678 = scmp.le.s32.totalorder 2, %s44
      // Predicated region
      $region157: #{tpu_custom_call.1} parent=5 // pred_check
        %p2679 = pneg %p2678
      $region158: #{tpu_custom_call.1} parent=5 // pred_check_branch
        %2681 = sbr.rel (%p2679) target = $region160
      $region159: #{tpu_custom_call.1} parent=5 // pred_region
        %s2682 = ssub.s32 %s44, 2
        // Predicated region
        $region161: #{tpu_custom_call.1} parent=159 // pred_check
          %p2683 = pneg %p594
        $region162: #{tpu_custom_call.1} parent=159 // pred_check_branch
          %2685 = sbr.rel (%p2683) target = $region164
        $region163: #{tpu_custom_call.1} parent=159 // pred_region
          %s2686 = sand.u32 %s579, 1
          %s2687 = scalar_lea.sflag [#allocation4], %s2686
          %s2688 = sand.u32 %s579, 1
          %s2689 = smul.addr %s2688, 8
          %s2690 = scalar_lea.vmem [#allocation19], %s2689
          %2691 = dma.done %s2687, 128
        $region164: #{tpu_custom_call.1} parent=159 // pred_fallthru
          _
      $region160: #{tpu_custom_call.1} parent=5 // pred_fallthru
        _
    $region6: #{tpu_custom_call.1} parent=1 // loop_footer
      %s48 = sadd.s32 1, %s44
    $region7: #{tpu_custom_call.1} parent=1 // loop_footer_branch
      %43 = sbr.rel target = $region3
    $region8: #{tpu_custom_call.1} parent=1 // loop_exit
      _
    %2692 = vsyncpa [#allocation3], 1
    %s2693 = scalar_lea.sflag [#allocation3], 1
    %2694 = vsyncpa %s2693, 1
    %2695 = vsyncpa [#allocation6], 1
    %s2696 = scalar_lea.sflag [#allocation6], 1
    %2697 = vsyncpa %s2696, 1
    %2698 = vsyncpa [#allocation9], 1
    %s2699 = scalar_lea.sflag [#allocation9], 1
    %2700 = vsyncpa %s2699, 1
    %2701 = vsyncpa [#allocation12], 1
    %2702 = vsyncpa [#allocation15], 1
    %2703 = vsyncpa [#allocation18], 1
    %2704 = vsyncpa [#allocation4], 1
    %s2705 = scalar_lea.sflag [#allocation4], 1
    %2706 = vsyncpa %s2705, 1

// kernel: tpu_custom_call.1
$region0: #{tpu_custom_call.1}
  #allocation0 [shape = 'u32[]', space=smem, size = 0x4, offset = 0x4, fixed_abs, tag = 'smem constant byte address 0x4 - core index']
  #allocation1 [shape = 'u32[144,128]{1,0:T(1,128)}', space=vmem, size = 0x12000, scoped, tag = 'internal scratch']
  %s0 = inlined_call_operand.hbm [shape: f32[2,8,128], index: 0, kind: input, shape index: {}]
  %s1 = inlined_call_operand.hbm [shape: f32[2,16,128], index: 1, kind: input, shape index: {}]
  %s2 = inlined_call_operand.hbm [shape: f32[2,8,128], index: 2, kind: input, shape index: {}]
  %s3 = inlined_call_operand.hbm [shape: f32[2,16,128], index: 3, kind: input, shape index: {}]
  %s4 = inlined_call_operand.vmem [shape: f32[1,128], index: 4, kind: input, shape index: {}]
  %s5 = inlined_call_operand.vmem [shape: f32[1,128], index: 5, kind: input, shape index: {}]
  %s6 = inlined_call_operand.vmem [shape: f32[1,128], index: 6, kind: input, shape index: {}]
  %s7 = inlined_call_operand.vmem [shape: f32[1,128], index: 7, kind: input, shape index: {}]
  %s8 = inlined_call_operand.vmem [shape: f32[1,128], index: 8, kind: input, shape index: {}]
  %s9 = inlined_call_operand.vmem [shape: f32[1,128], index: 9, kind: input, shape index: {}]
  %s10 = inlined_call_operand.hbm [shape: bf16[128,128], index: 10, kind: input, shape index: {}]
  %s11 = inlined_call_operand.hbm [shape: bf16[128,128], index: 11, kind: input, shape index: {}]
  %s12 = inlined_call_operand.hbm [shape: bf16[128,128], index: 12, kind: input, shape index: {}]
  %s13 = inlined_call_operand.hbm [shape: bf16[128,128], index: 13, kind: input, shape index: {}]
  %s14 = inlined_call_operand.vmem [shape: f32[1,128], index: 14, kind: input, shape index: {}]
  %s15 = inlined_call_operand.vmem [shape: f32[1,128], index: 15, kind: input, shape index: {}]
  %s16 = inlined_call_operand.vmem [shape: f32[1,128], index: 16, kind: input, shape index: {}]
  %s17 = inlined_call_operand.hbm [shape: bf16[128,512], index: 17, kind: input, shape index: {}]
  %s18 = inlined_call_operand.vmem [shape: f32[1,512], index: 18, kind: input, shape index: {}]
  %s19 = inlined_call_operand.hbm [shape: bf16[512,128], index: 19, kind: input, shape index: {}]
  %s20 = inlined_call_operand.vmem [shape: f32[1,128], index: 20, kind: input, shape index: {}]
  %s21 = inlined_call_operand.vmem [shape: f32[1,128], index: 21, kind: input, shape index: {}]
  %s22 = inlined_call_operand.vmem [shape: f32[1,128], index: 22, kind: input, shape index: {}]
  %s23 = inlined_call_operand.hbm [shape: f32[2,8,128], index: 23, kind: output, shape index: {}]
  %s24 = sld [smem:[#allocation0]]
  $region165: #{tpu_custom_call.1} parent=0
    _
  %s26 = ssub.s32 1, %s24
  %s27 = scalar_select 0, %s26, %s24
  $region1: #{tpu_custom_call.1} parent=0
    #allocation2 [shape = 'u8[8192]{0}', space=vmem, size = 0x2000, scoped, tag = 'input window, operand 0']
    #allocation3 [shape = 's32[2]{0}', space=sflag, size = 0x8, scoped, tag = 'scoped memory for tpu_custom_call.1']
    #allocation4 [shape = 's32[2]{0}', space=sflag, size = 0x8, scoped, tag = 'scoped memory for tpu_custom_call.1']
    #allocation5 [shape = 'u8[16384]{0}', space=vmem, size = 0x4000, scoped, tag = 'input window, operand 1']
    #allocation6 [shape = 's32[2]{0}', space=sflag, size = 0x8, scoped, tag = 'scoped memory for tpu_custom_call.1']
    #allocation7 [shape = 'u8[8192]{0}', space=vmem, size = 0x2000, scoped, tag = 'input window, operand 2']
    #allocation8 [shape = 'u8[16384]{0}', space=vmem, size = 0x4000, scoped, tag = 'input window, operand 3']
    #allocation9 [shape = 's32[2]{0}', space=sflag, size = 0x8, scoped, tag = 'scoped memory for tpu_custom_call.1']
    #allocation10 [shape = 'u8[32768]{0}', space=vmem, size = 0x8000, scoped, tag = 'input window, operand 10, single buffered']
    #allocation11 [shape = 'u8[32768]{0}', space=vmem, size = 0x8000, scoped, tag = 'input window, operand 11, single buffered']
    #allocation12 [shape = 's32[1]{0}', space=sflag, size = 0x4, scoped, tag = 'scoped memory for tpu_custom_call.1']
    #allocation13 [shape = 'u8[32768]{0}', space=vmem, size = 0x8000, scoped, tag = 'input window, operand 12, single buffered']
    #allocation14 [shape = 'u8[32768]{0}', space=vmem, size = 0x8000, scoped, tag = 'input window, operand 13, single buffered']
    #allocation15 [shape = 's32[1]{0}', space=sflag, size = 0x4, scoped, tag = 'scoped memory for tpu_custom_call.1']
    #allocation16 [shape = 'u8[131072]{0}', space=vmem, size = 0x20000, scoped, tag = 'input window, operand 17, single buffered']
    #allocation17 [shape = 'u8[131072]{0}', space=vmem, size = 0x20000, scoped, tag = 'input window, operand 19, single buffered']
    #allocation18 [shape = 's32[1]{0}', space=sflag, size = 0x4, scoped, tag = 'scoped memory for tpu_custom_call.1']
    #allocation19 [shape = 'u8[8192]{0}', space=vmem, size = 0x2000, scoped, tag = 'output window, operand 0']
    %28 = vsyncpa [#allocation3], 0
    %s29 = scalar_lea.sflag [#allocation3], 1
    %30 = vsyncpa %s29, 0
    %31 = vsyncpa [#allocation6], 0
    %s32 = scalar_lea.sflag [#allocation6], 1
    %33 = vsyncpa %s32, 0
    %34 = vsyncpa [#allocation9], 0
    %s35 = scalar_lea.sflag [#allocation9], 1
    %36 = vsyncpa %s35, 0
    %37 = vsyncpa [#allocation12], 0
    %38 = vsyncpa [#allocation15], 0
    %39 = vsyncpa [#allocation18], 0
    %40 = vsyncpa [#allocation4], 0
    %s41 = scalar_lea.sflag [#allocation4], 1
    %42 = vsyncpa %s41, 0
    loop: start=0, step=1, limit=4
    $region2: #{tpu_custom_call.1} parent=1 // loop_pre_header
      _
    $region3: #{tpu_custom_call.1} parent=1 // loop_header
      %s44 = sphi 0, %s48
      %p45 = scmp.ge.s32.totalorder %s44, 4
      %s51 = sphi 0, %s63
      %s52 = sphi 0, %s59
      %s53 = sphi 0, %s51
      %s54 = sphi 0, %s52
      %s55 = sphi 0, %s53
      %s56 = sphi 0, %s54
      %s68 = sphi 0, %s70
      %s71 = sphi 0, %s68
      %s72 = sphi 0, %s71
      %s88 = sphi 0, %s72
      %s94 = sphi 0, %s96
      %s97 = sphi 0, %s94
      %s98 = sphi 0, %s97
      %s114 = sphi 0, %s98
      %s122 = sphi 0, %s124
      %s125 = sphi 0, %s122
      %s126 = sphi 0, %s125
      %s142 = sphi 0, %s126
      %s148 = sphi 0, %s150
      %s151 = sphi 0, %s148
      %s152 = sphi 0, %s151
      %s168 = sphi 0, %s152
      %s172 = sphi 0, %s172
      %s174 = sphi 0, %s172
      %s175 = sphi 0, %s174
      %s189 = sphi 0, %s175
      %s193 = sphi 0, %s193
      %s195 = sphi 0, %s193
      %s196 = sphi 0, %s195
      %s210 = sphi 0, %s196
      %s214 = sphi 0, %s214
      %s216 = sphi 0, %s214
      %s217 = sphi 0, %s216
      %s231 = sphi 0, %s217
      %s235 = sphi 0, %s235
      %s237 = sphi 0, %s235
      %s238 = sphi 0, %s237
      %s252 = sphi 0, %s238
      %s256 = sphi 0, %s256
      %s258 = sphi 0, %s256
      %s259 = sphi 0, %s258
      %s273 = sphi 0, %s259
      %s277 = sphi 0, %s277
      %s279 = sphi 0, %s277
      %s280 = sphi 0, %s279
      %s294 = sphi 0, %s280
      %s298 = sphi 0, %s298
      %s300 = sphi 0, %s298
      %s301 = sphi 0, %s300
      %s315 = sphi 0, %s301
      %s319 = sphi 0, %s319
      %s321 = sphi 0, %s319
      %s322 = sphi 0, %s321
      %s336 = sphi 0, %s322
      %s340 = sphi 0, %s340
      %s342 = sphi 0, %s340
      %s343 = sphi 0, %s342
      %s357 = sphi 0, %s343
      %s361 = sphi 0, %s361
      %s363 = sphi 0, %s361
      %s364 = sphi 0, %s363
      %s378 = sphi 0, %s364
      %s382 = sphi 0, %s382
      %s384 = sphi 0, %s382
      %s385 = sphi 0, %s384
      %s399 = sphi 0, %s385
      %s403 = sphi 0, %s403
      %s405 = sphi 0, %s403
      %s406 = sphi 0, %s405
      %s420 = sphi 0, %s406
      %s424 = sphi 0, %s424
      %s426 = sphi 0, %s424
      %s427 = sphi 0, %s426
      %s441 = sphi 0, %s427
      %s445 = sphi 0, %s445
      %s447 = sphi 0, %s445
      %s448 = sphi 0, %s447
      %s462 = sphi 0, %s448
      %s466 = sphi 0, %s466
      %s468 = sphi 0, %s466
      %s469 = sphi 0, %s468
      %s483 = sphi 0, %s469
      %s487 = sphi 0, %s487
      %s489 = sphi 0, %s487
      %s490 = sphi 0, %s489
      %s504 = sphi 0, %s490
      %s508 = sphi 0, %s508
      %s510 = sphi 0, %s508
      %s511 = sphi 0, %s510
      %s525 = sphi 0, %s511
      %s529 = sphi 0, %s529
      %s531 = sphi 0, %s529
      %s532 = sphi 0, %s531
      %s546 = sphi 0, %s532
      %s550 = sphi 0, %s550
      %s552 = sphi 0, %s550
      %s553 = sphi 0, %s552
      %s567 = sphi 0, %s553
      %s575 = sphi 0, %s577
      %s578 = sphi 0, %s575
      %s579 = sphi 0, %s578
      %s595 = sphi 0, %s579
    $region4: #{tpu_custom_call.1} parent=1 // loop_header_branch
      %47 = sbr.rel (%p45) target = $region8
    $region5: #{tpu_custom_call.1} parent=1 // loop_body
      %s49 = ssub.s32 %s44, 1
      %s50 = ssub.s32 %s44, 2
      %s57 = sadd.s32 1, %s52
      %p58 = scmp.ge.s32.totalorder %s57, 1
      %s59 = scalar_select %p58, 0, %s57
      %s60 = sadd.s32 1, %s51
      %s61 = scalar_select %p58, %s60, %s51
      %p62 = scmp.ge.s32.totalorder %s61, 2
      %s63 = scalar_select %p62, 0, %s61
      %s64 = ssub.s32 %s51, %s63
      %s65 = ssub.s32 %s52, %s59
      %s66 = sor.u32 %s64, %s65
      %p67 = scmp.eq.s32.totalorder %s66, 0
      %s69 = sadd.s32 %s68, 1
      %s70 = scalar_select %p67, %s68, %s69
      %p73 = pneg %p67
      %p74 = scmp.eq.s32.totalorder %s44, 1
      %p75 = por %p73, %p74
      %p76 = scmp.ne.s32.totalorder %s68, %s71
      %p77 = scmp.eq.s32.totalorder %s44, 0
      %p78 = por %p76, %p77
      %p79 = scmp.ne.s32.totalorder %s68, %s71
      %p80 = scmp.eq.s32.totalorder %s49, 1
      %p81 = por %p79, %p80
      %p82 = scmp.ne.s32.totalorder %s71, %s72
      %p83 = scmp.eq.s32.totalorder %s49, 0
      %p84 = por %p82, %p83
      %p85 = scmp.ne.s32.totalorder %s71, %s72
      %p86 = scmp.eq.s32.totalorder %s50, 1
      %p87 = por %p85, %p86
      %p89 = scmp.ne.s32.totalorder %s72, %s88
      %p90 = scmp.eq.s32.totalorder %s50, 0
      %p91 = por %p89, %p90
      %s92 = ssub.s32 %s51, %s63
      %p93 = scmp.eq.s32.totalorder %s92, 0
      %s95 = sadd.s32 %s94, 1
      %s96 = scalar_select %p93, %s94, %s95
      %p99 = pneg %p93
      %p100 = scmp.eq.s32.totalorder %s44, 1
      %p101 = por %p99, %p100
      %p102 = scmp.ne.s32.totalorder %s94, %s97
      %p103 = scmp.eq.s32.totalorder %s44, 0
      %p104 = por %p102, %p103
      %p105 = scmp.ne.s32.totalorder %s94, %s97
      %p106 = scmp.eq.s32.totalorder %s49, 1
      %p107 = por %p105, %p106
      %p108 = scmp.ne.s32.totalorder %s97, %s98
      %p109 = scmp.eq.s32.totalorder %s49, 0
      %p110 = por %p108, %p109
      %p111 = scmp.ne.s32.totalorder %s97, %s98
      %p112 = scmp.eq.s32.totalorder %s50, 1
      %p113 = por %p111, %p112
      %p115 = scmp.ne.s32.totalorder %s98, %s114
      %p116 = scmp.eq.s32.totalorder %s50, 0
      %p117 = por %p115, %p116
      %s118 = ssub.s32 %s51, %s63
      %s119 = ssub.s32 %s52, %s59
      %s120 = sor.u32 %s118, %s119
      %p121 = scmp.eq.s32.totalorder %s120, 0
      %s123 = sadd.s32 %s122, 1
      %s124 = scalar_select %p121, %s122, %s123
      %p127 = pneg %p121
      %p128 = scmp.eq.s32.totalorder %s44, 1
      %p129 = por %p127, %p128
      %p130 = scmp.ne.s32.totalorder %s122, %s125
      %p131 = scmp.eq.s32.totalorder %s44, 0
      %p132 = por %p130, %p131
      %p133 = scmp.ne.s32.totalorder %s122, %s125
      %p134 = scmp.eq.s32.totalorder %s49, 1
      %p135 = por %p133, %p134
      %p136 = scmp.ne.s32.totalorder %s125, %s126
      %p137 = scmp.eq.s32.totalorder %s49, 0
      %p138 = por %p136, %p137
      %p139 = scmp.ne.s32.totalorder %s125, %s126
      %p140 = scmp.eq.s32.totalorder %s50, 1
      %p141 = por %p139, %p140
      %p143 = scmp.ne.s32.totalorder %s126, %s142
      %p144 = scmp.eq.s32.totalorder %s50, 0
      %p145 = por %p143, %p144
      %s146 = ssub.s32 %s51, %s63
      %p147 = scmp.eq.s32.totalorder %s146, 0
      %s149 = sadd.s32 %s148, 1
      %s150 = scalar_select %p147, %s148, %s149
      %p153 = pneg %p147
      %p154 = scmp.eq.s32.totalorder %s44, 1
      %p155 = por %p153, %p154
      %p156 = scmp.ne.s32.totalorder %s148, %s151
      %p157 = scmp.eq.s32.totalorder %s44, 0
      %p158 = por %p156, %p157
      %p159 = scmp.ne.s32.totalorder %s148, %s151
      %p160 = scmp.eq.s32.totalorder %s49, 1
      %p161 = por %p159, %p160
      %p162 = scmp.ne.s32.totalorder %s151, %s152
      %p163 = scmp.eq.s32.totalorder %s49, 0
      %p164 = por %p162, %p163
      %p165 = scmp.ne.s32.totalorder %s151, %s152
      %p166 = scmp.eq.s32.totalorder %s50, 1
      %p167 = por %p165, %p166
      %p169 = scmp.ne.s32.totalorder %s152, %s168
      %p170 = scmp.eq.s32.totalorder %s50, 0
      %p171 = por %p169, %p170
      %s173 = sadd.s32 %s172, 1
      %p176 = scmp.eq.s32.totalorder %s44, 1
      %p177 = scmp.ne.s32.totalorder %s172, %s174
      %p178 = scmp.eq.s32.totalorder %s44, 0
      %p179 = por %p177, %p178
      %p180 = scmp.ne.s32.totalorder %s172, %s174
      %p181 = scmp.eq.s32.totalorder %s49, 1
      %p182 = por %p180, %p181
      %p183 = scmp.ne.s32.totalorder %s174, %s175
      %p184 = scmp.eq.s32.totalorder %s49, 0
      %p185 = por %p183, %p184
      %p186 = scmp.ne.s32.totalorder %s174, %s175
      %p187 = scmp.eq.s32.totalorder %s50, 1
      %p188 = por %p186, %p187
      %p190 = scmp.ne.s32.totalorder %s175, %s189
      %p191 = scmp.eq.s32.totalorder %s50, 0
      %p192 = por %p190, %p191
      %s194 = sadd.s32 %s193, 1
      %p197 = scmp.eq.s32.totalorder %s44, 1
      %p198 = scmp.ne.s32.totalorder %s193, %s195
      %p199 = scmp.eq.s32.totalorder %s44, 0
      %p200 = por %p198, %p199
      %p201 = scmp.ne.s32.totalorder %s193, %s195
      %p202 = scmp.eq.s32.totalorder %s49, 1
      %p203 = por %p201, %p202
      %p204 = scmp.ne.s32.totalorder %s195, %s196
      %p205 = scmp.eq.s32.totalorder %s49, 0
      %p206 = por %p204, %p205
      %p207 = scmp.ne.s32.totalorder %s195, %s196
      %p208 = scmp.eq.s32.totalorder %s50, 1
      %p209 = por %p207, %p208
      %p211 = scmp.ne.s32.totalorder %s196, %s210
      %p212 = scmp.eq.s32.totalorder %s50, 0
      %p213 = por %p211, %p212
      %s215 = sadd.s32 %s214, 1
      %p218 = scmp.eq.s32.totalorder %s44, 1
      %p219 = scmp.ne.s32.totalorder %s214, %s216
      %p220 = scmp.eq.s32.totalorder %s44, 0
      %p221 = por %p219, %p220
      %p222 = scmp.ne.s32.totalorder %s214, %s216
      %p223 = scmp.eq.s32.totalorder %s49, 1
      %p224 = por %p222, %p223
      %p225 = scmp.ne.s32.totalorder %s216, %s217
      %p226 = scmp.eq.s32.totalorder %s49, 0
      %p227 = por %p225, %p226
      %p228 = scmp.ne.s32.totalorder %s216, %s217
      %p229 = scmp.eq.s32.totalorder %s50, 1
      %p230 = por %p228, %p229
      %p232 = scmp.ne.s32.totalorder %s217, %s231
      %p233 = scmp.eq.s32.totalorder %s50, 0
      %p234 = por %p232, %p233
      %s236 = sadd.s32 %s235, 1
      %p239 = scmp.eq.s32.totalorder %s44, 1
      %p240 = scmp.ne.s32.totalorder %s235, %s237
      %p241 = scmp.eq.s32.totalorder %s44, 0
      %p242 = por %p240, %p241
      %p243 = scmp.ne.s32.totalorder %s235, %s237
      %p244 = scmp.eq.s32.totalorder %s49, 1
      %p245 = por %p243, %p244
      %p246 = scmp.ne.s32.totalorder %s237, %s238
      %p247 = scmp.eq.s32.totalorder %s49, 0
      %p248 = por %p246, %p247
      %p249 = scmp.ne.s32.totalorder %s237, %s238
      %p250 = scmp.eq.s32.totalorder %s50, 1
      %p251 = por %p249, %p250
      %p253 = scmp.ne.s32.totalorder %s238, %s252
      %p254 = scmp.eq.s32.totalorder %s50, 0
      %p255 = por %p253, %p254
      %s257 = sadd.s32 %s256, 1
      %p260 = scmp.eq.s32.totalorder %s44, 1
      %p261 = scmp.ne.s32.totalorder %s256, %s258
      %p262 = scmp.eq.s32.totalorder %s44, 0
      %p263 = por %p261, %p262
      %p264 = scmp.ne.s32.totalorder %s256, %s258
      %p265 = scmp.eq.s32.totalorder %s49, 1
      %p266 = por %p264, %p265
      %p267 = scmp.ne.s32.totalorder %s258, %s259
      %p268 = scmp.eq.s32.totalorder %s49, 0
      %p269 = por %p267, %p268
      %p270 = scmp.ne.s32.totalorder %s258, %s259
      %p271 = scmp.eq.s32.totalorder %s50, 1
      %p272 = por %p270, %p271
      %p274 = scmp.ne.s32.totalorder %s259, %s273
      %p275 = scmp.eq.s32.totalorder %s50, 0
      %p276 = por %p274, %p275
      %s278 = sadd.s32 %s277, 1
      %p281 = scmp.eq.s32.totalorder %s44, 1
      %p282 = scmp.ne.s32.totalorder %s277, %s279
      %p283 = scmp.eq.s32.totalorder %s44, 0
      %p284 = por %p282, %p283
      %p285 = scmp.ne.s32.totalorder %s277, %s279
      %p286 = scmp.eq.s32.totalorder %s49, 1
      %p287 = por %p285, %p286
      %p288 = scmp.ne.s32.totalorder %s279, %s280
      %p289 = scmp.eq.s32.totalorder %s49, 0
      %p290 = por %p288, %p289
      %p291 = scmp.ne.s32.totalorder %s279, %s280
      %p292 = scmp.eq.s32.totalorder %s50, 1
      %p293 = por %p291, %p292
      %p295 = scmp.ne.s32.totalorder %s280, %s294
      %p296 = scmp.eq.s32.totalorder %s50, 0
      %p297 = por %p295, %p296
      %s299 = sadd.s32 %s298, 1
      %p302 = scmp.eq.s32.totalorder %s44, 1
      %p303 = scmp.ne.s32.totalorder %s298, %s300
      %p304 = scmp.eq.s32.totalorder %s44, 0
      %p305 = por %p303, %p304
      %p306 = scmp.ne.s32.totalorder %s298, %s300
      %p307 = scmp.eq.s32.totalorder %s49, 1
      %p308 = por %p306, %p307
      %p309 = scmp.ne.s32.totalorder %s300, %s301
      %p310 = scmp.eq.s32.totalorder %s49, 0
      %p311 = por %p309, %p310
      %p312 = scmp.ne.s32.totalorder %s300, %s301
      %p313 = scmp.eq.s32.totalorder %s50, 1
      %p314 = por %p312, %p313
      %p316 = scmp.ne.s32.totalorder %s301, %s315
      %p317 = scmp.eq.s32.totalorder %s50, 0
      %p318 = por %p316, %p317
      %s320 = sadd.s32 %s319, 1
      %p323 = scmp.eq.s32.totalorder %s44, 1
      %p324 = scmp.ne.s32.totalorder %s319, %s321
      %p325 = scmp.eq.s32.totalorder %s44, 0
      %p326 = por %p324, %p325
      %p327 = scmp.ne.s32.totalorder %s319, %s321
      %p328 = scmp.eq.s32.totalorder %s49, 1
      %p329 = por %p327, %p328
      %p330 = scmp.ne.s32.totalorder %s321, %s322
      %p331 = scmp.eq.s32.totalorder %s49, 0
      %p332 = por %p330, %p331
      %p333 = scmp.ne.s32.totalorder %s321, %s322
      %p334 = scmp.eq.s32.totalorder %s50, 1
      %p335 = por %p333, %p334
      %p337 = scmp.ne.s32.totalorder %s322, %s336
      %p338 = scmp.eq.s32.totalorder %s50, 0
      %p339 = por %p337, %p338
      %s341 = sadd.s32 %s340, 1
      %p344 = scmp.eq.s32.totalorder %s44, 1
      %p345 = scmp.ne.s32.totalorder %s340, %s342
      %p346 = scmp.eq.s32.totalorder %s44, 0
      %p347 = por %p345, %p346
      %p348 = scmp.ne.s32.totalorder %s340, %s342
      %p349 = scmp.eq.s32.totalorder %s49, 1
      %p350 = por %p348, %p349
      %p351 = scmp.ne.s32.totalorder %s342, %s343
      %p352 = scmp.eq.s32.totalorder %s49, 0
      %p353 = por %p351, %p352
      %p354 = scmp.ne.s32.totalorder %s342, %s343
      %p355 = scmp.eq.s32.totalorder %s50, 1
      %p356 = por %p354, %p355
      %p358 = scmp.ne.s32.totalorder %s343, %s357
      %p359 = scmp.eq.s32.totalorder %s50, 0
      %p360 = por %p358, %p359
      %s362 = sadd.s32 %s361, 1
      %p365 = scmp.eq.s32.totalorder %s44, 1
      %p366 = scmp.ne.s32.totalorder %s361, %s363
      %p367 = scmp.eq.s32.totalorder %s44, 0
      %p368 = por %p366, %p367
      %p369 = scmp.ne.s32.totalorder %s361, %s363
      %p370 = scmp.eq.s32.totalorder %s49, 1
      %p371 = por %p369, %p370
      %p372 = scmp.ne.s32.totalorder %s363, %s364
      %p373 = scmp.eq.s32.totalorder %s49, 0
      %p374 = por %p372, %p373
      %p375 = scmp.ne.s32.totalorder %s363, %s364
      %p376 = scmp.eq.s32.totalorder %s50, 1
      %p377 = por %p375, %p376
      %p379 = scmp.ne.s32.totalorder %s364, %s378
      %p380 = scmp.eq.s32.totalorder %s50, 0
      %p381 = por %p379, %p380
      %s383 = sadd.s32 %s382, 1
      %p386 = scmp.eq.s32.totalorder %s44, 1
      %p387 = scmp.ne.s32.totalorder %s382, %s384
      %p388 = scmp.eq.s32.totalorder %s44, 0
      %p389 = por %p387, %p388
      %p390 = scmp.ne.s32.totalorder %s382, %s384
      %p391 = scmp.eq.s32.totalorder %s49, 1
      %p392 = por %p390, %p391
      %p393 = scmp.ne.s32.totalorder %s384, %s385
      %p394 = scmp.eq.s32.totalorder %s49, 0
      %p395 = por %p393, %p394
      %p396 = scmp.ne.s32.totalorder %s384, %s385
      %p397 = scmp.eq.s32.totalorder %s50, 1
      %p398 = por %p396, %p397
      %p400 = scmp.ne.s32.totalorder %s385, %s399
      %p401 = scmp.eq.s32.totalorder %s50, 0
      %p402 = por %p400, %p401
      %s404 = sadd.s32 %s403, 1
      %p407 = scmp.eq.s32.totalorder %s44, 1
      %p408 = scmp.ne.s32.totalorder %s403, %s405
      %p409 = scmp.eq.s32.totalorder %s44, 0
      %p410 = por %p408, %p409
      %p411 = scmp.ne.s32.totalorder %s403, %s405
      %p412 = scmp.eq.s32.totalorder %s49, 1
      %p413 = por %p411, %p412
      %p414 = scmp.ne.s32.totalorder %s405, %s406
      %p415 = scmp.eq.s32.totalorder %s49, 0
      %p416 = por %p414, %p415
      %p417 = scmp.ne.s32.totalorder %s405, %s406
      %p418 = scmp.eq.s32.totalorder %s50, 1
      %p419 = por %p417, %p418
      %p421 = scmp.ne.s32.totalorder %s406, %s420
      %p422 = scmp.eq.s32.totalorder %s50, 0
      %p423 = por %p421, %p422
      %s425 = sadd.s32 %s424, 1
      %p428 = scmp.eq.s32.totalorder %s44, 1
      %p429 = scmp.ne.s32.totalorder %s424, %s426
      %p430 = scmp.eq.s32.totalorder %s44, 0
      %p431 = por %p429, %p430
      %p432 = scmp.ne.s32.totalorder %s424, %s426
      %p433 = scmp.eq.s32.totalorder %s49, 1
      %p434 = por %p432, %p433
      %p435 = scmp.ne.s32.totalorder %s426, %s427
      %p436 = scmp.eq.s32.totalorder %s49, 0
      %p437 = por %p435, %p436
      %p438 = scmp.ne.s32.totalorder %s426, %s427
      %p439 = scmp.eq.s32.totalorder %s50, 1
      %p440 = por %p438, %p439
      %p442 = scmp.ne.s32.totalorder %s427, %s441
      %p443 = scmp.eq.s32.totalorder %s50, 0
      %p444 = por %p442, %p443
      %s446 = sadd.s32 %s445, 1
      %p449 = scmp.eq.s32.totalorder %s44, 1
      %p450 = scmp.ne.s32.totalorder %s445, %s447
      %p451 = scmp.eq.s32.totalorder %s44, 0
      %p452 = por %p450, %p451
      %p453 = scmp.ne.s32.totalorder %s445, %s447
      %p454 = scmp.eq.s32.totalorder %s49, 1
      %p455 = por %p453, %p454
      %p456 = scmp.ne.s32.totalorder %s447, %s448
      %p457 = scmp.eq.s32.totalorder %s49, 0
      %p458 = por %p456, %p457
      %p459 = scmp.ne.s32.totalorder %s447, %s448
      %p460 = scmp.eq.s32.totalorder %s50, 1
      %p461 = por %p459, %p460
      %p463 = scmp.ne.s32.totalorder %s448, %s462
      %p464 = scmp.eq.s32.totalorder %s50, 0
      %p465 = por %p463, %p464
      %s467 = sadd.s32 %s466, 1
      %p470 = scmp.eq.s32.totalorder %s44, 1
      %p471 = scmp.ne.s32.totalorder %s466, %s468
      %p472 = scmp.eq.s32.totalorder %s44, 0
      %p473 = por %p471, %p472
      %p474 = scmp.ne.s32.totalorder %s466, %s468
      %p475 = scmp.eq.s32.totalorder %s49, 1
      %p476 = por %p474, %p475
      %p477 = scmp.ne.s32.totalorder %s468, %s469
      %p478 = scmp.eq.s32.totalorder %s49, 0
      %p479 = por %p477, %p478
      %p480 = scmp.ne.s32.totalorder %s468, %s469
      %p481 = scmp.eq.s32.totalorder %s50, 1
      %p482 = por %p480, %p481
      %p484 = scmp.ne.s32.totalorder %s469, %s483
      %p485 = scmp.eq.s32.totalorder %s50, 0
      %p486 = por %p484, %p485
      %s488 = sadd.s32 %s487, 1
      %p491 = scmp.eq.s32.totalorder %s44, 1
      %p492 = scmp.ne.s32.totalorder %s487, %s489
      %p493 = scmp.eq.s32.totalorder %s44, 0
      %p494 = por %p492, %p493
      %p495 = scmp.ne.s32.totalorder %s487, %s489
      %p496 = scmp.eq.s32.totalorder %s49, 1
      %p497 = por %p495, %p496
      %p498 = scmp.ne.s32.totalorder %s489, %s490
      %p499 = scmp.eq.s32.totalorder %s49, 0
      %p500 = por %p498, %p499
      %p501 = scmp.ne.s32.totalorder %s489, %s490
      %p502 = scmp.eq.s32.totalorder %s50, 1
      %p503 = por %p501, %p502
      %p505 = scmp.ne.s32.totalorder %s490, %s504
      %p506 = scmp.eq.s32.totalorder %s50, 0
      %p507 = por %p505, %p506
      %s509 = sadd.s32 %s508, 1
      %p512 = scmp.eq.s32.totalorder %s44, 1
      %p513 = scmp.ne.s32.totalorder %s508, %s510
      %p514 = scmp.eq.s32.totalorder %s44, 0
      %p515 = por %p513, %p514
      %p516 = scmp.ne.s32.totalorder %s508, %s510
      %p517 = scmp.eq.s32.totalorder %s49, 1
      %p518 = por %p516, %p517
      %p519 = scmp.ne.s32.totalorder %s510, %s511
      %p520 = scmp.eq.s32.totalorder %s49, 0
      %p521 = por %p519, %p520
      %p522 = scmp.ne.s32.totalorder %s510, %s511
      %p523 = scmp.eq.s32.totalorder %s50, 1
      %p524 = por %p522, %p523
      %p526 = scmp.ne.s32.totalorder %s511, %s525
      %p527 = scmp.eq.s32.totalorder %s50, 0
      %p528 = por %p526, %p527
      %s530 = sadd.s32 %s529, 1
      %p533 = scmp.eq.s32.totalorder %s44, 1
      %p534 = scmp.ne.s32.totalorder %s529, %s531
      %p535 = scmp.eq.s32.totalorder %s44, 0
      %p536 = por %p534, %p535
      %p537 = scmp.ne.s32.totalorder %s529, %s531
      %p538 = scmp.eq.s32.totalorder %s49, 1
      %p539 = por %p537, %p538
      %p540 = scmp.ne.s32.totalorder %s531, %s532
      %p541 = scmp.eq.s32.totalorder %s49, 0
      %p542 = por %p540, %p541
      %p543 = scmp.ne.s32.totalorder %s531, %s532
      %p544 = scmp.eq.s32.totalorder %s50, 1
      %p545 = por %p543, %p544
      %p547 = scmp.ne.s32.totalorder %s532, %s546
      %p548 = scmp.eq.s32.totalorder %s50, 0
      %p549 = por %p547, %p548
      %s551 = sadd.s32 %s550, 1
      %p554 = scmp.eq.s32.totalorder %s44, 1
      %p555 = scmp.ne.s32.totalorder %s550, %s552
      %p556 = scmp.eq.s32.totalorder %s44, 0
      %p557 = por %p555, %p556
      %p558 = scmp.ne.s32.totalorder %s550, %s552
      %p559 = scmp.eq.s32.totalorder %s49, 1
      %p560 = por %p558, %p559
      %p561 = scmp.ne.s32.totalorder %s552, %s553
      %p562 = scmp.eq.s32.totalorder %s49, 0
      %p563 = por %p561, %p562
      %p564 = scmp.ne.s32.totalorder %s552, %s553
      %p565 = scmp.eq.s32.totalorder %s50, 1
      %p566 = por %p564, %p565
      %p568 = scmp.ne.s32.totalorder %s553, %s567
      %p569 = scmp.eq.s32.totalorder %s50, 0
      %p570 = por %p568, %p569
      %s571 = ssub.s32 %s51, %s63
      %s572 = ssub.s32 %s52, %s59
      %s573 = sor.u32 %s571, %s572
      %p574 = scmp.eq.s32.totalorder %s573, 0
      %s576 = sadd.s32 %s575, 1
      %s577 = scalar_select %p574, %s575, %s576
      %p580 = pneg %p574
      %p581 = scmp.eq.s32.totalorder %s44, 1
      %p582 = por %p580, %p581
      %p583 = scmp.ne.s32.totalorder %s575, %s578
      %p584 = scmp.eq.s32.totalorder %s44, 0
      %p585 = por %p583, %p584
      %p586 = scmp.ne.s32.totalorder %s575, %s578
      %p587 = scmp.eq.s32.totalorder %s49, 1
      %p588 = por %p586, %p587
      %p589 = scmp.ne.s32.totalorder %s578, %s579
      %p590 = scmp.eq.s32.totalorder %s49, 0
      %p591 = por %p589, %p590
      %p592 = scmp.ne.s32.totalorder %s578, %s579
      %p593 = scmp.eq.s32.totalorder %s50, 1
      %p594 = por %p592, %p593
      %p596 = scmp.ne.s32.totalorder %s579, %s595
      %p597 = scmp.eq.s32.totalorder %s50, 0
      %p598 = por %p596, %p597
      %p599 = scmp.le.s32.totalorder 1, %s44
      %p600 = scmp.lt.s32.totalorder %s44, 3
      %p601 = pnand %p599, %p600
      %p602 = pneg %p601
      // Predicated region
      $region9: #{tpu_custom_call.1} parent=5 // pred_check
        _
      $region10: #{tpu_custom_call.1} parent=5 // pred_check_branch
        %604 = sbr.rel (%p601) target = $region12
      $region11: #{tpu_custom_call.1} parent=5 // pred_region
        %s605 = ssub.s32 %s44, 1
        // Predicated region
        $region13: #{tpu_custom_call.1} parent=11 // pred_check
          %p606 = pneg %p185
        $region14: #{tpu_custom_call.1} parent=11 // pred_check_branch
          %608 = sbr.rel (%p606) target = $region16
        $region15: #{tpu_custom_call.1} parent=11 // pred_region
          _
        $region16: #{tpu_custom_call.1} parent=11 // pred_fallthru
          _
        // Predicated region
        $region17: #{tpu_custom_call.1} parent=11 // pred_check
          %p609 = pneg %p206
        $region18: #{tpu_custom_call.1} parent=11 // pred_check_branch
          %611 = sbr.rel (%p609) target = $region20
        $region19: #{tpu_custom_call.1} parent=11 // pred_region
          _
        $region20: #{tpu_custom_call.1} parent=11 // pred_fallthru
          _
        // Predicated region
        $region21: #{tpu_custom_call.1} parent=11 // pred_check
          %p612 = pneg %p227
        $region22: #{tpu_custom_call.1} parent=11 // pred_check_branch
          %614 = sbr.rel (%p612) target = $region24
        $region23: #{tpu_custom_call.1} parent=11 // pred_region
          _
        $region24: #{tpu_custom_call.1} parent=11 // pred_fallthru
          _
        // Predicated region
        $region25: #{tpu_custom_call.1} parent=11 // pred_check
          %p615 = pneg %p248
        $region26: #{tpu_custom_call.1} parent=11 // pred_check_branch
          %617 = sbr.rel (%p615) target = $region28
        $region27: #{tpu_custom_call.1} parent=11 // pred_region
          _
        $region28: #{tpu_custom_call.1} parent=11 // pred_fallthru
          _
        // Predicated region
        $region29: #{tpu_custom_call.1} parent=11 // pred_check
          %p618 = pneg %p269
        $region30: #{tpu_custom_call.1} parent=11 // pred_check_branch
          %620 = sbr.rel (%p618) target = $region32
        $region31: #{tpu_custom_call.1} parent=11 // pred_region
          _
        $region32: #{tpu_custom_call.1} parent=11 // pred_fallthru
          _
        // Predicated region
        $region33: #{tpu_custom_call.1} parent=11 // pred_check
          %p621 = pneg %p290
        $region34: #{tpu_custom_call.1} parent=11 // pred_check_branch
          %623 = sbr.rel (%p621) target = $region36
        $region35: #{tpu_custom_call.1} parent=11 // pred_region
          _
        $region36: #{tpu_custom_call.1} parent=11 // pred_fallthru
          _
        // Predicated region
        $region37: #{tpu_custom_call.1} parent=11 // pred_check
          %p624 = pneg %p311
        $region38: #{tpu_custom_call.1} parent=11 // pred_check_branch
          %626 = sbr.rel (%p624) target = $region40
        $region39: #{tpu_custom_call.1} parent=11 // pred_region
          %s628 = ssub.s32 1024, 1024
          %629 = vsyncadd [#allocation9], %s628
          %s630 = sshll.u32 [#allocation10], 4
          %s631 = int_to_ptr.vmem [resolvable:$true] %s630
          %636 = dma.hbm_to_vmem [thread:$0]  %s10, 1024, %s631, [#allocation9], 64, 64, 4
        $region40: #{tpu_custom_call.1} parent=11 // pred_fallthru
          _
        // Predicated region
        $region41: #{tpu_custom_call.1} parent=11 // pred_check
          %p637 = pneg %p332
        $region42: #{tpu_custom_call.1} parent=11 // pred_check_branch
          %639 = sbr.rel (%p637) target = $region44
        $region43: #{tpu_custom_call.1} parent=11 // pred_region
          %s641 = ssub.s32 1024, 1024
          %642 = vsyncadd [#allocation12], %s641
          %s643 = sshll.u32 [#allocation11], 4
          %s644 = int_to_ptr.vmem [resolvable:$true] %s643
          %649 = dma.hbm_to_vmem [thread:$0]  %s11, 1024, %s644, [#allocation12], 64, 64, 4
        $region44: #{tpu_custom_call.1} parent=11 // pred_fallthru
          _
        // Predicated region
        $region45: #{tpu_custom_call.1} parent=11 // pred_check
          %p650 = pneg %p353
        $region46: #{tpu_custom_call.1} parent=11 // pred_check_branch
          %652 = sbr.rel (%p650) target = $region48
        $region47: #{tpu_custom_call.1} parent=11 // pred_region
          %s654 = ssub.s32 1024, 1024
          %655 = vsyncadd [#allocation12], %s654
          %s656 = sshll.u32 [#allocation13], 4
          %s657 = int_to_ptr.vmem [resolvable:$true] %s656
          %662 = dma.hbm_to_vmem [thread:$0]  %s12, 1024, %s657, [#allocation12], 64, 64, 4
        $region48: #{tpu_custom_call.1} parent=11 // pred_fallthru
          _
        // Predicated region
        $region49: #{tpu_custom_call.1} parent=11 // pred_check
          %p663 = pneg %p374
        $region50: #{tpu_custom_call.1} parent=11 // pred_check_branch
          %665 = sbr.rel (%p663) target = $region52
        $region51: #{tpu_custom_call.1} parent=11 // pred_region
          %s667 = ssub.s32 1024, 1024
          %668 = vsyncadd [#allocation15], %s667
          %s669 = sshll.u32 [#allocation14], 4
          %s670 = int_to_ptr.vmem [resolvable:$true] %s669
          %675 = dma.hbm_to_vmem [thread:$0]  %s13, 1024, %s670, [#allocation15], 64, 64, 4
        $region52: #{tpu_custom_call.1} parent=11 // pred_fallthru
          _
        // Predicated region
        $region53: #{tpu_custom_call.1} parent=11 // pred_check
          %p676 = pneg %p395
        $region54: #{tpu_custom_call.1} parent=11 // pred_check_branch
          %678 = sbr.rel (%p676) target = $region56
        $region55: #{tpu_custom_call.1} parent=11 // pred_region
          _
        $region56: #{tpu_custom_call.1} parent=11 // pred_fallthru
          _
        // Predicated region
        $region57: #{tpu_custom_call.1} parent=11 // pred_check
          %p679 = pneg %p416
        $region58: #{tpu_custom_call.1} parent=11 // pred_check_branch
          %681 = sbr.rel (%p679) target = $region60
        $region59: #{tpu_custom_call.1} parent=11 // pred_region
          _
        $region60: #{tpu_custom_call.1} parent=11 // pred_fallthru
          _
        // Predicated region
        $region61: #{tpu_custom_call.1} parent=11 // pred_check
          %p682 = pneg %p437
        $region62: #{tpu_custom_call.1} parent=11 // pred_check_branch
          %684 = sbr.rel (%p682) target = $region64
        $region63: #{tpu_custom_call.1} parent=11 // pred_region
          _
        $region64: #{tpu_custom_call.1} parent=11 // pred_fallthru
          _
        // Predicated region
        $region65: #{tpu_custom_call.1} parent=11 // pred_check
          %p685 = pneg %p458
        $region66: #{tpu_custom_call.1} parent=11 // pred_check_branch
          %687 = sbr.rel (%p685) target = $region68
        $region67: #{tpu_custom_call.1} parent=11 // pred_region
          %s689 = ssub.s32 4096, 4096
          %690 = vsyncadd [#allocation15], %s689
          %s691 = sshll.u32 [#allocation16], 4
          %s692 = int_to_ptr.vmem [resolvable:$true] %s691
          %697 = dma.hbm_to_vmem [thread:$0]  %s17, 4096, %s692, [#allocation15], 256, 256, 16
        $region68: #{tpu_custom_call.1} parent=11 // pred_fallthru
          _
        // Predicated region
        $region69: #{tpu_custom_call.1} parent=11 // pred_check
          %p698 = pneg %p479
        $region70: #{tpu_custom_call.1} parent=11 // pred_check_branch
          %700 = sbr.rel (%p698) target = $region72
        $region71: #{tpu_custom_call.1} parent=11 // pred_region
          _
        $region72: #{tpu_custom_call.1} parent=11 // pred_fallthru
          _
        // Predicated region
        $region73: #{tpu_custom_call.1} parent=11 // pred_check
          %p701 = pneg %p500
        $region74: #{tpu_custom_call.1} parent=11 // pred_check_branch
          %703 = sbr.rel (%p701) target = $region76
        $region75: #{tpu_custom_call.1} parent=11 // pred_region
          %s705 = ssub.s32 4096, 4096
          %706 = vsyncadd [#allocation18], %s705
          %s707 = sshll.u32 [#allocation17], 4
          %s708 = int_to_ptr.vmem [resolvable:$true] %s707
          %713 = dma.hbm_to_vmem [thread:$0]  %s19, 4096, %s708, [#allocation18], 64, 64, 4
        $region76: #{tpu_custom_call.1} parent=11 // pred_fallthru
          _
        // Predicated region
        $region77: #{tpu_custom_call.1} parent=11 // pred_check
          %p714 = pneg %p521
        $region78: #{tpu_custom_call.1} parent=11 // pred_check_branch
          %716 = sbr.rel (%p714) target = $region80
        $region79: #{tpu_custom_call.1} parent=11 // pred_region
          _
        $region80: #{tpu_custom_call.1} parent=11 // pred_fallthru
          _
        // Predicated region
        $region81: #{tpu_custom_call.1} parent=11 // pred_check
          %p717 = pneg %p542
        $region82: #{tpu_custom_call.1} parent=11 // pred_check_branch
          %719 = sbr.rel (%p717) target = $region84
        $region83: #{tpu_custom_call.1} parent=11 // pred_region
          _
        $region84: #{tpu_custom_call.1} parent=11 // pred_fallthru
          _
        // Predicated region
        $region85: #{tpu_custom_call.1} parent=11 // pred_check
          %p720 = pneg %p563
        $region86: #{tpu_custom_call.1} parent=11 // pred_check_branch
          %722 = sbr.rel (%p720) target = $region88
        $region87: #{tpu_custom_call.1} parent=11 // pred_region
          _
        $region88: #{tpu_custom_call.1} parent=11 // pred_fallthru
          _
      $region12: #{tpu_custom_call.1} parent=5 // pred_fallthru
        _
      %p723 = scmp.lt.s32.totalorder %s44, 2
      // Predicated region
      $region89: #{tpu_custom_call.1} parent=5 // pred_check
        %p724 = pneg %p723
      $region90: #{tpu_custom_call.1} parent=5 // pred_check_branch
        %726 = sbr.rel (%p724) target = $region92
      $region91: #{tpu_custom_call.1} parent=5 // pred_region
        // Predicated region
        $region93: #{tpu_custom_call.1} parent=91 // pred_check
          %p727 = pneg %p78
        $region94: #{tpu_custom_call.1} parent=91 // pred_check_branch
          %729 = sbr.rel (%p727) target = $region96
        $region95: #{tpu_custom_call.1} parent=91 // pred_region
          %s730 = sand.u32 %s68, 1
          %s731 = scalar_lea.sflag [#allocation3], %s730
          %s732 = sand.u32 %s68, 1
          %s733 = smul.addr %s732, 8
          %s734 = scalar_lea.vmem [#allocation2], %s733
          %s736 = ssub.s32 128, 128
          %737 = vsyncadd %s731, %s736
          %s738 = sadd.s32 %s52, %s51
          %s739 = smul.addr %s738, 128
          %s740 = scalar_lea.hbm %s0, %s739
          %s742 = sshll.u32 %s734, 4
          %s743 = int_to_ptr.vmem [resolvable:$true] %s742
          %745 = dma.hbm_to_vmem [thread:$0]  %s740, 128, %s743, %s731
        $region96: #{tpu_custom_call.1} parent=91 // pred_fallthru
          _
        // Predicated region
        $region97: #{tpu_custom_call.1} parent=91 // pred_check
          %p746 = pneg %p104
        $region98: #{tpu_custom_call.1} parent=91 // pred_check_branch
          %748 = sbr.rel (%p746) target = $region100
        $region99: #{tpu_custom_call.1} parent=91 // pred_region
          %s749 = sand.u32 %s44, 1
          %s750 = scalar_lea.sflag [#allocation6], %s749
          %s751 = sand.u32 %s94, 1
          %s752 = smul.addr %s751, 16
          %s753 = scalar_lea.vmem [#allocation5], %s752
          %s755 = ssub.s32 256, 256
          %756 = vsyncadd %s750, %s755
          %s757 = smul.addr %s51, 2
          %s758 = smul.addr %s757, 128
          %s759 = scalar_lea.hbm %s1, %s758
          %s760 = sshll.u32 %s753, 4
          %s761 = int_to_ptr.vmem [resolvable:$true] %s760
          %766 = dma.hbm_to_vmem [thread:$0]  %s759, 256, %s761, %s750, 128, 128, 8
        $region100: #{tpu_custom_call.1} parent=91 // pred_fallthru
          _
        // Predicated region
        $region101: #{tpu_custom_call.1} parent=91 // pred_check
          %p767 = pneg %p132
        $region102: #{tpu_custom_call.1} parent=91 // pred_check_branch
          %769 = sbr.rel (%p767) target = $region104
        $region103: #{tpu_custom_call.1} parent=91 // pred_region
          %s770 = sand.u32 %s44, 1
          %s771 = scalar_lea.sflag [#allocation6], %s770
          %s772 = sand.u32 %s122, 1
          %s773 = smul.addr %s772, 8
          %s774 = scalar_lea.vmem [#allocation7], %s773
          %s776 = ssub.s32 128, 128
          %777 = vsyncadd %s771, %s776
          %s778 = sadd.s32 %s52, %s51
          %s779 = smul.addr %s778, 128
          %s780 = scalar_lea.hbm %s2, %s779
          %s782 = sshll.u32 %s774, 4
          %s783 = int_to_ptr.vmem [resolvable:$true] %s782
          %785 = dma.hbm_to_vmem [thread:$0]  %s780, 128, %s783, %s771
        $region104: #{tpu_custom_call.1} parent=91 // pred_fallthru
          _
        // Predicated region
        $region105: #{tpu_custom_call.1} parent=91 // pred_check
          %p786 = pneg %p158
        $region106: #{tpu_custom_call.1} parent=91 // pred_check_branch
          %788 = sbr.rel (%p786) target = $region108
        $region107: #{tpu_custom_call.1} parent=91 // pred_region
          %s789 = sand.u32 %s44, 1
          %s790 = scalar_lea.sflag [#allocation9], %s789
          %s791 = sand.u32 %s148, 1
          %s792 = smul.addr %s791, 16
          %s793 = scalar_lea.vmem [#allocation8], %s792
          %s795 = ssub.s32 256, 256
          %796 = vsyncadd %s790, %s795
          %s797 = smul.addr %s51, 2
          %s798 = smul.addr %s797, 128
          %s799 = scalar_lea.hbm %s3, %s798
          %s800 = sshll.u32 %s793, 4
          %s801 = int_to_ptr.vmem [resolvable:$true] %s800
          %806 = dma.hbm_to_vmem [thread:$0]  %s799, 256, %s801, %s790, 128, 128, 8
        $region108: #{tpu_custom_call.1} parent=91 // pred_fallthru
          _
      $region92: #{tpu_custom_call.1} parent=5 // pred_fallthru
        _
      %p807 = scmp.le.s32.totalorder 1, %s44
      %p808 = scmp.lt.s32.totalorder %s44, 3
      %p809 = pnand %p807, %p808
      %p810 = pneg %p809
      // Predicated region
      $region109: #{tpu_custom_call.1} parent=5 // pred_check
        _
      $region110: #{tpu_custom_call.1} parent=5 // pred_check_branch
        %812 = sbr.rel (%p809) target = $region112
      $region111: #{tpu_custom_call.1} parent=5 // pred_region
        %s813 = ssub.s32 %s44, 1
        %s814 = sand.u32 %s71, 1
        %s815 = scalar_lea.sflag [#allocation3], %s814
        %s816 = sand.u32 %s71, 1
        %s817 = smul.addr %s816, 8
        %s818 = scalar_lea.vmem [#allocation2], %s817
        // Predicated region
        $region113: #{tpu_custom_call.1} parent=111 // pred_check
          %p819 = pneg %p84
        $region114: #{tpu_custom_call.1} parent=111 // pred_check_branch
          %821 = sbr.rel (%p819) target = $region116
        $region115: #{tpu_custom_call.1} parent=111 // pred_region
          %822 = dma.done %s815, 128
        $region116: #{tpu_custom_call.1} parent=111 // pred_fallthru
          _
        %s823 = sand.u32 %s49, 1
        %s824 = scalar_lea.sflag [#allocation6], %s823
        %s825 = sand.u32 %s97, 1
        %s826 = smul.addr %s825, 16
        %s827 = scalar_lea.vmem [#allocation5], %s826
        // Predicated region
        $region117: #{tpu_custom_call.1} parent=111 // pred_check
          %p828 = pneg %p110
        $region118: #{tpu_custom_call.1} parent=111 // pred_check_branch
          %830 = sbr.rel (%p828) target = $region120
        $region119: #{tpu_custom_call.1} parent=111 // pred_region
          %831 = dma.done %s824, 256
        $region120: #{tpu_custom_call.1} parent=111 // pred_fallthru
          _
        %s832 = sand.u32 %s49, 1
        %s833 = scalar_lea.sflag [#allocation6], %s832
        %s834 = sand.u32 %s125, 1
        %s835 = smul.addr %s834, 8
        %s836 = scalar_lea.vmem [#allocation7], %s835
        // Predicated region
        $region121: #{tpu_custom_call.1} parent=111 // pred_check
          %p837 = pneg %p138
        $region122: #{tpu_custom_call.1} parent=111 // pred_check_branch
          %839 = sbr.rel (%p837) target = $region124
        $region123: #{tpu_custom_call.1} parent=111 // pred_region
          %840 = dma.done %s833, 128
        $region124: #{tpu_custom_call.1} parent=111 // pred_fallthru
          _
        %s841 = sand.u32 %s49, 1
        %s842 = scalar_lea.sflag [#allocation9], %s841
        %s843 = sand.u32 %s151, 1
        %s844 = smul.addr %s843, 16
        %s845 = scalar_lea.vmem [#allocation8], %s844
        // Predicated region
        $region125: #{tpu_custom_call.1} parent=111 // pred_check
          %p846 = pneg %p164
        $region126: #{tpu_custom_call.1} parent=111 // pred_check_branch
          %848 = sbr.rel (%p846) target = $region128
        $region127: #{tpu_custom_call.1} parent=111 // pred_region
          %849 = dma.done %s842, 256
        $region128: #{tpu_custom_call.1} parent=111 // pred_fallthru
          _
        // Predicated region
        $region129: #{tpu_custom_call.1} parent=111 // pred_check
          %p850 = pneg %p311
        $region130: #{tpu_custom_call.1} parent=111 // pred_check_branch
          %852 = sbr.rel (%p850) target = $region132
        $region131: #{tpu_custom_call.1} parent=111 // pred_region
          %853 = dma.done [#allocation9], 1024
        $region132: #{tpu_custom_call.1} parent=111 // pred_fallthru
          _
        // Predicated region
        $region133: #{tpu_custom_call.1} parent=111 // pred_check
          %p854 = pneg %p332
        $region134: #{tpu_custom_call.1} parent=111 // pred_check_branch
          %856 = sbr.rel (%p854) target = $region136
        $region135: #{tpu_custom_call.1} parent=111 // pred_region
          %857 = dma.done [#allocation12], 1024
        $region136: #{tpu_custom_call.1} parent=111 // pred_fallthru
          _
        // Predicated region
        $region137: #{tpu_custom_call.1} parent=111 // pred_check
          %p858 = pneg %p353
        $region138: #{tpu_custom_call.1} parent=111 // pred_check_branch
          %860 = sbr.rel (%p858) target = $region140
        $region139: #{tpu_custom_call.1} parent=111 // pred_region
          %861 = dma.done [#allocation12], 1024
        $region140: #{tpu_custom_call.1} parent=111 // pred_fallthru
          _
        // Predicated region
        $region141: #{tpu_custom_call.1} parent=111 // pred_check
          %p862 = pneg %p374
        $region142: #{tpu_custom_call.1} parent=111 // pred_check_branch
          %864 = sbr.rel (%p862) target = $region144
        $region143: #{tpu_custom_call.1} parent=111 // pred_region
          %865 = dma.done [#allocation15], 1024
        $region144: #{tpu_custom_call.1} parent=111 // pred_fallthru
          _
        // Predicated region
        $region145: #{tpu_custom_call.1} parent=111 // pred_check
          %p866 = pneg %p458
        $region146: #{tpu_custom_call.1} parent=111 // pred_check_branch
          %868 = sbr.rel (%p866) target = $region148
        $region147: #{tpu_custom_call.1} parent=111 // pred_region
          %869 = dma.done [#allocation15], 4096
        $region148: #{tpu_custom_call.1} parent=111 // pred_fallthru
          _
        // Predicated region
        $region149: #{tpu_custom_call.1} parent=111 // pred_check
          %p870 = pneg %p500
        $region150: #{tpu_custom_call.1} parent=111 // pred_check_branch
          %872 = sbr.rel (%p870) target = $region152
        $region151: #{tpu_custom_call.1} parent=111 // pred_region
          %873 = dma.done [#allocation18], 4096
        $region152: #{tpu_custom_call.1} parent=111 // pred_fallthru
          _
        %s874 = sand.u32 %s71, 1
        %s875 = scalar_lea.sflag [#allocation3], %s874
        %s876 = sand.u32 %s71, 1
        %s877 = smul.addr %s876, 8
        %s878 = scalar_lea.vmem [#allocation2], %s877
        %p879 = pneg %p84
        %p880 = pneg %p81
        %s881 = sand.u32 %s49, 1
        %s882 = scalar_lea.sflag [#allocation6], %s881
        %s883 = sand.u32 %s97, 1
        %s884 = smul.addr %s883, 16
        %s885 = scalar_lea.vmem [#allocation5], %s884
        %p886 = pneg %p110
        %p887 = pneg %p107
        %s888 = sand.u32 %s49, 1
        %s889 = scalar_lea.sflag [#allocation6], %s888
        %s890 = sand.u32 %s125, 1
        %s891 = smul.addr %s890, 8
        %s892 = scalar_lea.vmem [#allocation7], %s891
        %p893 = pneg %p138
        %p894 = pneg %p135
        %s895 = sand.u32 %s49, 1
        %s896 = scalar_lea.sflag [#allocation9], %s895
        %s897 = sand.u32 %s151, 1
        %s898 = smul.addr %s897, 16
        %s899 = scalar_lea.vmem [#allocation8], %s898
        %p900 = pneg %p164
        %p901 = pneg %p161
        %p902 = pneg %p185
        %p903 = pneg %p182
        %p904 = pneg %p206
        %p905 = pneg %p203
        %p906 = pneg %p227
        %p907 = pneg %p224
        %p908 = pneg %p248
        %p909 = pneg %p245
        %p910 = pneg %p269
        %p911 = pneg %p266
        %p912 = pneg %p290
        %p913 = pneg %p287
        %p914 = pneg %p311
        %p915 = pneg %p308
        %p916 = pneg %p332
        %p917 = pneg %p329
        %p918 = pneg %p353
        %p919 = pneg %p350
        %p920 = pneg %p374
        %p921 = pneg %p371
        %p922 = pneg %p395
        %p923 = pneg %p392
        %p924 = pneg %p416
        %p925 = pneg %p413
        %p926 = pneg %p437
        %p927 = pneg %p434
        %p928 = pneg %p458
        %p929 = pneg %p455
        %p930 = pneg %p479
        %p931 = pneg %p476
        %p932 = pneg %p500
        %p933 = pneg %p497
        %p934 = pneg %p521
        %p935 = pneg %p518
        %p936 = pneg %p542
        %p937 = pneg %p539
        %p938 = pneg %p563
        %p939 = pneg %p560
        %p940 = pneg %p591
        %p941 = pneg %p588
        %s942 = sand.u32 %s578, 1
        %s943 = scalar_lea.sflag [#allocation4], %s942
        %s944 = sand.u32 %s578, 1
        %s945 = smul.addr %s944, 8
        %s946 = scalar_lea.vmem [#allocation19], %s945
        %v948 = vld [vmem:[%s818] sm:$0xff]
        %v949 = vld [vmem:[%s836] sm:$0xff]
        %v950 = vld [vmem:[%s827] sm:$0xff]
        %v951 = vld [vmem:[%s827 + $0x8] sm:$0xff]
        %v952 = vld [vmem:[%s845] sm:$0xff]
        %v953 = vld [vmem:[%s845 + $0x8] sm:$0xff]
        %v954 = vadd.f32 %v948, %v949
        %v955 = vld [vmem:[%s4] sm:$0x1]
        %v956 = vld [vmem:[%s5] sm:$0x1]
        %957 = vadd.xlane.f32.xlu0 %v954
        %v958 = vpop.xlane.xlu0 %957
        %v959 = vrcp.pop 128.0
        %v960 = vmul.f32 %v958, %v959
        %v961 = vsub.f32 %v954, %v960
        %v962 = vmul.f32 %v961, %v961
        %963 = vadd.xlane.f32.xlu0 %v962
        %v964 = vpop.xlane.xlu0 %963
        %v965 = vmul.f32 %v964, %v959
        %v966 = vadd.f32 %v965, 1e-05
        %v967 = vrsqrt.pop %v966
        %v968 = vmul.f32 %v961, %v967
        %v970 = vlaneseq
        %v971 = vshrl.u32 %v970, 7
        %v972 = vsub.s32 0, %v971
        %v973 = vrot.slane %v955, %v972
        %v975 = vmul.f32 %v968, %v973
        %v977 = vlaneseq
        %v978 = vshrl.u32 %v977, 7
        %v979 = vsub.s32 0, %v978
        %v980 = vrot.slane %v956, %v979
        %v982 = vadd.f32 %v975, %v980
        %v983 = vpack.c.bf16 %v982, %v982
        %v984 = vadd.f32 %v950, %v952
        %v985 = vadd.f32 %v951, %v953
        %v986 = vld [vmem:[%s6] sm:$0x1]
        %v987 = vld [vmem:[%s7] sm:$0x1]
        %988 = vadd.xlane.f32.xlu0 %v984
        %v989 = vpop.xlane.xlu0 %988
        %990 = vadd.xlane.f32.xlu0 %v985
        %v991 = vpop.xlane.xlu0 %990
        %v992 = vmul.f32 %v989, %v959
        %v993 = vmul.f32 %v991, %v959
        %v994 = vsub.f32 %v984, %v992
        %v995 = vsub.f32 %v985, %v993
        %v996 = vmul.f32 %v994, %v994
        %v997 = vmul.f32 %v995, %v995
        %998 = vadd.xlane.f32.xlu0 %v996
        %v999 = vpop.xlane.xlu0 %998
        %1000 = vadd.xlane.f32.xlu0 %v997
        %v1001 = vpop.xlane.xlu0 %1000
        %v1002 = vmul.f32 %v999, %v959
        %v1003 = vmul.f32 %v1001, %v959
        %v1004 = vadd.f32 %v1002, 1e-05
        %v1005 = vadd.f32 %v1003, 1e-05
        %v1006 = vrsqrt.pop %v1004
        %v1007 = vrsqrt.pop %v1005
        %v1008 = vmul.f32 %v994, %v1006
        %v1009 = vmul.f32 %v995, %v1007
        %v1011 = vlaneseq
        %v1012 = vshrl.u32 %v1011, 7
        %v1013 = vsub.s32 0, %v1012
        %v1014 = vrot.slane %v986, %v1013
        %v1016 = vmul.f32 %v1008, %v1014
        %v1017 = vmul.f32 %v1009, %v1014
        %v1019 = vlaneseq
        %v1020 = vshrl.u32 %v1019, 7
        %v1021 = vsub.s32 0, %v1020
        %v1022 = vrot.slane %v987, %v1021
        %v1024 = vadd.f32 %v1016, %v1022
        %v1025 = vadd.f32 %v1017, %v1022
        %v1026 = vpack.c.bf16 %v1025, %v1024
        %v1027 = vld [vmem:[%s8] sm:$0x1]
        %v1028 = vld [vmem:[%s9] sm:$0x1]
        %1029 = vadd.xlane.f32.xlu0 %v950
        %v1030 = vpop.xlane.xlu0 %1029
        %1031 = vadd.xlane.f32.xlu0 %v951
        %v1032 = vpop.xlane.xlu0 %1031
        %v1033 = vmul.f32 %v1030, %v959
        %v1034 = vmul.f32 %v1032, %v959
        %v1035 = vsub.f32 %v950, %v1033
        %v1036 = vsub.f32 %v951, %v1034
        %v1037 = vmul.f32 %v1035, %v1035
        %v1038 = vmul.f32 %v1036, %v1036
        %1039 = vadd.xlane.f32.xlu0 %v1037
        %v1040 = vpop.xlane.xlu0 %1039
        %1041 = vadd.xlane.f32.xlu0 %v1038
        %v1042 = vpop.xlane.xlu0 %1041
        %v1043 = vmul.f32 %v1040, %v959
        %v1044 = vmul.f32 %v1042, %v959
        %v1045 = vadd.f32 %v1043, 1e-05
        %v1046 = vadd.f32 %v1044, 1e-05
        %v1047 = vrsqrt.pop %v1045
        %v1048 = vrsqrt.pop %v1046
        %v1049 = vmul.f32 %v1035, %v1047
        %v1050 = vmul.f32 %v1036, %v1048
        %v1052 = vlaneseq
        %v1053 = vshrl.u32 %v1052, 7
        %v1054 = vsub.s32 0, %v1053
        %v1055 = vrot.slane %v1027, %v1054
        %v1057 = vmul.f32 %v1049, %v1055
        %v1058 = vmul.f32 %v1050, %v1055
        %v1060 = vlaneseq
        %v1061 = vshrl.u32 %v1060, 7
        %v1062 = vsub.s32 0, %v1061
        %v1063 = vrot.slane %v1028, %v1062
        %v1065 = vadd.f32 %v1057, %v1063
        %v1066 = vadd.f32 %v1058, %v1063
        %v1067 = vpack.c.bf16 %v1066, %v1065
        %v1068 = vld [vmem:[#allocation10] sm:$0xf]
        %v1069 = vld [vmem:[#allocation10 + $0x4] sm:$0xf]
        %v1070 = vld [vmem:[#allocation10 + $0x8] sm:$0xf]
        %v1071 = vld [vmem:[#allocation10 + $0xc] sm:$0xf]
        %v1072 = vld [vmem:[#allocation10 + $0x10] sm:$0xf]
        %v1073 = vld [vmem:[#allocation10 + $0x14] sm:$0xf]
        %v1074 = vld [vmem:[#allocation10 + $0x18] sm:$0xf]
        %v1075 = vld [vmem:[#allocation10 + $0x1c] sm:$0xf]
        %v1076 = vld [vmem:[#allocation10 + $0x20] sm:$0xf]
        %v1077 = vld [vmem:[#allocation10 + $0x24] sm:$0xf]
        %v1078 = vld [vmem:[#allocation10 + $0x28] sm:$0xf]
        %v1079 = vld [vmem:[#allocation10 + $0x2c] sm:$0xf]
        %v1080 = vld [vmem:[#allocation10 + $0x30] sm:$0xf]
        %v1081 = vld [vmem:[#allocation10 + $0x34] sm:$0xf]
        %v1082 = vld [vmem:[#allocation10 + $0x38] sm:$0xf]
        %v1083 = vld [vmem:[#allocation10 + $0x3c] sm:$0xf]
        %v1100 = vunpack.c.l.b16 %v1068
        %v1101 = vunpack.c.l.b16 %v1069
        %v1102 = vunpack.c.l.b16 %v1070
        %v1103 = vunpack.c.l.b16 %v1071
        %v1104 = vunpack.c.l.b16 %v1072
        %v1105 = vunpack.c.l.b16 %v1073
        %v1106 = vunpack.c.l.b16 %v1074
        %v1107 = vunpack.c.l.b16 %v1075
        %v1108 = vunpack.c.l.b16 %v1076
        %v1109 = vunpack.c.l.b16 %v1077
        %v1110 = vunpack.c.l.b16 %v1078
        %v1111 = vunpack.c.l.b16 %v1079
        %v1112 = vunpack.c.l.b16 %v1080
        %v1113 = vunpack.c.l.b16 %v1081
        %v1114 = vunpack.c.l.b16 %v1082
        %v1115 = vunpack.c.l.b16 %v1083
        %v1116 = vpack.c.b16 %v1101, %v1100
        %v1117 = vpack.c.b16 %v1103, %v1102
        %v1118 = vpack.c.b16 %v1105, %v1104
        %v1119 = vpack.c.b16 %v1107, %v1106
        %v1120 = vpack.c.b16 %v1109, %v1108
        %v1121 = vpack.c.b16 %v1111, %v1110
        %v1122 = vpack.c.b16 %v1113, %v1112
        %v1123 = vpack.c.b16 %v1115, %v1114
        %1132 = vmatprep.subr.bf16.mxu0 0
        %1133 = vmatpush1.bf16.msra.mxu0 %v1116
        %1134 = vmatprep.subr.bf16.mxu0 0
        %1135 = vmatpush1.bf16.msra.mxu0 %v1117
        %1136 = vmatprep.subr.bf16.mxu0 0
        %1137 = vmatpush1.bf16.msra.mxu0 %v1118
        %1138 = vmatprep.subr.bf16.mxu0 0
        %1139 = vmatpush1.bf16.msra.mxu0 %v1119
        %1140 = vmatprep.subr.bf16.mxu0 0
        %1141 = vmatpush1.bf16.msra.mxu0 %v1120
        %1142 = vmatprep.subr.bf16.mxu0 0
        %1143 = vmatpush1.bf16.msra.mxu0 %v1121
        %1144 = vmatprep.subr.bf16.mxu0 0
        %1145 = vmatpush1.bf16.msra.mxu0 %v1122
        %1146 = vmatprep.subr.bf16.mxu0 0
        %1147 = vmatpush1.bf16.msra.mxu0 %v1123
        %1148 = vmatprep.subr.bf16.mxu0 0
        %1149 = vmatpush1.bf16.msra.mxu0 0
        %1150 = vmatprep.subr.bf16.mxu0 0
        %1151 = vmatpush1.bf16.msra.mxu0 0
        %1152 = vmatprep.subr.bf16.mxu0 0
        %1153 = vmatpush1.bf16.msra.mxu0 0
        %1154 = vmatprep.subr.bf16.mxu0 0
        %1155 = vmatpush1.bf16.msra.mxu0 0
        %1156 = vmatprep.subr.bf16.mxu0 0
        %1157 = vmatpush1.bf16.msra.mxu0 0
        %1158 = vmatprep.subr.bf16.mxu0 0
        %1159 = vmatpush1.bf16.msra.mxu0 0
        %1160 = vmatprep.subr.bf16.mxu0 0
        %1161 = vmatpush1.bf16.msra.mxu0 0
        %1162 = vmatprep.subr.bf16.mxu0 0
        %1163 = vmatpush1.bf16.msra.mxu0 0
        %1164 = vmatprep.mubr.bf16.mxu0 0
        %1165 = vmatmul.mubr.bf16.gmra.mrb[0].mxu0 %v983
        %v1166 = vpop.f32.mrb[0].mxu0
        %v1167 = vadd.f32 0.0, %v1166
        %v1168 = vpop.f32.mrb[0].mxu0
        %v1169 = vpop.f32.mrb[0].mxu0
        %v1170 = vpop.f32.mrb[0].mxu0
        %1171 = vdwg.mxu0
        %v1172 = vpack.c.bf16 %v1167, %v1167
        %v1173 = vld [vmem:[#allocation11] sm:$0xf]
        %v1174 = vld [vmem:[#allocation11 + $0x4] sm:$0xf]
        %v1175 = vld [vmem:[#allocation11 + $0x8] sm:$0xf]
        %v1176 = vld [vmem:[#allocation11 + $0xc] sm:$0xf]
        %v1177 = vld [vmem:[#allocation11 + $0x10] sm:$0xf]
        %v1178 = vld [vmem:[#allocation11 + $0x14] sm:$0xf]
        %v1179 = vld [vmem:[#allocation11 + $0x18] sm:$0xf]
        %v1180 = vld [vmem:[#allocation11 + $0x1c] sm:$0xf]
        %v1181 = vld [vmem:[#allocation11 + $0x20] sm:$0xf]
        %v1182 = vld [vmem:[#allocation11 + $0x24] sm:$0xf]
        %v1183 = vld [vmem:[#allocation11 + $0x28] sm:$0xf]
        %v1184 = vld [vmem:[#allocation11 + $0x2c] sm:$0xf]
        %v1185 = vld [vmem:[#allocation11 + $0x30] sm:$0xf]
        %v1186 = vld [vmem:[#allocation11 + $0x34] sm:$0xf]
        %v1187 = vld [vmem:[#allocation11 + $0x38] sm:$0xf]
        %v1188 = vld [vmem:[#allocation11 + $0x3c] sm:$0xf]
        %v1205 = vunpack.c.l.b16 %v1173
        %v1206 = vunpack.c.l.b16 %v1174
        %v1207 = vunpack.c.l.b16 %v1175
        %v1208 = vunpack.c.l.b16 %v1176
        %v1209 = vunpack.c.l.b16 %v1177
        %v1210 = vunpack.c.l.b16 %v1178
        %v1211 = vunpack.c.l.b16 %v1179
        %v1212 = vunpack.c.l.b16 %v1180
        %v1213 = vunpack.c.l.b16 %v1181
        %v1214 = vunpack.c.l.b16 %v1182
        %v1215 = vunpack.c.l.b16 %v1183
        %v1216 = vunpack.c.l.b16 %v1184
        %v1217 = vunpack.c.l.b16 %v1185
        %v1218 = vunpack.c.l.b16 %v1186
        %v1219 = vunpack.c.l.b16 %v1187
        %v1220 = vunpack.c.l.b16 %v1188
        %v1221 = vpack.c.b16 %v1206, %v1205
        %v1222 = vpack.c.b16 %v1208, %v1207
        %v1223 = vpack.c.b16 %v1210, %v1209
        %v1224 = vpack.c.b16 %v1212, %v1211
        %v1225 = vpack.c.b16 %v1214, %v1213
        %v1226 = vpack.c.b16 %v1216, %v1215
        %v1227 = vpack.c.b16 %v1218, %v1217
        %v1228 = vpack.c.b16 %v1220, %v1219
        %1237 = vmatprep.subr.bf16.mxu0 0
        %1238 = vmatpush1.bf16.msra.mxu0 %v1221
        %1239 = vmatprep.subr.bf16.mxu0 0
        %1240 = vmatpush1.bf16.msra.mxu0 %v1222
        %1241 = vmatprep.subr.bf16.mxu0 0
        %1242 = vmatpush1.bf16.msra.mxu0 %v1223
        %1243 = vmatprep.subr.bf16.mxu0 0
        %1244 = vmatpush1.bf16.msra.mxu0 %v1224
        %1245 = vmatprep.subr.bf16.mxu0 0
        %1246 = vmatpush1.bf16.msra.mxu0 %v1225
        %1247 = vmatprep.subr.bf16.mxu0 0
        %1248 = vmatpush1.bf16.msra.mxu0 %v1226
        %1249 = vmatprep.subr.bf16.mxu0 0
        %1250 = vmatpush1.bf16.msra.mxu0 %v1227
        %1251 = vmatprep.subr.bf16.mxu0 0
        %1252 = vmatpush1.bf16.msra.mxu0 %v1228
        %1253 = vmatprep.subr.bf16.mxu0 0
        %1254 = vmatpush1.bf16.msra.mxu0 0
        %1255 = vmatprep.subr.bf16.mxu0 0
        %1256 = vmatpush1.bf16.msra.mxu0 0
        %1257 = vmatprep.subr.bf16.mxu0 0
        %1258 = vmatpush1.bf16.msra.mxu0 0
        %1259 = vmatprep.subr.bf16.mxu0 0
        %1260 = vmatpush1.bf16.msra.mxu0 0
        %1261 = vmatprep.subr.bf16.mxu0 0
        %1262 = vmatpush1.bf16.msra.mxu0 0
        %1263 = vmatprep.subr.bf16.mxu0 0
        %1264 = vmatpush1.bf16.msra.mxu0 0
        %1265 = vmatprep.subr.bf16.mxu0 0
        %1266 = vmatpush1.bf16.msra.mxu0 0
        %1267 = vmatprep.subr.bf16.mxu0 0
        %1268 = vmatpush1.bf16.msra.mxu0 0
        %1269 = vmatprep.mubr.bf16.mxu0 0
        %1270 = vmatmul.mubr.bf16.gmra.mrb[0].mxu0 %v1026
        %v1271 = vpop.f32.mrb[0].mxu0
        %v1272 = vadd.f32 0.0, %v1271
        %v1273 = vpop.f32.mrb[0].mxu0
        %v1274 = vpop.f32.mrb[0].mxu0
        %v1275 = vadd.f32 0.0, %v1274
        %v1276 = vpop.f32.mrb[0].mxu0
        %1277 = vdwg.mxu0
        %v1278 = vpack.c.bf16 %v1275, %v1272
        %v1279 = vld [vmem:[#allocation13] sm:$0xf]
        %v1280 = vld [vmem:[#allocation13 + $0x4] sm:$0xf]
        %v1281 = vld [vmem:[#allocation13 + $0x8] sm:$0xf]
        %v1282 = vld [vmem:[#allocation13 + $0xc] sm:$0xf]
        %v1283 = vld [vmem:[#allocation13 + $0x10] sm:$0xf]
        %v1284 = vld [vmem:[#allocation13 + $0x14] sm:$0xf]
        %v1285 = vld [vmem:[#allocation13 + $0x18] sm:$0xf]
        %v1286 = vld [vmem:[#allocation13 + $0x1c] sm:$0xf]
        %v1287 = vld [vmem:[#allocation13 + $0x20] sm:$0xf]
        %v1288 = vld [vmem:[#allocation13 + $0x24] sm:$0xf]
        %v1289 = vld [vmem:[#allocation13 + $0x28] sm:$0xf]
        %v1290 = vld [vmem:[#allocation13 + $0x2c] sm:$0xf]
        %v1291 = vld [vmem:[#allocation13 + $0x30] sm:$0xf]
        %v1292 = vld [vmem:[#allocation13 + $0x34] sm:$0xf]
        %v1293 = vld [vmem:[#allocation13 + $0x38] sm:$0xf]
        %v1294 = vld [vmem:[#allocation13 + $0x3c] sm:$0xf]
        %v1311 = vunpack.c.l.b16 %v1279
        %v1312 = vunpack.c.l.b16 %v1280
        %v1313 = vunpack.c.l.b16 %v1281
        %v1314 = vunpack.c.l.b16 %v1282
        %v1315 = vunpack.c.l.b16 %v1283
        %v1316 = vunpack.c.l.b16 %v1284
        %v1317 = vunpack.c.l.b16 %v1285
        %v1318 = vunpack.c.l.b16 %v1286
        %v1319 = vunpack.c.l.b16 %v1287
        %v1320 = vunpack.c.l.b16 %v1288
        %v1321 = vunpack.c.l.b16 %v1289
        %v1322 = vunpack.c.l.b16 %v1290
        %v1323 = vunpack.c.l.b16 %v1291
        %v1324 = vunpack.c.l.b16 %v1292
        %v1325 = vunpack.c.l.b16 %v1293
        %v1326 = vunpack.c.l.b16 %v1294
        %v1327 = vpack.c.b16 %v1312, %v1311
        %v1328 = vpack.c.b16 %v1314, %v1313
        %v1329 = vpack.c.b16 %v1316, %v1315
        %v1330 = vpack.c.b16 %v1318, %v1317
        %v1331 = vpack.c.b16 %v1320, %v1319
        %v1332 = vpack.c.b16 %v1322, %v1321
        %v1333 = vpack.c.b16 %v1324, %v1323
        %v1334 = vpack.c.b16 %v1326, %v1325
        %1343 = vmatprep.subr.bf16.mxu0 0
        %1344 = vmatpush1.bf16.msra.mxu0 %v1327
        %1345 = vmatprep.subr.bf16.mxu0 0
        %1346 = vmatpush1.bf16.msra.mxu0 %v1328
        %1347 = vmatprep.subr.bf16.mxu0 0
        %1348 = vmatpush1.bf16.msra.mxu0 %v1329
        %1349 = vmatprep.subr.bf16.mxu0 0
        %1350 = vmatpush1.bf16.msra.mxu0 %v1330
        %1351 = vmatprep.subr.bf16.mxu0 0
        %1352 = vmatpush1.bf16.msra.mxu0 %v1331
        %1353 = vmatprep.subr.bf16.mxu0 0
        %1354 = vmatpush1.bf16.msra.mxu0 %v1332
        %1355 = vmatprep.subr.bf16.mxu0 0
        %1356 = vmatpush1.bf16.msra.mxu0 %v1333
        %1357 = vmatprep.subr.bf16.mxu0 0
        %1358 = vmatpush1.bf16.msra.mxu0 %v1334
        %1359 = vmatprep.subr.bf16.mxu0 0
        %1360 = vmatpush1.bf16.msra.mxu0 0
        %1361 = vmatprep.subr.bf16.mxu0 0
        %1362 = vmatpush1.bf16.msra.mxu0 0
        %1363 = vmatprep.subr.bf16.mxu0 0
        %1364 = vmatpush1.bf16.msra.mxu0 0
        %1365 = vmatprep.subr.bf16.mxu0 0
        %1366 = vmatpush1.bf16.msra.mxu0 0
        %1367 = vmatprep.subr.bf16.mxu0 0
        %1368 = vmatpush1.bf16.msra.mxu0 0
        %1369 = vmatprep.subr.bf16.mxu0 0
        %1370 = vmatpush1.bf16.msra.mxu0 0
        %1371 = vmatprep.subr.bf16.mxu0 0
        %1372 = vmatpush1.bf16.msra.mxu0 0
        %1373 = vmatprep.subr.bf16.mxu0 0
        %1374 = vmatpush1.bf16.msra.mxu0 0
        %1375 = vmatprep.mubr.bf16.mxu0 0
        %1376 = vmatmul.mubr.bf16.gmra.mrb[0].mxu0 %v1067
        %v1377 = vpop.f32.mrb[0].mxu0
        %v1378 = vadd.f32 0.0, %v1377
        %v1379 = vpop.f32.mrb[0].mxu0
        %v1380 = vpop.f32.mrb[0].mxu0
        %v1381 = vadd.f32 0.0, %v1380
        %v1382 = vpop.f32.mrb[0].mxu0
        %1383 = vdwg.mxu0
        %v1384 = vpack.c.bf16 %v1381, %v1378
        %1386 = vrot.lane.b32.xlu0 %v1172, 96
        %v1387 = vpop.permute.xlu0 %1386
        %1388 = vrot.lane.b32.xlu0 %v1172, 64
        %v1389 = vpop.permute.xlu0 %1388
        %1390 = vrot.lane.b32.xlu0 %v1172, 32
        %v1391 = vpop.permute.xlu0 %1390
        %1393 = vrot.lane.b32.xlu0 %v1278, 96
        %v1394 = vpop.permute.xlu0 %1393
        %1395 = vrot.lane.b32.xlu0 %v1278, 64
        %v1396 = vpop.permute.xlu0 %1395
        %1397 = vrot.lane.b32.xlu0 %v1278, 32
        %v1398 = vpop.permute.xlu0 %1397
        %1400 = vrot.lane.b32.xlu0 %v1384, 96
        %v1401 = vpop.permute.xlu0 %1400
        %1403 = vrot.lane.b32.xlu0 %v1384, 64
        %v1404 = vpop.permute.xlu0 %1403
        %1406 = vrot.lane.b32.xlu0 %v1384, 32
        %v1407 = vpop.permute.xlu0 %1406
        %vm1409 = vcmask 261120
        %v1411 = vsel %vm1409, %v1172, 0
        %v1414 = vsel %vm1409, %v1278, 0
        %1416 = vmatprep.subr.bf16.mxu0 0
        %1417 = vmatpush1.bf16.xpose.msra.mxu0 %v1414
        %1418 = vmatprep.subr.bf16.mxu0 0
        %1419 = vmatpush1.bf16.xpose.msra.mxu0 0
        %1420 = vmatprep.subr.bf16.mxu0 0
        %1421 = vmatpush1.bf16.xpose.msra.mxu0 0
        %1422 = vmatprep.subr.bf16.mxu0 0
        %1423 = vmatpush1.bf16.xpose.msra.mxu0 0
        %1424 = vmatprep.subr.bf16.mxu0 0
        %1425 = vmatpush1.bf16.xpose.msra.mxu0 0
        %1426 = vmatprep.subr.bf16.mxu0 0
        %1427 = vmatpush1.bf16.xpose.msra.mxu0 0
        %1428 = vmatprep.subr.bf16.mxu0 0
        %1429 = vmatpush1.bf16.xpose.msra.mxu0 0
        %1430 = vmatprep.subr.bf16.mxu0 0
        %1431 = vmatpush1.bf16.xpose.msra.mxu0 0
        %1432 = vmatprep.subr.bf16.mxu0 0
        %1433 = vmatpush1.bf16.xpose.msra.mxu0 0
        %1434 = vmatprep.subr.bf16.mxu0 0
        %1435 = vmatpush1.bf16.xpose.msra.mxu0 0
        %1436 = vmatprep.subr.bf16.mxu0 0
        %1437 = vmatpush1.bf16.xpose.msra.mxu0 0
        %1438 = vmatprep.subr.bf16.mxu0 0
        %1439 = vmatpush1.bf16.xpose.msra.mxu0 0
        %1440 = vmatprep.subr.bf16.mxu0 0
        %1441 = vmatpush1.bf16.xpose.msra.mxu0 0
        %1442 = vmatprep.subr.bf16.mxu0 0
        %1443 = vmatpush1.bf16.xpose.msra.mxu0 0
        %1444 = vmatprep.subr.bf16.mxu0 0
        %1445 = vmatpush1.bf16.xpose.msra.mxu0 0
        %1446 = vmatprep.subr.bf16.mxu0 0
        %1447 = vmatpush1.bf16.xpose.msra.mxu0 0
        %1448 = vmatprep.mubr.bf16.mxu0 0
        %1449 = vmatmul.mubr.bf16.gmra.mrb[0].mxu0 %v1411
        %v1450 = vpop.f32.mrb[0].mxu0
        %v1451 = vadd.f32 0.0, %v1450
        %v1452 = vpop.f32.mrb[0].mxu0
        %v1453 = vpop.f32.mrb[0].mxu0
        %v1454 = vpop.f32.mrb[0].mxu0
        %1455 = vdwg.mxu0
        %v1457 = vsel %vm1409, %v1387, 0
        %v1460 = vsel %vm1409, %v1394, 0
        %1462 = vmatprep.subr.bf16.mxu0 0
        %1463 = vmatpush1.bf16.xpose.msra.mxu0 %v1460
        %1464 = vmatprep.subr.bf16.mxu0 0
        %1465 = vmatpush1.bf16.xpose.msra.mxu0 0
        %1466 = vmatprep.subr.bf16.mxu0 0
        %1467 = vmatpush1.bf16.xpose.msra.mxu0 0
        %1468 = vmatprep.subr.bf16.mxu0 0
        %1469 = vmatpush1.bf16.xpose.msra.mxu0 0
        %1470 = vmatprep.subr.bf16.mxu0 0
        %1471 = vmatpush1.bf16.xpose.msra.mxu0 0
        %1472 = vmatprep.subr.bf16.mxu0 0
        %1473 = vmatpush1.bf16.xpose.msra.mxu0 0
        %1474 = vmatprep.subr.bf16.mxu0 0
        %1475 = vmatpush1.bf16.xpose.msra.mxu0 0
        %1476 = vmatprep.subr.bf16.mxu0 0
        %1477 = vmatpush1.bf16.xpose.msra.mxu0 0
        %1478 = vmatprep.subr.bf16.mxu0 0
        %1479 = vmatpush1.bf16.xpose.msra.mxu0 0
        %1480 = vmatprep.subr.bf16.mxu0 0
        %1481 = vmatpush1.bf16.xpose.msra.mxu0 0
        %1482 = vmatprep.subr.bf16.mxu0 0
        %1483 = vmatpush1.bf16.xpose.msra.mxu0 0
        %1484 = vmatprep.subr.bf16.mxu0 0
        %1485 = vmatpush1.bf16.xpose.msra.mxu0 0
        %1486 = vmatprep.subr.bf16.mxu0 0
        %1487 = vmatpush1.bf16.xpose.msra.mxu0 0
        %1488 = vmatprep.subr.bf16.mxu0 0
        %1489 = vmatpush1.bf16.xpose.msra.mxu0 0
        %1490 = vmatprep.subr.bf16.mxu0 0
        %1491 = vmatpush1.bf16.xpose.msra.mxu0 0
        %1492 = vmatprep.subr.bf16.mxu0 0
        %1493 = vmatpush1.bf16.xpose.msra.mxu0 0
        %1494 = vmatprep.mubr.bf16.mxu0 0
        %1495 = vmatmul.mubr.bf16.gmra.mrb[0].mxu0 %v1457
        %v1496 = vpop.f32.mrb[0].mxu0
        %v1497 = vadd.f32 0.0, %v1496
        %v1498 = vpop.f32.mrb[0].mxu0
        %v1499 = vpop.f32.mrb[0].mxu0
        %v1500 = vpop.f32.mrb[0].mxu0
        %1501 = vdwg.mxu0
        %v1503 = vsel %vm1409, %v1389, 0
        %v1506 = vsel %vm1409, %v1396, 0
        %1508 = vmatprep.subr.bf16.mxu0 0
        %1509 = vmatpush1.bf16.xpose.msra.mxu0 %v1506
        %1510 = vmatprep.subr.bf16.mxu0 0
        %1511 = vmatpush1.bf16.xpose.msra.mxu0 0
        %1512 = vmatprep.subr.bf16.mxu0 0
        %1513 = vmatpush1.bf16.xpose.msra.mxu0 0
        %1514 = vmatprep.subr.bf16.mxu0 0
        %1515 = vmatpush1.bf16.xpose.msra.mxu0 0
        %1516 = vmatprep.subr.bf16.mxu0 0
        %1517 = vmatpush1.bf16.xpose.msra.mxu0 0
        %1518 = vmatprep.subr.bf16.mxu0 0
        %1519 = vmatpush1.bf16.xpose.msra.mxu0 0
        %1520 = vmatprep.subr.bf16.mxu0 0
        %1521 = vmatpush1.bf16.xpose.msra.mxu0 0
        %1522 = vmatprep.subr.bf16.mxu0 0
        %1523 = vmatpush1.bf16.xpose.msra.mxu0 0
        %1524 = vmatprep.subr.bf16.mxu0 0
        %1525 = vmatpush1.bf16.xpose.msra.mxu0 0
        %1526 = vmatprep.subr.bf16.mxu0 0
        %1527 = vmatpush1.bf16.xpose.msra.mxu0 0
        %1528 = vmatprep.subr.bf16.mxu0 0
        %1529 = vmatpush1.bf16.xpose.msra.mxu0 0
        %1530 = vmatprep.subr.bf16.mxu0 0
        %1531 = vmatpush1.bf16.xpose.msra.mxu0 0
        %1532 = vmatprep.subr.bf16.mxu0 0
        %1533 = vmatpush1.bf16.xpose.msra.mxu0 0
        %1534 = vmatprep.subr.bf16.mxu0 0
        %1535 = vmatpush1.bf16.xpose.msra.mxu0 0
        %1536 = vmatprep.subr.bf16.mxu0 0
        %1537 = vmatpush1.bf16.xpose.msra.mxu0 0
        %1538 = vmatprep.subr.bf16.mxu0 0
        %1539 = vmatpush1.bf16.xpose.msra.mxu0 0
        %1540 = vmatprep.mubr.bf16.mxu0 0
        %1541 = vmatmul.mubr.bf16.gmra.mrb[0].mxu0 %v1503
        %v1542 = vpop.f32.mrb[0].mxu0
        %v1543 = vadd.f32 0.0, %v1542
        %v1544 = vpop.f32.mrb[0].mxu0
        %v1545 = vpop.f32.mrb[0].mxu0
        %v1546 = vpop.f32.mrb[0].mxu0
        %1547 = vdwg.mxu0
        %v1549 = vsel %vm1409, %v1391, 0
        %v1552 = vsel %vm1409, %v1398, 0
        %1554 = vmatprep.subr.bf16.mxu0 0
        %1555 = vmatpush1.bf16.xpose.msra.mxu0 %v1552
        %1556 = vmatprep.subr.bf16.mxu0 0
        %1557 = vmatpush1.bf16.xpose.msra.mxu0 0
        %1558 = vmatprep.subr.bf16.mxu0 0
        %1559 = vmatpush1.bf16.xpose.msra.mxu0 0
        %1560 = vmatprep.subr.bf16.mxu0 0
        %1561 = vmatpush1.bf16.xpose.msra.mxu0 0
        %1562 = vmatprep.subr.bf16.mxu0 0
        %1563 = vmatpush1.bf16.xpose.msra.mxu0 0
        %1564 = vmatprep.subr.bf16.mxu0 0
        %1565 = vmatpush1.bf16.xpose.msra.mxu0 0
        %1566 = vmatprep.subr.bf16.mxu0 0
        %1567 = vmatpush1.bf16.xpose.msra.mxu0 0
        %1568 = vmatprep.subr.bf16.mxu0 0
        %1569 = vmatpush1.bf16.xpose.msra.mxu0 0
        %1570 = vmatprep.subr.bf16.mxu0 0
        %1571 = vmatpush1.bf16.xpose.msra.mxu0 0
        %1572 = vmatprep.subr.bf16.mxu0 0
        %1573 = vmatpush1.bf16.xpose.msra.mxu0 0
        %1574 = vmatprep.subr.bf16.mxu0 0
        %1575 = vmatpush1.bf16.xpose.msra.mxu0 0
        %1576 = vmatprep.subr.bf16.mxu0 0
        %1577 = vmatpush1.bf16.xpose.msra.mxu0 0
        %1578 = vmatprep.subr.bf16.mxu0 0
        %1579 = vmatpush1.bf16.xpose.msra.mxu0 0
        %1580 = vmatprep.subr.bf16.mxu0 0
        %1581 = vmatpush1.bf16.xpose.msra.mxu0 0
        %1582 = vmatprep.subr.bf16.mxu0 0
        %1583 = vmatpush1.bf16.xpose.msra.mxu0 0
        %1584 = vmatprep.subr.bf16.mxu0 0
        %1585 = vmatpush1.bf16.xpose.msra.mxu0 0
        %1586 = vmatprep.mubr.bf16.mxu0 0
        %1587 = vmatmul.mubr.bf16.gmra.mrb[0].mxu0 %v1549
        %v1588 = vpop.f32.mrb[0].mxu0
        %v1589 = vadd.f32 0.0, %v1588
        %v1590 = vpop.f32.mrb[0].mxu0
        %v1591 = vpop.f32.mrb[0].mxu0
        %v1592 = vpop.f32.mrb[0].mxu0
        %1593 = vdwg.mxu0
        %vm1594 = vcmask 130048
        %v1595 = vsel %vm1594, %v1451, -inf
        %1596 = vmax.xlane.f32.xlu0 %v1595
        %v1597 = vpop.xlane.xlu0 %1596
        %v1598 = vsel %vm1594, %v1497, -inf
        %1599 = vmax.xlane.f32.xlu0 %v1598
        %v1600 = vpop.xlane.xlu0 %1599
        %v1601 = vsel %vm1594, %v1543, -inf
        %1602 = vmax.xlane.f32.xlu0 %v1601
        %v1603 = vpop.xlane.xlu0 %1602
        %v1604 = vsel %vm1594, %v1589, -inf
        %1605 = vmax.xlane.f32.xlu0 %v1604
        %v1606 = vpop.xlane.xlu0 %1605
        %v1607 = vsub.f32 %v1451, %v1597
        %v1608 = vsub.f32 %v1497, %v1600
        %v1609 = vsub.f32 %v1543, %v1603
        %v1610 = vsub.f32 %v1589, %v1606
        %v1611 = vmul.f32 %v1607, 1.442695
        %v1612 = vpow.pop %v1611
        %v1613 = vmul.f32 %v1608, 1.442695
        %v1614 = vpow.pop %v1613
        %v1615 = vmul.f32 %v1609, 1.442695
        %v1616 = vpow.pop %v1615
        %v1617 = vmul.f32 %v1610, 1.442695
        %v1618 = vpow.pop %v1617
        %v1619 = vsel %vm1594, %v1612, 0.0
        %1620 = vadd.xlane.f32.xlu0 %v1619
        %v1621 = vpop.xlane.xlu0 %1620
        %v1622 = vsel %vm1594, %v1614, 0.0
        %1623 = vadd.xlane.f32.xlu0 %v1622
        %v1624 = vpop.xlane.xlu0 %1623
        %v1625 = vsel %vm1594, %v1616, 0.0
        %1626 = vadd.xlane.f32.xlu0 %v1625
        %v1627 = vpop.xlane.xlu0 %1626
        %v1628 = vsel %vm1594, %v1618, 0.0
        %1629 = vadd.xlane.f32.xlu0 %v1628
        %v1630 = vpop.xlane.xlu0 %1629
        %v1631 = vrcp.pop %v1621
        %v1632 = vmul.f32 %v1612, %v1631
        %v1633 = vrcp.pop %v1624
        %v1634 = vmul.f32 %v1614, %v1633
        %v1635 = vrcp.pop %v1627
        %v1636 = vmul.f32 %v1616, %v1635
        %v1637 = vrcp.pop %v1630
        %v1638 = vmul.f32 %v1618, %v1637
        %v1639 = vpack.c.bf16 %v1632, %v1632
        %v1640 = vpack.c.bf16 %v1634, %v1634
        %v1641 = vpack.c.bf16 %v1636, %v1636
        %v1642 = vpack.c.bf16 %v1638, %v1638
        %v1644 = vsel %vm1594, %v1639, 0
        %1646 = vmatprep.subr.bf16.mxu0 0
        %1647 = vmatpush1.bf16.msra.mxu0 %v1384
        %1648 = vmatprep.subr.bf16.mxu0 0
        %1649 = vmatpush1.bf16.msra.mxu0 0
        %1650 = vmatprep.subr.bf16.mxu0 0
        %1651 = vmatpush1.bf16.msra.mxu0 0
        %1652 = vmatprep.subr.bf16.mxu0 0
        %1653 = vmatpush1.bf16.msra.mxu0 0
        %1654 = vmatprep.subr.bf16.mxu0 0
        %1655 = vmatpush1.bf16.msra.mxu0 0
        %1656 = vmatprep.subr.bf16.mxu0 0
        %1657 = vmatpush1.bf16.msra.mxu0 0
        %1658 = vmatprep.subr.bf16.mxu0 0
        %1659 = vmatpush1.bf16.msra.mxu0 0
        %1660 = vmatprep.subr.bf16.mxu0 0
        %1661 = vmatpush1.bf16.msra.mxu0 0
        %1662 = vmatprep.subr.bf16.mxu0 0
        %1663 = vmatpush1.bf16.msra.mxu0 0
        %1664 = vmatprep.subr.bf16.mxu0 0
        %1665 = vmatpush1.bf16.msra.mxu0 0
        %1666 = vmatprep.subr.bf16.mxu0 0
        %1667 = vmatpush1.bf16.msra.mxu0 0
        %1668 = vmatprep.subr.bf16.mxu0 0
        %1669 = vmatpush1.bf16.msra.mxu0 0
        %1670 = vmatprep.subr.bf16.mxu0 0
        %1671 = vmatpush1.bf16.msra.mxu0 0
        %1672 = vmatprep.subr.bf16.mxu0 0
        %1673 = vmatpush1.bf16.msra.mxu0 0
        %1674 = vmatprep.subr.bf16.mxu0 0
        %1675 = vmatpush1.bf16.msra.mxu0 0
        %1676 = vmatprep.subr.bf16.mxu0 0
        %1677 = vmatpush1.bf16.msra.mxu0 0
        %1678 = vmatprep.mubr.bf16.mxu0 0
        %1679 = vmatmul.mubr.bf16.gmra.mrb[0].mxu0 %v1644
        %v1680 = vpop.f32.mrb[0].mxu0
        %v1681 = vadd.f32 0.0, %v1680
        %v1682 = vpop.f32.mrb[0].mxu0
        %v1683 = vpop.f32.mrb[0].mxu0
        %v1684 = vpop.f32.mrb[0].mxu0
        %1685 = vdwg.mxu0
        %v1687 = vsel %vm1594, %v1640, 0
        %1689 = vmatprep.subr.bf16.mxu0 0
        %1690 = vmatpush1.bf16.msra.mxu0 %v1401
        %1691 = vmatprep.subr.bf16.mxu0 0
        %1692 = vmatpush1.bf16.msra.mxu0 0
        %1693 = vmatprep.subr.bf16.mxu0 0
        %1694 = vmatpush1.bf16.msra.mxu0 0
        %1695 = vmatprep.subr.bf16.mxu0 0
        %1696 = vmatpush1.bf16.msra.mxu0 0
        %1697 = vmatprep.subr.bf16.mxu0 0
        %1698 = vmatpush1.bf16.msra.mxu0 0
        %1699 = vmatprep.subr.bf16.mxu0 0
        %1700 = vmatpush1.bf16.msra.mxu0 0
        %1701 = vmatprep.subr.bf16.mxu0 0
        %1702 = vmatpush1.bf16.msra.mxu0 0
        %1703 = vmatprep.subr.bf16.mxu0 0
        %1704 = vmatpush1.bf16.msra.mxu0 0
        %1705 = vmatprep.subr.bf16.mxu0 0
        %1706 = vmatpush1.bf16.msra.mxu0 0
        %1707 = vmatprep.subr.bf16.mxu0 0
        %1708 = vmatpush1.bf16.msra.mxu0 0
        %1709 = vmatprep.subr.bf16.mxu0 0
        %1710 = vmatpush1.bf16.msra.mxu0 0
        %1711 = vmatprep.subr.bf16.mxu0 0
        %1712 = vmatpush1.bf16.msra.mxu0 0
        %1713 = vmatprep.subr.bf16.mxu0 0
        %1714 = vmatpush1.bf16.msra.mxu0 0
        %1715 = vmatprep.subr.bf16.mxu0 0
        %1716 = vmatpush1.bf16.msra.mxu0 0
        %1717 = vmatprep.subr.bf16.mxu0 0
        %1718 = vmatpush1.bf16.msra.mxu0 0
        %1719 = vmatprep.subr.bf16.mxu0 0
        %1720 = vmatpush1.bf16.msra.mxu0 0
        %1721 = vmatprep.mubr.bf16.mxu0 0
        %1722 = vmatmul.mubr.bf16.gmra.mrb[0].mxu0 %v1687
        %v1723 = vpop.f32.mrb[0].mxu0
        %v1724 = vadd.f32 0.0, %v1723
        %v1725 = vpop.f32.mrb[0].mxu0
        %v1726 = vpop.f32.mrb[0].mxu0
        %v1727 = vpop.f32.mrb[0].mxu0
        %1728 = vdwg.mxu0
        %v1730 = vsel %vm1594, %v1641, 0
        %1732 = vmatprep.subr.bf16.mxu0 0
        %1733 = vmatpush1.bf16.msra.mxu0 %v1404
        %1734 = vmatprep.subr.bf16.mxu0 0
        %1735 = vmatpush1.bf16.msra.mxu0 0
        %1736 = vmatprep.subr.bf16.mxu0 0
        %1737 = vmatpush1.bf16.msra.mxu0 0
        %1738 = vmatprep.subr.bf16.mxu0 0
        %1739 = vmatpush1.bf16.msra.mxu0 0
        %1740 = vmatprep.subr.bf16.mxu0 0
        %1741 = vmatpush1.bf16.msra.mxu0 0
        %1742 = vmatprep.subr.bf16.mxu0 0
        %1743 = vmatpush1.bf16.msra.mxu0 0
        %1744 = vmatprep.subr.bf16.mxu0 0
        %1745 = vmatpush1.bf16.msra.mxu0 0
        %1746 = vmatprep.subr.bf16.mxu0 0
        %1747 = vmatpush1.bf16.msra.mxu0 0
        %1748 = vmatprep.subr.bf16.mxu0 0
        %1749 = vmatpush1.bf16.msra.mxu0 0
        %1750 = vmatprep.subr.bf16.mxu0 0
        %1751 = vmatpush1.bf16.msra.mxu0 0
        %1752 = vmatprep.subr.bf16.mxu0 0
        %1753 = vmatpush1.bf16.msra.mxu0 0
        %1754 = vmatprep.subr.bf16.mxu0 0
        %1755 = vmatpush1.bf16.msra.mxu0 0
        %1756 = vmatprep.subr.bf16.mxu0 0
        %1757 = vmatpush1.bf16.msra.mxu0 0
        %1758 = vmatprep.subr.bf16.mxu0 0
        %1759 = vmatpush1.bf16.msra.mxu0 0
        %1760 = vmatprep.subr.bf16.mxu0 0
        %1761 = vmatpush1.bf16.msra.mxu0 0
        %1762 = vmatprep.subr.bf16.mxu0 0
        %1763 = vmatpush1.bf16.msra.mxu0 0
        %1764 = vmatprep.mubr.bf16.mxu0 0
        %1765 = vmatmul.mubr.bf16.gmra.mrb[0].mxu0 %v1730
        %v1766 = vpop.f32.mrb[0].mxu0
        %v1767 = vadd.f32 0.0, %v1766
        %v1768 = vpop.f32.mrb[0].mxu0
        %v1769 = vpop.f32.mrb[0].mxu0
        %v1770 = vpop.f32.mrb[0].mxu0
        %1771 = vdwg.mxu0
        %v1773 = vsel %vm1594, %v1642, 0
        %1775 = vmatprep.subr.bf16.mxu0 0
        %1776 = vmatpush1.bf16.msra.mxu0 %v1407
        %1777 = vmatprep.subr.bf16.mxu0 0
        %1778 = vmatpush1.bf16.msra.mxu0 0
        %1779 = vmatprep.subr.bf16.mxu0 0
        %1780 = vmatpush1.bf16.msra.mxu0 0
        %1781 = vmatprep.subr.bf16.mxu0 0
        %1782 = vmatpush1.bf16.msra.mxu0 0
        %1783 = vmatprep.subr.bf16.mxu0 0
        %1784 = vmatpush1.bf16.msra.mxu0 0
        %1785 = vmatprep.subr.bf16.mxu0 0
        %1786 = vmatpush1.bf16.msra.mxu0 0
        %1787 = vmatprep.subr.bf16.mxu0 0
        %1788 = vmatpush1.bf16.msra.mxu0 0
        %1789 = vmatprep.subr.bf16.mxu0 0
        %1790 = vmatpush1.bf16.msra.mxu0 0
        %1791 = vmatprep.subr.bf16.mxu0 0
        %1792 = vmatpush1.bf16.msra.mxu0 0
        %1793 = vmatprep.subr.bf16.mxu0 0
        %1794 = vmatpush1.bf16.msra.mxu0 0
        %1795 = vmatprep.subr.bf16.mxu0 0
        %1796 = vmatpush1.bf16.msra.mxu0 0
        %1797 = vmatprep.subr.bf16.mxu0 0
        %1798 = vmatpush1.bf16.msra.mxu0 0
        %1799 = vmatprep.subr.bf16.mxu0 0
        %1800 = vmatpush1.bf16.msra.mxu0 0
        %1801 = vmatprep.subr.bf16.mxu0 0
        %1802 = vmatpush1.bf16.msra.mxu0 0
        %1803 = vmatprep.subr.bf16.mxu0 0
        %1804 = vmatpush1.bf16.msra.mxu0 0
        %1805 = vmatprep.subr.bf16.mxu0 0
        %1806 = vmatpush1.bf16.msra.mxu0 0
        %1807 = vmatprep.mubr.bf16.mxu0 0
        %1808 = vmatmul.mubr.bf16.gmra.mrb[0].mxu0 %v1773
        %v1809 = vpop.f32.mrb[0].mxu0
        %v1810 = vadd.f32 0.0, %v1809
        %v1811 = vpop.f32.mrb[0].mxu0
        %v1812 = vpop.f32.mrb[0].mxu0
        %v1813 = vpop.f32.mrb[0].mxu0
        %1814 = vdwg.mxu0
        %v1815 = vpack.c.bf16 %v1681, %v1681
        %v1816 = vpack.c.bf16 %v1724, %v1724
        %v1817 = vpack.c.bf16 %v1767, %v1767
        %v1818 = vpack.c.bf16 %v1810, %v1810
        %1820 = vrot.lane.b32.xlu0 %v1816, 32
        %v1821 = vpop.permute.xlu0 %1820
        %1823 = vrot.lane.b32.xlu0 %v1817, 64
        %v1824 = vpop.permute.xlu0 %1823
        %1826 = vrot.lane.b32.xlu0 %v1818, 96
        %v1827 = vpop.permute.xlu0 %1826
        %v1830 = vsel %vm1409, %v1815, %v1821
        %vm1831 = vcmask 523264
        %v1833 = vsel %vm1831, %v1830, %v1824
        %vm1834 = vcmask 785408
        %v1836 = vsel %vm1834, %v1833, %v1827
        %v1838 = vld [vmem:[#allocation14] sm:$0xf]
        %v1839 = vld [vmem:[#allocation14 + $0x4] sm:$0xf]
        %v1840 = vld [vmem:[#allocation14 + $0x8] sm:$0xf]
        %v1841 = vld [vmem:[#allocation14 + $0xc] sm:$0xf]
        %v1842 = vld [vmem:[#allocation14 + $0x10] sm:$0xf]
        %v1843 = vld [vmem:[#allocation14 + $0x14] sm:$0xf]
        %v1844 = vld [vmem:[#allocation14 + $0x18] sm:$0xf]
        %v1845 = vld [vmem:[#allocation14 + $0x1c] sm:$0xf]
        %v1846 = vld [vmem:[#allocation14 + $0x20] sm:$0xf]
        %v1847 = vld [vmem:[#allocation14 + $0x24] sm:$0xf]
        %v1848 = vld [vmem:[#allocation14 + $0x28] sm:$0xf]
        %v1849 = vld [vmem:[#allocation14 + $0x2c] sm:$0xf]
        %v1850 = vld [vmem:[#allocation14 + $0x30] sm:$0xf]
        %v1851 = vld [vmem:[#allocation14 + $0x34] sm:$0xf]
        %v1852 = vld [vmem:[#allocation14 + $0x38] sm:$0xf]
        %v1853 = vld [vmem:[#allocation14 + $0x3c] sm:$0xf]
        %v1854 = vld [vmem:[%s14] sm:$0x1]
        %v1856 = vlaneseq
        %v1857 = vshrl.u32 %v1856, 7
        %v1858 = vsub.s32 0, %v1857
        %v1859 = vrot.slane %v1854, %v1858
        %v1877 = vunpack.c.l.b16 %v1838
        %v1878 = vunpack.c.l.b16 %v1839
        %v1879 = vunpack.c.l.b16 %v1840
        %v1880 = vunpack.c.l.b16 %v1841
        %v1881 = vunpack.c.l.b16 %v1842
        %v1882 = vunpack.c.l.b16 %v1843
        %v1883 = vunpack.c.l.b16 %v1844
        %v1884 = vunpack.c.l.b16 %v1845
        %v1885 = vunpack.c.l.b16 %v1846
        %v1886 = vunpack.c.l.b16 %v1847
        %v1887 = vunpack.c.l.b16 %v1848
        %v1888 = vunpack.c.l.b16 %v1849
        %v1889 = vunpack.c.l.b16 %v1850
        %v1890 = vunpack.c.l.b16 %v1851
        %v1891 = vunpack.c.l.b16 %v1852
        %v1892 = vunpack.c.l.b16 %v1853
        %v1893 = vpack.c.b16 %v1878, %v1877
        %v1894 = vpack.c.b16 %v1880, %v1879
        %v1895 = vpack.c.b16 %v1882, %v1881
        %v1896 = vpack.c.b16 %v1884, %v1883
        %v1897 = vpack.c.b16 %v1886, %v1885
        %v1898 = vpack.c.b16 %v1888, %v1887
        %v1899 = vpack.c.b16 %v1890, %v1889
        %v1900 = vpack.c.b16 %v1892, %v1891
        %1909 = vmatprep.subr.bf16.mxu0 0
        %1910 = vmatpush1.bf16.msra.mxu0 %v1893
        %1911 = vmatprep.subr.bf16.mxu0 0
        %1912 = vmatpush1.bf16.msra.mxu0 %v1894
        %1913 = vmatprep.subr.bf16.mxu0 0
        %1914 = vmatpush1.bf16.msra.mxu0 %v1895
        %1915 = vmatprep.subr.bf16.mxu0 0
        %1916 = vmatpush1.bf16.msra.mxu0 %v1896
        %1917 = vmatprep.subr.bf16.mxu0 0
        %1918 = vmatpush1.bf16.msra.mxu0 %v1897
        %1919 = vmatprep.subr.bf16.mxu0 0
        %1920 = vmatpush1.bf16.msra.mxu0 %v1898
        %1921 = vmatprep.subr.bf16.mxu0 0
        %1922 = vmatpush1.bf16.msra.mxu0 %v1899
        %1923 = vmatprep.subr.bf16.mxu0 0
        %1924 = vmatpush1.bf16.msra.mxu0 %v1900
        %1925 = vmatprep.subr.bf16.mxu0 0
        %1926 = vmatpush1.bf16.msra.mxu0 0
        %1927 = vmatprep.subr.bf16.mxu0 0
        %1928 = vmatpush1.bf16.msra.mxu0 0
        %1929 = vmatprep.subr.bf16.mxu0 0
        %1930 = vmatpush1.bf16.msra.mxu0 0
        %1931 = vmatprep.subr.bf16.mxu0 0
        %1932 = vmatpush1.bf16.msra.mxu0 0
        %1933 = vmatprep.subr.bf16.mxu0 0
        %1934 = vmatpush1.bf16.msra.mxu0 0
        %1935 = vmatprep.subr.bf16.mxu0 0
        %1936 = vmatpush1.bf16.msra.mxu0 0
        %1937 = vmatprep.subr.bf16.mxu0 0
        %1938 = vmatpush1.bf16.msra.mxu0 0
        %1939 = vmatprep.subr.bf16.mxu0 0
        %1940 = vmatpush1.bf16.msra.mxu0 0
        %1941 = vmatprep.mubr.bf16.mxu0 0
        %1942 = vmatmul.mubr.bf16.gmra.mrb[0].mxu0 %v1836
        %v1943 = vpop.f32.mrb[0].mxu0
        %v1944 = vadd.f32 %v1859, %v1943
        %v1945 = vpop.f32.mrb[0].mxu0
        %v1946 = vpop.f32.mrb[0].mxu0
        %v1947 = vpop.f32.mrb[0].mxu0
        %1948 = vdwg.mxu0
        %v1949 = vld [vmem:[%s21] sm:$0x1]
        %v1951 = vlaneseq
        %v1952 = vshrl.u32 %v1951, 7
        %v1953 = vsub.s32 0, %v1952
        %v1954 = vrot.slane %v1949, %v1953
        %v1956 = vmul.f32 %v1954, %v1944
        %v1957 = vadd.f32 %v948, %v1956
        %v1958 = vld [vmem:[%s15] sm:$0x1]
        %v1959 = vld [vmem:[%s16] sm:$0x1]
        %1960 = vadd.xlane.f32.xlu0 %v1957
        %v1961 = vpop.xlane.xlu0 %1960
        %v1962 = vmul.f32 %v1961, %v959
        %v1963 = vsub.f32 %v1957, %v1962
        %v1964 = vmul.f32 %v1963, %v1963
        %1965 = vadd.xlane.f32.xlu0 %v1964
        %v1966 = vpop.xlane.xlu0 %1965
        %v1967 = vmul.f32 %v1966, %v959
        %v1968 = vadd.f32 %v1967, 1e-05
        %v1969 = vrsqrt.pop %v1968
        %v1970 = vmul.f32 %v1963, %v1969
        %v1972 = vlaneseq
        %v1973 = vshrl.u32 %v1972, 7
        %v1974 = vsub.s32 0, %v1973
        %v1975 = vrot.slane %v1958, %v1974
        %v1977 = vmul.f32 %v1970, %v1975
        %v1979 = vlaneseq
        %v1980 = vshrl.u32 %v1979, 7
        %v1981 = vsub.s32 0, %v1980
        %v1982 = vrot.slane %v1959, %v1981
        %v1984 = vadd.f32 %v1977, %v1982
        %v1985 = vpack.c.bf16 %v1984, %v1984
        %v1986 = vld [vmem:[#allocation16] sm:$0xff]
        %v1987 = vld [vmem:[#allocation16 + $0x8] sm:$0xff]
        %v1988 = vld [vmem:[#allocation16 + $0x10] sm:$0xff]
        %v1989 = vld [vmem:[#allocation16 + $0x18] sm:$0xff]
        %v1990 = vld [vmem:[#allocation16 + $0x20] sm:$0xff]
        %v1991 = vld [vmem:[#allocation16 + $0x28] sm:$0xff]
        %v1992 = vld [vmem:[#allocation16 + $0x30] sm:$0xff]
        %v1993 = vld [vmem:[#allocation16 + $0x38] sm:$0xff]
        %v1994 = vld [vmem:[#allocation16 + $0x40] sm:$0xff]
        %v1995 = vld [vmem:[#allocation16 + $0x48] sm:$0xff]
        %v1996 = vld [vmem:[#allocation16 + $0x50] sm:$0xff]
        %v1997 = vld [vmem:[#allocation16 + $0x58] sm:$0xff]
        %v1998 = vld [vmem:[#allocation16 + $0x60] sm:$0xff]
        %v1999 = vld [vmem:[#allocation16 + $0x68] sm:$0xff]
        %v2000 = vld [vmem:[#allocation16 + $0x70] sm:$0xff]
        %v2001 = vld [vmem:[#allocation16 + $0x78] sm:$0xff]
        %v2002 = vld [vmem:[#allocation16 + $0x80] sm:$0xff]
        %v2003 = vld [vmem:[#allocation16 + $0x88] sm:$0xff]
        %v2004 = vld [vmem:[#allocation16 + $0x90] sm:$0xff]
        %v2005 = vld [vmem:[#allocation16 + $0x98] sm:$0xff]
        %v2006 = vld [vmem:[#allocation16 + $0xa0] sm:$0xff]
        %v2007 = vld [vmem:[#allocation16 + $0xa8] sm:$0xff]
        %v2008 = vld [vmem:[#allocation16 + $0xb0] sm:$0xff]
        %v2009 = vld [vmem:[#allocation16 + $0xb8] sm:$0xff]
        %v2010 = vld [vmem:[#allocation16 + $0xc0] sm:$0xff]
        %v2011 = vld [vmem:[#allocation16 + $0xc8] sm:$0xff]
        %v2012 = vld [vmem:[#allocation16 + $0xd0] sm:$0xff]
        %v2013 = vld [vmem:[#allocation16 + $0xd8] sm:$0xff]
        %v2014 = vld [vmem:[#allocation16 + $0xe0] sm:$0xff]
        %v2015 = vld [vmem:[#allocation16 + $0xe8] sm:$0xff]
        %v2016 = vld [vmem:[#allocation16 + $0xf0] sm:$0xff]
        %v2017 = vld [vmem:[#allocation16 + $0xf8] sm:$0xff]
        %v2018 = vld [vmem:[%s18] sm:$0xf]
        %v2020 = vlaneseq
        %v2021 = vshrl.u32 %v2020, 7
        %v2022 = vsub.s32 0, %v2021
        %v2023 = vrot.slane %v2018, %v2022
        %v2024 = vlaneseq
        %v2025 = vshrl.u32 %v2024, 7
        %v2026 = vsub.s32 1, %v2025
        %v2027 = vrot.slane %v2018, %v2026
        %v2028 = vlaneseq
        %v2029 = vshrl.u32 %v2028, 7
        %v2030 = vsub.s32 2, %v2029
        %v2031 = vrot.slane %v2018, %v2030
        %v2032 = vlaneseq
        %v2033 = vshrl.u32 %v2032, 7
        %v2034 = vsub.s32 3, %v2033
        %v2035 = vrot.slane %v2018, %v2034
        %v2072 = vunpack.c.l.b16 %v1986
        %v2073 = vunpack.c.h.b16 %v1986
        %v2074 = vunpack.c.l.b16 %v1987
        %v2075 = vunpack.c.h.b16 %v1987
        %v2076 = vunpack.c.l.b16 %v1988
        %v2077 = vunpack.c.h.b16 %v1988
        %v2078 = vunpack.c.l.b16 %v1989
        %v2079 = vunpack.c.h.b16 %v1989
        %v2080 = vunpack.c.l.b16 %v1990
        %v2081 = vunpack.c.h.b16 %v1990
        %v2082 = vunpack.c.l.b16 %v1991
        %v2083 = vunpack.c.h.b16 %v1991
        %v2084 = vunpack.c.l.b16 %v1992
        %v2085 = vunpack.c.h.b16 %v1992
        %v2086 = vunpack.c.l.b16 %v1993
        %v2087 = vunpack.c.h.b16 %v1993
        %v2088 = vunpack.c.l.b16 %v1994
        %v2089 = vunpack.c.h.b16 %v1994
        %v2090 = vunpack.c.l.b16 %v1995
        %v2091 = vunpack.c.h.b16 %v1995
        %v2092 = vunpack.c.l.b16 %v1996
        %v2093 = vunpack.c.h.b16 %v1996
        %v2094 = vunpack.c.l.b16 %v1997
        %v2095 = vunpack.c.h.b16 %v1997
        %v2096 = vunpack.c.l.b16 %v1998
        %v2097 = vunpack.c.h.b16 %v1998
        %v2098 = vunpack.c.l.b16 %v1999
        %v2099 = vunpack.c.h.b16 %v1999
        %v2100 = vunpack.c.l.b16 %v2000
        %v2101 = vunpack.c.h.b16 %v2000
        %v2102 = vunpack.c.l.b16 %v2001
        %v2103 = vunpack.c.h.b16 %v2001
        %v2104 = vunpack.c.l.b16 %v2002
        %v2105 = vunpack.c.h.b16 %v2002
        %v2106 = vunpack.c.l.b16 %v2003
        %v2107 = vunpack.c.h.b16 %v2003
        %v2108 = vunpack.c.l.b16 %v2004
        %v2109 = vunpack.c.h.b16 %v2004
        %v2110 = vunpack.c.l.b16 %v2005
        %v2111 = vunpack.c.h.b16 %v2005
        %v2112 = vunpack.c.l.b16 %v2006
        %v2113 = vunpack.c.h.b16 %v2006
        %v2114 = vunpack.c.l.b16 %v2007
        %v2115 = vunpack.c.h.b16 %v2007
        %v2116 = vunpack.c.l.b16 %v2008
        %v2117 = vunpack.c.h.b16 %v2008
        %v2118 = vunpack.c.l.b16 %v2009
        %v2119 = vunpack.c.h.b16 %v2009
        %v2120 = vunpack.c.l.b16 %v2010
        %v2121 = vunpack.c.h.b16 %v2010
        %v2122 = vunpack.c.l.b16 %v2011
        %v2123 = vunpack.c.h.b16 %v2011
        %v2124 = vunpack.c.l.b16 %v2012
        %v2125 = vunpack.c.h.b16 %v2012
        %v2126 = vunpack.c.l.b16 %v2013
        %v2127 = vunpack.c.h.b16 %v2013
        %v2128 = vunpack.c.l.b16 %v2014
        %v2129 = vunpack.c.h.b16 %v2014
        %v2130 = vunpack.c.l.b16 %v2015
        %v2131 = vunpack.c.h.b16 %v2015
        %v2132 = vunpack.c.l.b16 %v2016
        %v2133 = vunpack.c.h.b16 %v2016
        %v2134 = vunpack.c.l.b16 %v2017
        %v2135 = vunpack.c.h.b16 %v2017
        %v2136 = vpack.c.b16 %v2076, %v2072
        %v2137 = vpack.c.b16 %v2077, %v2073
        %v2138 = vpack.c.b16 %v2078, %v2074
        %v2139 = vpack.c.b16 %v2079, %v2075
        %v2140 = vpack.c.b16 %v2084, %v2080
        %v2141 = vpack.c.b16 %v2085, %v2081
        %v2142 = vpack.c.b16 %v2086, %v2082
        %v2143 = vpack.c.b16 %v2087, %v2083
        %v2144 = vpack.c.b16 %v2092, %v2088
        %v2145 = vpack.c.b16 %v2093, %v2089
        %v2146 = vpack.c.b16 %v2094, %v2090
        %v2147 = vpack.c.b16 %v2095, %v2091
        %v2148 = vpack.c.b16 %v2100, %v2096
        %v2149 = vpack.c.b16 %v2101, %v2097
        %v2150 = vpack.c.b16 %v2102, %v2098
        %v2151 = vpack.c.b16 %v2103, %v2099
        %v2152 = vpack.c.b16 %v2108, %v2104
        %v2153 = vpack.c.b16 %v2109, %v2105
        %v2154 = vpack.c.b16 %v2110, %v2106
        %v2155 = vpack.c.b16 %v2111, %v2107
        %v2156 = vpack.c.b16 %v2116, %v2112
        %v2157 = vpack.c.b16 %v2117, %v2113
        %v2158 = vpack.c.b16 %v2118, %v2114
        %v2159 = vpack.c.b16 %v2119, %v2115
        %v2160 = vpack.c.b16 %v2124, %v2120
        %v2161 = vpack.c.b16 %v2125, %v2121
        %v2162 = vpack.c.b16 %v2126, %v2122
        %v2163 = vpack.c.b16 %v2127, %v2123
        %v2164 = vpack.c.b16 %v2132, %v2128
        %v2165 = vpack.c.b16 %v2133, %v2129
        %v2166 = vpack.c.b16 %v2134, %v2130
        %v2167 = vpack.c.b16 %v2135, %v2131
        %2200 = vmatprep.subr.bf16.mxu0 %v2137
        %2201 = vmatpush1.bf16.msra.mxu0 %v2136
        %2202 = vmatprep.subr.bf16.mxu0 %v2141
        %2203 = vmatpush1.bf16.msra.mxu0 %v2140
        %2204 = vmatprep.subr.bf16.mxu0 %v2145
        %2205 = vmatpush1.bf16.msra.mxu0 %v2144
        %2206 = vmatprep.subr.bf16.mxu0 %v2149
        %2207 = vmatpush1.bf16.msra.mxu0 %v2148
        %2208 = vmatprep.subr.bf16.mxu0 %v2153
        %2209 = vmatpush1.bf16.msra.mxu0 %v2152
        %2210 = vmatprep.subr.bf16.mxu0 %v2157
        %2211 = vmatpush1.bf16.msra.mxu0 %v2156
        %2212 = vmatprep.subr.bf16.mxu0 %v2161
        %2213 = vmatpush1.bf16.msra.mxu0 %v2160
        %2214 = vmatprep.subr.bf16.mxu0 %v2165
        %2215 = vmatpush1.bf16.msra.mxu0 %v2164
        %2216 = vmatprep.subr.bf16.mxu0 0
        %2217 = vmatpush1.bf16.msra.mxu0 0
        %2218 = vmatprep.subr.bf16.mxu0 0
        %2219 = vmatpush1.bf16.msra.mxu0 0
        %2220 = vmatprep.subr.bf16.mxu0 0
        %2221 = vmatpush1.bf16.msra.mxu0 0
        %2222 = vmatprep.subr.bf16.mxu0 0
        %2223 = vmatpush1.bf16.msra.mxu0 0
        %2224 = vmatprep.subr.bf16.mxu0 0
        %2225 = vmatpush1.bf16.msra.mxu0 0
        %2226 = vmatprep.subr.bf16.mxu0 0
        %2227 = vmatpush1.bf16.msra.mxu0 0
        %2228 = vmatprep.subr.bf16.mxu0 0
        %2229 = vmatpush1.bf16.msra.mxu0 0
        %2230 = vmatprep.subr.bf16.mxu0 0
        %2231 = vmatpush1.bf16.msra.mxu0 0
        %2232 = vmatprep.mubr.bf16.mxu0 0
        %2233 = vmatmul.mubr.bf16.gmra.mrb[0].mxu0 %v1985
        %v2234 = vpop.f32.mrb[0].mxu0
        %v2235 = vadd.f32 %v2023, %v2234
        %v2236 = vpop.f32.mrb[0].mxu0
        %v2237 = vadd.f32 %v2027, %v2236
        %v2238 = vpop.f32.mrb[0].mxu0
        %v2239 = vpop.f32.mrb[0].mxu0
        %2240 = vdwg.mxu0
        %2241 = vmatprep.subr.bf16.mxu0 %v2139
        %2242 = vmatpush1.bf16.msra.mxu0 %v2138
        %2243 = vmatprep.subr.bf16.mxu0 %v2143
        %2244 = vmatpush1.bf16.msra.mxu0 %v2142
        %2245 = vmatprep.subr.bf16.mxu0 %v2147
        %2246 = vmatpush1.bf16.msra.mxu0 %v2146
        %2247 = vmatprep.subr.bf16.mxu0 %v2151
        %2248 = vmatpush1.bf16.msra.mxu0 %v2150
        %2249 = vmatprep.subr.bf16.mxu0 %v2155
        %2250 = vmatpush1.bf16.msra.mxu0 %v2154
        %2251 = vmatprep.subr.bf16.mxu0 %v2159
        %2252 = vmatpush1.bf16.msra.mxu0 %v2158
        %2253 = vmatprep.subr.bf16.mxu0 %v2163
        %2254 = vmatpush1.bf16.msra.mxu0 %v2162
        %2255 = vmatprep.subr.bf16.mxu0 %v2167
        %2256 = vmatpush1.bf16.msra.mxu0 %v2166
        %2257 = vmatprep.subr.bf16.mxu0 0
        %2258 = vmatpush1.bf16.msra.mxu0 0
        %2259 = vmatprep.subr.bf16.mxu0 0
        %2260 = vmatpush1.bf16.msra.mxu0 0
        %2261 = vmatprep.subr.bf16.mxu0 0
        %2262 = vmatpush1.bf16.msra.mxu0 0
        %2263 = vmatprep.subr.bf16.mxu0 0
        %2264 = vmatpush1.bf16.msra.mxu0 0
        %2265 = vmatprep.subr.bf16.mxu0 0
        %2266 = vmatpush1.bf16.msra.mxu0 0
        %2267 = vmatprep.subr.bf16.mxu0 0
        %2268 = vmatpush1.bf16.msra.mxu0 0
        %2269 = vmatprep.subr.bf16.mxu0 0
        %2270 = vmatpush1.bf16.msra.mxu0 0
        %2271 = vmatprep.subr.bf16.mxu0 0
        %2272 = vmatpush1.bf16.msra.mxu0 0
        %2273 = vmatprep.mubr.bf16.mxu0 0
        %2274 = vmatmul.mubr.bf16.gmra.mrb[0].mxu0 %v1985
        %v2275 = vpop.f32.mrb[0].mxu0
        %v2276 = vadd.f32 %v2031, %v2275
        %v2277 = vpop.f32.mrb[0].mxu0
        %v2278 = vadd.f32 %v2035, %v2277
        %v2279 = vpop.f32.mrb[0].mxu0
        %v2280 = vpop.f32.mrb[0].mxu0
        %2281 = vdwg.mxu0
        %v2282 = vmul.f32 %v2235, 0.5
        %v2283 = vmul.f32 %v2237, 0.5
        %v2284 = vmul.f32 %v2276, 0.5
        %v2285 = vmul.f32 %v2278, 0.5
        %v2286 = vmul.f32 %v2235, 0.70710677
        %v2287 = vmul.f32 %v2237, 0.70710677
        %v2288 = vmul.f32 %v2276, 0.70710677
        %v2289 = vmul.f32 %v2278, 0.70710677
        %v2290 = verf.f32.pop %v2286
        %v2291 = verf.f32.pop %v2287
        %v2292 = verf.f32.pop %v2288
        %v2293 = verf.f32.pop %v2289
        %v2294 = vadd.f32 %v2290, 1.0
        %v2295 = vadd.f32 %v2291, 1.0
        %v2296 = vadd.f32 %v2292, 1.0
        %v2297 = vadd.f32 %v2293, 1.0
        %v2298 = vmul.f32 %v2282, %v2294
        %v2299 = vmul.f32 %v2283, %v2295
        %v2300 = vmul.f32 %v2284, %v2296
        %v2301 = vmul.f32 %v2285, %v2297
        %v2302 = vpack.c.bf16 %v2298, %v2298
        %v2303 = vpack.c.bf16 %v2299, %v2299
        %v2304 = vpack.c.bf16 %v2300, %v2300
        %v2305 = vpack.c.bf16 %v2301, %v2301
        %v2306 = vld [vmem:[#allocation17] sm:$0xf]
        %v2307 = vld [vmem:[#allocation17 + $0x4] sm:$0xf]
        %v2308 = vld [vmem:[#allocation17 + $0x8] sm:$0xf]
        %v2309 = vld [vmem:[#allocation17 + $0xc] sm:$0xf]
        %v2310 = vld [vmem:[#allocation17 + $0x10] sm:$0xf]
        %v2311 = vld [vmem:[#allocation17 + $0x14] sm:$0xf]
        %v2312 = vld [vmem:[#allocation17 + $0x18] sm:$0xf]
        %v2313 = vld [vmem:[#allocation17 + $0x1c] sm:$0xf]
        %v2314 = vld [vmem:[#allocation17 + $0x20] sm:$0xf]
        %v2315 = vld [vmem:[#allocation17 + $0x24] sm:$0xf]
        %v2316 = vld [vmem:[#allocation17 + $0x28] sm:$0xf]
        %v2317 = vld [vmem:[#allocation17 + $0x2c] sm:$0xf]
        %v2318 = vld [vmem:[#allocation17 + $0x30] sm:$0xf]
        %v2319 = vld [vmem:[#allocation17 + $0x34] sm:$0xf]
        %v2320 = vld [vmem:[#allocation17 + $0x38] sm:$0xf]
        %v2321 = vld [vmem:[#allocation17 + $0x3c] sm:$0xf]
        %v2322 = vld [vmem:[#allocation17 + $0x40] sm:$0xf]
        %v2323 = vld [vmem:[#allocation17 + $0x44] sm:$0xf]
        %v2324 = vld [vmem:[#allocation17 + $0x48] sm:$0xf]
        %v2325 = vld [vmem:[#allocation17 + $0x4c] sm:$0xf]
        %v2326 = vld [vmem:[#allocation17 + $0x50] sm:$0xf]
        %v2327 = vld [vmem:[#allocation17 + $0x54] sm:$0xf]
        %v2328 = vld [vmem:[#allocation17 + $0x58] sm:$0xf]
        %v2329 = vld [vmem:[#allocation17 + $0x5c] sm:$0xf]
        %v2330 = vld [vmem:[#allocation17 + $0x60] sm:$0xf]
        %v2331 = vld [vmem:[#allocation17 + $0x64] sm:$0xf]
        %v2332 = vld [vmem:[#allocation17 + $0x68] sm:$0xf]
        %v2333 = vld [vmem:[#allocation17 + $0x6c] sm:$0xf]
        %v2334 = vld [vmem:[#allocation17 + $0x70] sm:$0xf]
        %v2335 = vld [vmem:[#allocation17 + $0x74] sm:$0xf]
        %v2336 = vld [vmem:[#allocation17 + $0x78] sm:$0xf]
        %v2337 = vld [vmem:[#allocation17 + $0x7c] sm:$0xf]
        %v2338 = vld [vmem:[#allocation17 + $0x80] sm:$0xf]
        %v2339 = vld [vmem:[#allocation17 + $0x84] sm:$0xf]
        %v2340 = vld [vmem:[#allocation17 + $0x88] sm:$0xf]
        %v2341 = vld [vmem:[#allocation17 + $0x8c] sm:$0xf]
        %v2342 = vld [vmem:[#allocation17 + $0x90] sm:$0xf]
        %v2343 = vld [vmem:[#allocation17 + $0x94] sm:$0xf]
        %v2344 = vld [vmem:[#allocation17 + $0x98] sm:$0xf]
        %v2345 = vld [vmem:[#allocation17 + $0x9c] sm:$0xf]
        %v2346 = vld [vmem:[#allocation17 + $0xa0] sm:$0xf]
        %v2347 = vld [vmem:[#allocation17 + $0xa4] sm:$0xf]
        %v2348 = vld [vmem:[#allocation17 + $0xa8] sm:$0xf]
        %v2349 = vld [vmem:[#allocation17 + $0xac] sm:$0xf]
        %v2350 = vld [vmem:[#allocation17 + $0xb0] sm:$0xf]
        %v2351 = vld [vmem:[#allocation17 + $0xb4] sm:$0xf]
        %v2352 = vld [vmem:[#allocation17 + $0xb8] sm:$0xf]
        %v2353 = vld [vmem:[#allocation17 + $0xbc] sm:$0xf]
        %v2354 = vld [vmem:[#allocation17 + $0xc0] sm:$0xf]
        %v2355 = vld [vmem:[#allocation17 + $0xc4] sm:$0xf]
        %v2356 = vld [vmem:[#allocation17 + $0xc8] sm:$0xf]
        %v2357 = vld [vmem:[#allocation17 + $0xcc] sm:$0xf]
        %v2358 = vld [vmem:[#allocation17 + $0xd0] sm:$0xf]
        %v2359 = vld [vmem:[#allocation17 + $0xd4] sm:$0xf]
        %v2360 = vld [vmem:[#allocation17 + $0xd8] sm:$0xf]
        %v2361 = vld [vmem:[#allocation17 + $0xdc] sm:$0xf]
        %v2362 = vld [vmem:[#allocation17 + $0xe0] sm:$0xf]
        %v2363 = vld [vmem:[#allocation17 + $0xe4] sm:$0xf]
        %v2364 = vld [vmem:[#allocation17 + $0xe8] sm:$0xf]
        %v2365 = vld [vmem:[#allocation17 + $0xec] sm:$0xf]
        %v2366 = vld [vmem:[#allocation17 + $0xf0] sm:$0xf]
        %v2367 = vld [vmem:[#allocation17 + $0xf4] sm:$0xf]
        %v2368 = vld [vmem:[#allocation17 + $0xf8] sm:$0xf]
        %v2369 = vld [vmem:[#allocation17 + $0xfc] sm:$0xf]
        %v2370 = vld [vmem:[%s20] sm:$0x1]
        %v2372 = vlaneseq
        %v2373 = vshrl.u32 %v2372, 7
        %v2374 = vsub.s32 0, %v2373
        %v2375 = vrot.slane %v2370, %v2374
        %v2441 = vunpack.c.l.b16 %v2306
        %v2442 = vunpack.c.l.b16 %v2307
        %v2443 = vunpack.c.l.b16 %v2308
        %v2444 = vunpack.c.l.b16 %v2309
        %v2445 = vunpack.c.l.b16 %v2310
        %v2446 = vunpack.c.l.b16 %v2311
        %v2447 = vunpack.c.l.b16 %v2312
        %v2448 = vunpack.c.l.b16 %v2313
        %v2449 = vunpack.c.l.b16 %v2314
        %v2450 = vunpack.c.l.b16 %v2315
        %v2451 = vunpack.c.l.b16 %v2316
        %v2452 = vunpack.c.l.b16 %v2317
        %v2453 = vunpack.c.l.b16 %v2318
        %v2454 = vunpack.c.l.b16 %v2319
        %v2455 = vunpack.c.l.b16 %v2320
        %v2456 = vunpack.c.l.b16 %v2321
        %v2457 = vunpack.c.l.b16 %v2322
        %v2458 = vunpack.c.l.b16 %v2323
        %v2459 = vunpack.c.l.b16 %v2324
        %v2460 = vunpack.c.l.b16 %v2325
        %v2461 = vunpack.c.l.b16 %v2326
        %v2462 = vunpack.c.l.b16 %v2327
        %v2463 = vunpack.c.l.b16 %v2328
        %v2464 = vunpack.c.l.b16 %v2329
        %v2465 = vunpack.c.l.b16 %v2330
        %v2466 = vunpack.c.l.b16 %v2331
        %v2467 = vunpack.c.l.b16 %v2332
        %v2468 = vunpack.c.l.b16 %v2333
        %v2469 = vunpack.c.l.b16 %v2334
        %v2470 = vunpack.c.l.b16 %v2335
        %v2471 = vunpack.c.l.b16 %v2336
        %v2472 = vunpack.c.l.b16 %v2337
        %v2473 = vunpack.c.l.b16 %v2338
        %v2474 = vunpack.c.l.b16 %v2339
        %v2475 = vunpack.c.l.b16 %v2340
        %v2476 = vunpack.c.l.b16 %v2341
        %v2477 = vunpack.c.l.b16 %v2342
        %v2478 = vunpack.c.l.b16 %v2343
        %v2479 = vunpack.c.l.b16 %v2344
        %v2480 = vunpack.c.l.b16 %v2345
        %v2481 = vunpack.c.l.b16 %v2346
        %v2482 = vunpack.c.l.b16 %v2347
        %v2483 = vunpack.c.l.b16 %v2348
        %v2484 = vunpack.c.l.b16 %v2349
        %v2485 = vunpack.c.l.b16 %v2350
        %v2486 = vunpack.c.l.b16 %v2351
        %v2487 = vunpack.c.l.b16 %v2352
        %v2488 = vunpack.c.l.b16 %v2353
        %v2489 = vunpack.c.l.b16 %v2354
        %v2490 = vunpack.c.l.b16 %v2355
        %v2491 = vunpack.c.l.b16 %v2356
        %v2492 = vunpack.c.l.b16 %v2357
        %v2493 = vunpack.c.l.b16 %v2358
        %v2494 = vunpack.c.l.b16 %v2359
        %v2495 = vunpack.c.l.b16 %v2360
        %v2496 = vunpack.c.l.b16 %v2361
        %v2497 = vunpack.c.l.b16 %v2362
        %v2498 = vunpack.c.l.b16 %v2363
        %v2499 = vunpack.c.l.b16 %v2364
        %v2500 = vunpack.c.l.b16 %v2365
        %v2501 = vunpack.c.l.b16 %v2366
        %v2502 = vunpack.c.l.b16 %v2367
        %v2503 = vunpack.c.l.b16 %v2368
        %v2504 = vunpack.c.l.b16 %v2369
        %v2505 = vpack.c.b16 %v2442, %v2441
        %v2506 = vpack.c.b16 %v2444, %v2443
        %v2507 = vpack.c.b16 %v2446, %v2445
        %v2508 = vpack.c.b16 %v2448, %v2447
        %v2509 = vpack.c.b16 %v2450, %v2449
        %v2510 = vpack.c.b16 %v2452, %v2451
        %v2511 = vpack.c.b16 %v2454, %v2453
        %v2512 = vpack.c.b16 %v2456, %v2455
        %v2513 = vpack.c.b16 %v2458, %v2457
        %v2514 = vpack.c.b16 %v2460, %v2459
        %v2515 = vpack.c.b16 %v2462, %v2461
        %v2516 = vpack.c.b16 %v2464, %v2463
        %v2517 = vpack.c.b16 %v2466, %v2465
        %v2518 = vpack.c.b16 %v2468, %v2467
        %v2519 = vpack.c.b16 %v2470, %v2469
        %v2520 = vpack.c.b16 %v2472, %v2471
        %v2521 = vpack.c.b16 %v2474, %v2473
        %v2522 = vpack.c.b16 %v2476, %v2475
        %v2523 = vpack.c.b16 %v2478, %v2477
        %v2524 = vpack.c.b16 %v2480, %v2479
        %v2525 = vpack.c.b16 %v2482, %v2481
        %v2526 = vpack.c.b16 %v2484, %v2483
        %v2527 = vpack.c.b16 %v2486, %v2485
        %v2528 = vpack.c.b16 %v2488, %v2487
        %v2529 = vpack.c.b16 %v2490, %v2489
        %v2530 = vpack.c.b16 %v2492, %v2491
        %v2531 = vpack.c.b16 %v2494, %v2493
        %v2532 = vpack.c.b16 %v2496, %v2495
        %v2533 = vpack.c.b16 %v2498, %v2497
        %v2534 = vpack.c.b16 %v2500, %v2499
        %v2535 = vpack.c.b16 %v2502, %v2501
        %v2536 = vpack.c.b16 %v2504, %v2503
        %2569 = vmatprep.subr.bf16.mxu0 0
        %2570 = vmatpush1.bf16.msra.mxu0 %v2505
        %2571 = vmatprep.subr.bf16.mxu0 0
        %2572 = vmatpush1.bf16.msra.mxu0 %v2506
        %2573 = vmatprep.subr.bf16.mxu0 0
        %2574 = vmatpush1.bf16.msra.mxu0 %v2507
        %2575 = vmatprep.subr.bf16.mxu0 0
        %2576 = vmatpush1.bf16.msra.mxu0 %v2508
        %2577 = vmatprep.subr.bf16.mxu0 0
        %2578 = vmatpush1.bf16.msra.mxu0 %v2509
        %2579 = vmatprep.subr.bf16.mxu0 0
        %2580 = vmatpush1.bf16.msra.mxu0 %v2510
        %2581 = vmatprep.subr.bf16.mxu0 0
        %2582 = vmatpush1.bf16.msra.mxu0 %v2511
        %2583 = vmatprep.subr.bf16.mxu0 0
        %2584 = vmatpush1.bf16.msra.mxu0 %v2512
        %2585 = vmatprep.subr.bf16.mxu0 0
        %2586 = vmatpush1.bf16.msra.mxu0 %v2513
        %2587 = vmatprep.subr.bf16.mxu0 0
        %2588 = vmatpush1.bf16.msra.mxu0 %v2514
        %2589 = vmatprep.subr.bf16.mxu0 0
        %2590 = vmatpush1.bf16.msra.mxu0 %v2515
        %2591 = vmatprep.subr.bf16.mxu0 0
        %2592 = vmatpush1.bf16.msra.mxu0 %v2516
        %2593 = vmatprep.subr.bf16.mxu0 0
        %2594 = vmatpush1.bf16.msra.mxu0 %v2517
        %2595 = vmatprep.subr.bf16.mxu0 0
        %2596 = vmatpush1.bf16.msra.mxu0 %v2518
        %2597 = vmatprep.subr.bf16.mxu0 0
        %2598 = vmatpush1.bf16.msra.mxu0 %v2519
        %2599 = vmatprep.subr.bf16.mxu0 0
        %2600 = vmatpush1.bf16.msra.mxu0 %v2520
        %2601 = vmatprep.mubr.bf16.mxu0 %v2303
        %2602 = vmatmul.mubr.bf16.gmra.mrb[0].mxu0 %v2302
        %v2603 = vpop.f32.mrb[0].mxu0
        %v2604 = vadd.f32 %v2375, %v2603
        %v2605 = vpop.f32.mrb[0].mxu0
        %v2606 = vpop.f32.mrb[0].mxu0
        %v2607 = vpop.f32.mrb[0].mxu0
        %2608 = vdwg.mxu0
        %2609 = vmatprep.subr.bf16.mxu0 0
        %2610 = vmatpush1.bf16.msra.mxu0 %v2521
        %2611 = vmatprep.subr.bf16.mxu0 0
        %2612 = vmatpush1.bf16.msra.mxu0 %v2522
        %2613 = vmatprep.subr.bf16.mxu0 0
        %2614 = vmatpush1.bf16.msra.mxu0 %v2523
        %2615 = vmatprep.subr.bf16.mxu0 0
        %2616 = vmatpush1.bf16.msra.mxu0 %v2524
        %2617 = vmatprep.subr.bf16.mxu0 0
        %2618 = vmatpush1.bf16.msra.mxu0 %v2525
        %2619 = vmatprep.subr.bf16.mxu0 0
        %2620 = vmatpush1.bf16.msra.mxu0 %v2526
        %2621 = vmatprep.subr.bf16.mxu0 0
        %2622 = vmatpush1.bf16.msra.mxu0 %v2527
        %2623 = vmatprep.subr.bf16.mxu0 0
        %2624 = vmatpush1.bf16.msra.mxu0 %v2528
        %2625 = vmatprep.subr.bf16.mxu0 0
        %2626 = vmatpush1.bf16.msra.mxu0 %v2529
        %2627 = vmatprep.subr.bf16.mxu0 0
        %2628 = vmatpush1.bf16.msra.mxu0 %v2530
        %2629 = vmatprep.subr.bf16.mxu0 0
        %2630 = vmatpush1.bf16.msra.mxu0 %v2531
        %2631 = vmatprep.subr.bf16.mxu0 0
        %2632 = vmatpush1.bf16.msra.mxu0 %v2532
        %2633 = vmatprep.subr.bf16.mxu0 0
        %2634 = vmatpush1.bf16.msra.mxu0 %v2533
        %2635 = vmatprep.subr.bf16.mxu0 0
        %2636 = vmatpush1.bf16.msra.mxu0 %v2534
        %2637 = vmatprep.subr.bf16.mxu0 0
        %2638 = vmatpush1.bf16.msra.mxu0 %v2535
        %2639 = vmatprep.subr.bf16.mxu0 0
        %2640 = vmatpush1.bf16.msra.mxu0 %v2536
        %2641 = vmatprep.mubr.bf16.mxu0 %v2305
        %2642 = vmatmul.mubr.bf16.gmra.mrb[0].mxu0 %v2304
        %v2643 = vpop.f32.mrb[0].mxu0
        %v2644 = vadd.f32 %v2604, %v2643
        %v2645 = vpop.f32.mrb[0].mxu0
        %v2646 = vpop.f32.mrb[0].mxu0
        %v2647 = vpop.f32.mrb[0].mxu0
        %2648 = vdwg.mxu0
        %v2649 = vld [vmem:[%s22] sm:$0x1]
        %v2651 = vlaneseq
        %v2652 = vshrl.u32 %v2651, 7
        %v2653 = vsub.s32 0, %v2652
        %v2654 = vrot.slane %v2649, %v2653
        %v2656 = vmul.f32 %v2654, %v2644
        %v2657 = vadd.f32 %v1984, %v2656
        %2658 = vst [vmem:[%s946] sm:$0xff] %v2657
        %s2659 = sand.u32 %s578, 1
        %s2660 = scalar_lea.sflag [#allocation4], %s2659
        %s2661 = sand.u32 %s578, 1
        %s2662 = smul.addr %s2661, 8
        %s2663 = scalar_lea.vmem [#allocation19], %s2662
        // Predicated region
        $region153: #{tpu_custom_call.1} parent=111 // pred_check
          %p2664 = pneg %p588
        $region154: #{tpu_custom_call.1} parent=111 // pred_check_branch
          %2666 = sbr.rel (%p2664) target = $region156
        $region155: #{tpu_custom_call.1} parent=111 // pred_region
          %s2668 = ssub.s32 128, 128
          %2669 = vsyncadd %s2660, %s2668
          %s2670 = sadd.s32 %s54, %s53
          %s2671 = smul.addr %s2670, 128
          %s2672 = scalar_lea.hbm %s23, %s2671
          %s2674 = sshll.u32 %s2663, 4
          %s2675 = int_to_ptr.vmem [resolvable:$true] %s2674
          %2677 = dma.vmem_to_hbm [thread:$0]  %s2675, 128, %s2672, %s2660
        $region156: #{tpu_custom_call.1} parent=111 // pred_fallthru
          _
      $region112: #{tpu_custom_call.1} parent=5 // pred_fallthru
        _
      %p2678 = scmp.le.s32.totalorder 2, %s44
      // Predicated region
      $region157: #{tpu_custom_call.1} parent=5 // pred_check
        %p2679 = pneg %p2678
      $region158: #{tpu_custom_call.1} parent=5 // pred_check_branch
        %2681 = sbr.rel (%p2679) target = $region160
      $region159: #{tpu_custom_call.1} parent=5 // pred_region
        %s2682 = ssub.s32 %s44, 2
        // Predicated region
        $region161: #{tpu_custom_call.1} parent=159 // pred_check
          %p2683 = pneg %p594
        $region162: #{tpu_custom_call.1} parent=159 // pred_check_branch
          %2685 = sbr.rel (%p2683) target = $region164
        $region163: #{tpu_custom_call.1} parent=159 // pred_region
          %s2686 = sand.u32 %s579, 1
          %s2687 = scalar_lea.sflag [#allocation4], %s2686
          %s2688 = sand.u32 %s579, 1
          %s2689 = smul.addr %s2688, 8
          %s2690 = scalar_lea.vmem [#allocation19], %s2689
          %2691 = dma.done %s2687, 128
        $region164: #{tpu_custom_call.1} parent=159 // pred_fallthru
          _
      $region160: #{tpu_custom_call.1} parent=5 // pred_fallthru
        _
    $region6: #{tpu_custom_call.1} parent=1 // loop_footer
      %s48 = sadd.s32 1, %s44
    $region7: #{tpu_custom_call.1} parent=1 // loop_footer_branch
      %43 = sbr.rel target = $region3
    $region8: #{tpu_custom_call.1} parent=1 // loop_exit
      _
    %2692 = vsyncpa [#allocation3], 1
    %s2693 = scalar_lea.sflag [#allocation3], 1
    %2694 = vsyncpa %s2693, 1
    %2695 = vsyncpa [#allocation6], 1
    %s2696 = scalar_lea.sflag [#allocation6], 1
    %2697 = vsyncpa %s2696, 1
    %2698 = vsyncpa [#allocation9], 1
    %s2699 = scalar_lea.sflag [#allocation9], 1
    %2700 = vsyncpa %s2699, 1
    %2701 = vsyncpa [#allocation12], 1
    %2702 = vsyncpa [#allocation15], 1
    %2703 = vsyncpa [#allocation18], 1
    %2704 = vsyncpa [#allocation4], 1
    %s2705 = scalar_lea.sflag [#allocation4], 1
    %2706 = vsyncpa %s2705, 1

</llo_original>
